<compile_context>
chip_gen: v7x
topology: tpu7x:2x2x1
jax: 0.10.0
libtpu: 0.0.40
codegen_flags: <defaults>
</compile_context>

<pallas_src>
import functools

import jax
import jax.numpy as jnp
from jax import lax
from jax.experimental import pallas as pl
from jax.experimental.pallas import tpu as pltpu

EPS = 1e-5
LANES = 128
ACC_BUDGET_BYTES = 128 * 1024   # f32 accumulator footprint target per row block


def _round_up(x, m):
    return (x + m - 1) // m * m


def _conv_taps(x_ref, w_ref, row0, hb2, W, KH, KW, cin_p, cout_p):
    """3x3 conv for `hb2` output rows as KH*KW shifted ref-slice matmuls.

    The per-tap LHS is sliced directly from the VMEM ref (no full-image value
    load, no im2col blow-up in HBM); bf16 MXU inputs, f32 accumulation.
    """
    acc = jnp.zeros((hb2 * W, cout_p), jnp.float32)
    for kh in range(KH):
        for kw in range(KW):
            xs = x_ref[pl.ds(row0 + kh, hb2), pl.ds(kw, W), :]   # (hb2, W, cin_p) bf16
            acc = acc + jnp.dot(xs.reshape(hb2 * W, cin_p), w_ref[kh, kw],
                                preferred_element_type=jnp.float32)
    return acc


def _conv_stats_kernel(x_ref, w_ref, mask_ref, sum_ref, ssq_ref,
                       *, W, hb2, KH, KW, cin_p, cout_p):
    # x_ref:    (Hp+2, W+2, cin_p)     bf16  (spatially + row-block padded image)
    # w_ref:    (KH, KW, cin_p, cout_p) bf16
    # mask_ref: (hb2*W, 1)             f32   1.0 for real conv rows, 0.0 for pad rows
    # sum_ref:  (1, cout_p)            f32   per-(image, row-block) partial sum
    # ssq_ref:  (1, cout_p)            f32   per-(image, row-block) partial sum of squares
    r = pl.program_id(1)
    row0 = pl.multiple_of(r * hb2, hb2)
    acc = _conv_taps(x_ref, w_ref, row0, hb2, W, KH, KW, cin_p, cout_p)
    m = mask_ref[...]                       # mask padded tail rows out of the stats
    am = acc * m
    sum_ref[...] = jnp.sum(am, axis=0, keepdims=True)
    ssq_ref[...] = jnp.sum(am * acc, axis=0, keepdims=True)


def _conv_bn_relu_pool_kernel(x_ref, w_ref, scale_ref, shift_ref, o_ref,
                              *, W, Wo, hb2, hbp, KH, KW, cin_p, cout_p):
    # x_ref: (Hp+2, W+2, cin_p) bf16, w_ref: (KH, KW, cin_p, cout_p) bf16
    # scale_ref/shift_ref: (1, cout_p) f32 (folded BatchNorm)
    # o_ref: (hbp, Wo, cout_p)  f32 (pooled rows for this block, lane-dense)
    r = pl.program_id(1)
    row0 = pl.multiple_of(r * hb2, hb2)
    acc = _conv_taps(x_ref, w_ref, row0, hb2, W, KH, KW, cin_p, cout_p)
    # Folded BatchNorm + ReLU: single mul-add per element.
    z = jnp.maximum(acc * scale_ref[...] + shift_ref[...], 0.0)   # (hb2*W, cout_p)
    # 2x2 max-pool (lane dim cout_p untouched by either reshape).
    z = z.reshape(hbp, 2, W, cout_p)
    zr = jnp.maximum(z[:, 0], z[:, 1])[:, :2 * Wo, :]             # row-pair max
    zc = zr.reshape(hbp, Wo, 2, cout_p)
    o_ref[...] = jnp.maximum(zc[:, :, 0, :], zc[:, :, 1, :])      # col-pair max


@jax.jit
def conv_block_forward(x_nchw, conv_w, conv_b, bn_gamma, bn_beta):
    del conv_b  # cancelled exactly by the BN batch-mean subtraction (training mode)
    N, Cin, H, W = x_nchw.shape
    Cout, _, KH, KW = conv_w.shape
    assert KH == 3 and KW == 3, "ConvBlock uses kernel_size=3 with padding=1"

    cin_p = _round_up(Cin, 16)         # bf16 sublane tile on the contraction dim
    cout_p = _round_up(Cout, LANES)    # lane-dense channel dim (>= 128)
    Ho, Wo = H // 2, W // 2            # MaxPool2d(2,2), ceil_mode=False -> floor

    # Row-block size driven by the accumulator byte budget (not divisibility).
    hbp = max(1, min(Ho, ACC_BUDGET_BYTES // (4 * cout_p * 2 * W)))  # pooled rows/block
    hb2 = 2 * hbp                       # conv rows per block
    R = -(-H // hb2)                    # row blocks (ragged last block is masked)
    Hp = R * hb2                        # conv rows covered by the padded image

    # --- glue: NCHW -> NHWC, bf16, spatial 'same' + row-block zero padding ---
    x = jnp.transpose(x_nchw, (0, 2, 3, 1)).astype(jnp.bfloat16)
    x = jnp.pad(x, ((0, 0), (1, 1 + Hp - H), (1, 1), (0, cin_p - Cin)))
    # weight (Cout, Cin, KH, KW) -> (KH, KW, cin_p, cout_p), bf16 for the MXU.
    w = jnp.transpose(conv_w, (2, 3, 1, 0)).astype(jnp.float32)
    w = jnp.pad(w, ((0, 0), (0, 0), (0, cin_p - Cin), (0, cout_p - Cout)))
    w = w.astype(jnp.bfloat16)
    # Per-pixel validity (conv rows >= H belong to the row-block padding).
    valid = (jnp.arange(Hp) < H).astype(jnp.float32)
    rowmask = jnp.repeat(valid, W).reshape(R, hb2 * W, 1)

    common_params = pltpu.CompilerParams(
        dimension_semantics=("parallel", "parallel"),
        vmem_limit_bytes=32 * 1024 * 1024,
    )

    # --- Pass 1: conv recompute -> per-(image, row-block) BN partial sums ---
    stats_kernel = functools.partial(
        _conv_stats_kernel, W=W, hb2=hb2, KH=KH, KW=KW,
        cin_p=cin_p, cout_p=cout_p)
    psum, pssq = pl.pallas_call(
        stats_kernel,
        grid=(N, R),
        in_specs=[
            pl.BlockSpec((None, Hp + 2, W + 2, cin_p), lambda n, r: (n, 0, 0, 0)),
            pl.BlockSpec((KH, KW, cin_p, cout_p), lambda n, r: (0, 0, 0, 0)),
            pl.BlockSpec((None, hb2 * W, 1), lambda n, r: (r, 0, 0)),
        ],
        out_specs=(
            pl.BlockSpec((None, None, 1, cout_p), lambda n, r: (n, r, 0, 0)),
            pl.BlockSpec((None, None, 1, cout_p), lambda n, r: (n, r, 0, 0)),
        ),
        out_shape=(
            jax.ShapeDtypeStruct((N, R, 1, cout_p), jnp.float32),
            jax.ShapeDtypeStruct((N, R, 1, cout_p), jnp.float32),
        ),
        compiler_params=common_params,
    )(x, w, rowmask)

    # --- glue: combine partial sums -> folded BN scale/shift (tiny) ---
    M = N * H * W
    tot = jnp.sum(psum, axis=(0, 1, 2))               # (cout_p,)
    tsq = jnp.sum(pssq, axis=(0, 1, 2))
    mean = tot / M
    var = jnp.maximum(tsq / M - mean * mean, 0.0)      # biased (training) variance
    gamma_p = jnp.pad(bn_gamma.astype(jnp.float32), (0, cout_p - Cout))
    beta_p = jnp.pad(bn_beta.astype(jnp.float32), (0, cout_p - Cout))
    scale = gamma_p * lax.rsqrt(var + EPS)
    shift = beta_p - mean * scale
    scale = scale[None, :]                             # (1, cout_p)
    shift = shift[None, :]

    # --- Pass 2: fused conv recompute + BN-apply + ReLU + 2x2 max-pool ---
    pool_kernel = functools.partial(
        _conv_bn_relu_pool_kernel, W=W, Wo=Wo, hb2=hb2, hbp=hbp, KH=KH, KW=KW,
        cin_p=cin_p, cout_p=cout_p)
    pooled = pl.pallas_call(
        pool_kernel,
        grid=(N, R),
        in_specs=[
            pl.BlockSpec((None, Hp + 2, W + 2, cin_p), lambda n, r: (n, 0, 0, 0)),
            pl.BlockSpec((KH, KW, cin_p, cout_p), lambda n, r: (0, 0, 0, 0)),
            pl.BlockSpec((1, cout_p), lambda n, r: (0, 0)),
            pl.BlockSpec((1, cout_p), lambda n, r: (0, 0)),
        ],
        out_specs=pl.BlockSpec((None, hbp, Wo, cout_p), lambda n, r: (n, r, 0, 0)),
        out_shape=jax.ShapeDtypeStruct((N, R * hbp, Wo, cout_p), jnp.float32),
        compiler_params=common_params,
    )(x, w, scale, shift)

    # drop row-block / channel padding; back to NCHW only at the module boundary
    out = pooled[:, :Ho, :, :Cout]
    return jnp.transpose(out, (0, 3, 1, 2))


def reference_forward(x_nchw, conv_w, conv_b, bn_gamma, bn_beta):
    # pure-JAX f32 reference for a correctness check
    y = lax.conv_general_dilated(
        x_nchw, conv_w, window_strides=(1, 1), padding=((1, 1), (1, 1)),
        dimension_numbers=("NCHW", "OIHW", "NCHW"),
    ) + conv_b.reshape(1, -1, 1, 1)
    mean = jnp.mean(y, axis=(0, 2, 3), keepdims=True)
    var = jnp.mean((y - mean) ** 2, axis=(0, 2, 3), keepdims=True)
    y = (y - mean) * lax.rsqrt(var + EPS)
    y = bn_gamma.reshape(1, -1, 1, 1) * y + bn_beta.reshape(1, -1, 1, 1)
    y = jnp.maximum(y, 0.0)
    return lax.reduce_window(
        y, -jnp.inf, lax.max, (1, 1, 2, 2), (1, 1, 2, 2), "VALID"
    )


if __name__ == "__main__":
    N, Cin, H, W = 2, 4, 16, 16
    Cout, K = 8, 3

    key = jax.random.PRNGKey(0)
    kx, kw, kg = jax.random.split(key, 3)

    x = jax.random.normal(kx, (N, Cin, H, W), dtype=jnp.float32)

    # Conv2d params: xavier_uniform_ weight (gain=1), zero bias
    fan_in = Cin * K * K
    fan_out = Cout * K * K
    bound = (6.0 / (fan_in + fan_out)) ** 0.5
    conv_w = jax.random.uniform(kw, (Cout, Cin, K, K), jnp.float32, -bound, bound)
    conv_b = jnp.zeros((Cout,), jnp.float32)

    # BatchNorm2d params: weight ~ U[0,1), bias = 0
    bn_gamma = jax.random.uniform(kg, (Cout,), jnp.float32, 0.0, 1.0)
    bn_beta = jnp.zeros((Cout,), jnp.float32)

    out = conv_block_forward(x, conv_w, conv_b, bn_gamma, bn_beta)
    out = jax.block_until_ready(out)

    ref = reference_forward(x, conv_w, conv_b, bn_gamma, bn_beta)
    assert out.shape == (N, Cout, H // 2, W // 2), out.shape
    # bf16 MXU inputs vs. the pure-f32 reference -> allow a few 1e-2 of slack.
    assert jnp.allclose(out, ref, rtol=5e-2, atol=5e-2), \
        float(jnp.max(jnp.abs(out - ref)))

    print("KERNEL_OK")
</pallas_src>

<mosaic_0001>
module attributes {stable_mosaic.version = 11 : i64} {
  func.func @_conv_stats_kernel(%arg0: i32, %arg1: i32, %arg2: memref<1x18x18x16xbf16, #tpu.memory_space<vmem>>, %arg3: memref<3x3x16x128xbf16, #tpu.memory_space<vmem>>, %arg4: memref<1x256x1xf32, #tpu.memory_space<vmem>>, %arg5: memref<1x1x1x128xf32, #tpu.memory_space<vmem>>, %arg6: memref<1x1x1x128xf32, #tpu.memory_space<vmem>>) attributes {dimension_semantics = [#tpu.dimension_semantics<parallel>, #tpu.dimension_semantics<parallel>], iteration_bounds = array<i64: 2, 1>, scalar_prefetch = 0 : i64, scratch_operands = 0 : i64, tpu.core_type = #tpu.core_type<tc>, window_params = [{transform_indices = @transform_0, window_bounds = array<i64: 1, 18, 18, 16>}, {pipeline_mode = #tpu.pipeline_mode<synchronous>, transform_indices = @transform_1, window_bounds = array<i64: 3, 3, 16, 128>}, {transform_indices = @transform_2, window_bounds = array<i64: 1, 256, 1>}, {transform_indices = @transform_3, window_bounds = array<i64: 1, 1, 1, 128>}, {transform_indices = @transform_4, window_bounds = array<i64: 1, 1, 1, 128>}]} {
    %c16_i32 = arith.constant 16 : i32
    %0 = arith.muli %arg1, %c16_i32 : i32
    %1 = tpu.assume_multiple %0, 16 : i32
    %cst = arith.constant 0.000000e+00 : f32
    %2 = vector.broadcast %cst : f32 to vector<256x128xf32>
    %c0_i32 = arith.constant 0 : i32
    %3 = arith.addi %1, %c0_i32 : i32
    %c0 = arith.constant 0 : index
    %4 = arith.index_cast %3 : i32 to index
    %c0_0 = arith.constant 0 : index
    %c0_1 = arith.constant 0 : index
    %5 = vector.load %arg2[%c0, %4, %c0_0, %c0_1] : memref<1x18x18x16xbf16, #tpu.memory_space<vmem>>, vector<1x16x16x16xbf16>
    %6 = vector.shape_cast %5 : vector<1x16x16x16xbf16> to vector<16x16x16xbf16>
    %7 = vector.shape_cast %6 : vector<16x16x16xbf16> to vector<256x16xbf16>
    %c0_2 = arith.constant 0 : index
    %c0_3 = arith.constant 0 : index
    %c0_4 = arith.constant 0 : index
    %c0_5 = arith.constant 0 : index
    %8 = vector.load %arg3[%c0_2, %c0_3, %c0_4, %c0_5] : memref<3x3x16x128xbf16, #tpu.memory_space<vmem>>, vector<1x1x16x128xbf16>
    %9 = vector.shape_cast %8 : vector<1x1x16x128xbf16> to vector<16x128xbf16>
    %cst_6 = arith.constant dense<0.000000e+00> : vector<256x128xf32>
    %10 = tpu.matmul %7, %9, %cst_6 {dimension_numbers = #tpu.dot_dimension_numbers<[1], [0], [0], [1], [0, 0, 1, 1], [], []>} : vector<256x16xbf16>, vector<16x128xbf16>, vector<256x128xf32> -> vector<256x128xf32>
    %11 = arith.addf %2, %10 : vector<256x128xf32>
    %c0_i32_7 = arith.constant 0 : i32
    %12 = arith.addi %1, %c0_i32_7 : i32
    %c0_8 = arith.constant 0 : index
    %13 = arith.index_cast %12 : i32 to index
    %c1 = arith.constant 1 : index
    %c0_9 = arith.constant 0 : index
    %14 = vector.load %arg2[%c0_8, %13, %c1, %c0_9] : memref<1x18x18x16xbf16, #tpu.memory_space<vmem>>, vector<1x16x16x16xbf16>
    %15 = vector.shape_cast %14 : vector<1x16x16x16xbf16> to vector<16x16x16xbf16>
    %16 = vector.shape_cast %15 : vector<16x16x16xbf16> to vector<256x16xbf16>
    %c0_10 = arith.constant 0 : index
    %c1_11 = arith.constant 1 : index
    %c0_12 = arith.constant 0 : index
    %c0_13 = arith.constant 0 : index
    %17 = vector.load %arg3[%c0_10, %c1_11, %c0_12, %c0_13] : memref<3x3x16x128xbf16, #tpu.memory_space<vmem>>, vector<1x1x16x128xbf16>
    %18 = vector.shape_cast %17 : vector<1x1x16x128xbf16> to vector<16x128xbf16>
    %cst_14 = arith.constant dense<0.000000e+00> : vector<256x128xf32>
    %19 = tpu.matmul %16, %18, %cst_14 {dimension_numbers = #tpu.dot_dimension_numbers<[1], [0], [0], [1], [0, 0, 1, 1], [], []>} : vector<256x16xbf16>, vector<16x128xbf16>, vector<256x128xf32> -> vector<256x128xf32>
    %20 = arith.addf %11, %19 : vector<256x128xf32>
    %c0_i32_15 = arith.constant 0 : i32
    %21 = arith.addi %1, %c0_i32_15 : i32
    %c0_16 = arith.constant 0 : index
    %22 = arith.index_cast %21 : i32 to index
    %c2 = arith.constant 2 : index
    %c0_17 = arith.constant 0 : index
    %23 = vector.load %arg2[%c0_16, %22, %c2, %c0_17] : memref<1x18x18x16xbf16, #tpu.memory_space<vmem>>, vector<1x16x16x16xbf16>
    %24 = vector.shape_cast %23 : vector<1x16x16x16xbf16> to vector<16x16x16xbf16>
    %25 = vector.shape_cast %24 : vector<16x16x16xbf16> to vector<256x16xbf16>
    %c0_18 = arith.constant 0 : index
    %c2_19 = arith.constant 2 : index
    %c0_20 = arith.constant 0 : index
    %c0_21 = arith.constant 0 : index
    %26 = vector.load %arg3[%c0_18, %c2_19, %c0_20, %c0_21] : memref<3x3x16x128xbf16, #tpu.memory_space<vmem>>, vector<1x1x16x128xbf16>
    %27 = vector.shape_cast %26 : vector<1x1x16x128xbf16> to vector<16x128xbf16>
    %cst_22 = arith.constant dense<0.000000e+00> : vector<256x128xf32>
    %28 = tpu.matmul %25, %27, %cst_22 {dimension_numbers = #tpu.dot_dimension_numbers<[1], [0], [0], [1], [0, 0, 1, 1], [], []>} : vector<256x16xbf16>, vector<16x128xbf16>, vector<256x128xf32> -> vector<256x128xf32>
    %29 = arith.addf %20, %28 : vector<256x128xf32>
    %c1_i32 = arith.constant 1 : i32
    %30 = arith.addi %1, %c1_i32 : i32
    %c0_23 = arith.constant 0 : index
    %31 = arith.index_cast %30 : i32 to index
    %c0_24 = arith.constant 0 : index
    %c0_25 = arith.constant 0 : index
    %32 = vector.load %arg2[%c0_23, %31, %c0_24, %c0_25] : memref<1x18x18x16xbf16, #tpu.memory_space<vmem>>, vector<1x16x16x16xbf16>
    %33 = vector.shape_cast %32 : vector<1x16x16x16xbf16> to vector<16x16x16xbf16>
    %34 = vector.shape_cast %33 : vector<16x16x16xbf16> to vector<256x16xbf16>
    %c1_26 = arith.constant 1 : index
    %c0_27 = arith.constant 0 : index
    %c0_28 = arith.constant 0 : index
    %c0_29 = arith.constant 0 : index
    %35 = vector.load %arg3[%c1_26, %c0_27, %c0_28, %c0_29] : memref<3x3x16x128xbf16, #tpu.memory_space<vmem>>, vector<1x1x16x128xbf16>
    %36 = vector.shape_cast %35 : vector<1x1x16x128xbf16> to vector<16x128xbf16>
    %cst_30 = arith.constant dense<0.000000e+00> : vector<256x128xf32>
    %37 = tpu.matmul %34, %36, %cst_30 {dimension_numbers = #tpu.dot_dimension_numbers<[1], [0], [0], [1], [0, 0, 1, 1], [], []>} : vector<256x16xbf16>, vector<16x128xbf16>, vector<256x128xf32> -> vector<256x128xf32>
    %38 = arith.addf %29, %37 : vector<256x128xf32>
    %c1_i32_31 = arith.constant 1 : i32
    %39 = arith.addi %1, %c1_i32_31 : i32
    %c0_32 = arith.constant 0 : index
    %40 = arith.index_cast %39 : i32 to index
    %c1_33 = arith.constant 1 : index
    %c0_34 = arith.constant 0 : index
    %41 = vector.load %arg2[%c0_32, %40, %c1_33, %c0_34] : memref<1x18x18x16xbf16, #tpu.memory_space<vmem>>, vector<1x16x16x16xbf16>
    %42 = vector.shape_cast %41 : vector<1x16x16x16xbf16> to vector<16x16x16xbf16>
    %43 = vector.shape_cast %42 : vector<16x16x16xbf16> to vector<256x16xbf16>
    %c1_35 = arith.constant 1 : index
    %c1_36 = arith.constant 1 : index
    %c0_37 = arith.constant 0 : index
    %c0_38 = arith.constant 0 : index
    %44 = vector.load %arg3[%c1_35, %c1_36, %c0_37, %c0_38] : memref<3x3x16x128xbf16, #tpu.memory_space<vmem>>, vector<1x1x16x128xbf16>
    %45 = vector.shape_cast %44 : vector<1x1x16x128xbf16> to vector<16x128xbf16>
    %cst_39 = arith.constant dense<0.000000e+00> : vector<256x128xf32>
    %46 = tpu.matmul %43, %45, %cst_39 {dimension_numbers = #tpu.dot_dimension_numbers<[1], [0], [0], [1], [0, 0, 1, 1], [], []>} : vector<256x16xbf16>, vector<16x128xbf16>, vector<256x128xf32> -> vector<256x128xf32>
    %47 = arith.addf %38, %46 : vector<256x128xf32>
    %c1_i32_40 = arith.constant 1 : i32
    %48 = arith.addi %1, %c1_i32_40 : i32
    %c0_41 = arith.constant 0 : index
    %49 = arith.index_cast %48 : i32 to index
    %c2_42 = arith.constant 2 : index
    %c0_43 = arith.constant 0 : index
    %50 = vector.load %arg2[%c0_41, %49, %c2_42, %c0_43] : memref<1x18x18x16xbf16, #tpu.memory_space<vmem>>, vector<1x16x16x16xbf16>
    %51 = vector.shape_cast %50 : vector<1x16x16x16xbf16> to vector<16x16x16xbf16>
    %52 = vector.shape_cast %51 : vector<16x16x16xbf16> to vector<256x16xbf16>
    %c1_44 = arith.constant 1 : index
    %c2_45 = arith.constant 2 : index
    %c0_46 = arith.constant 0 : index
    %c0_47 = arith.constant 0 : index
    %53 = vector.load %arg3[%c1_44, %c2_45, %c0_46, %c0_47] : memref<3x3x16x128xbf16, #tpu.memory_space<vmem>>, vector<1x1x16x128xbf16>
    %54 = vector.shape_cast %53 : vector<1x1x16x128xbf16> to vector<16x128xbf16>
    %cst_48 = arith.constant dense<0.000000e+00> : vector<256x128xf32>
    %55 = tpu.matmul %52, %54, %cst_48 {dimension_numbers = #tpu.dot_dimension_numbers<[1], [0], [0], [1], [0, 0, 1, 1], [], []>} : vector<256x16xbf16>, vector<16x128xbf16>, vector<256x128xf32> -> vector<256x128xf32>
    %56 = arith.addf %47, %55 : vector<256x128xf32>
    %c2_i32 = arith.constant 2 : i32
    %57 = arith.addi %1, %c2_i32 : i32
    %c0_49 = arith.constant 0 : index
    %58 = arith.index_cast %57 : i32 to index
    %c0_50 = arith.constant 0 : index
    %c0_51 = arith.constant 0 : index
    %59 = vector.load %arg2[%c0_49, %58, %c0_50, %c0_51] : memref<1x18x18x16xbf16, #tpu.memory_space<vmem>>, vector<1x16x16x16xbf16>
    %60 = vector.shape_cast %59 : vector<1x16x16x16xbf16> to vector<16x16x16xbf16>
    %61 = vector.shape_cast %60 : vector<16x16x16xbf16> to vector<256x16xbf16>
    %c2_52 = arith.constant 2 : index
    %c0_53 = arith.constant 0 : index
    %c0_54 = arith.constant 0 : index
    %c0_55 = arith.constant 0 : index
    %62 = vector.load %arg3[%c2_52, %c0_53, %c0_54, %c0_55] : memref<3x3x16x128xbf16, #tpu.memory_space<vmem>>, vector<1x1x16x128xbf16>
    %63 = vector.shape_cast %62 : vector<1x1x16x128xbf16> to vector<16x128xbf16>
    %cst_56 = arith.constant dense<0.000000e+00> : vector<256x128xf32>
    %64 = tpu.matmul %61, %63, %cst_56 {dimension_numbers = #tpu.dot_dimension_numbers<[1], [0], [0], [1], [0, 0, 1, 1], [], []>} : vector<256x16xbf16>, vector<16x128xbf16>, vector<256x128xf32> -> vector<256x128xf32>
    %65 = arith.addf %56, %64 : vector<256x128xf32>
    %c2_i32_57 = arith.constant 2 : i32
    %66 = arith.addi %1, %c2_i32_57 : i32
    %c0_58 = arith.constant 0 : index
    %67 = arith.index_cast %66 : i32 to index
    %c1_59 = arith.constant 1 : index
    %c0_60 = arith.constant 0 : index
    %68 = vector.load %arg2[%c0_58, %67, %c1_59, %c0_60] : memref<1x18x18x16xbf16, #tpu.memory_space<vmem>>, vector<1x16x16x16xbf16>
    %69 = vector.shape_cast %68 : vector<1x16x16x16xbf16> to vector<16x16x16xbf16>
    %70 = vector.shape_cast %69 : vector<16x16x16xbf16> to vector<256x16xbf16>
    %c2_61 = arith.constant 2 : index
    %c1_62 = arith.constant 1 : index
    %c0_63 = arith.constant 0 : index
    %c0_64 = arith.constant 0 : index
    %71 = vector.load %arg3[%c2_61, %c1_62, %c0_63, %c0_64] : memref<3x3x16x128xbf16, #tpu.memory_space<vmem>>, vector<1x1x16x128xbf16>
    %72 = vector.shape_cast %71 : vector<1x1x16x128xbf16> to vector<16x128xbf16>
    %cst_65 = arith.constant dense<0.000000e+00> : vector<256x128xf32>
    %73 = tpu.matmul %70, %72, %cst_65 {dimension_numbers = #tpu.dot_dimension_numbers<[1], [0], [0], [1], [0, 0, 1, 1], [], []>} : vector<256x16xbf16>, vector<16x128xbf16>, vector<256x128xf32> -> vector<256x128xf32>
    %74 = arith.addf %65, %73 : vector<256x128xf32>
    %c2_i32_66 = arith.constant 2 : i32
    %75 = arith.addi %1, %c2_i32_66 : i32
    %c0_67 = arith.constant 0 : index
    %76 = arith.index_cast %75 : i32 to index
    %c2_68 = arith.constant 2 : index
    %c0_69 = arith.constant 0 : index
    %77 = vector.load %arg2[%c0_67, %76, %c2_68, %c0_69] : memref<1x18x18x16xbf16, #tpu.memory_space<vmem>>, vector<1x16x16x16xbf16>
    %78 = vector.shape_cast %77 : vector<1x16x16x16xbf16> to vector<16x16x16xbf16>
    %79 = vector.shape_cast %78 : vector<16x16x16xbf16> to vector<256x16xbf16>
    %c2_70 = arith.constant 2 : index
    %c2_71 = arith.constant 2 : index
    %c0_72 = arith.constant 0 : index
    %c0_73 = arith.constant 0 : index
    %80 = vector.load %arg3[%c2_70, %c2_71, %c0_72, %c0_73] : memref<3x3x16x128xbf16, #tpu.memory_space<vmem>>, vector<1x1x16x128xbf16>
    %81 = vector.shape_cast %80 : vector<1x1x16x128xbf16> to vector<16x128xbf16>
    %cst_74 = arith.constant dense<0.000000e+00> : vector<256x128xf32>
    %82 = tpu.matmul %79, %81, %cst_74 {dimension_numbers = #tpu.dot_dimension_numbers<[1], [0], [0], [1], [0, 0, 1, 1], [], []>} : vector<256x16xbf16>, vector<16x128xbf16>, vector<256x128xf32> -> vector<256x128xf32>
    %83 = arith.addf %74, %82 : vector<256x128xf32>
    %c0_75 = arith.constant 0 : index
    %c0_76 = arith.constant 0 : index
    %c0_77 = arith.constant 0 : index
    %84 = vector.load %arg4[%c0_75, %c0_76, %c0_77] : memref<1x256x1xf32, #tpu.memory_space<vmem>>, vector<1x256x1xf32>
    %85 = vector.shape_cast %84 : vector<1x256x1xf32> to vector<256x1xf32>
    %86 = vector.broadcast %85 : vector<256x1xf32> to vector<256x128xf32>
    %87 = arith.mulf %83, %86 : vector<256x128xf32>
    %cst_78 = arith.constant dense<0.000000e+00> : vector<128xf32>
    %88 = vector.multi_reduction <add>, %87, %cst_78 [0] : vector<256x128xf32> to vector<128xf32>
    %89 = vector.shape_cast %88 : vector<128xf32> to vector<1x128xf32>
    %c0_79 = arith.constant 0 : index
    %c0_80 = arith.constant 0 : index
    %c0_81 = arith.constant 0 : index
    %c0_82 = arith.constant 0 : index
    %90 = vector.load %arg5[%c0_79, %c0_80, %c0_81, %c0_82] : memref<1x1x1x128xf32, #tpu.memory_space<vmem>>, vector<1x1x1x128xf32>
    %91 = vector.shape_cast %90 : vector<1x1x1x128xf32> to vector<1x128xf32>
    %92 = vector.shape_cast %89 : vector<1x128xf32> to vector<1x1x1x128xf32>
    tpu.vector_store %arg5[%c0_79, %c0_80, %c0_81, %c0_82], %92 {strides = array<i32>} : memref<1x1x1x128xf32, #tpu.memory_space<vmem>>, vector<1x1x1x128xf32>,
    %93 = arith.mulf %87, %83 : vector<256x128xf32>
    %cst_83 = arith.constant dense<0.000000e+00> : vector<128xf32>
    %94 = vector.multi_reduction <add>, %93, %cst_83 [0] : vector<256x128xf32> to vector<128xf32>
    %95 = vector.shape_cast %94 : vector<128xf32> to vector<1x128xf32>
    %c0_84 = arith.constant 0 : index
    %c0_85 = arith.constant 0 : index
    %c0_86 = arith.constant 0 : index
    %c0_87 = arith.constant 0 : index
    %96 = vector.load %arg6[%c0_84, %c0_85, %c0_86, %c0_87] : memref<1x1x1x128xf32, #tpu.memory_space<vmem>>, vector<1x1x1x128xf32>
    %97 = vector.shape_cast %96 : vector<1x1x1x128xf32> to vector<1x128xf32>
    %98 = vector.shape_cast %95 : vector<1x128xf32> to vector<1x1x1x128xf32>
    tpu.vector_store %arg6[%c0_84, %c0_85, %c0_86, %c0_87], %98 {strides = array<i32>} : memref<1x1x1x128xf32, #tpu.memory_space<vmem>>, vector<1x1x1x128xf32>,
    return
  }
  func.func @transform_0(%arg0: i32, %arg1: i32) -> (i32, i32, i32, i32) {
    %c0_i32 = arith.constant 0 : i32
    %c0_i32_0 = arith.constant 0 : i32
    %c0_i32_1 = arith.constant 0 : i32
    %c0_i32_2 = arith.constant 0 : i32
    return %arg0, %c0_i32, %c0_i32_0, %c0_i32_1 : i32, i32, i32, i32
  }
  func.func @transform_1(%arg0: i32, %arg1: i32) -> (i32, i32, i32, i32) {
    %c0_i32 = arith.constant 0 : i32
    %c0_i32_0 = arith.constant 0 : i32
    %c0_i32_1 = arith.constant 0 : i32
    %c0_i32_2 = arith.constant 0 : i32
    %c0_i32_3 = arith.constant 0 : i32
    return %c0_i32, %c0_i32_0, %c0_i32_1, %c0_i32_2 : i32, i32, i32, i32
  }
  func.func @transform_2(%arg0: i32, %arg1: i32) -> (i32, i32, i32) {
    %c0_i32 = arith.constant 0 : i32
    %c0_i32_0 = arith.constant 0 : i32
    %c0_i32_1 = arith.constant 0 : i32
    return %arg1, %c0_i32, %c0_i32_0 : i32, i32, i32
  }
  func.func @transform_3(%arg0: i32, %arg1: i32) -> (i32, i32, i32, i32) {
    %c0_i32 = arith.constant 0 : i32
    %c0_i32_0 = arith.constant 0 : i32
    %c0_i32_1 = arith.constant 0 : i32
    return %arg0, %arg1, %c0_i32, %c0_i32_0 : i32, i32, i32, i32
  }
  func.func @transform_4(%arg0: i32, %arg1: i32) -> (i32, i32, i32, i32) {
    %c0_i32 = arith.constant 0 : i32
    %c0_i32_0 = arith.constant 0 : i32
    %c0_i32_1 = arith.constant 0 : i32
    return %arg0, %arg1, %c0_i32, %c0_i32_0 : i32, i32, i32, i32
  }
}

module attributes {stable_mosaic.version = 11 : i64} {
  func.func @_conv_bn_relu_pool_kernel(%arg0: i32, %arg1: i32, %arg2: memref<1x18x18x16xbf16, #tpu.memory_space<vmem>>, %arg3: memref<3x3x16x128xbf16, #tpu.memory_space<vmem>>, %arg4: memref<1x128xf32, #tpu.memory_space<vmem>>, %arg5: memref<1x128xf32, #tpu.memory_space<vmem>>, %arg6: memref<1x8x8x128xf32, #tpu.memory_space<vmem>>) attributes {dimension_semantics = [#tpu.dimension_semantics<parallel>, #tpu.dimension_semantics<parallel>], iteration_bounds = array<i64: 2, 1>, scalar_prefetch = 0 : i64, scratch_operands = 0 : i64, tpu.core_type = #tpu.core_type<tc>, window_params = [{transform_indices = @transform_0, window_bounds = array<i64: 1, 18, 18, 16>}, {pipeline_mode = #tpu.pipeline_mode<synchronous>, transform_indices = @transform_1, window_bounds = array<i64: 3, 3, 16, 128>}, {pipeline_mode = #tpu.pipeline_mode<synchronous>, transform_indices = @transform_2, window_bounds = array<i64: 1, 128>}, {pipeline_mode = #tpu.pipeline_mode<synchronous>, transform_indices = @transform_3, window_bounds = array<i64: 1, 128>}, {transform_indices = @transform_4, window_bounds = array<i64: 1, 8, 8, 128>}]} {
    %c16_i32 = arith.constant 16 : i32
    %0 = arith.muli %arg1, %c16_i32 : i32
    %1 = tpu.assume_multiple %0, 16 : i32
    %cst = arith.constant 0.000000e+00 : f32
    %2 = vector.broadcast %cst : f32 to vector<256x128xf32>
    %c0_i32 = arith.constant 0 : i32
    %3 = arith.addi %1, %c0_i32 : i32
    %c0 = arith.constant 0 : index
    %4 = arith.index_cast %3 : i32 to index
    %c0_0 = arith.constant 0 : index
    %c0_1 = arith.constant 0 : index
    %5 = vector.load %arg2[%c0, %4, %c0_0, %c0_1] : memref<1x18x18x16xbf16, #tpu.memory_space<vmem>>, vector<1x16x16x16xbf16>
    %6 = vector.shape_cast %5 : vector<1x16x16x16xbf16> to vector<16x16x16xbf16>
    %7 = vector.shape_cast %6 : vector<16x16x16xbf16> to vector<256x16xbf16>
    %c0_2 = arith.constant 0 : index
    %c0_3 = arith.constant 0 : index
    %c0_4 = arith.constant 0 : index
    %c0_5 = arith.constant 0 : index
    %8 = vector.load %arg3[%c0_2, %c0_3, %c0_4, %c0_5] : memref<3x3x16x128xbf16, #tpu.memory_space<vmem>>, vector<1x1x16x128xbf16>
    %9 = vector.shape_cast %8 : vector<1x1x16x128xbf16> to vector<16x128xbf16>
    %cst_6 = arith.constant dense<0.000000e+00> : vector<256x128xf32>
    %10 = tpu.matmul %7, %9, %cst_6 {dimension_numbers = #tpu.dot_dimension_numbers<[1], [0], [0], [1], [0, 0, 1, 1], [], []>} : vector<256x16xbf16>, vector<16x128xbf16>, vector<256x128xf32> -> vector<256x128xf32>
    %11 = arith.addf %2, %10 : vector<256x128xf32>
    %c0_i32_7 = arith.constant 0 : i32
    %12 = arith.addi %1, %c0_i32_7 : i32
    %c0_8 = arith.constant 0 : index
    %13 = arith.index_cast %12 : i32 to index
    %c1 = arith.constant 1 : index
    %c0_9 = arith.constant 0 : index
    %14 = vector.load %arg2[%c0_8, %13, %c1, %c0_9] : memref<1x18x18x16xbf16, #tpu.memory_space<vmem>>, vector<1x16x16x16xbf16>
    %15 = vector.shape_cast %14 : vector<1x16x16x16xbf16> to vector<16x16x16xbf16>
    %16 = vector.shape_cast %15 : vector<16x16x16xbf16> to vector<256x16xbf16>
    %c0_10 = arith.constant 0 : index
    %c1_11 = arith.constant 1 : index
    %c0_12 = arith.constant 0 : index
    %c0_13 = arith.constant 0 : index
    %17 = vector.load %arg3[%c0_10, %c1_11, %c0_12, %c0_13] : memref<3x3x16x128xbf16, #tpu.memory_space<vmem>>, vector<1x1x16x128xbf16>
    %18 = vector.shape_cast %17 : vector<1x1x16x128xbf16> to vector<16x128xbf16>
    %cst_14 = arith.constant dense<0.000000e+00> : vector<256x128xf32>
    %19 = tpu.matmul %16, %18, %cst_14 {dimension_numbers = #tpu.dot_dimension_numbers<[1], [0], [0], [1], [0, 0, 1, 1], [], []>} : vector<256x16xbf16>, vector<16x128xbf16>, vector<256x128xf32> -> vector<256x128xf32>
    %20 = arith.addf %11, %19 : vector<256x128xf32>
    %c0_i32_15 = arith.constant 0 : i32
    %21 = arith.addi %1, %c0_i32_15 : i32
    %c0_16 = arith.constant 0 : index
    %22 = arith.index_cast %21 : i32 to index
    %c2 = arith.constant 2 : index
    %c0_17 = arith.constant 0 : index
    %23 = vector.load %arg2[%c0_16, %22, %c2, %c0_17] : memref<1x18x18x16xbf16, #tpu.memory_space<vmem>>, vector<1x16x16x16xbf16>
    %24 = vector.shape_cast %23 : vector<1x16x16x16xbf16> to vector<16x16x16xbf16>
    %25 = vector.shape_cast %24 : vector<16x16x16xbf16> to vector<256x16xbf16>
    %c0_18 = arith.constant 0 : index
    %c2_19 = arith.constant 2 : index
    %c0_20 = arith.constant 0 : index
    %c0_21 = arith.constant 0 : index
    %26 = vector.load %arg3[%c0_18, %c2_19, %c0_20, %c0_21] : memref<3x3x16x128xbf16, #tpu.memory_space<vmem>>, vector<1x1x16x128xbf16>
    %27 = vector.shape_cast %26 : vector<1x1x16x128xbf16> to vector<16x128xbf16>
    %cst_22 = arith.constant dense<0.000000e+00> : vector<256x128xf32>
    %28 = tpu.matmul %25, %27, %cst_22 {dimension_numbers = #tpu.dot_dimension_numbers<[1], [0], [0], [1], [0, 0, 1, 1], [], []>} : vector<256x16xbf16>, vector<16x128xbf16>, vector<256x128xf32> -> vector<256x128xf32>
    %29 = arith.addf %20, %28 : vector<256x128xf32>
    %c1_i32 = arith.constant 1 : i32
    %30 = arith.addi %1, %c1_i32 : i32
    %c0_23 = arith.constant 0 : index
    %31 = arith.index_cast %30 : i32 to index
    %c0_24 = arith.constant 0 : index
    %c0_25 = arith.constant 0 : index
    %32 = vector.load %arg2[%c0_23, %31, %c0_24, %c0_25] : memref<1x18x18x16xbf16, #tpu.memory_space<vmem>>, vector<1x16x16x16xbf16>
    %33 = vector.shape_cast %32 : vector<1x16x16x16xbf16> to vector<16x16x16xbf16>
    %34 = vector.shape_cast %33 : vector<16x16x16xbf16> to vector<256x16xbf16>
    %c1_26 = arith.constant 1 : index
    %c0_27 = arith.constant 0 : index
    %c0_28 = arith.constant 0 : index
    %c0_29 = arith.constant 0 : index
    %35 = vector.load %arg3[%c1_26, %c0_27, %c0_28, %c0_29] : memref<3x3x16x128xbf16, #tpu.memory_space<vmem>>, vector<1x1x16x128xbf16>
    %36 = vector.shape_cast %35 : vector<1x1x16x128xbf16> to vector<16x128xbf16>
    %cst_30 = arith.constant dense<0.000000e+00> : vector<256x128xf32>
    %37 = tpu.matmul %34, %36, %cst_30 {dimension_numbers = #tpu.dot_dimension_numbers<[1], [0], [0], [1], [0, 0, 1, 1], [], []>} : vector<256x16xbf16>, vector<16x128xbf16>, vector<256x128xf32> -> vector<256x128xf32>
    %38 = arith.addf %29, %37 : vector<256x128xf32>
    %c1_i32_31 = arith.constant 1 : i32
    %39 = arith.addi %1, %c1_i32_31 : i32
    %c0_32 = arith.constant 0 : index
    %40 = arith.index_cast %39 : i32 to index
    %c1_33 = arith.constant 1 : index
    %c0_34 = arith.constant 0 : index
    %41 = vector.load %arg2[%c0_32, %40, %c1_33, %c0_34] : memref<1x18x18x16xbf16, #tpu.memory_space<vmem>>, vector<1x16x16x16xbf16>
    %42 = vector.shape_cast %41 : vector<1x16x16x16xbf16> to vector<16x16x16xbf16>
    %43 = vector.shape_cast %42 : vector<16x16x16xbf16> to vector<256x16xbf16>
    %c1_35 = arith.constant 1 : index
    %c1_36 = arith.constant 1 : index
    %c0_37 = arith.constant 0 : index
    %c0_38 = arith.constant 0 : index
    %44 = vector.load %arg3[%c1_35, %c1_36, %c0_37, %c0_38] : memref<3x3x16x128xbf16, #tpu.memory_space<vmem>>, vector<1x1x16x128xbf16>
    %45 = vector.shape_cast %44 : vector<1x1x16x128xbf16> to vector<16x128xbf16>
    %cst_39 = arith.constant dense<0.000000e+00> : vector<256x128xf32>
    %46 = tpu.matmul %43, %45, %cst_39 {dimension_numbers = #tpu.dot_dimension_numbers<[1], [0], [0], [1], [0, 0, 1, 1], [], []>} : vector<256x16xbf16>, vector<16x128xbf16>, vector<256x128xf32> -> vector<256x128xf32>
    %47 = arith.addf %38, %46 : vector<256x128xf32>
    %c1_i32_40 = arith.constant 1 : i32
    %48 = arith.addi %1, %c1_i32_40 : i32
    %c0_41 = arith.constant 0 : index
    %49 = arith.index_cast %48 : i32 to index
    %c2_42 = arith.constant 2 : index
    %c0_43 = arith.constant 0 : index
    %50 = vector.load %arg2[%c0_41, %49, %c2_42, %c0_43] : memref<1x18x18x16xbf16, #tpu.memory_space<vmem>>, vector<1x16x16x16xbf16>
    %51 = vector.shape_cast %50 : vector<1x16x16x16xbf16> to vector<16x16x16xbf16>
    %52 = vector.shape_cast %51 : vector<16x16x16xbf16> to vector<256x16xbf16>
    %c1_44 = arith.constant 1 : index
    %c2_45 = arith.constant 2 : index
    %c0_46 = arith.constant 0 : index
    %c0_47 = arith.constant 0 : index
    %53 = vector.load %arg3[%c1_44, %c2_45, %c0_46, %c0_47] : memref<3x3x16x128xbf16, #tpu.memory_space<vmem>>, vector<1x1x16x128xbf16>
    %54 = vector.shape_cast %53 : vector<1x1x16x128xbf16> to vector<16x128xbf16>
    %cst_48 = arith.constant dense<0.000000e+00> : vector<256x128xf32>
    %55 = tpu.matmul %52, %54, %cst_48 {dimension_numbers = #tpu.dot_dimension_numbers<[1], [0], [0], [1], [0, 0, 1, 1], [], []>} : vector<256x16xbf16>, vector<16x128xbf16>, vector<256x128xf32> -> vector<256x128xf32>
    %56 = arith.addf %47, %55 : vector<256x128xf32>
    %c2_i32 = arith.constant 2 : i32
    %57 = arith.addi %1, %c2_i32 : i32
    %c0_49 = arith.constant 0 : index
    %58 = arith.index_cast %57 : i32 to index
    %c0_50 = arith.constant 0 : index
    %c0_51 = arith.constant 0 : index
    %59 = vector.load %arg2[%c0_49, %58, %c0_50, %c0_51] : memref<1x18x18x16xbf16, #tpu.memory_space<vmem>>, vector<1x16x16x16xbf16>
    %60 = vector.shape_cast %59 : vector<1x16x16x16xbf16> to vector<16x16x16xbf16>
    %61 = vector.shape_cast %60 : vector<16x16x16xbf16> to vector<256x16xbf16>
    %c2_52 = arith.constant 2 : index
    %c0_53 = arith.constant 0 : index
    %c0_54 = arith.constant 0 : index
    %c0_55 = arith.constant 0 : index
    %62 = vector.load %arg3[%c2_52, %c0_53, %c0_54, %c0_55] : memref<3x3x16x128xbf16, #tpu.memory_space<vmem>>, vector<1x1x16x128xbf16>
    %63 = vector.shape_cast %62 : vector<1x1x16x128xbf16> to vector<16x128xbf16>
    %cst_56 = arith.constant dense<0.000000e+00> : vector<256x128xf32>
    %64 = tpu.matmul %61, %63, %cst_56 {dimension_numbers = #tpu.dot_dimension_numbers<[1], [0], [0], [1], [0, 0, 1, 1], [], []>} : vector<256x16xbf16>, vector<16x128xbf16>, vector<256x128xf32> -> vector<256x128xf32>
    %65 = arith.addf %56, %64 : vector<256x128xf32>
    %c2_i32_57 = arith.constant 2 : i32
    %66 = arith.addi %1, %c2_i32_57 : i32
    %c0_58 = arith.constant 0 : index
    %67 = arith.index_cast %66 : i32 to index
    %c1_59 = arith.constant 1 : index
    %c0_60 = arith.constant 0 : index
    %68 = vector.load %arg2[%c0_58, %67, %c1_59, %c0_60] : memref<1x18x18x16xbf16, #tpu.memory_space<vmem>>, vector<1x16x16x16xbf16>
    %69 = vector.shape_cast %68 : vector<1x16x16x16xbf16> to vector<16x16x16xbf16>
    %70 = vector.shape_cast %69 : vector<16x16x16xbf16> to vector<256x16xbf16>
    %c2_61 = arith.constant 2 : index
    %c1_62 = arith.constant 1 : index
    %c0_63 = arith.constant 0 : index
    %c0_64 = arith.constant 0 : index
    %71 = vector.load %arg3[%c2_61, %c1_62, %c0_63, %c0_64] : memref<3x3x16x128xbf16, #tpu.memory_space<vmem>>, vector<1x1x16x128xbf16>
    %72 = vector.shape_cast %71 : vector<1x1x16x128xbf16> to vector<16x128xbf16>
    %cst_65 = arith.constant dense<0.000000e+00> : vector<256x128xf32>
    %73 = tpu.matmul %70, %72, %cst_65 {dimension_numbers = #tpu.dot_dimension_numbers<[1], [0], [0], [1], [0, 0, 1, 1], [], []>} : vector<256x16xbf16>, vector<16x128xbf16>, vector<256x128xf32> -> vector<256x128xf32>
    %74 = arith.addf %65, %73 : vector<256x128xf32>
    %c2_i32_66 = arith.constant 2 : i32
    %75 = arith.addi %1, %c2_i32_66 : i32
    %c0_67 = arith.constant 0 : index
    %76 = arith.index_cast %75 : i32 to index
    %c2_68 = arith.constant 2 : index
    %c0_69 = arith.constant 0 : index
    %77 = vector.load %arg2[%c0_67, %76, %c2_68, %c0_69] : memref<1x18x18x16xbf16, #tpu.memory_space<vmem>>, vector<1x16x16x16xbf16>
    %78 = vector.shape_cast %77 : vector<1x16x16x16xbf16> to vector<16x16x16xbf16>
    %79 = vector.shape_cast %78 : vector<16x16x16xbf16> to vector<256x16xbf16>
    %c2_70 = arith.constant 2 : index
    %c2_71 = arith.constant 2 : index
    %c0_72 = arith.constant 0 : index
    %c0_73 = arith.constant 0 : index
    %80 = vector.load %arg3[%c2_70, %c2_71, %c0_72, %c0_73] : memref<3x3x16x128xbf16, #tpu.memory_space<vmem>>, vector<1x1x16x128xbf16>
    %81 = vector.shape_cast %80 : vector<1x1x16x128xbf16> to vector<16x128xbf16>
    %cst_74 = arith.constant dense<0.000000e+00> : vector<256x128xf32>
    %82 = tpu.matmul %79, %81, %cst_74 {dimension_numbers = #tpu.dot_dimension_numbers<[1], [0], [0], [1], [0, 0, 1, 1], [], []>} : vector<256x16xbf16>, vector<16x128xbf16>, vector<256x128xf32> -> vector<256x128xf32>
    %83 = arith.addf %74, %82 : vector<256x128xf32>
    %c0_75 = arith.constant 0 : index
    %c0_76 = arith.constant 0 : index
    %84 = vector.load %arg4[%c0_75, %c0_76] : memref<1x128xf32, #tpu.memory_space<vmem>>, vector<1x128xf32>
    %85 = vector.broadcast %84 : vector<1x128xf32> to vector<256x128xf32>
    %86 = arith.mulf %83, %85 : vector<256x128xf32>
    %c0_77 = arith.constant 0 : index
    %c0_78 = arith.constant 0 : index
    %87 = vector.load %arg5[%c0_77, %c0_78] : memref<1x128xf32, #tpu.memory_space<vmem>>, vector<1x128xf32>
    %88 = vector.broadcast %87 : vector<1x128xf32> to vector<256x128xf32>
    %89 = arith.addf %86, %88 : vector<256x128xf32>
    %cst_79 = arith.constant 0.000000e+00 : f32
    %90 = vector.broadcast %cst_79 : f32 to vector<256x128xf32>
    %91 = arith.maximumf %89, %90 : vector<256x128xf32>
    %92 = vector.shape_cast %91 : vector<256x128xf32> to vector<8x2x16x128xf32>
    %93 = vector.extract_strided_slice %92 {offsets = [0, 0, 0, 0], sizes = [8, 1, 16, 128], strides = [1, 1, 1, 1]} : vector<8x2x16x128xf32> to vector<8x1x16x128xf32>
    %94 = vector.shape_cast %93 : vector<8x1x16x128xf32> to vector<8x16x128xf32>
    %95 = vector.extract_strided_slice %92 {offsets = [0, 1, 0, 0], sizes = [8, 1, 16, 128], strides = [1, 1, 1, 1]} : vector<8x2x16x128xf32> to vector<8x1x16x128xf32>
    %96 = vector.shape_cast %95 : vector<8x1x16x128xf32> to vector<8x16x128xf32>
    %97 = arith.maximumf %94, %96 : vector<8x16x128xf32>
    %98 = vector.shape_cast %97 : vector<8x16x128xf32> to vector<8x8x2x128xf32>
    %99 = vector.extract_strided_slice %98 {offsets = [0, 0, 0, 0], sizes = [8, 8, 1, 128], strides = [1, 1, 1, 1]} : vector<8x8x2x128xf32> to vector<8x8x1x128xf32>
    %100 = vector.shape_cast %99 : vector<8x8x1x128xf32> to vector<8x8x128xf32>
    %101 = vector.extract_strided_slice %98 {offsets = [0, 0, 1, 0], sizes = [8, 8, 1, 128], strides = [1, 1, 1, 1]} : vector<8x8x2x128xf32> to vector<8x8x1x128xf32>
    %102 = vector.shape_cast %101 : vector<8x8x1x128xf32> to vector<8x8x128xf32>
    %103 = arith.maximumf %100, %102 : vector<8x8x128xf32>
    %c0_80 = arith.constant 0 : index
    %c0_81 = arith.constant 0 : index
    %c0_82 = arith.constant 0 : index
    %c0_83 = arith.constant 0 : index
    %104 = vector.load %arg6[%c0_80, %c0_81, %c0_82, %c0_83] : memref<1x8x8x128xf32, #tpu.memory_space<vmem>>, vector<1x8x8x128xf32>
    %105 = vector.shape_cast %104 : vector<1x8x8x128xf32> to vector<8x8x128xf32>
    %106 = vector.shape_cast %103 : vector<8x8x128xf32> to vector<1x8x8x128xf32>
    tpu.vector_store %arg6[%c0_80, %c0_81, %c0_82, %c0_83], %106 {strides = array<i32>} : memref<1x8x8x128xf32, #tpu.memory_space<vmem>>, vector<1x8x8x128xf32>,
    return
  }
  func.func @transform_0(%arg0: i32, %arg1: i32) -> (i32, i32, i32, i32) {
    %c0_i32 = arith.constant 0 : i32
    %c0_i32_0 = arith.constant 0 : i32
    %c0_i32_1 = arith.constant 0 : i32
    %c0_i32_2 = arith.constant 0 : i32
    return %arg0, %c0_i32, %c0_i32_0, %c0_i32_1 : i32, i32, i32, i32
  }
  func.func @transform_1(%arg0: i32, %arg1: i32) -> (i32, i32, i32, i32) {
    %c0_i32 = arith.constant 0 : i32
    %c0_i32_0 = arith.constant 0 : i32
    %c0_i32_1 = arith.constant 0 : i32
    %c0_i32_2 = arith.constant 0 : i32
    %c0_i32_3 = arith.constant 0 : i32
    return %c0_i32, %c0_i32_0, %c0_i32_1, %c0_i32_2 : i32, i32, i32, i32
  }
  func.func @transform_2(%arg0: i32, %arg1: i32) -> (i32, i32) {
    %c0_i32 = arith.constant 0 : i32
    %c0_i32_0 = arith.constant 0 : i32
    %c0_i32_1 = arith.constant 0 : i32
    return %c0_i32, %c0_i32_0 : i32, i32
  }
  func.func @transform_3(%arg0: i32, %arg1: i32) -> (i32, i32) {
    %c0_i32 = arith.constant 0 : i32
    %c0_i32_0 = arith.constant 0 : i32
    %c0_i32_1 = arith.constant 0 : i32
    return %c0_i32, %c0_i32_0 : i32, i32
  }
  func.func @transform_4(%arg0: i32, %arg1: i32) -> (i32, i32, i32, i32) {
    %c0_i32 = arith.constant 0 : i32
    %c0_i32_0 = arith.constant 0 : i32
    %c0_i32_1 = arith.constant 0 : i32
    return %arg0, %arg1, %c0_i32, %c0_i32_0 : i32, i32, i32, i32
  }
}

</mosaic_0001>

<llo_original>
// kernel: conv_block_forward.2
$region0: #{conv_block_forward.2}
  #allocation0 [shape = 'u32[]', space=smem, size = 0x4, offset = 0x4, fixed_abs, tag = 'smem constant byte address 0x4 - core index']
  #allocation1 [shape = 'u32[144,128]{1,0:T(1,128)}', space=vmem, size = 0x12000, scoped, tag = 'internal scratch']
  %s0 = inlined_call_operand.vmem [shape: bf16[2,18,18,16], index: 0, kind: input, shape index: {}]
  %s1 = inlined_call_operand.vmem [shape: bf16[3,3,16,128], index: 1, kind: input, shape index: {}]
  %s2 = inlined_call_operand.vmem [shape: f32[1,256,1], index: 2, kind: input, shape index: {}]
  %s3 = inlined_call_operand.vmem [shape: f32[2,1,1,128], index: 3, kind: output, shape index: {0}]
  %s4 = inlined_call_operand.vmem [shape: f32[2,1,1,128], index: 4, kind: output, shape index: {1}]
  %5 = xla_tuple %s3, %s4
  %s6 = sld [smem:[#allocation0]]
  $region53: #{conv_block_forward.2} parent=0
    _
  %s8 = ssub.s32 1, %s6
  %s9 = scalar_select 0, %s8, %s6
  loop: start=0, step=1, limit=4
  $region2: #{conv_block_forward.2} parent=0 // loop_pre_header
    _
  $region3: #{conv_block_forward.2} parent=0 // loop_header
    %s11 = sphi 0, %s15
    %p12 = scmp.ge.s32.totalorder %s11, 4
    %s18 = sphi 0, %s30
    %s19 = sphi 0, %s26
    %s20 = sphi 0, %s18
    %s21 = sphi 0, %s19
    %s22 = sphi 0, %s20
    %s23 = sphi 0, %s21
    %s33 = sphi 0, %s35
    %s36 = sphi 0, %s33
    %s37 = sphi 0, %s36
    %s53 = sphi 0, %s37
    %s57 = sphi 0, %s57
    %s59 = sphi 0, %s57
    %s60 = sphi 0, %s59
    %s74 = sphi 0, %s60
    %s80 = sphi 0, %s82
    %s83 = sphi 0, %s80
    %s84 = sphi 0, %s83
    %s100 = sphi 0, %s84
    %s108 = sphi 0, %s110
    %s111 = sphi 0, %s108
    %s112 = sphi 0, %s111
    %s128 = sphi 0, %s112
    %s136 = sphi 0, %s138
    %s139 = sphi 0, %s136
    %s140 = sphi 0, %s139
    %s156 = sphi 0, %s140
  $region4: #{conv_block_forward.2} parent=0 // loop_header_branch
    %14 = sbr.rel (%p12) target = $region8
  $region5: #{conv_block_forward.2} parent=0 // loop_body
    %s16 = ssub.s32 %s11, 1
    %s17 = ssub.s32 %s11, 2
    %s24 = sadd.s32 1, %s19
    %p25 = scmp.ge.s32.totalorder %s24, 1
    %s26 = scalar_select %p25, 0, %s24
    %s27 = sadd.s32 1, %s18
    %s28 = scalar_select %p25, %s27, %s18
    %p29 = scmp.ge.s32.totalorder %s28, 2
    %s30 = scalar_select %p29, 0, %s28
    %s31 = ssub.s32 %s18, %s30
    %p32 = scmp.eq.s32.totalorder %s31, 0
    %s34 = sadd.s32 %s33, 1
    %s35 = scalar_select %p32, %s33, %s34
    %p38 = pneg %p32
    %p39 = scmp.eq.s32.totalorder %s11, 1
    %p40 = por %p38, %p39
    %p41 = scmp.ne.s32.totalorder %s33, %s36
    %p42 = scmp.eq.s32.totalorder %s11, 0
    %p43 = por %p41, %p42
    %p44 = scmp.ne.s32.totalorder %s33, %s36
    %p45 = scmp.eq.s32.totalorder %s16, 1
    %p46 = por %p44, %p45
    %p47 = scmp.ne.s32.totalorder %s36, %s37
    %p48 = scmp.eq.s32.totalorder %s16, 0
    %p49 = por %p47, %p48
    %p50 = scmp.ne.s32.totalorder %s36, %s37
    %p51 = scmp.eq.s32.totalorder %s17, 1
    %p52 = por %p50, %p51
    %p54 = scmp.ne.s32.totalorder %s37, %s53
    %p55 = scmp.eq.s32.totalorder %s17, 0
    %p56 = por %p54, %p55
    %s58 = sadd.s32 %s57, 1
    %p61 = scmp.eq.s32.totalorder %s11, 1
    %p62 = scmp.ne.s32.totalorder %s57, %s59
    %p63 = scmp.eq.s32.totalorder %s11, 0
    %p64 = por %p62, %p63
    %p65 = scmp.ne.s32.totalorder %s57, %s59
    %p66 = scmp.eq.s32.totalorder %s16, 1
    %p67 = por %p65, %p66
    %p68 = scmp.ne.s32.totalorder %s59, %s60
    %p69 = scmp.eq.s32.totalorder %s16, 0
    %p70 = por %p68, %p69
    %p71 = scmp.ne.s32.totalorder %s59, %s60
    %p72 = scmp.eq.s32.totalorder %s17, 1
    %p73 = por %p71, %p72
    %p75 = scmp.ne.s32.totalorder %s60, %s74
    %p76 = scmp.eq.s32.totalorder %s17, 0
    %p77 = por %p75, %p76
    %s78 = ssub.s32 %s19, %s26
    %p79 = scmp.eq.s32.totalorder %s78, 0
    %s81 = sadd.s32 %s80, 1
    %s82 = scalar_select %p79, %s80, %s81
    %p85 = pneg %p79
    %p86 = scmp.eq.s32.totalorder %s11, 1
    %p87 = por %p85, %p86
    %p88 = scmp.ne.s32.totalorder %s80, %s83
    %p89 = scmp.eq.s32.totalorder %s11, 0
    %p90 = por %p88, %p89
    %p91 = scmp.ne.s32.totalorder %s80, %s83
    %p92 = scmp.eq.s32.totalorder %s16, 1
    %p93 = por %p91, %p92
    %p94 = scmp.ne.s32.totalorder %s83, %s84
    %p95 = scmp.eq.s32.totalorder %s16, 0
    %p96 = por %p94, %p95
    %p97 = scmp.ne.s32.totalorder %s83, %s84
    %p98 = scmp.eq.s32.totalorder %s17, 1
    %p99 = por %p97, %p98
    %p101 = scmp.ne.s32.totalorder %s84, %s100
    %p102 = scmp.eq.s32.totalorder %s17, 0
    %p103 = por %p101, %p102
    %s104 = ssub.s32 %s18, %s30
    %s105 = ssub.s32 %s19, %s26
    %s106 = sor.u32 %s104, %s105
    %p107 = scmp.eq.s32.totalorder %s106, 0
    %s109 = sadd.s32 %s108, 1
    %s110 = scalar_select %p107, %s108, %s109
    %p113 = pneg %p107
    %p114 = scmp.eq.s32.totalorder %s11, 1
    %p115 = por %p113, %p114
    %p116 = scmp.ne.s32.totalorder %s108, %s111
    %p117 = scmp.eq.s32.totalorder %s11, 0
    %p118 = por %p116, %p117
    %p119 = scmp.ne.s32.totalorder %s108, %s111
    %p120 = scmp.eq.s32.totalorder %s16, 1
    %p121 = por %p119, %p120
    %p122 = scmp.ne.s32.totalorder %s111, %s112
    %p123 = scmp.eq.s32.totalorder %s16, 0
    %p124 = por %p122, %p123
    %p125 = scmp.ne.s32.totalorder %s111, %s112
    %p126 = scmp.eq.s32.totalorder %s17, 1
    %p127 = por %p125, %p126
    %p129 = scmp.ne.s32.totalorder %s112, %s128
    %p130 = scmp.eq.s32.totalorder %s17, 0
    %p131 = por %p129, %p130
    %s132 = ssub.s32 %s18, %s30
    %s133 = ssub.s32 %s19, %s26
    %s134 = sor.u32 %s132, %s133
    %p135 = scmp.eq.s32.totalorder %s134, 0
    %s137 = sadd.s32 %s136, 1
    %s138 = scalar_select %p135, %s136, %s137
    %p141 = pneg %p135
    %p142 = scmp.eq.s32.totalorder %s11, 1
    %p143 = por %p141, %p142
    %p144 = scmp.ne.s32.totalorder %s136, %s139
    %p145 = scmp.eq.s32.totalorder %s11, 0
    %p146 = por %p144, %p145
    %p147 = scmp.ne.s32.totalorder %s136, %s139
    %p148 = scmp.eq.s32.totalorder %s16, 1
    %p149 = por %p147, %p148
    %p150 = scmp.ne.s32.totalorder %s139, %s140
    %p151 = scmp.eq.s32.totalorder %s16, 0
    %p152 = por %p150, %p151
    %p153 = scmp.ne.s32.totalorder %s139, %s140
    %p154 = scmp.eq.s32.totalorder %s17, 1
    %p155 = por %p153, %p154
    %p157 = scmp.ne.s32.totalorder %s140, %s156
    %p158 = scmp.eq.s32.totalorder %s17, 0
    %p159 = por %p157, %p158
    %p160 = scmp.le.s32.totalorder 1, %s11
    %p161 = scmp.lt.s32.totalorder %s11, 3
    %p162 = pnand %p160, %p161
    %p163 = pneg %p162
    // Predicated region
    $region9: #{conv_block_forward.2} parent=5 // pred_check
      _
    $region10: #{conv_block_forward.2} parent=5 // pred_check_branch
      %165 = sbr.rel (%p162) target = $region12
    $region11: #{conv_block_forward.2} parent=5 // pred_region
      %s166 = ssub.s32 %s11, 1
      // Predicated region
      $region13: #{conv_block_forward.2} parent=11 // pred_check
        %p167 = pneg %p70
      $region14: #{conv_block_forward.2} parent=11 // pred_check_branch
        %169 = sbr.rel (%p167) target = $region16
      $region15: #{conv_block_forward.2} parent=11 // pred_region
        _
      $region16: #{conv_block_forward.2} parent=11 // pred_fallthru
        _
      // Predicated region
      $region17: #{conv_block_forward.2} parent=11 // pred_check
        %p170 = pneg %p96
      $region18: #{conv_block_forward.2} parent=11 // pred_check_branch
        %172 = sbr.rel (%p170) target = $region20
      $region19: #{conv_block_forward.2} parent=11 // pred_region
        %p173 = scmp.lt.s32.totalorder %s21, 0
        %s174 = scalar_select %p173, %s21, 0
        %s175 = smul.addr %s174, 32
        %s176 = smul.addr %s175, 8
        %s177 = scalar_lea.vmem %s2, %s176
      $region20: #{conv_block_forward.2} parent=11 // pred_fallthru
        _
    $region12: #{conv_block_forward.2} parent=5 // pred_fallthru
      _
    %p178 = scmp.lt.s32.totalorder %s11, 2
    // Predicated region
    $region21: #{conv_block_forward.2} parent=5 // pred_check
      %p179 = pneg %p178
    $region22: #{conv_block_forward.2} parent=5 // pred_check_branch
      %181 = sbr.rel (%p179) target = $region24
    $region23: #{conv_block_forward.2} parent=5 // pred_region
      // Predicated region
      $region25: #{conv_block_forward.2} parent=23 // pred_check
        %p182 = pneg %p43
      $region26: #{conv_block_forward.2} parent=23 // pred_check_branch
        %184 = sbr.rel (%p182) target = $region28
      $region27: #{conv_block_forward.2} parent=23 // pred_region
        %p185 = scmp.lt.s32.totalorder %s18, 1
        %s186 = scalar_select %p185, %s18, 1
        %s187 = smul.addr %s186, 54
        %s188 = smul.addr %s187, 4
        %s189 = scalar_lea.vmem %s0, %s188
      $region28: #{conv_block_forward.2} parent=23 // pred_fallthru
        _
    $region24: #{conv_block_forward.2} parent=5 // pred_fallthru
      _
    %p190 = scmp.le.s32.totalorder 1, %s11
    %p191 = scmp.lt.s32.totalorder %s11, 3
    %p192 = pnand %p190, %p191
    %p193 = pneg %p192
    // Predicated region
    $region29: #{conv_block_forward.2} parent=5 // pred_check
      _
    $region30: #{conv_block_forward.2} parent=5 // pred_check_branch
      %195 = sbr.rel (%p192) target = $region32
    $region31: #{conv_block_forward.2} parent=5 // pred_region
      %s196 = ssub.s32 %s11, 1
      %p197 = scmp.lt.s32.totalorder %s20, 1
      %s198 = scalar_select %p197, %s20, 1
      %s199 = smul.addr %s198, 54
      %s200 = smul.addr %s199, 4
      %s201 = scalar_lea.vmem %s0, %s200
      %p202 = pneg %p49
      %p203 = pneg %p46
      %p204 = pneg %p70
      %p205 = pneg %p67
      %p206 = scmp.lt.s32.totalorder %s21, 0
      %s207 = scalar_select %p206, %s21, 0
      %s208 = smul.addr %s207, 32
      %s209 = smul.addr %s208, 8
      %s210 = scalar_lea.vmem %s2, %s209
      %p211 = pneg %p96
      %p212 = pneg %p93
      %p213 = pneg %p124
      %p214 = pneg %p121
      %p215 = scmp.lt.s32.totalorder %s20, 1
      %s216 = scalar_select %p215, %s20, 1
      %p217 = scmp.lt.s32.totalorder %s21, 0
      %s218 = scalar_select %p217, %s21, 0
      %s219 = sadd.s32 %s218, %s216
      %s220 = scalar_lea.vmem %s3, %s219
      %p221 = pneg %p152
      %p222 = pneg %p149
      %p223 = scmp.lt.s32.totalorder %s20, 1
      %s224 = scalar_select %p223, %s20, 1
      %p225 = scmp.lt.s32.totalorder %s21, 0
      %s226 = scalar_select %p225, %s21, 0
      %s227 = sadd.s32 %s226, %s224
      %s228 = scalar_lea.vmem %s4, %s227
      %p229 = scmp.lt.s32.totalorder %s20, 1
      %s230 = scalar_select %p229, %s20, 1
      %s231 = smul.addr %s230, 54
      %s232 = smul.addr %s231, 4
      %s233 = scalar_lea.vmem %s0, %s232
      %p234 = scmp.lt.s32.totalorder %s21, 0
      %s235 = scalar_select %p234, %s21, 0
      %s236 = smul.addr %s235, 32
      %s237 = smul.addr %s236, 8
      %s238 = scalar_lea.vmem %s2, %s237
      %p239 = scmp.lt.s32.totalorder %s20, 1
      %s240 = scalar_select %p239, %s20, 1
      %p241 = scmp.lt.s32.totalorder %s21, 0
      %s242 = scalar_select %p241, %s21, 0
      %s243 = sadd.s32 %s242, %s240
      %s244 = scalar_lea.vmem %s3, %s243
      %p245 = scmp.lt.s32.totalorder %s20, 1
      %s246 = scalar_select %p245, %s20, 1
      %p247 = scmp.lt.s32.totalorder %s21, 0
      %s248 = scalar_select %p247, %s21, 0
      %s249 = sadd.s32 %s248, %s246
      %s250 = scalar_lea.vmem %s4, %s249
      %s252 = smul.u32 %s21, 16
      %s253 = smul.u32 %s252, 3
      %s254 = smul.addr %s253, 4
      %s255 = scalar_lea.vmem %s233, %s254
      %v256 = vld [vmem:[%s255] sm:$0xf]
      %v257 = vld [vmem:[%s255 + $0x4] sm:$0xf]
      %v258 = vld [vmem:[%s255 + $0xc] sm:$0xf]
      %v259 = vld [vmem:[%s255 + $0x10] sm:$0xf]
      %v260 = vld [vmem:[%s255 + $0x18] sm:$0xf]
      %v261 = vld [vmem:[%s255 + $0x1c] sm:$0xf]
      %v262 = vld [vmem:[%s255 + $0x24] sm:$0xf]
      %v263 = vld [vmem:[%s255 + $0x28] sm:$0xf]
      %v264 = vld [vmem:[%s255 + $0x30] sm:$0xf]
      %v265 = vld [vmem:[%s255 + $0x34] sm:$0xf]
      %v266 = vld [vmem:[%s255 + $0x3c] sm:$0xf]
      %v267 = vld [vmem:[%s255 + $0x40] sm:$0xf]
      %v268 = vld [vmem:[%s255 + $0x48] sm:$0xf]
      %v269 = vld [vmem:[%s255 + $0x4c] sm:$0xf]
      %v270 = vld [vmem:[%s255 + $0x54] sm:$0xf]
      %v271 = vld [vmem:[%s255 + $0x58] sm:$0xf]
      %v272 = vld [vmem:[%s255 + $0x60] sm:$0xf]
      %v273 = vld [vmem:[%s255 + $0x64] sm:$0xf]
      %v274 = vld [vmem:[%s255 + $0x6c] sm:$0xf]
      %v275 = vld [vmem:[%s255 + $0x70] sm:$0xf]
      %v276 = vld [vmem:[%s255 + $0x78] sm:$0xf]
      %v277 = vld [vmem:[%s255 + $0x7c] sm:$0xf]
      %v278 = vld [vmem:[%s255 + $0x84] sm:$0xf]
      %v279 = vld [vmem:[%s255 + $0x88] sm:$0xf]
      %v280 = vld [vmem:[%s255 + $0x90] sm:$0xf]
      %v281 = vld [vmem:[%s255 + $0x94] sm:$0xf]
      %v282 = vld [vmem:[%s255 + $0x9c] sm:$0xf]
      %v283 = vld [vmem:[%s255 + $0xa0] sm:$0xf]
      %v284 = vld [vmem:[%s255 + $0xa8] sm:$0xf]
      %v285 = vld [vmem:[%s255 + $0xac] sm:$0xf]
      %v286 = vld [vmem:[%s255 + $0xb4] sm:$0xf]
      %v287 = vld [vmem:[%s255 + $0xb8] sm:$0xf]
      %v288 = vld [vmem:[%s1] sm:$0xf]
      %v289 = vld [vmem:[%s1 + $0x4] sm:$0xf]
      %v290 = vld [vmem:[%s255 + $0x8] sm:$0x1]
      %v291 = vld [vmem:[%s255 + $0x14] sm:$0x1]
      %v292 = vld [vmem:[%s255 + $0x20] sm:$0x1]
      %v293 = vld [vmem:[%s255 + $0x2c] sm:$0x1]
      %v294 = vld [vmem:[%s255 + $0x38] sm:$0x1]
      %v295 = vld [vmem:[%s255 + $0x44] sm:$0x1]
      %v296 = vld [vmem:[%s255 + $0x50] sm:$0x1]
      %v297 = vld [vmem:[%s255 + $0x5c] sm:$0x1]
      %v298 = vld [vmem:[%s255 + $0x68] sm:$0x1]
      %v299 = vld [vmem:[%s255 + $0x74] sm:$0x1]
      %v300 = vld [vmem:[%s255 + $0x80] sm:$0x1]
      %v301 = vld [vmem:[%s255 + $0x8c] sm:$0x1]
      %v302 = vld [vmem:[%s255 + $0x98] sm:$0x1]
      %v303 = vld [vmem:[%s255 + $0xa4] sm:$0x1]
      %v304 = vld [vmem:[%s255 + $0xb0] sm:$0x1]
      %v305 = vld [vmem:[%s255 + $0xbc] sm:$0x1]
      %vm306 = vsmask.f32 3328
      %vm307 = vsmask.f32 7440
      %vm308 = vmor %vm306, %vm307
      %v310 = vshrl.u32 %v256, 16
      %v312 = vrot.slane %v310, 4
      %v313 = vshll.u32 %v256, 16
      %v315 = vrot.slane %v313, 5
      %v316 = vor.u32 %v312, %v315
      %v317 = vrot.slane %v316, 4
      %v319 = vshll.u32 %v257, 16
      %v321 = vrot.slane %v319, 5
      %v322 = vsel %vm308, %v317, %v321
      %v323 = vshrl.u32 %v257, 16
      %v325 = vrot.slane %v323, 4
      %v326 = vor.u32 %v325, %v321
      %v327 = vrot.slane %v326, 4
      %v329 = vshll.u32 %v290, 16
      %v331 = vrot.slane %v329, 5
      %v332 = vsel %vm308, %v327, %v331
      %v334 = vshrl.u32 %v258, 16
      %v336 = vrot.slane %v334, 4
      %v337 = vshll.u32 %v258, 16
      %v339 = vrot.slane %v337, 5
      %v340 = vor.u32 %v336, %v339
      %v341 = vrot.slane %v340, 4
      %v343 = vshll.u32 %v259, 16
      %v345 = vrot.slane %v343, 5
      %v346 = vsel %vm308, %v341, %v345
      %v347 = vshrl.u32 %v259, 16
      %v349 = vrot.slane %v347, 4
      %v350 = vor.u32 %v349, %v345
      %v351 = vrot.slane %v350, 4
      %v353 = vshll.u32 %v291, 16
      %v355 = vrot.slane %v353, 5
      %v356 = vsel %vm308, %v351, %v355
      %v358 = vshrl.u32 %v260, 16
      %v360 = vrot.slane %v358, 4
      %v361 = vshll.u32 %v260, 16
      %v363 = vrot.slane %v361, 5
      %v364 = vor.u32 %v360, %v363
      %v365 = vrot.slane %v364, 4
      %v367 = vshll.u32 %v261, 16
      %v369 = vrot.slane %v367, 5
      %v370 = vsel %vm308, %v365, %v369
      %v371 = vshrl.u32 %v261, 16
      %v373 = vrot.slane %v371, 4
      %v374 = vor.u32 %v373, %v369
      %v375 = vrot.slane %v374, 4
      %v377 = vshll.u32 %v292, 16
      %v379 = vrot.slane %v377, 5
      %v380 = vsel %vm308, %v375, %v379
      %v382 = vshrl.u32 %v262, 16
      %v384 = vrot.slane %v382, 4
      %v385 = vshll.u32 %v262, 16
      %v387 = vrot.slane %v385, 5
      %v388 = vor.u32 %v384, %v387
      %v389 = vrot.slane %v388, 4
      %v391 = vshll.u32 %v263, 16
      %v393 = vrot.slane %v391, 5
      %v394 = vsel %vm308, %v389, %v393
      %v395 = vshrl.u32 %v263, 16
      %v397 = vrot.slane %v395, 4
      %v398 = vor.u32 %v397, %v393
      %v399 = vrot.slane %v398, 4
      %v401 = vshll.u32 %v293, 16
      %v403 = vrot.slane %v401, 5
      %v404 = vsel %vm308, %v399, %v403
      %v406 = vshrl.u32 %v264, 16
      %v408 = vrot.slane %v406, 4
      %v409 = vshll.u32 %v264, 16
      %v411 = vrot.slane %v409, 5
      %v412 = vor.u32 %v408, %v411
      %v413 = vrot.slane %v412, 4
      %v415 = vshll.u32 %v265, 16
      %v417 = vrot.slane %v415, 5
      %v418 = vsel %vm308, %v413, %v417
      %v419 = vshrl.u32 %v265, 16
      %v421 = vrot.slane %v419, 4
      %v422 = vor.u32 %v421, %v417
      %v423 = vrot.slane %v422, 4
      %v425 = vshll.u32 %v294, 16
      %v427 = vrot.slane %v425, 5
      %v428 = vsel %vm308, %v423, %v427
      %v430 = vshrl.u32 %v266, 16
      %v432 = vrot.slane %v430, 4
      %v433 = vshll.u32 %v266, 16
      %v435 = vrot.slane %v433, 5
      %v436 = vor.u32 %v432, %v435
      %v437 = vrot.slane %v436, 4
      %v439 = vshll.u32 %v267, 16
      %v441 = vrot.slane %v439, 5
      %v442 = vsel %vm308, %v437, %v441
      %v443 = vshrl.u32 %v267, 16
      %v445 = vrot.slane %v443, 4
      %v446 = vor.u32 %v445, %v441
      %v447 = vrot.slane %v446, 4
      %v449 = vshll.u32 %v295, 16
      %v451 = vrot.slane %v449, 5
      %v452 = vsel %vm308, %v447, %v451
      %v454 = vshrl.u32 %v268, 16
      %v456 = vrot.slane %v454, 4
      %v457 = vshll.u32 %v268, 16
      %v459 = vrot.slane %v457, 5
      %v460 = vor.u32 %v456, %v459
      %v461 = vrot.slane %v460, 4
      %v463 = vshll.u32 %v269, 16
      %v465 = vrot.slane %v463, 5
      %v466 = vsel %vm308, %v461, %v465
      %v467 = vshrl.u32 %v269, 16
      %v469 = vrot.slane %v467, 4
      %v470 = vor.u32 %v469, %v465
      %v471 = vrot.slane %v470, 4
      %v473 = vshll.u32 %v296, 16
      %v475 = vrot.slane %v473, 5
      %v476 = vsel %vm308, %v471, %v475
      %v478 = vshrl.u32 %v270, 16
      %v480 = vrot.slane %v478, 4
      %v481 = vshll.u32 %v270, 16
      %v483 = vrot.slane %v481, 5
      %v484 = vor.u32 %v480, %v483
      %v485 = vrot.slane %v484, 4
      %v487 = vshll.u32 %v271, 16
      %v489 = vrot.slane %v487, 5
      %v490 = vsel %vm308, %v485, %v489
      %v491 = vshrl.u32 %v271, 16
      %v493 = vrot.slane %v491, 4
      %v494 = vor.u32 %v493, %v489
      %v495 = vrot.slane %v494, 4
      %v497 = vshll.u32 %v297, 16
      %v499 = vrot.slane %v497, 5
      %v500 = vsel %vm308, %v495, %v499
      %v502 = vshrl.u32 %v272, 16
      %v504 = vrot.slane %v502, 4
      %v505 = vshll.u32 %v272, 16
      %v507 = vrot.slane %v505, 5
      %v508 = vor.u32 %v504, %v507
      %v509 = vrot.slane %v508, 4
      %v511 = vshll.u32 %v273, 16
      %v513 = vrot.slane %v511, 5
      %v514 = vsel %vm308, %v509, %v513
      %v515 = vshrl.u32 %v273, 16
      %v517 = vrot.slane %v515, 4
      %v518 = vor.u32 %v517, %v513
      %v519 = vrot.slane %v518, 4
      %v521 = vshll.u32 %v298, 16
      %v523 = vrot.slane %v521, 5
      %v524 = vsel %vm308, %v519, %v523
      %v526 = vshrl.u32 %v274, 16
      %v528 = vrot.slane %v526, 4
      %v529 = vshll.u32 %v274, 16
      %v531 = vrot.slane %v529, 5
      %v532 = vor.u32 %v528, %v531
      %v533 = vrot.slane %v532, 4
      %v535 = vshll.u32 %v275, 16
      %v537 = vrot.slane %v535, 5
      %v538 = vsel %vm308, %v533, %v537
      %v539 = vshrl.u32 %v275, 16
      %v541 = vrot.slane %v539, 4
      %v542 = vor.u32 %v541, %v537
      %v543 = vrot.slane %v542, 4
      %v545 = vshll.u32 %v299, 16
      %v547 = vrot.slane %v545, 5
      %v548 = vsel %vm308, %v543, %v547
      %v550 = vshrl.u32 %v276, 16
      %v552 = vrot.slane %v550, 4
      %v553 = vshll.u32 %v276, 16
      %v555 = vrot.slane %v553, 5
      %v556 = vor.u32 %v552, %v555
      %v557 = vrot.slane %v556, 4
      %v559 = vshll.u32 %v277, 16
      %v561 = vrot.slane %v559, 5
      %v562 = vsel %vm308, %v557, %v561
      %v563 = vshrl.u32 %v277, 16
      %v565 = vrot.slane %v563, 4
      %v566 = vor.u32 %v565, %v561
      %v567 = vrot.slane %v566, 4
      %v569 = vshll.u32 %v300, 16
      %v571 = vrot.slane %v569, 5
      %v572 = vsel %vm308, %v567, %v571
      %v574 = vshrl.u32 %v278, 16
      %v576 = vrot.slane %v574, 4
      %v577 = vshll.u32 %v278, 16
      %v579 = vrot.slane %v577, 5
      %v580 = vor.u32 %v576, %v579
      %v581 = vrot.slane %v580, 4
      %v583 = vshll.u32 %v279, 16
      %v585 = vrot.slane %v583, 5
      %v586 = vsel %vm308, %v581, %v585
      %v587 = vshrl.u32 %v279, 16
      %v589 = vrot.slane %v587, 4
      %v590 = vor.u32 %v589, %v585
      %v591 = vrot.slane %v590, 4
      %v593 = vshll.u32 %v301, 16
      %v595 = vrot.slane %v593, 5
      %v596 = vsel %vm308, %v591, %v595
      %v598 = vshrl.u32 %v280, 16
      %v600 = vrot.slane %v598, 4
      %v601 = vshll.u32 %v280, 16
      %v603 = vrot.slane %v601, 5
      %v604 = vor.u32 %v600, %v603
      %v605 = vrot.slane %v604, 4
      %v607 = vshll.u32 %v281, 16
      %v609 = vrot.slane %v607, 5
      %v610 = vsel %vm308, %v605, %v609
      %v611 = vshrl.u32 %v281, 16
      %v613 = vrot.slane %v611, 4
      %v614 = vor.u32 %v613, %v609
      %v615 = vrot.slane %v614, 4
      %v617 = vshll.u32 %v302, 16
      %v619 = vrot.slane %v617, 5
      %v620 = vsel %vm308, %v615, %v619
      %v622 = vshrl.u32 %v282, 16
      %v624 = vrot.slane %v622, 4
      %v625 = vshll.u32 %v282, 16
      %v627 = vrot.slane %v625, 5
      %v628 = vor.u32 %v624, %v627
      %v629 = vrot.slane %v628, 4
      %v631 = vshll.u32 %v283, 16
      %v633 = vrot.slane %v631, 5
      %v634 = vsel %vm308, %v629, %v633
      %v635 = vshrl.u32 %v283, 16
      %v637 = vrot.slane %v635, 4
      %v638 = vor.u32 %v637, %v633
      %v639 = vrot.slane %v638, 4
      %v641 = vshll.u32 %v303, 16
      %v643 = vrot.slane %v641, 5
      %v644 = vsel %vm308, %v639, %v643
      %v646 = vshrl.u32 %v284, 16
      %v648 = vrot.slane %v646, 4
      %v649 = vshll.u32 %v284, 16
      %v651 = vrot.slane %v649, 5
      %v652 = vor.u32 %v648, %v651
      %v653 = vrot.slane %v652, 4
      %v655 = vshll.u32 %v285, 16
      %v657 = vrot.slane %v655, 5
      %v658 = vsel %vm308, %v653, %v657
      %v659 = vshrl.u32 %v285, 16
      %v661 = vrot.slane %v659, 4
      %v662 = vor.u32 %v661, %v657
      %v663 = vrot.slane %v662, 4
      %v665 = vshll.u32 %v304, 16
      %v667 = vrot.slane %v665, 5
      %v668 = vsel %vm308, %v663, %v667
      %v670 = vshrl.u32 %v286, 16
      %v672 = vrot.slane %v670, 4
      %v673 = vshll.u32 %v286, 16
      %v675 = vrot.slane %v673, 5
      %v676 = vor.u32 %v672, %v675
      %v677 = vrot.slane %v676, 4
      %v679 = vshll.u32 %v287, 16
      %v681 = vrot.slane %v679, 5
      %v682 = vsel %vm308, %v677, %v681
      %v683 = vshrl.u32 %v287, 16
      %v685 = vrot.slane %v683, 4
      %v686 = vor.u32 %v685, %v681
      %v687 = vrot.slane %v686, 4
      %v689 = vshll.u32 %v305, 16
      %v691 = vrot.slane %v689, 5
      %v692 = vsel %vm308, %v687, %v691
      %s693 = scalar_lea.vmem %s1, 8
      %v694 = vld [vmem:[%s693] sm:$0xf]
      %v695 = vld [vmem:[%s693 + $0x4] sm:$0xf]
      %v696 = vunpack.c.l.b16 %v322
      %v697 = vunpack.c.l.b16 %v332
      %v698 = vunpack.c.l.b16 %v346
      %v699 = vunpack.c.l.b16 %v356
      %v700 = vunpack.c.l.b16 %v370
      %v701 = vunpack.c.l.b16 %v380
      %v702 = vunpack.c.l.b16 %v394
      %v703 = vunpack.c.l.b16 %v404
      %v704 = vunpack.c.l.b16 %v418
      %v705 = vunpack.c.l.b16 %v428
      %v706 = vunpack.c.l.b16 %v442
      %v707 = vunpack.c.l.b16 %v452
      %v708 = vunpack.c.l.b16 %v466
      %v709 = vunpack.c.l.b16 %v476
      %v710 = vunpack.c.l.b16 %v490
      %v711 = vunpack.c.l.b16 %v500
      %v712 = vunpack.c.l.b16 %v514
      %v713 = vunpack.c.l.b16 %v524
      %v714 = vunpack.c.l.b16 %v538
      %v715 = vunpack.c.l.b16 %v548
      %v716 = vunpack.c.l.b16 %v562
      %v717 = vunpack.c.l.b16 %v572
      %v718 = vunpack.c.l.b16 %v586
      %v719 = vunpack.c.l.b16 %v596
      %v720 = vunpack.c.l.b16 %v610
      %v721 = vunpack.c.l.b16 %v620
      %v722 = vunpack.c.l.b16 %v634
      %v723 = vunpack.c.l.b16 %v644
      %v724 = vunpack.c.l.b16 %v658
      %v725 = vunpack.c.l.b16 %v668
      %v726 = vunpack.c.l.b16 %v682
      %v727 = vunpack.c.l.b16 %v692
      %v728 = vpack.c.b16 %v697, %v696
      %v729 = vpack.c.b16 %v699, %v698
      %v730 = vpack.c.b16 %v701, %v700
      %v731 = vpack.c.b16 %v703, %v702
      %v732 = vpack.c.b16 %v705, %v704
      %v733 = vpack.c.b16 %v707, %v706
      %v734 = vpack.c.b16 %v709, %v708
      %v735 = vpack.c.b16 %v711, %v710
      %v736 = vpack.c.b16 %v713, %v712
      %v737 = vpack.c.b16 %v715, %v714
      %v738 = vpack.c.b16 %v717, %v716
      %v739 = vpack.c.b16 %v719, %v718
      %v740 = vpack.c.b16 %v721, %v720
      %v741 = vpack.c.b16 %v723, %v722
      %v742 = vpack.c.b16 %v725, %v724
      %v743 = vpack.c.b16 %v727, %v726
      %v746 = vunpack.c.l.b16 %v694
      %v747 = vunpack.c.l.b16 %v695
      %v748 = vpack.c.b16 %v747, %v746
      %vm750 = vcmask 130048
      %v752 = vsel %vm750, %v728, 0
      %v755 = vsel %vm750, %v729, 0
      %v758 = vsel %vm750, %v730, 0
      %v761 = vsel %vm750, %v731, 0
      %v764 = vsel %vm750, %v732, 0
      %v767 = vsel %vm750, %v733, 0
      %v770 = vsel %vm750, %v734, 0
      %v773 = vsel %vm750, %v735, 0
      %v776 = vsel %vm750, %v736, 0
      %v779 = vsel %vm750, %v737, 0
      %v782 = vsel %vm750, %v738, 0
      %v785 = vsel %vm750, %v739, 0
      %v788 = vsel %vm750, %v740, 0
      %v791 = vsel %vm750, %v741, 0
      %v794 = vsel %vm750, %v742, 0
      %v797 = vsel %vm750, %v743, 0
      %799 = vmatprep.subr.bf16.mxu0 0
      %800 = vmatpush1.bf16.msra.mxu0 %v748
      %801 = vmatprep.subr.bf16.mxu0 0
      %802 = vmatpush1.bf16.msra.mxu0 0
      %803 = vmatprep.subr.bf16.mxu0 0
      %804 = vmatpush1.bf16.msra.mxu0 0
      %805 = vmatprep.subr.bf16.mxu0 0
      %806 = vmatpush1.bf16.msra.mxu0 0
      %807 = vmatprep.subr.bf16.mxu0 0
      %808 = vmatpush1.bf16.msra.mxu0 0
      %809 = vmatprep.subr.bf16.mxu0 0
      %810 = vmatpush1.bf16.msra.mxu0 0
      %811 = vmatprep.subr.bf16.mxu0 0
      %812 = vmatpush1.bf16.msra.mxu0 0
      %813 = vmatprep.subr.bf16.mxu0 0
      %814 = vmatpush1.bf16.msra.mxu0 0
      %815 = vmatprep.subr.bf16.mxu0 0
      %816 = vmatpush1.bf16.msra.mxu0 0
      %817 = vmatprep.subr.bf16.mxu0 0
      %818 = vmatpush1.bf16.msra.mxu0 0
      %819 = vmatprep.subr.bf16.mxu0 0
      %820 = vmatpush1.bf16.msra.mxu0 0
      %821 = vmatprep.subr.bf16.mxu0 0
      %822 = vmatpush1.bf16.msra.mxu0 0
      %823 = vmatprep.subr.bf16.mxu0 0
      %824 = vmatpush1.bf16.msra.mxu0 0
      %825 = vmatprep.subr.bf16.mxu0 0
      %826 = vmatpush1.bf16.msra.mxu0 0
      %827 = vmatprep.subr.bf16.mxu0 0
      %828 = vmatpush1.bf16.msra.mxu0 0
      %829 = vmatprep.subr.bf16.mxu0 0
      %830 = vmatpush1.bf16.msra.mxu0 0
      %831 = vmatprep.mubr.bf16.mxu0 0
      %832 = vmatmul.mubr.bf16.gmra.mrb[0].mxu0 %v752
      %v833 = vpop.f32.mrb[0].mxu0
      %v834 = vadd.f32 0.0, %v833
      %v835 = vpop.f32.mrb[0].mxu0
      %v836 = vpop.f32.mrb[0].mxu0
      %v837 = vadd.f32 0.0, %v836
      %v838 = vpop.f32.mrb[0].mxu0
      %839 = vmatprep.mubr.bf16.mxu0 0
      %840 = vmatmul.mubr.bf16.gmra.mrb[0].mxu0 %v755
      %v841 = vpop.f32.mrb[0].mxu0
      %v842 = vadd.f32 0.0, %v841
      %v843 = vpop.f32.mrb[0].mxu0
      %v844 = vpop.f32.mrb[0].mxu0
      %v845 = vadd.f32 0.0, %v844
      %v846 = vpop.f32.mrb[0].mxu0
      %847 = vmatprep.mubr.bf16.mxu0 0
      %848 = vmatmul.mubr.bf16.gmra.mrb[0].mxu0 %v758
      %v849 = vpop.f32.mrb[0].mxu0
      %v850 = vadd.f32 0.0, %v849
      %v851 = vpop.f32.mrb[0].mxu0
      %v852 = vpop.f32.mrb[0].mxu0
      %v853 = vadd.f32 0.0, %v852
      %v854 = vpop.f32.mrb[0].mxu0
      %855 = vmatprep.mubr.bf16.mxu0 0
      %856 = vmatmul.mubr.bf16.gmra.mrb[0].mxu0 %v761
      %v857 = vpop.f32.mrb[0].mxu0
      %v858 = vadd.f32 0.0, %v857
      %v859 = vpop.f32.mrb[0].mxu0
      %v860 = vpop.f32.mrb[0].mxu0
      %v861 = vadd.f32 0.0, %v860
      %v862 = vpop.f32.mrb[0].mxu0
      %863 = vmatprep.mubr.bf16.mxu0 0
      %864 = vmatmul.mubr.bf16.gmra.mrb[0].mxu0 %v764
      %v865 = vpop.f32.mrb[0].mxu0
      %v866 = vadd.f32 0.0, %v865
      %v867 = vpop.f32.mrb[0].mxu0
      %v868 = vpop.f32.mrb[0].mxu0
      %v869 = vadd.f32 0.0, %v868
      %v870 = vpop.f32.mrb[0].mxu0
      %871 = vmatprep.mubr.bf16.mxu0 0
      %872 = vmatmul.mubr.bf16.gmra.mrb[0].mxu0 %v767
      %v873 = vpop.f32.mrb[0].mxu0
      %v874 = vadd.f32 0.0, %v873
      %v875 = vpop.f32.mrb[0].mxu0
      %v876 = vpop.f32.mrb[0].mxu0
      %v877 = vadd.f32 0.0, %v876
      %v878 = vpop.f32.mrb[0].mxu0
      %879 = vmatprep.mubr.bf16.mxu0 0
      %880 = vmatmul.mubr.bf16.gmra.mrb[0].mxu0 %v770
      %v881 = vpop.f32.mrb[0].mxu0
      %v882 = vadd.f32 0.0, %v881
      %v883 = vpop.f32.mrb[0].mxu0
      %v884 = vpop.f32.mrb[0].mxu0
      %v885 = vadd.f32 0.0, %v884
      %v886 = vpop.f32.mrb[0].mxu0
      %887 = vmatprep.mubr.bf16.mxu0 0
      %888 = vmatmul.mubr.bf16.gmra.mrb[0].mxu0 %v773
      %v889 = vpop.f32.mrb[0].mxu0
      %v890 = vadd.f32 0.0, %v889
      %v891 = vpop.f32.mrb[0].mxu0
      %v892 = vpop.f32.mrb[0].mxu0
      %v893 = vadd.f32 0.0, %v892
      %v894 = vpop.f32.mrb[0].mxu0
      %895 = vmatprep.mubr.bf16.mxu0 0
      %896 = vmatmul.mubr.bf16.gmra.mrb[0].mxu0 %v776
      %v897 = vpop.f32.mrb[0].mxu0
      %v898 = vadd.f32 0.0, %v897
      %v899 = vpop.f32.mrb[0].mxu0
      %v900 = vpop.f32.mrb[0].mxu0
      %v901 = vadd.f32 0.0, %v900
      %v902 = vpop.f32.mrb[0].mxu0
      %903 = vmatprep.mubr.bf16.mxu0 0
      %904 = vmatmul.mubr.bf16.gmra.mrb[0].mxu0 %v779
      %v905 = vpop.f32.mrb[0].mxu0
      %v906 = vadd.f32 0.0, %v905
      %v907 = vpop.f32.mrb[0].mxu0
      %v908 = vpop.f32.mrb[0].mxu0
      %v909 = vadd.f32 0.0, %v908
      %v910 = vpop.f32.mrb[0].mxu0
      %911 = vmatprep.mubr.bf16.mxu0 0
      %912 = vmatmul.mubr.bf16.gmra.mrb[0].mxu0 %v782
      %v913 = vpop.f32.mrb[0].mxu0
      %v914 = vadd.f32 0.0, %v913
      %v915 = vpop.f32.mrb[0].mxu0
      %v916 = vpop.f32.mrb[0].mxu0
      %v917 = vadd.f32 0.0, %v916
      %v918 = vpop.f32.mrb[0].mxu0
      %919 = vmatprep.mubr.bf16.mxu0 0
      %920 = vmatmul.mubr.bf16.gmra.mrb[0].mxu0 %v785
      %v921 = vpop.f32.mrb[0].mxu0
      %v922 = vadd.f32 0.0, %v921
      %v923 = vpop.f32.mrb[0].mxu0
      %v924 = vpop.f32.mrb[0].mxu0
      %v925 = vadd.f32 0.0, %v924
      %v926 = vpop.f32.mrb[0].mxu0
      %927 = vmatprep.mubr.bf16.mxu0 0
      %928 = vmatmul.mubr.bf16.gmra.mrb[0].mxu0 %v788
      %v929 = vpop.f32.mrb[0].mxu0
      %v930 = vadd.f32 0.0, %v929
      %v931 = vpop.f32.mrb[0].mxu0
      %v932 = vpop.f32.mrb[0].mxu0
      %v933 = vadd.f32 0.0, %v932
      %v934 = vpop.f32.mrb[0].mxu0
      %935 = vmatprep.mubr.bf16.mxu0 0
      %936 = vmatmul.mubr.bf16.gmra.mrb[0].mxu0 %v791
      %v937 = vpop.f32.mrb[0].mxu0
      %v938 = vadd.f32 0.0, %v937
      %v939 = vpop.f32.mrb[0].mxu0
      %v940 = vpop.f32.mrb[0].mxu0
      %v941 = vadd.f32 0.0, %v940
      %v942 = vpop.f32.mrb[0].mxu0
      %943 = vmatprep.mubr.bf16.mxu0 0
      %944 = vmatmul.mubr.bf16.gmra.mrb[0].mxu0 %v794
      %v945 = vpop.f32.mrb[0].mxu0
      %v946 = vadd.f32 0.0, %v945
      %v947 = vpop.f32.mrb[0].mxu0
      %v948 = vpop.f32.mrb[0].mxu0
      %v949 = vadd.f32 0.0, %v948
      %v950 = vpop.f32.mrb[0].mxu0
      %951 = vmatprep.mubr.bf16.mxu0 0
      %952 = vmatmul.mubr.bf16.gmra.mrb[0].mxu0 %v797
      %v953 = vpop.f32.mrb[0].mxu0
      %v954 = vadd.f32 0.0, %v953
      %v955 = vpop.f32.mrb[0].mxu0
      %v956 = vpop.f32.mrb[0].mxu0
      %v957 = vadd.f32 0.0, %v956
      %v958 = vpop.f32.mrb[0].mxu0
      %959 = vdwg.mxu0
      %v992 = vunpack.c.l.b16 %v256
      %v993 = vunpack.c.l.b16 %v257
      %v994 = vunpack.c.l.b16 %v258
      %v995 = vunpack.c.l.b16 %v259
      %v996 = vunpack.c.l.b16 %v260
      %v997 = vunpack.c.l.b16 %v261
      %v998 = vunpack.c.l.b16 %v262
      %v999 = vunpack.c.l.b16 %v263
      %v1000 = vunpack.c.l.b16 %v264
      %v1001 = vunpack.c.l.b16 %v265
      %v1002 = vunpack.c.l.b16 %v266
      %v1003 = vunpack.c.l.b16 %v267
      %v1004 = vunpack.c.l.b16 %v268
      %v1005 = vunpack.c.l.b16 %v269
      %v1006 = vunpack.c.l.b16 %v270
      %v1007 = vunpack.c.l.b16 %v271
      %v1008 = vunpack.c.l.b16 %v272
      %v1009 = vunpack.c.l.b16 %v273
      %v1010 = vunpack.c.l.b16 %v274
      %v1011 = vunpack.c.l.b16 %v275
      %v1012 = vunpack.c.l.b16 %v276
      %v1013 = vunpack.c.l.b16 %v277
      %v1014 = vunpack.c.l.b16 %v278
      %v1015 = vunpack.c.l.b16 %v279
      %v1016 = vunpack.c.l.b16 %v280
      %v1017 = vunpack.c.l.b16 %v281
      %v1018 = vunpack.c.l.b16 %v282
      %v1019 = vunpack.c.l.b16 %v283
      %v1020 = vunpack.c.l.b16 %v284
      %v1021 = vunpack.c.l.b16 %v285
      %v1022 = vunpack.c.l.b16 %v286
      %v1023 = vunpack.c.l.b16 %v287
      %v1024 = vpack.c.b16 %v993, %v992
      %v1025 = vpack.c.b16 %v995, %v994
      %v1026 = vpack.c.b16 %v997, %v996
      %v1027 = vpack.c.b16 %v999, %v998
      %v1028 = vpack.c.b16 %v1001, %v1000
      %v1029 = vpack.c.b16 %v1003, %v1002
      %v1030 = vpack.c.b16 %v1005, %v1004
      %v1031 = vpack.c.b16 %v1007, %v1006
      %v1032 = vpack.c.b16 %v1009, %v1008
      %v1033 = vpack.c.b16 %v1011, %v1010
      %v1034 = vpack.c.b16 %v1013, %v1012
      %v1035 = vpack.c.b16 %v1015, %v1014
      %v1036 = vpack.c.b16 %v1017, %v1016
      %v1037 = vpack.c.b16 %v1019, %v1018
      %v1038 = vpack.c.b16 %v1021, %v1020
      %v1039 = vpack.c.b16 %v1023, %v1022
      %v1042 = vunpack.c.l.b16 %v288
      %v1043 = vunpack.c.l.b16 %v289
      %v1044 = vpack.c.b16 %v1043, %v1042
      %v1047 = vsel %vm750, %v1024, 0
      %v1050 = vsel %vm750, %v1025, 0
      %v1053 = vsel %vm750, %v1026, 0
      %v1056 = vsel %vm750, %v1027, 0
      %v1059 = vsel %vm750, %v1028, 0
      %v1062 = vsel %vm750, %v1029, 0
      %v1065 = vsel %vm750, %v1030, 0
      %v1068 = vsel %vm750, %v1031, 0
      %v1071 = vsel %vm750, %v1032, 0
      %v1074 = vsel %vm750, %v1033, 0
      %v1077 = vsel %vm750, %v1034, 0
      %v1080 = vsel %vm750, %v1035, 0
      %v1083 = vsel %vm750, %v1036, 0
      %v1086 = vsel %vm750, %v1037, 0
      %v1089 = vsel %vm750, %v1038, 0
      %v1092 = vsel %vm750, %v1039, 0
      %1094 = vmatprep.subr.bf16.mxu0 0
      %1095 = vmatpush1.bf16.msra.mxu0 %v1044
      %1096 = vmatprep.subr.bf16.mxu0 0
      %1097 = vmatpush1.bf16.msra.mxu0 0
      %1098 = vmatprep.subr.bf16.mxu0 0
      %1099 = vmatpush1.bf16.msra.mxu0 0
      %1100 = vmatprep.subr.bf16.mxu0 0
      %1101 = vmatpush1.bf16.msra.mxu0 0
      %1102 = vmatprep.subr.bf16.mxu0 0
      %1103 = vmatpush1.bf16.msra.mxu0 0
      %1104 = vmatprep.subr.bf16.mxu0 0
      %1105 = vmatpush1.bf16.msra.mxu0 0
      %1106 = vmatprep.subr.bf16.mxu0 0
      %1107 = vmatpush1.bf16.msra.mxu0 0
      %1108 = vmatprep.subr.bf16.mxu0 0
      %1109 = vmatpush1.bf16.msra.mxu0 0
      %1110 = vmatprep.subr.bf16.mxu0 0
      %1111 = vmatpush1.bf16.msra.mxu0 0
      %1112 = vmatprep.subr.bf16.mxu0 0
      %1113 = vmatpush1.bf16.msra.mxu0 0
      %1114 = vmatprep.subr.bf16.mxu0 0
      %1115 = vmatpush1.bf16.msra.mxu0 0
      %1116 = vmatprep.subr.bf16.mxu0 0
      %1117 = vmatpush1.bf16.msra.mxu0 0
      %1118 = vmatprep.subr.bf16.mxu0 0
      %1119 = vmatpush1.bf16.msra.mxu0 0
      %1120 = vmatprep.subr.bf16.mxu0 0
      %1121 = vmatpush1.bf16.msra.mxu0 0
      %1122 = vmatprep.subr.bf16.mxu0 0
      %1123 = vmatpush1.bf16.msra.mxu0 0
      %1124 = vmatprep.subr.bf16.mxu0 0
      %1125 = vmatpush1.bf16.msra.mxu0 0
      %1126 = vmatprep.mubr.bf16.mxu0 0
      %1127 = vmatmul.mubr.bf16.gmra.mrb[0].mxu0 %v1047
      %v1128 = vpop.f32.mrb[0].mxu0
      %v1129 = vadd.f32 %v834, %v1128
      %v1130 = vpop.f32.mrb[0].mxu0
      %v1131 = vpop.f32.mrb[0].mxu0
      %v1132 = vadd.f32 %v837, %v1131
      %v1133 = vpop.f32.mrb[0].mxu0
      %1134 = vmatprep.mubr.bf16.mxu0 0
      %1135 = vmatmul.mubr.bf16.gmra.mrb[0].mxu0 %v1050
      %v1136 = vpop.f32.mrb[0].mxu0
      %v1137 = vadd.f32 %v842, %v1136
      %v1138 = vpop.f32.mrb[0].mxu0
      %v1139 = vpop.f32.mrb[0].mxu0
      %v1140 = vadd.f32 %v845, %v1139
      %v1141 = vpop.f32.mrb[0].mxu0
      %1142 = vmatprep.mubr.bf16.mxu0 0
      %1143 = vmatmul.mubr.bf16.gmra.mrb[0].mxu0 %v1053
      %v1144 = vpop.f32.mrb[0].mxu0
      %v1145 = vadd.f32 %v850, %v1144
      %v1146 = vpop.f32.mrb[0].mxu0
      %v1147 = vpop.f32.mrb[0].mxu0
      %v1148 = vadd.f32 %v853, %v1147
      %v1149 = vpop.f32.mrb[0].mxu0
      %1150 = vmatprep.mubr.bf16.mxu0 0
      %1151 = vmatmul.mubr.bf16.gmra.mrb[0].mxu0 %v1056
      %v1152 = vpop.f32.mrb[0].mxu0
      %v1153 = vadd.f32 %v858, %v1152
      %v1154 = vpop.f32.mrb[0].mxu0
      %v1155 = vpop.f32.mrb[0].mxu0
      %v1156 = vadd.f32 %v861, %v1155
      %v1157 = vpop.f32.mrb[0].mxu0
      %1158 = vmatprep.mubr.bf16.mxu0 0
      %1159 = vmatmul.mubr.bf16.gmra.mrb[0].mxu0 %v1059
      %v1160 = vpop.f32.mrb[0].mxu0
      %v1161 = vadd.f32 %v866, %v1160
      %v1162 = vpop.f32.mrb[0].mxu0
      %v1163 = vpop.f32.mrb[0].mxu0
      %v1164 = vadd.f32 %v869, %v1163
      %v1165 = vpop.f32.mrb[0].mxu0
      %1166 = vmatprep.mubr.bf16.mxu0 0
      %1167 = vmatmul.mubr.bf16.gmra.mrb[0].mxu0 %v1062
      %v1168 = vpop.f32.mrb[0].mxu0
      %v1169 = vadd.f32 %v874, %v1168
      %v1170 = vpop.f32.mrb[0].mxu0
      %v1171 = vpop.f32.mrb[0].mxu0
      %v1172 = vadd.f32 %v877, %v1171
      %v1173 = vpop.f32.mrb[0].mxu0
      %1174 = vmatprep.mubr.bf16.mxu0 0
      %1175 = vmatmul.mubr.bf16.gmra.mrb[0].mxu0 %v1065
      %v1176 = vpop.f32.mrb[0].mxu0
      %v1177 = vadd.f32 %v882, %v1176
      %v1178 = vpop.f32.mrb[0].mxu0
      %v1179 = vpop.f32.mrb[0].mxu0
      %v1180 = vadd.f32 %v885, %v1179
      %v1181 = vpop.f32.mrb[0].mxu0
      %1182 = vmatprep.mubr.bf16.mxu0 0
      %1183 = vmatmul.mubr.bf16.gmra.mrb[0].mxu0 %v1068
      %v1184 = vpop.f32.mrb[0].mxu0
      %v1185 = vadd.f32 %v890, %v1184
      %v1186 = vpop.f32.mrb[0].mxu0
      %v1187 = vpop.f32.mrb[0].mxu0
      %v1188 = vadd.f32 %v893, %v1187
      %v1189 = vpop.f32.mrb[0].mxu0
      %1190 = vmatprep.mubr.bf16.mxu0 0
      %1191 = vmatmul.mubr.bf16.gmra.mrb[0].mxu0 %v1071
      %v1192 = vpop.f32.mrb[0].mxu0
      %v1193 = vadd.f32 %v898, %v1192
      %v1194 = vpop.f32.mrb[0].mxu0
      %v1195 = vpop.f32.mrb[0].mxu0
      %v1196 = vadd.f32 %v901, %v1195
      %v1197 = vpop.f32.mrb[0].mxu0
      %1198 = vmatprep.mubr.bf16.mxu0 0
      %1199 = vmatmul.mubr.bf16.gmra.mrb[0].mxu0 %v1074
      %v1200 = vpop.f32.mrb[0].mxu0
      %v1201 = vadd.f32 %v906, %v1200
      %v1202 = vpop.f32.mrb[0].mxu0
      %v1203 = vpop.f32.mrb[0].mxu0
      %v1204 = vadd.f32 %v909, %v1203
      %v1205 = vpop.f32.mrb[0].mxu0
      %1206 = vmatprep.mubr.bf16.mxu0 0
      %1207 = vmatmul.mubr.bf16.gmra.mrb[0].mxu0 %v1077
      %v1208 = vpop.f32.mrb[0].mxu0
      %v1209 = vadd.f32 %v914, %v1208
      %v1210 = vpop.f32.mrb[0].mxu0
      %v1211 = vpop.f32.mrb[0].mxu0
      %v1212 = vadd.f32 %v917, %v1211
      %v1213 = vpop.f32.mrb[0].mxu0
      %1214 = vmatprep.mubr.bf16.mxu0 0
      %1215 = vmatmul.mubr.bf16.gmra.mrb[0].mxu0 %v1080
      %v1216 = vpop.f32.mrb[0].mxu0
      %v1217 = vadd.f32 %v922, %v1216
      %v1218 = vpop.f32.mrb[0].mxu0
      %v1219 = vpop.f32.mrb[0].mxu0
      %v1220 = vadd.f32 %v925, %v1219
      %v1221 = vpop.f32.mrb[0].mxu0
      %1222 = vmatprep.mubr.bf16.mxu0 0
      %1223 = vmatmul.mubr.bf16.gmra.mrb[0].mxu0 %v1083
      %v1224 = vpop.f32.mrb[0].mxu0
      %v1225 = vadd.f32 %v930, %v1224
      %v1226 = vpop.f32.mrb[0].mxu0
      %v1227 = vpop.f32.mrb[0].mxu0
      %v1228 = vadd.f32 %v933, %v1227
      %v1229 = vpop.f32.mrb[0].mxu0
      %1230 = vmatprep.mubr.bf16.mxu0 0
      %1231 = vmatmul.mubr.bf16.gmra.mrb[0].mxu0 %v1086
      %v1232 = vpop.f32.mrb[0].mxu0
      %v1233 = vadd.f32 %v938, %v1232
      %v1234 = vpop.f32.mrb[0].mxu0
      %v1235 = vpop.f32.mrb[0].mxu0
      %v1236 = vadd.f32 %v941, %v1235
      %v1237 = vpop.f32.mrb[0].mxu0
      %1238 = vmatprep.mubr.bf16.mxu0 0
      %1239 = vmatmul.mubr.bf16.gmra.mrb[0].mxu0 %v1089
      %v1240 = vpop.f32.mrb[0].mxu0
      %v1241 = vadd.f32 %v946, %v1240
      %v1242 = vpop.f32.mrb[0].mxu0
      %v1243 = vpop.f32.mrb[0].mxu0
      %v1244 = vadd.f32 %v949, %v1243
      %v1245 = vpop.f32.mrb[0].mxu0
      %1246 = vmatprep.mubr.bf16.mxu0 0
      %1247 = vmatmul.mubr.bf16.gmra.mrb[0].mxu0 %v1092
      %v1248 = vpop.f32.mrb[0].mxu0
      %v1249 = vadd.f32 %v954, %v1248
      %v1250 = vpop.f32.mrb[0].mxu0
      %v1251 = vpop.f32.mrb[0].mxu0
      %v1252 = vadd.f32 %v957, %v1251
      %v1253 = vpop.f32.mrb[0].mxu0
      %1254 = vdwg.mxu0
      %v1255 = vld [vmem:[%s255] sm:$0xe]
      %v1256 = vld [vmem:[%s255 + $0xc] sm:$0xe]
      %v1257 = vld [vmem:[%s255 + $0x18] sm:$0xe]
      %v1258 = vld [vmem:[%s255 + $0x24] sm:$0xe]
      %v1259 = vld [vmem:[%s255 + $0x30] sm:$0xe]
      %v1260 = vld [vmem:[%s255 + $0x3c] sm:$0xe]
      %v1261 = vld [vmem:[%s255 + $0x48] sm:$0xe]
      %v1262 = vld [vmem:[%s255 + $0x54] sm:$0xe]
      %v1263 = vld [vmem:[%s255 + $0x60] sm:$0xe]
      %v1264 = vld [vmem:[%s255 + $0x6c] sm:$0xe]
      %v1265 = vld [vmem:[%s255 + $0x78] sm:$0xe]
      %v1266 = vld [vmem:[%s255 + $0x84] sm:$0xe]
      %v1267 = vld [vmem:[%s255 + $0x90] sm:$0xe]
      %v1268 = vld [vmem:[%s255 + $0x9c] sm:$0xe]
      %v1269 = vld [vmem:[%s255 + $0xa8] sm:$0xe]
      %v1270 = vld [vmem:[%s255 + $0xb4] sm:$0xe]
      %vm1303 = vcmask 1042432
      %vm1304 = vcmask 1046532
      %vm1305 = vmor %vm1303, %vm1304
      %v1306 = vrot.slane %v1255, 5
      %v1307 = vrot.slane %v1306, 4
      %v1308 = vrot.slane %v257, 5
      %v1309 = vsel %vm1305, %v1307, %v1308
      %v1310 = vrot.slane %v1308, 4
      %v1311 = vrot.slane %v290, 5
      %v1312 = vsel %vm1305, %v1310, %v1311
      %v1313 = vrot.slane %v1256, 5
      %v1314 = vrot.slane %v1313, 4
      %v1315 = vrot.slane %v259, 5
      %v1316 = vsel %vm1305, %v1314, %v1315
      %v1317 = vrot.slane %v1315, 4
      %v1318 = vrot.slane %v291, 5
      %v1319 = vsel %vm1305, %v1317, %v1318
      %v1320 = vrot.slane %v1257, 5
      %v1321 = vrot.slane %v1320, 4
      %v1322 = vrot.slane %v261, 5
      %v1323 = vsel %vm1305, %v1321, %v1322
      %v1324 = vrot.slane %v1322, 4
      %v1325 = vrot.slane %v292, 5
      %v1326 = vsel %vm1305, %v1324, %v1325
      %v1327 = vrot.slane %v1258, 5
      %v1328 = vrot.slane %v1327, 4
      %v1329 = vrot.slane %v263, 5
      %v1330 = vsel %vm1305, %v1328, %v1329
      %v1331 = vrot.slane %v1329, 4
      %v1332 = vrot.slane %v293, 5
      %v1333 = vsel %vm1305, %v1331, %v1332
      %v1334 = vrot.slane %v1259, 5
      %v1335 = vrot.slane %v1334, 4
      %v1336 = vrot.slane %v265, 5
      %v1337 = vsel %vm1305, %v1335, %v1336
      %v1338 = vrot.slane %v1336, 4
      %v1339 = vrot.slane %v294, 5
      %v1340 = vsel %vm1305, %v1338, %v1339
      %v1341 = vrot.slane %v1260, 5
      %v1342 = vrot.slane %v1341, 4
      %v1343 = vrot.slane %v267, 5
      %v1344 = vsel %vm1305, %v1342, %v1343
      %v1345 = vrot.slane %v1343, 4
      %v1346 = vrot.slane %v295, 5
      %v1347 = vsel %vm1305, %v1345, %v1346
      %v1348 = vrot.slane %v1261, 5
      %v1349 = vrot.slane %v1348, 4
      %v1350 = vrot.slane %v269, 5
      %v1351 = vsel %vm1305, %v1349, %v1350
      %v1352 = vrot.slane %v1350, 4
      %v1353 = vrot.slane %v296, 5
      %v1354 = vsel %vm1305, %v1352, %v1353
      %v1355 = vrot.slane %v1262, 5
      %v1356 = vrot.slane %v1355, 4
      %v1357 = vrot.slane %v271, 5
      %v1358 = vsel %vm1305, %v1356, %v1357
      %v1359 = vrot.slane %v1357, 4
      %v1360 = vrot.slane %v297, 5
      %v1361 = vsel %vm1305, %v1359, %v1360
      %v1362 = vrot.slane %v1263, 5
      %v1363 = vrot.slane %v1362, 4
      %v1364 = vrot.slane %v273, 5
      %v1365 = vsel %vm1305, %v1363, %v1364
      %v1366 = vrot.slane %v1364, 4
      %v1367 = vrot.slane %v298, 5
      %v1368 = vsel %vm1305, %v1366, %v1367
      %v1369 = vrot.slane %v1264, 5
      %v1370 = vrot.slane %v1369, 4
      %v1371 = vrot.slane %v275, 5
      %v1372 = vsel %vm1305, %v1370, %v1371
      %v1373 = vrot.slane %v1371, 4
      %v1374 = vrot.slane %v299, 5
      %v1375 = vsel %vm1305, %v1373, %v1374
      %v1376 = vrot.slane %v1265, 5
      %v1377 = vrot.slane %v1376, 4
      %v1378 = vrot.slane %v277, 5
      %v1379 = vsel %vm1305, %v1377, %v1378
      %v1380 = vrot.slane %v1378, 4
      %v1381 = vrot.slane %v300, 5
      %v1382 = vsel %vm1305, %v1380, %v1381
      %v1383 = vrot.slane %v1266, 5
      %v1384 = vrot.slane %v1383, 4
      %v1385 = vrot.slane %v279, 5
      %v1386 = vsel %vm1305, %v1384, %v1385
      %v1387 = vrot.slane %v1385, 4
      %v1388 = vrot.slane %v301, 5
      %v1389 = vsel %vm1305, %v1387, %v1388
      %v1390 = vrot.slane %v1267, 5
      %v1391 = vrot.slane %v1390, 4
      %v1392 = vrot.slane %v281, 5
      %v1393 = vsel %vm1305, %v1391, %v1392
      %v1394 = vrot.slane %v1392, 4
      %v1395 = vrot.slane %v302, 5
      %v1396 = vsel %vm1305, %v1394, %v1395
      %v1397 = vrot.slane %v1268, 5
      %v1398 = vrot.slane %v1397, 4
      %v1399 = vrot.slane %v283, 5
      %v1400 = vsel %vm1305, %v1398, %v1399
      %v1401 = vrot.slane %v1399, 4
      %v1402 = vrot.slane %v303, 5
      %v1403 = vsel %vm1305, %v1401, %v1402
      %v1404 = vrot.slane %v1269, 5
      %v1405 = vrot.slane %v1404, 4
      %v1406 = vrot.slane %v285, 5
      %v1407 = vsel %vm1305, %v1405, %v1406
      %v1408 = vrot.slane %v1406, 4
      %v1409 = vrot.slane %v304, 5
      %v1410 = vsel %vm1305, %v1408, %v1409
      %v1411 = vrot.slane %v1270, 5
      %v1412 = vrot.slane %v1411, 4
      %v1413 = vrot.slane %v287, 5
      %v1414 = vsel %vm1305, %v1412, %v1413
      %v1415 = vrot.slane %v1413, 4
      %v1416 = vrot.slane %v305, 5
      %v1417 = vsel %vm1305, %v1415, %v1416
      %s1418 = scalar_lea.vmem %s1, 16
      %v1419 = vld [vmem:[%s1418] sm:$0xf]
      %v1420 = vld [vmem:[%s1418 + $0x4] sm:$0xf]
      %v1421 = vunpack.c.l.b16 %v1309
      %v1422 = vunpack.c.l.b16 %v1312
      %v1423 = vunpack.c.l.b16 %v1316
      %v1424 = vunpack.c.l.b16 %v1319
      %v1425 = vunpack.c.l.b16 %v1323
      %v1426 = vunpack.c.l.b16 %v1326
      %v1427 = vunpack.c.l.b16 %v1330
      %v1428 = vunpack.c.l.b16 %v1333
      %v1429 = vunpack.c.l.b16 %v1337
      %v1430 = vunpack.c.l.b16 %v1340
      %v1431 = vunpack.c.l.b16 %v1344
      %v1432 = vunpack.c.l.b16 %v1347
      %v1433 = vunpack.c.l.b16 %v1351
      %v1434 = vunpack.c.l.b16 %v1354
      %v1435 = vunpack.c.l.b16 %v1358
      %v1436 = vunpack.c.l.b16 %v1361
      %v1437 = vunpack.c.l.b16 %v1365
      %v1438 = vunpack.c.l.b16 %v1368
      %v1439 = vunpack.c.l.b16 %v1372
      %v1440 = vunpack.c.l.b16 %v1375
      %v1441 = vunpack.c.l.b16 %v1379
      %v1442 = vunpack.c.l.b16 %v1382
      %v1443 = vunpack.c.l.b16 %v1386
      %v1444 = vunpack.c.l.b16 %v1389
      %v1445 = vunpack.c.l.b16 %v1393
      %v1446 = vunpack.c.l.b16 %v1396
      %v1447 = vunpack.c.l.b16 %v1400
      %v1448 = vunpack.c.l.b16 %v1403
      %v1449 = vunpack.c.l.b16 %v1407
      %v1450 = vunpack.c.l.b16 %v1410
      %v1451 = vunpack.c.l.b16 %v1414
      %v1452 = vunpack.c.l.b16 %v1417
      %v1453 = vpack.c.b16 %v1422, %v1421
      %v1454 = vpack.c.b16 %v1424, %v1423
      %v1455 = vpack.c.b16 %v1426, %v1425
      %v1456 = vpack.c.b16 %v1428, %v1427
      %v1457 = vpack.c.b16 %v1430, %v1429
      %v1458 = vpack.c.b16 %v1432, %v1431
      %v1459 = vpack.c.b16 %v1434, %v1433
      %v1460 = vpack.c.b16 %v1436, %v1435
      %v1461 = vpack.c.b16 %v1438, %v1437
      %v1462 = vpack.c.b16 %v1440, %v1439
      %v1463 = vpack.c.b16 %v1442, %v1441
      %v1464 = vpack.c.b16 %v1444, %v1443
      %v1465 = vpack.c.b16 %v1446, %v1445
      %v1466 = vpack.c.b16 %v1448, %v1447
      %v1467 = vpack.c.b16 %v1450, %v1449
      %v1468 = vpack.c.b16 %v1452, %v1451
      %v1471 = vunpack.c.l.b16 %v1419
      %v1472 = vunpack.c.l.b16 %v1420
      %v1473 = vpack.c.b16 %v1472, %v1471
      %v1476 = vsel %vm750, %v1453, 0
      %v1479 = vsel %vm750, %v1454, 0
      %v1482 = vsel %vm750, %v1455, 0
      %v1485 = vsel %vm750, %v1456, 0
      %v1488 = vsel %vm750, %v1457, 0
      %v1491 = vsel %vm750, %v1458, 0
      %v1494 = vsel %vm750, %v1459, 0
      %v1497 = vsel %vm750, %v1460, 0
      %v1500 = vsel %vm750, %v1461, 0
      %v1503 = vsel %vm750, %v1462, 0
      %v1506 = vsel %vm750, %v1463, 0
      %v1509 = vsel %vm750, %v1464, 0
      %v1512 = vsel %vm750, %v1465, 0
      %v1515 = vsel %vm750, %v1466, 0
      %v1518 = vsel %vm750, %v1467, 0
      %v1521 = vsel %vm750, %v1468, 0
      %1523 = vmatprep.subr.bf16.mxu0 0
      %1524 = vmatpush1.bf16.msra.mxu0 %v1473
      %1525 = vmatprep.subr.bf16.mxu0 0
      %1526 = vmatpush1.bf16.msra.mxu0 0
      %1527 = vmatprep.subr.bf16.mxu0 0
      %1528 = vmatpush1.bf16.msra.mxu0 0
      %1529 = vmatprep.subr.bf16.mxu0 0
      %1530 = vmatpush1.bf16.msra.mxu0 0
      %1531 = vmatprep.subr.bf16.mxu0 0
      %1532 = vmatpush1.bf16.msra.mxu0 0
      %1533 = vmatprep.subr.bf16.mxu0 0
      %1534 = vmatpush1.bf16.msra.mxu0 0
      %1535 = vmatprep.subr.bf16.mxu0 0
      %1536 = vmatpush1.bf16.msra.mxu0 0
      %1537 = vmatprep.subr.bf16.mxu0 0
      %1538 = vmatpush1.bf16.msra.mxu0 0
      %1539 = vmatprep.subr.bf16.mxu0 0
      %1540 = vmatpush1.bf16.msra.mxu0 0
      %1541 = vmatprep.subr.bf16.mxu0 0
      %1542 = vmatpush1.bf16.msra.mxu0 0
      %1543 = vmatprep.subr.bf16.mxu0 0
      %1544 = vmatpush1.bf16.msra.mxu0 0
      %1545 = vmatprep.subr.bf16.mxu0 0
      %1546 = vmatpush1.bf16.msra.mxu0 0
      %1547 = vmatprep.subr.bf16.mxu0 0
      %1548 = vmatpush1.bf16.msra.mxu0 0
      %1549 = vmatprep.subr.bf16.mxu0 0
      %1550 = vmatpush1.bf16.msra.mxu0 0
      %1551 = vmatprep.subr.bf16.mxu0 0
      %1552 = vmatpush1.bf16.msra.mxu0 0
      %1553 = vmatprep.subr.bf16.mxu0 0
      %1554 = vmatpush1.bf16.msra.mxu0 0
      %1555 = vmatprep.mubr.bf16.mxu0 0
      %1556 = vmatmul.mubr.bf16.gmra.mrb[0].mxu0 %v1476
      %v1557 = vpop.f32.mrb[0].mxu0
      %v1558 = vadd.f32 0.0, %v1557
      %v1559 = vpop.f32.mrb[0].mxu0
      %v1560 = vpop.f32.mrb[0].mxu0
      %v1561 = vadd.f32 0.0, %v1560
      %v1562 = vpop.f32.mrb[0].mxu0
      %1563 = vmatprep.mubr.bf16.mxu0 0
      %1564 = vmatmul.mubr.bf16.gmra.mrb[0].mxu0 %v1479
      %v1565 = vpop.f32.mrb[0].mxu0
      %v1566 = vadd.f32 0.0, %v1565
      %v1567 = vpop.f32.mrb[0].mxu0
      %v1568 = vpop.f32.mrb[0].mxu0
      %v1569 = vadd.f32 0.0, %v1568
      %v1570 = vpop.f32.mrb[0].mxu0
      %1571 = vmatprep.mubr.bf16.mxu0 0
      %1572 = vmatmul.mubr.bf16.gmra.mrb[0].mxu0 %v1482
      %v1573 = vpop.f32.mrb[0].mxu0
      %v1574 = vadd.f32 0.0, %v1573
      %v1575 = vpop.f32.mrb[0].mxu0
      %v1576 = vpop.f32.mrb[0].mxu0
      %v1577 = vadd.f32 0.0, %v1576
      %v1578 = vpop.f32.mrb[0].mxu0
      %1579 = vmatprep.mubr.bf16.mxu0 0
      %1580 = vmatmul.mubr.bf16.gmra.mrb[0].mxu0 %v1485
      %v1581 = vpop.f32.mrb[0].mxu0
      %v1582 = vadd.f32 0.0, %v1581
      %v1583 = vpop.f32.mrb[0].mxu0
      %v1584 = vpop.f32.mrb[0].mxu0
      %v1585 = vadd.f32 0.0, %v1584
      %v1586 = vpop.f32.mrb[0].mxu0
      %1587 = vmatprep.mubr.bf16.mxu0 0
      %1588 = vmatmul.mubr.bf16.gmra.mrb[0].mxu0 %v1488
      %v1589 = vpop.f32.mrb[0].mxu0
      %v1590 = vadd.f32 0.0, %v1589
      %v1591 = vpop.f32.mrb[0].mxu0
      %v1592 = vpop.f32.mrb[0].mxu0
      %v1593 = vadd.f32 0.0, %v1592
      %v1594 = vpop.f32.mrb[0].mxu0
      %1595 = vmatprep.mubr.bf16.mxu0 0
      %1596 = vmatmul.mubr.bf16.gmra.mrb[0].mxu0 %v1491
      %v1597 = vpop.f32.mrb[0].mxu0
      %v1598 = vadd.f32 0.0, %v1597
      %v1599 = vpop.f32.mrb[0].mxu0
      %v1600 = vpop.f32.mrb[0].mxu0
      %v1601 = vadd.f32 0.0, %v1600
      %v1602 = vpop.f32.mrb[0].mxu0
      %1603 = vmatprep.mubr.bf16.mxu0 0
      %1604 = vmatmul.mubr.bf16.gmra.mrb[0].mxu0 %v1494
      %v1605 = vpop.f32.mrb[0].mxu0
      %v1606 = vadd.f32 0.0, %v1605
      %v1607 = vpop.f32.mrb[0].mxu0
      %v1608 = vpop.f32.mrb[0].mxu0
      %v1609 = vadd.f32 0.0, %v1608
      %v1610 = vpop.f32.mrb[0].mxu0
      %1611 = vmatprep.mubr.bf16.mxu0 0
      %1612 = vmatmul.mubr.bf16.gmra.mrb[0].mxu0 %v1497
      %v1613 = vpop.f32.mrb[0].mxu0
      %v1614 = vadd.f32 0.0, %v1613
      %v1615 = vpop.f32.mrb[0].mxu0
      %v1616 = vpop.f32.mrb[0].mxu0
      %v1617 = vadd.f32 0.0, %v1616
      %v1618 = vpop.f32.mrb[0].mxu0
      %1619 = vmatprep.mubr.bf16.mxu0 0
      %1620 = vmatmul.mubr.bf16.gmra.mrb[0].mxu0 %v1500
      %v1621 = vpop.f32.mrb[0].mxu0
      %v1622 = vadd.f32 0.0, %v1621
      %v1623 = vpop.f32.mrb[0].mxu0
      %v1624 = vpop.f32.mrb[0].mxu0
      %v1625 = vadd.f32 0.0, %v1624
      %v1626 = vpop.f32.mrb[0].mxu0
      %1627 = vmatprep.mubr.bf16.mxu0 0
      %1628 = vmatmul.mubr.bf16.gmra.mrb[0].mxu0 %v1503
      %v1629 = vpop.f32.mrb[0].mxu0
      %v1630 = vadd.f32 0.0, %v1629
      %v1631 = vpop.f32.mrb[0].mxu0
      %v1632 = vpop.f32.mrb[0].mxu0
      %v1633 = vadd.f32 0.0, %v1632
      %v1634 = vpop.f32.mrb[0].mxu0
      %1635 = vmatprep.mubr.bf16.mxu0 0
      %1636 = vmatmul.mubr.bf16.gmra.mrb[0].mxu0 %v1506
      %v1637 = vpop.f32.mrb[0].mxu0
      %v1638 = vadd.f32 0.0, %v1637
      %v1639 = vpop.f32.mrb[0].mxu0
      %v1640 = vpop.f32.mrb[0].mxu0
      %v1641 = vadd.f32 0.0, %v1640
      %v1642 = vpop.f32.mrb[0].mxu0
      %1643 = vmatprep.mubr.bf16.mxu0 0
      %1644 = vmatmul.mubr.bf16.gmra.mrb[0].mxu0 %v1509
      %v1645 = vpop.f32.mrb[0].mxu0
      %v1646 = vadd.f32 0.0, %v1645
      %v1647 = vpop.f32.mrb[0].mxu0
      %v1648 = vpop.f32.mrb[0].mxu0
      %v1649 = vadd.f32 0.0, %v1648
      %v1650 = vpop.f32.mrb[0].mxu0
      %1651 = vmatprep.mubr.bf16.mxu0 0
      %1652 = vmatmul.mubr.bf16.gmra.mrb[0].mxu0 %v1512
      %v1653 = vpop.f32.mrb[0].mxu0
      %v1654 = vadd.f32 0.0, %v1653
      %v1655 = vpop.f32.mrb[0].mxu0
      %v1656 = vpop.f32.mrb[0].mxu0
      %v1657 = vadd.f32 0.0, %v1656
      %v1658 = vpop.f32.mrb[0].mxu0
      %1659 = vmatprep.mubr.bf16.mxu0 0
      %1660 = vmatmul.mubr.bf16.gmra.mrb[0].mxu0 %v1515
      %v1661 = vpop.f32.mrb[0].mxu0
      %v1662 = vadd.f32 0.0, %v1661
      %v1663 = vpop.f32.mrb[0].mxu0
      %v1664 = vpop.f32.mrb[0].mxu0
      %v1665 = vadd.f32 0.0, %v1664
      %v1666 = vpop.f32.mrb[0].mxu0
      %1667 = vmatprep.mubr.bf16.mxu0 0
      %1668 = vmatmul.mubr.bf16.gmra.mrb[0].mxu0 %v1518
      %v1669 = vpop.f32.mrb[0].mxu0
      %v1670 = vadd.f32 0.0, %v1669
      %v1671 = vpop.f32.mrb[0].mxu0
      %v1672 = vpop.f32.mrb[0].mxu0
      %v1673 = vadd.f32 0.0, %v1672
      %v1674 = vpop.f32.mrb[0].mxu0
      %1675 = vmatprep.mubr.bf16.mxu0 0
      %1676 = vmatmul.mubr.bf16.gmra.mrb[0].mxu0 %v1521
      %v1677 = vpop.f32.mrb[0].mxu0
      %v1678 = vadd.f32 0.0, %v1677
      %v1679 = vpop.f32.mrb[0].mxu0
      %v1680 = vpop.f32.mrb[0].mxu0
      %v1681 = vadd.f32 0.0, %v1680
      %v1682 = vpop.f32.mrb[0].mxu0
      %1683 = vdwg.mxu0
      %v1684 = vadd.f32 %v1129, %v1558
      %v1685 = vadd.f32 %v1132, %v1561
      %v1686 = vadd.f32 %v1137, %v1566
      %v1687 = vadd.f32 %v1140, %v1569
      %v1688 = vadd.f32 %v1145, %v1574
      %v1689 = vadd.f32 %v1148, %v1577
      %v1690 = vadd.f32 %v1153, %v1582
      %v1691 = vadd.f32 %v1156, %v1585
      %v1692 = vadd.f32 %v1161, %v1590
      %v1693 = vadd.f32 %v1164, %v1593
      %v1694 = vadd.f32 %v1169, %v1598
      %v1695 = vadd.f32 %v1172, %v1601
      %v1696 = vadd.f32 %v1177, %v1606
      %v1697 = vadd.f32 %v1180, %v1609
      %v1698 = vadd.f32 %v1185, %v1614
      %v1699 = vadd.f32 %v1188, %v1617
      %v1700 = vadd.f32 %v1193, %v1622
      %v1701 = vadd.f32 %v1196, %v1625
      %v1702 = vadd.f32 %v1201, %v1630
      %v1703 = vadd.f32 %v1204, %v1633
      %v1704 = vadd.f32 %v1209, %v1638
      %v1705 = vadd.f32 %v1212, %v1641
      %v1706 = vadd.f32 %v1217, %v1646
      %v1707 = vadd.f32 %v1220, %v1649
      %v1708 = vadd.f32 %v1225, %v1654
      %v1709 = vadd.f32 %v1228, %v1657
      %v1710 = vadd.f32 %v1233, %v1662
      %v1711 = vadd.f32 %v1236, %v1665
      %v1712 = vadd.f32 %v1241, %v1670
      %v1713 = vadd.f32 %v1244, %v1673
      %v1714 = vadd.f32 %v1249, %v1678
      %v1715 = vadd.f32 %v1252, %v1681
      %s1716 = sadd.s32 %s252, 1
      %s1717 = smul.u32 %s1716, 3
      %s1718 = smul.addr %s1717, 4
      %s1719 = scalar_lea.vmem %s233, %s1718
      %v1720 = vld [vmem:[%s1719] sm:$0xf]
      %v1721 = vld [vmem:[%s1719 + $0x4] sm:$0xf]
      %v1722 = vld [vmem:[%s1719 + $0xc] sm:$0xf]
      %v1723 = vld [vmem:[%s1719 + $0x10] sm:$0xf]
      %v1724 = vld [vmem:[%s1719 + $0x18] sm:$0xf]
      %v1725 = vld [vmem:[%s1719 + $0x1c] sm:$0xf]
      %v1726 = vld [vmem:[%s1719 + $0x24] sm:$0xf]
      %v1727 = vld [vmem:[%s1719 + $0x28] sm:$0xf]
      %v1728 = vld [vmem:[%s1719 + $0x30] sm:$0xf]
      %v1729 = vld [vmem:[%s1719 + $0x34] sm:$0xf]
      %v1730 = vld [vmem:[%s1719 + $0x3c] sm:$0xf]
      %v1731 = vld [vmem:[%s1719 + $0x40] sm:$0xf]
      %v1732 = vld [vmem:[%s1719 + $0x48] sm:$0xf]
      %v1733 = vld [vmem:[%s1719 + $0x4c] sm:$0xf]
      %v1734 = vld [vmem:[%s1719 + $0x54] sm:$0xf]
      %v1735 = vld [vmem:[%s1719 + $0x58] sm:$0xf]
      %v1736 = vld [vmem:[%s1719 + $0x60] sm:$0xf]
      %v1737 = vld [vmem:[%s1719 + $0x64] sm:$0xf]
      %v1738 = vld [vmem:[%s1719 + $0x6c] sm:$0xf]
      %v1739 = vld [vmem:[%s1719 + $0x70] sm:$0xf]
      %v1740 = vld [vmem:[%s1719 + $0x78] sm:$0xf]
      %v1741 = vld [vmem:[%s1719 + $0x7c] sm:$0xf]
      %v1742 = vld [vmem:[%s1719 + $0x84] sm:$0xf]
      %v1743 = vld [vmem:[%s1719 + $0x88] sm:$0xf]
      %v1744 = vld [vmem:[%s1719 + $0x90] sm:$0xf]
      %v1745 = vld [vmem:[%s1719 + $0x94] sm:$0xf]
      %v1746 = vld [vmem:[%s1719 + $0x9c] sm:$0xf]
      %v1747 = vld [vmem:[%s1719 + $0xa0] sm:$0xf]
      %v1748 = vld [vmem:[%s1719 + $0xa8] sm:$0xf]
      %v1749 = vld [vmem:[%s1719 + $0xac] sm:$0xf]
      %v1750 = vld [vmem:[%s1719 + $0xb4] sm:$0xf]
      %v1751 = vld [vmem:[%s1719 + $0xb8] sm:$0xf]
      %s1752 = scalar_lea.vmem %s1, 24
      %v1753 = vld [vmem:[%s1752] sm:$0xf]
      %v1754 = vld [vmem:[%s1752 + $0x4] sm:$0xf]
      %v1787 = vunpack.c.l.b16 %v1720
      %v1788 = vunpack.c.l.b16 %v1721
      %v1789 = vunpack.c.l.b16 %v1722
      %v1790 = vunpack.c.l.b16 %v1723
      %v1791 = vunpack.c.l.b16 %v1724
      %v1792 = vunpack.c.l.b16 %v1725
      %v1793 = vunpack.c.l.b16 %v1726
      %v1794 = vunpack.c.l.b16 %v1727
      %v1795 = vunpack.c.l.b16 %v1728
      %v1796 = vunpack.c.l.b16 %v1729
      %v1797 = vunpack.c.l.b16 %v1730
      %v1798 = vunpack.c.l.b16 %v1731
      %v1799 = vunpack.c.l.b16 %v1732
      %v1800 = vunpack.c.l.b16 %v1733
      %v1801 = vunpack.c.l.b16 %v1734
      %v1802 = vunpack.c.l.b16 %v1735
      %v1803 = vunpack.c.l.b16 %v1736
      %v1804 = vunpack.c.l.b16 %v1737
      %v1805 = vunpack.c.l.b16 %v1738
      %v1806 = vunpack.c.l.b16 %v1739
      %v1807 = vunpack.c.l.b16 %v1740
      %v1808 = vunpack.c.l.b16 %v1741
      %v1809 = vunpack.c.l.b16 %v1742
      %v1810 = vunpack.c.l.b16 %v1743
      %v1811 = vunpack.c.l.b16 %v1744
      %v1812 = vunpack.c.l.b16 %v1745
      %v1813 = vunpack.c.l.b16 %v1746
      %v1814 = vunpack.c.l.b16 %v1747
      %v1815 = vunpack.c.l.b16 %v1748
      %v1816 = vunpack.c.l.b16 %v1749
      %v1817 = vunpack.c.l.b16 %v1750
      %v1818 = vunpack.c.l.b16 %v1751
      %v1819 = vpack.c.b16 %v1788, %v1787
      %v1820 = vpack.c.b16 %v1790, %v1789
      %v1821 = vpack.c.b16 %v1792, %v1791
      %v1822 = vpack.c.b16 %v1794, %v1793
      %v1823 = vpack.c.b16 %v1796, %v1795
      %v1824 = vpack.c.b16 %v1798, %v1797
      %v1825 = vpack.c.b16 %v1800, %v1799
      %v1826 = vpack.c.b16 %v1802, %v1801
      %v1827 = vpack.c.b16 %v1804, %v1803
      %v1828 = vpack.c.b16 %v1806, %v1805
      %v1829 = vpack.c.b16 %v1808, %v1807
      %v1830 = vpack.c.b16 %v1810, %v1809
      %v1831 = vpack.c.b16 %v1812, %v1811
      %v1832 = vpack.c.b16 %v1814, %v1813
      %v1833 = vpack.c.b16 %v1816, %v1815
      %v1834 = vpack.c.b16 %v1818, %v1817
      %v1837 = vunpack.c.l.b16 %v1753
      %v1838 = vunpack.c.l.b16 %v1754
      %v1839 = vpack.c.b16 %v1838, %v1837
      %v1842 = vsel %vm750, %v1819, 0
      %v1845 = vsel %vm750, %v1820, 0
      %v1848 = vsel %vm750, %v1821, 0
      %v1851 = vsel %vm750, %v1822, 0
      %v1854 = vsel %vm750, %v1823, 0
      %v1857 = vsel %vm750, %v1824, 0
      %v1860 = vsel %vm750, %v1825, 0
      %v1863 = vsel %vm750, %v1826, 0
      %v1866 = vsel %vm750, %v1827, 0
      %v1869 = vsel %vm750, %v1828, 0
      %v1872 = vsel %vm750, %v1829, 0
      %v1875 = vsel %vm750, %v1830, 0
      %v1878 = vsel %vm750, %v1831, 0
      %v1881 = vsel %vm750, %v1832, 0
      %v1884 = vsel %vm750, %v1833, 0
      %v1887 = vsel %vm750, %v1834, 0
      %1889 = vmatprep.subr.bf16.mxu0 0
      %1890 = vmatpush1.bf16.msra.mxu0 %v1839
      %1891 = vmatprep.subr.bf16.mxu0 0
      %1892 = vmatpush1.bf16.msra.mxu0 0
      %1893 = vmatprep.subr.bf16.mxu0 0
      %1894 = vmatpush1.bf16.msra.mxu0 0
      %1895 = vmatprep.subr.bf16.mxu0 0
      %1896 = vmatpush1.bf16.msra.mxu0 0
      %1897 = vmatprep.subr.bf16.mxu0 0
      %1898 = vmatpush1.bf16.msra.mxu0 0
      %1899 = vmatprep.subr.bf16.mxu0 0
      %1900 = vmatpush1.bf16.msra.mxu0 0
      %1901 = vmatprep.subr.bf16.mxu0 0
      %1902 = vmatpush1.bf16.msra.mxu0 0
      %1903 = vmatprep.subr.bf16.mxu0 0
      %1904 = vmatpush1.bf16.msra.mxu0 0
      %1905 = vmatprep.subr.bf16.mxu0 0
      %1906 = vmatpush1.bf16.msra.mxu0 0
      %1907 = vmatprep.subr.bf16.mxu0 0
      %1908 = vmatpush1.bf16.msra.mxu0 0
      %1909 = vmatprep.subr.bf16.mxu0 0
      %1910 = vmatpush1.bf16.msra.mxu0 0
      %1911 = vmatprep.subr.bf16.mxu0 0
      %1912 = vmatpush1.bf16.msra.mxu0 0
      %1913 = vmatprep.subr.bf16.mxu0 0
      %1914 = vmatpush1.bf16.msra.mxu0 0
      %1915 = vmatprep.subr.bf16.mxu0 0
      %1916 = vmatpush1.bf16.msra.mxu0 0
      %1917 = vmatprep.subr.bf16.mxu0 0
      %1918 = vmatpush1.bf16.msra.mxu0 0
      %1919 = vmatprep.subr.bf16.mxu0 0
      %1920 = vmatpush1.bf16.msra.mxu0 0
      %1921 = vmatprep.mubr.bf16.mxu0 0
      %1922 = vmatmul.mubr.bf16.gmra.mrb[0].mxu0 %v1842
      %v1923 = vpop.f32.mrb[0].mxu0
      %v1924 = vadd.f32 0.0, %v1923
      %v1925 = vpop.f32.mrb[0].mxu0
      %v1926 = vpop.f32.mrb[0].mxu0
      %v1927 = vadd.f32 0.0, %v1926
      %v1928 = vpop.f32.mrb[0].mxu0
      %1929 = vmatprep.mubr.bf16.mxu0 0
      %1930 = vmatmul.mubr.bf16.gmra.mrb[0].mxu0 %v1845
      %v1931 = vpop.f32.mrb[0].mxu0
      %v1932 = vadd.f32 0.0, %v1931
      %v1933 = vpop.f32.mrb[0].mxu0
      %v1934 = vpop.f32.mrb[0].mxu0
      %v1935 = vadd.f32 0.0, %v1934
      %v1936 = vpop.f32.mrb[0].mxu0
      %1937 = vmatprep.mubr.bf16.mxu0 0
      %1938 = vmatmul.mubr.bf16.gmra.mrb[0].mxu0 %v1848
      %v1939 = vpop.f32.mrb[0].mxu0
      %v1940 = vadd.f32 0.0, %v1939
      %v1941 = vpop.f32.mrb[0].mxu0
      %v1942 = vpop.f32.mrb[0].mxu0
      %v1943 = vadd.f32 0.0, %v1942
      %v1944 = vpop.f32.mrb[0].mxu0
      %1945 = vmatprep.mubr.bf16.mxu0 0
      %1946 = vmatmul.mubr.bf16.gmra.mrb[0].mxu0 %v1851
      %v1947 = vpop.f32.mrb[0].mxu0
      %v1948 = vadd.f32 0.0, %v1947
      %v1949 = vpop.f32.mrb[0].mxu0
      %v1950 = vpop.f32.mrb[0].mxu0
      %v1951 = vadd.f32 0.0, %v1950
      %v1952 = vpop.f32.mrb[0].mxu0
      %1953 = vmatprep.mubr.bf16.mxu0 0
      %1954 = vmatmul.mubr.bf16.gmra.mrb[0].mxu0 %v1854
      %v1955 = vpop.f32.mrb[0].mxu0
      %v1956 = vadd.f32 0.0, %v1955
      %v1957 = vpop.f32.mrb[0].mxu0
      %v1958 = vpop.f32.mrb[0].mxu0
      %v1959 = vadd.f32 0.0, %v1958
      %v1960 = vpop.f32.mrb[0].mxu0
      %1961 = vmatprep.mubr.bf16.mxu0 0
      %1962 = vmatmul.mubr.bf16.gmra.mrb[0].mxu0 %v1857
      %v1963 = vpop.f32.mrb[0].mxu0
      %v1964 = vadd.f32 0.0, %v1963
      %v1965 = vpop.f32.mrb[0].mxu0
      %v1966 = vpop.f32.mrb[0].mxu0
      %v1967 = vadd.f32 0.0, %v1966
      %v1968 = vpop.f32.mrb[0].mxu0
      %1969 = vmatprep.mubr.bf16.mxu0 0
      %1970 = vmatmul.mubr.bf16.gmra.mrb[0].mxu0 %v1860
      %v1971 = vpop.f32.mrb[0].mxu0
      %v1972 = vadd.f32 0.0, %v1971
      %v1973 = vpop.f32.mrb[0].mxu0
      %v1974 = vpop.f32.mrb[0].mxu0
      %v1975 = vadd.f32 0.0, %v1974
      %v1976 = vpop.f32.mrb[0].mxu0
      %1977 = vmatprep.mubr.bf16.mxu0 0
      %1978 = vmatmul.mubr.bf16.gmra.mrb[0].mxu0 %v1863
      %v1979 = vpop.f32.mrb[0].mxu0
      %v1980 = vadd.f32 0.0, %v1979
      %v1981 = vpop.f32.mrb[0].mxu0
      %v1982 = vpop.f32.mrb[0].mxu0
      %v1983 = vadd.f32 0.0, %v1982
      %v1984 = vpop.f32.mrb[0].mxu0
      %1985 = vmatprep.mubr.bf16.mxu0 0
      %1986 = vmatmul.mubr.bf16.gmra.mrb[0].mxu0 %v1866
      %v1987 = vpop.f32.mrb[0].mxu0
      %v1988 = vadd.f32 0.0, %v1987
      %v1989 = vpop.f32.mrb[0].mxu0
      %v1990 = vpop.f32.mrb[0].mxu0
      %v1991 = vadd.f32 0.0, %v1990
      %v1992 = vpop.f32.mrb[0].mxu0
      %1993 = vmatprep.mubr.bf16.mxu0 0
      %1994 = vmatmul.mubr.bf16.gmra.mrb[0].mxu0 %v1869
      %v1995 = vpop.f32.mrb[0].mxu0
      %v1996 = vadd.f32 0.0, %v1995
      %v1997 = vpop.f32.mrb[0].mxu0
      %v1998 = vpop.f32.mrb[0].mxu0
      %v1999 = vadd.f32 0.0, %v1998
      %v2000 = vpop.f32.mrb[0].mxu0
      %2001 = vmatprep.mubr.bf16.mxu0 0
      %2002 = vmatmul.mubr.bf16.gmra.mrb[0].mxu0 %v1872
      %v2003 = vpop.f32.mrb[0].mxu0
      %v2004 = vadd.f32 0.0, %v2003
      %v2005 = vpop.f32.mrb[0].mxu0
      %v2006 = vpop.f32.mrb[0].mxu0
      %v2007 = vadd.f32 0.0, %v2006
      %v2008 = vpop.f32.mrb[0].mxu0
      %2009 = vmatprep.mubr.bf16.mxu0 0
      %2010 = vmatmul.mubr.bf16.gmra.mrb[0].mxu0 %v1875
      %v2011 = vpop.f32.mrb[0].mxu0
      %v2012 = vadd.f32 0.0, %v2011
      %v2013 = vpop.f32.mrb[0].mxu0
      %v2014 = vpop.f32.mrb[0].mxu0
      %v2015 = vadd.f32 0.0, %v2014
      %v2016 = vpop.f32.mrb[0].mxu0
      %2017 = vmatprep.mubr.bf16.mxu0 0
      %2018 = vmatmul.mubr.bf16.gmra.mrb[0].mxu0 %v1878
      %v2019 = vpop.f32.mrb[0].mxu0
      %v2020 = vadd.f32 0.0, %v2019
      %v2021 = vpop.f32.mrb[0].mxu0
      %v2022 = vpop.f32.mrb[0].mxu0
      %v2023 = vadd.f32 0.0, %v2022
      %v2024 = vpop.f32.mrb[0].mxu0
      %2025 = vmatprep.mubr.bf16.mxu0 0
      %2026 = vmatmul.mubr.bf16.gmra.mrb[0].mxu0 %v1881
      %v2027 = vpop.f32.mrb[0].mxu0
      %v2028 = vadd.f32 0.0, %v2027
      %v2029 = vpop.f32.mrb[0].mxu0
      %v2030 = vpop.f32.mrb[0].mxu0
      %v2031 = vadd.f32 0.0, %v2030
      %v2032 = vpop.f32.mrb[0].mxu0
      %2033 = vmatprep.mubr.bf16.mxu0 0
      %2034 = vmatmul.mubr.bf16.gmra.mrb[0].mxu0 %v1884
      %v2035 = vpop.f32.mrb[0].mxu0
      %v2036 = vadd.f32 0.0, %v2035
      %v2037 = vpop.f32.mrb[0].mxu0
      %v2038 = vpop.f32.mrb[0].mxu0
      %v2039 = vadd.f32 0.0, %v2038
      %v2040 = vpop.f32.mrb[0].mxu0
      %2041 = vmatprep.mubr.bf16.mxu0 0
      %2042 = vmatmul.mubr.bf16.gmra.mrb[0].mxu0 %v1887
      %v2043 = vpop.f32.mrb[0].mxu0
      %v2044 = vadd.f32 0.0, %v2043
      %v2045 = vpop.f32.mrb[0].mxu0
      %v2046 = vpop.f32.mrb[0].mxu0
      %v2047 = vadd.f32 0.0, %v2046
      %v2048 = vpop.f32.mrb[0].mxu0
      %2049 = vdwg.mxu0
      %v2050 = vadd.f32 %v1684, %v1924
      %v2051 = vadd.f32 %v1685, %v1927
      %v2052 = vadd.f32 %v1686, %v1932
      %v2053 = vadd.f32 %v1687, %v1935
      %v2054 = vadd.f32 %v1688, %v1940
      %v2055 = vadd.f32 %v1689, %v1943
      %v2056 = vadd.f32 %v1690, %v1948
      %v2057 = vadd.f32 %v1691, %v1951
      %v2058 = vadd.f32 %v1692, %v1956
      %v2059 = vadd.f32 %v1693, %v1959
      %v2060 = vadd.f32 %v1694, %v1964
      %v2061 = vadd.f32 %v1695, %v1967
      %v2062 = vadd.f32 %v1696, %v1972
      %v2063 = vadd.f32 %v1697, %v1975
      %v2064 = vadd.f32 %v1698, %v1980
      %v2065 = vadd.f32 %v1699, %v1983
      %v2066 = vadd.f32 %v1700, %v1988
      %v2067 = vadd.f32 %v1701, %v1991
      %v2068 = vadd.f32 %v1702, %v1996
      %v2069 = vadd.f32 %v1703, %v1999
      %v2070 = vadd.f32 %v1704, %v2004
      %v2071 = vadd.f32 %v1705, %v2007
      %v2072 = vadd.f32 %v1706, %v2012
      %v2073 = vadd.f32 %v1707, %v2015
      %v2074 = vadd.f32 %v1708, %v2020
      %v2075 = vadd.f32 %v1709, %v2023
      %v2076 = vadd.f32 %v1710, %v2028
      %v2077 = vadd.f32 %v1711, %v2031
      %v2078 = vadd.f32 %v1712, %v2036
      %v2079 = vadd.f32 %v1713, %v2039
      %v2080 = vadd.f32 %v1714, %v2044
      %v2081 = vadd.f32 %v1715, %v2047
      %v2082 = vld [vmem:[%s1719] sm:$0xf]
      %v2083 = vld [vmem:[%s1719 + $0x4] sm:$0xf]
      %v2084 = vld [vmem:[%s1719 + $0x8] sm:$0x1]
      %v2085 = vld [vmem:[%s1719 + $0xc] sm:$0xf]
      %v2086 = vld [vmem:[%s1719 + $0x10] sm:$0xf]
      %v2087 = vld [vmem:[%s1719 + $0x14] sm:$0x1]
      %v2088 = vld [vmem:[%s1719 + $0x18] sm:$0xf]
      %v2089 = vld [vmem:[%s1719 + $0x1c] sm:$0xf]
      %v2090 = vld [vmem:[%s1719 + $0x20] sm:$0x1]
      %v2091 = vld [vmem:[%s1719 + $0x24] sm:$0xf]
      %v2092 = vld [vmem:[%s1719 + $0x28] sm:$0xf]
      %v2093 = vld [vmem:[%s1719 + $0x2c] sm:$0x1]
      %v2094 = vld [vmem:[%s1719 + $0x30] sm:$0xf]
      %v2095 = vld [vmem:[%s1719 + $0x34] sm:$0xf]
      %v2096 = vld [vmem:[%s1719 + $0x38] sm:$0x1]
      %v2097 = vld [vmem:[%s1719 + $0x3c] sm:$0xf]
      %v2098 = vld [vmem:[%s1719 + $0x40] sm:$0xf]
      %v2099 = vld [vmem:[%s1719 + $0x44] sm:$0x1]
      %v2100 = vld [vmem:[%s1719 + $0x48] sm:$0xf]
      %v2101 = vld [vmem:[%s1719 + $0x4c] sm:$0xf]
      %v2102 = vld [vmem:[%s1719 + $0x50] sm:$0x1]
      %v2103 = vld [vmem:[%s1719 + $0x54] sm:$0xf]
      %v2104 = vld [vmem:[%s1719 + $0x58] sm:$0xf]
      %v2105 = vld [vmem:[%s1719 + $0x5c] sm:$0x1]
      %v2106 = vld [vmem:[%s1719 + $0x60] sm:$0xf]
      %v2107 = vld [vmem:[%s1719 + $0x64] sm:$0xf]
      %v2108 = vld [vmem:[%s1719 + $0x68] sm:$0x1]
      %v2109 = vld [vmem:[%s1719 + $0x6c] sm:$0xf]
      %v2110 = vld [vmem:[%s1719 + $0x70] sm:$0xf]
      %v2111 = vld [vmem:[%s1719 + $0x74] sm:$0x1]
      %v2112 = vld [vmem:[%s1719 + $0x78] sm:$0xf]
      %v2113 = vld [vmem:[%s1719 + $0x7c] sm:$0xf]
      %v2114 = vld [vmem:[%s1719 + $0x80] sm:$0x1]
      %v2115 = vld [vmem:[%s1719 + $0x84] sm:$0xf]
      %v2116 = vld [vmem:[%s1719 + $0x88] sm:$0xf]
      %v2117 = vld [vmem:[%s1719 + $0x8c] sm:$0x1]
      %v2118 = vld [vmem:[%s1719 + $0x90] sm:$0xf]
      %v2119 = vld [vmem:[%s1719 + $0x94] sm:$0xf]
      %v2120 = vld [vmem:[%s1719 + $0x98] sm:$0x1]
      %v2121 = vld [vmem:[%s1719 + $0x9c] sm:$0xf]
      %v2122 = vld [vmem:[%s1719 + $0xa0] sm:$0xf]
      %v2123 = vld [vmem:[%s1719 + $0xa4] sm:$0x1]
      %v2124 = vld [vmem:[%s1719 + $0xa8] sm:$0xf]
      %v2125 = vld [vmem:[%s1719 + $0xac] sm:$0xf]
      %v2126 = vld [vmem:[%s1719 + $0xb0] sm:$0x1]
      %v2127 = vld [vmem:[%s1719 + $0xb4] sm:$0xf]
      %v2128 = vld [vmem:[%s1719 + $0xb8] sm:$0xf]
      %v2129 = vld [vmem:[%s1719 + $0xbc] sm:$0x1]
      %v2131 = vshrl.u32 %v2082, 16
      %v2133 = vrot.slane %v2131, 4
      %v2134 = vshll.u32 %v2082, 16
      %v2136 = vrot.slane %v2134, 5
      %v2137 = vor.u32 %v2133, %v2136
      %v2138 = vrot.slane %v2137, 4
      %v2140 = vshll.u32 %v2083, 16
      %v2142 = vrot.slane %v2140, 5
      %v2143 = vsel %vm308, %v2138, %v2142
      %v2144 = vshrl.u32 %v2083, 16
      %v2146 = vrot.slane %v2144, 4
      %v2147 = vor.u32 %v2146, %v2142
      %v2148 = vrot.slane %v2147, 4
      %v2150 = vshll.u32 %v2084, 16
      %v2152 = vrot.slane %v2150, 5
      %v2153 = vsel %vm308, %v2148, %v2152
      %v2155 = vshrl.u32 %v2085, 16
      %v2157 = vrot.slane %v2155, 4
      %v2158 = vshll.u32 %v2085, 16
      %v2160 = vrot.slane %v2158, 5
      %v2161 = vor.u32 %v2157, %v2160
      %v2162 = vrot.slane %v2161, 4
      %v2164 = vshll.u32 %v2086, 16
      %v2166 = vrot.slane %v2164, 5
      %v2167 = vsel %vm308, %v2162, %v2166
      %v2168 = vshrl.u32 %v2086, 16
      %v2170 = vrot.slane %v2168, 4
      %v2171 = vor.u32 %v2170, %v2166
      %v2172 = vrot.slane %v2171, 4
      %v2174 = vshll.u32 %v2087, 16
      %v2176 = vrot.slane %v2174, 5
      %v2177 = vsel %vm308, %v2172, %v2176
      %v2179 = vshrl.u32 %v2088, 16
      %v2181 = vrot.slane %v2179, 4
      %v2182 = vshll.u32 %v2088, 16
      %v2184 = vrot.slane %v2182, 5
      %v2185 = vor.u32 %v2181, %v2184
      %v2186 = vrot.slane %v2185, 4
      %v2188 = vshll.u32 %v2089, 16
      %v2190 = vrot.slane %v2188, 5
      %v2191 = vsel %vm308, %v2186, %v2190
      %v2192 = vshrl.u32 %v2089, 16
      %v2194 = vrot.slane %v2192, 4
      %v2195 = vor.u32 %v2194, %v2190
      %v2196 = vrot.slane %v2195, 4
      %v2198 = vshll.u32 %v2090, 16
      %v2200 = vrot.slane %v2198, 5
      %v2201 = vsel %vm308, %v2196, %v2200
      %v2203 = vshrl.u32 %v2091, 16
      %v2205 = vrot.slane %v2203, 4
      %v2206 = vshll.u32 %v2091, 16
      %v2208 = vrot.slane %v2206, 5
      %v2209 = vor.u32 %v2205, %v2208
      %v2210 = vrot.slane %v2209, 4
      %v2212 = vshll.u32 %v2092, 16
      %v2214 = vrot.slane %v2212, 5
      %v2215 = vsel %vm308, %v2210, %v2214
      %v2216 = vshrl.u32 %v2092, 16
      %v2218 = vrot.slane %v2216, 4
      %v2219 = vor.u32 %v2218, %v2214
      %v2220 = vrot.slane %v2219, 4
      %v2222 = vshll.u32 %v2093, 16
      %v2224 = vrot.slane %v2222, 5
      %v2225 = vsel %vm308, %v2220, %v2224
      %v2227 = vshrl.u32 %v2094, 16
      %v2229 = vrot.slane %v2227, 4
      %v2230 = vshll.u32 %v2094, 16
      %v2232 = vrot.slane %v2230, 5
      %v2233 = vor.u32 %v2229, %v2232
      %v2234 = vrot.slane %v2233, 4
      %v2236 = vshll.u32 %v2095, 16
      %v2238 = vrot.slane %v2236, 5
      %v2239 = vsel %vm308, %v2234, %v2238
      %v2240 = vshrl.u32 %v2095, 16
      %v2242 = vrot.slane %v2240, 4
      %v2243 = vor.u32 %v2242, %v2238
      %v2244 = vrot.slane %v2243, 4
      %v2246 = vshll.u32 %v2096, 16
      %v2248 = vrot.slane %v2246, 5
      %v2249 = vsel %vm308, %v2244, %v2248
      %v2251 = vshrl.u32 %v2097, 16
      %v2253 = vrot.slane %v2251, 4
      %v2254 = vshll.u32 %v2097, 16
      %v2256 = vrot.slane %v2254, 5
      %v2257 = vor.u32 %v2253, %v2256
      %v2258 = vrot.slane %v2257, 4
      %v2260 = vshll.u32 %v2098, 16
      %v2262 = vrot.slane %v2260, 5
      %v2263 = vsel %vm308, %v2258, %v2262
      %v2264 = vshrl.u32 %v2098, 16
      %v2266 = vrot.slane %v2264, 4
      %v2267 = vor.u32 %v2266, %v2262
      %v2268 = vrot.slane %v2267, 4
      %v2270 = vshll.u32 %v2099, 16
      %v2272 = vrot.slane %v2270, 5
      %v2273 = vsel %vm308, %v2268, %v2272
      %v2275 = vshrl.u32 %v2100, 16
      %v2277 = vrot.slane %v2275, 4
      %v2278 = vshll.u32 %v2100, 16
      %v2280 = vrot.slane %v2278, 5
      %v2281 = vor.u32 %v2277, %v2280
      %v2282 = vrot.slane %v2281, 4
      %v2284 = vshll.u32 %v2101, 16
      %v2286 = vrot.slane %v2284, 5
      %v2287 = vsel %vm308, %v2282, %v2286
      %v2288 = vshrl.u32 %v2101, 16
      %v2290 = vrot.slane %v2288, 4
      %v2291 = vor.u32 %v2290, %v2286
      %v2292 = vrot.slane %v2291, 4
      %v2294 = vshll.u32 %v2102, 16
      %v2296 = vrot.slane %v2294, 5
      %v2297 = vsel %vm308, %v2292, %v2296
      %v2299 = vshrl.u32 %v2103, 16
      %v2301 = vrot.slane %v2299, 4
      %v2302 = vshll.u32 %v2103, 16
      %v2304 = vrot.slane %v2302, 5
      %v2305 = vor.u32 %v2301, %v2304
      %v2306 = vrot.slane %v2305, 4
      %v2308 = vshll.u32 %v2104, 16
      %v2310 = vrot.slane %v2308, 5
      %v2311 = vsel %vm308, %v2306, %v2310
      %v2312 = vshrl.u32 %v2104, 16
      %v2314 = vrot.slane %v2312, 4
      %v2315 = vor.u32 %v2314, %v2310
      %v2316 = vrot.slane %v2315, 4
      %v2318 = vshll.u32 %v2105, 16
      %v2320 = vrot.slane %v2318, 5
      %v2321 = vsel %vm308, %v2316, %v2320
      %v2323 = vshrl.u32 %v2106, 16
      %v2325 = vrot.slane %v2323, 4
      %v2326 = vshll.u32 %v2106, 16
      %v2328 = vrot.slane %v2326, 5
      %v2329 = vor.u32 %v2325, %v2328
      %v2330 = vrot.slane %v2329, 4
      %v2332 = vshll.u32 %v2107, 16
      %v2334 = vrot.slane %v2332, 5
      %v2335 = vsel %vm308, %v2330, %v2334
      %v2336 = vshrl.u32 %v2107, 16
      %v2338 = vrot.slane %v2336, 4
      %v2339 = vor.u32 %v2338, %v2334
      %v2340 = vrot.slane %v2339, 4
      %v2342 = vshll.u32 %v2108, 16
      %v2344 = vrot.slane %v2342, 5
      %v2345 = vsel %vm308, %v2340, %v2344
      %v2347 = vshrl.u32 %v2109, 16
      %v2349 = vrot.slane %v2347, 4
      %v2350 = vshll.u32 %v2109, 16
      %v2352 = vrot.slane %v2350, 5
      %v2353 = vor.u32 %v2349, %v2352
      %v2354 = vrot.slane %v2353, 4
      %v2356 = vshll.u32 %v2110, 16
      %v2358 = vrot.slane %v2356, 5
      %v2359 = vsel %vm308, %v2354, %v2358
      %v2360 = vshrl.u32 %v2110, 16
      %v2362 = vrot.slane %v2360, 4
      %v2363 = vor.u32 %v2362, %v2358
      %v2364 = vrot.slane %v2363, 4
      %v2366 = vshll.u32 %v2111, 16
      %v2368 = vrot.slane %v2366, 5
      %v2369 = vsel %vm308, %v2364, %v2368
      %v2371 = vshrl.u32 %v2112, 16
      %v2373 = vrot.slane %v2371, 4
      %v2374 = vshll.u32 %v2112, 16
      %v2376 = vrot.slane %v2374, 5
      %v2377 = vor.u32 %v2373, %v2376
      %v2378 = vrot.slane %v2377, 4
      %v2380 = vshll.u32 %v2113, 16
      %v2382 = vrot.slane %v2380, 5
      %v2383 = vsel %vm308, %v2378, %v2382
      %v2384 = vshrl.u32 %v2113, 16
      %v2386 = vrot.slane %v2384, 4
      %v2387 = vor.u32 %v2386, %v2382
      %v2388 = vrot.slane %v2387, 4
      %v2390 = vshll.u32 %v2114, 16
      %v2392 = vrot.slane %v2390, 5
      %v2393 = vsel %vm308, %v2388, %v2392
      %v2395 = vshrl.u32 %v2115, 16
      %v2397 = vrot.slane %v2395, 4
      %v2398 = vshll.u32 %v2115, 16
      %v2400 = vrot.slane %v2398, 5
      %v2401 = vor.u32 %v2397, %v2400
      %v2402 = vrot.slane %v2401, 4
      %v2404 = vshll.u32 %v2116, 16
      %v2406 = vrot.slane %v2404, 5
      %v2407 = vsel %vm308, %v2402, %v2406
      %v2408 = vshrl.u32 %v2116, 16
      %v2410 = vrot.slane %v2408, 4
      %v2411 = vor.u32 %v2410, %v2406
      %v2412 = vrot.slane %v2411, 4
      %v2414 = vshll.u32 %v2117, 16
      %v2416 = vrot.slane %v2414, 5
      %v2417 = vsel %vm308, %v2412, %v2416
      %v2419 = vshrl.u32 %v2118, 16
      %v2421 = vrot.slane %v2419, 4
      %v2422 = vshll.u32 %v2118, 16
      %v2424 = vrot.slane %v2422, 5
      %v2425 = vor.u32 %v2421, %v2424
      %v2426 = vrot.slane %v2425, 4
      %v2428 = vshll.u32 %v2119, 16
      %v2430 = vrot.slane %v2428, 5
      %v2431 = vsel %vm308, %v2426, %v2430
      %v2432 = vshrl.u32 %v2119, 16
      %v2434 = vrot.slane %v2432, 4
      %v2435 = vor.u32 %v2434, %v2430
      %v2436 = vrot.slane %v2435, 4
      %v2438 = vshll.u32 %v2120, 16
      %v2440 = vrot.slane %v2438, 5
      %v2441 = vsel %vm308, %v2436, %v2440
      %v2443 = vshrl.u32 %v2121, 16
      %v2445 = vrot.slane %v2443, 4
      %v2446 = vshll.u32 %v2121, 16
      %v2448 = vrot.slane %v2446, 5
      %v2449 = vor.u32 %v2445, %v2448
      %v2450 = vrot.slane %v2449, 4
      %v2452 = vshll.u32 %v2122, 16
      %v2454 = vrot.slane %v2452, 5
      %v2455 = vsel %vm308, %v2450, %v2454
      %v2456 = vshrl.u32 %v2122, 16
      %v2458 = vrot.slane %v2456, 4
      %v2459 = vor.u32 %v2458, %v2454
      %v2460 = vrot.slane %v2459, 4
      %v2462 = vshll.u32 %v2123, 16
      %v2464 = vrot.slane %v2462, 5
      %v2465 = vsel %vm308, %v2460, %v2464
      %v2467 = vshrl.u32 %v2124, 16
      %v2469 = vrot.slane %v2467, 4
      %v2470 = vshll.u32 %v2124, 16
      %v2472 = vrot.slane %v2470, 5
      %v2473 = vor.u32 %v2469, %v2472
      %v2474 = vrot.slane %v2473, 4
      %v2476 = vshll.u32 %v2125, 16
      %v2478 = vrot.slane %v2476, 5
      %v2479 = vsel %vm308, %v2474, %v2478
      %v2480 = vshrl.u32 %v2125, 16
      %v2482 = vrot.slane %v2480, 4
      %v2483 = vor.u32 %v2482, %v2478
      %v2484 = vrot.slane %v2483, 4
      %v2486 = vshll.u32 %v2126, 16
      %v2488 = vrot.slane %v2486, 5
      %v2489 = vsel %vm308, %v2484, %v2488
      %v2491 = vshrl.u32 %v2127, 16
      %v2493 = vrot.slane %v2491, 4
      %v2494 = vshll.u32 %v2127, 16
      %v2496 = vrot.slane %v2494, 5
      %v2497 = vor.u32 %v2493, %v2496
      %v2498 = vrot.slane %v2497, 4
      %v2500 = vshll.u32 %v2128, 16
      %v2502 = vrot.slane %v2500, 5
      %v2503 = vsel %vm308, %v2498, %v2502
      %v2504 = vshrl.u32 %v2128, 16
      %v2506 = vrot.slane %v2504, 4
      %v2507 = vor.u32 %v2506, %v2502
      %v2508 = vrot.slane %v2507, 4
      %v2510 = vshll.u32 %v2129, 16
      %v2512 = vrot.slane %v2510, 5
      %v2513 = vsel %vm308, %v2508, %v2512
      %s2514 = scalar_lea.vmem %s1, 32
      %v2515 = vld [vmem:[%s2514] sm:$0xf]
      %v2516 = vld [vmem:[%s2514 + $0x4] sm:$0xf]
      %v2517 = vunpack.c.l.b16 %v2143
      %v2518 = vunpack.c.l.b16 %v2153
      %v2519 = vunpack.c.l.b16 %v2167
      %v2520 = vunpack.c.l.b16 %v2177
      %v2521 = vunpack.c.l.b16 %v2191
      %v2522 = vunpack.c.l.b16 %v2201
      %v2523 = vunpack.c.l.b16 %v2215
      %v2524 = vunpack.c.l.b16 %v2225
      %v2525 = vunpack.c.l.b16 %v2239
      %v2526 = vunpack.c.l.b16 %v2249
      %v2527 = vunpack.c.l.b16 %v2263
      %v2528 = vunpack.c.l.b16 %v2273
      %v2529 = vunpack.c.l.b16 %v2287
      %v2530 = vunpack.c.l.b16 %v2297
      %v2531 = vunpack.c.l.b16 %v2311
      %v2532 = vunpack.c.l.b16 %v2321
      %v2533 = vunpack.c.l.b16 %v2335
      %v2534 = vunpack.c.l.b16 %v2345
      %v2535 = vunpack.c.l.b16 %v2359
      %v2536 = vunpack.c.l.b16 %v2369
      %v2537 = vunpack.c.l.b16 %v2383
      %v2538 = vunpack.c.l.b16 %v2393
      %v2539 = vunpack.c.l.b16 %v2407
      %v2540 = vunpack.c.l.b16 %v2417
      %v2541 = vunpack.c.l.b16 %v2431
      %v2542 = vunpack.c.l.b16 %v2441
      %v2543 = vunpack.c.l.b16 %v2455
      %v2544 = vunpack.c.l.b16 %v2465
      %v2545 = vunpack.c.l.b16 %v2479
      %v2546 = vunpack.c.l.b16 %v2489
      %v2547 = vunpack.c.l.b16 %v2503
      %v2548 = vunpack.c.l.b16 %v2513
      %v2549 = vpack.c.b16 %v2518, %v2517
      %v2550 = vpack.c.b16 %v2520, %v2519
      %v2551 = vpack.c.b16 %v2522, %v2521
      %v2552 = vpack.c.b16 %v2524, %v2523
      %v2553 = vpack.c.b16 %v2526, %v2525
      %v2554 = vpack.c.b16 %v2528, %v2527
      %v2555 = vpack.c.b16 %v2530, %v2529
      %v2556 = vpack.c.b16 %v2532, %v2531
      %v2557 = vpack.c.b16 %v2534, %v2533
      %v2558 = vpack.c.b16 %v2536, %v2535
      %v2559 = vpack.c.b16 %v2538, %v2537
      %v2560 = vpack.c.b16 %v2540, %v2539
      %v2561 = vpack.c.b16 %v2542, %v2541
      %v2562 = vpack.c.b16 %v2544, %v2543
      %v2563 = vpack.c.b16 %v2546, %v2545
      %v2564 = vpack.c.b16 %v2548, %v2547
      %v2567 = vunpack.c.l.b16 %v2515
      %v2568 = vunpack.c.l.b16 %v2516
      %v2569 = vpack.c.b16 %v2568, %v2567
      %v2572 = vsel %vm750, %v2549, 0
      %v2575 = vsel %vm750, %v2550, 0
      %v2578 = vsel %vm750, %v2551, 0
      %v2581 = vsel %vm750, %v2552, 0
      %v2584 = vsel %vm750, %v2553, 0
      %v2587 = vsel %vm750, %v2554, 0
      %v2590 = vsel %vm750, %v2555, 0
      %v2593 = vsel %vm750, %v2556, 0
      %v2596 = vsel %vm750, %v2557, 0
      %v2599 = vsel %vm750, %v2558, 0
      %v2602 = vsel %vm750, %v2559, 0
      %v2605 = vsel %vm750, %v2560, 0
      %v2608 = vsel %vm750, %v2561, 0
      %v2611 = vsel %vm750, %v2562, 0
      %v2614 = vsel %vm750, %v2563, 0
      %v2617 = vsel %vm750, %v2564, 0
      %2619 = vmatprep.subr.bf16.mxu0 0
      %2620 = vmatpush1.bf16.msra.mxu0 %v2569
      %2621 = vmatprep.subr.bf16.mxu0 0
      %2622 = vmatpush1.bf16.msra.mxu0 0
      %2623 = vmatprep.subr.bf16.mxu0 0
      %2624 = vmatpush1.bf16.msra.mxu0 0
      %2625 = vmatprep.subr.bf16.mxu0 0
      %2626 = vmatpush1.bf16.msra.mxu0 0
      %2627 = vmatprep.subr.bf16.mxu0 0
      %2628 = vmatpush1.bf16.msra.mxu0 0
      %2629 = vmatprep.subr.bf16.mxu0 0
      %2630 = vmatpush1.bf16.msra.mxu0 0
      %2631 = vmatprep.subr.bf16.mxu0 0
      %2632 = vmatpush1.bf16.msra.mxu0 0
      %2633 = vmatprep.subr.bf16.mxu0 0
      %2634 = vmatpush1.bf16.msra.mxu0 0
      %2635 = vmatprep.subr.bf16.mxu0 0
      %2636 = vmatpush1.bf16.msra.mxu0 0
      %2637 = vmatprep.subr.bf16.mxu0 0
      %2638 = vmatpush1.bf16.msra.mxu0 0
      %2639 = vmatprep.subr.bf16.mxu0 0
      %2640 = vmatpush1.bf16.msra.mxu0 0
      %2641 = vmatprep.subr.bf16.mxu0 0
      %2642 = vmatpush1.bf16.msra.mxu0 0
      %2643 = vmatprep.subr.bf16.mxu0 0
      %2644 = vmatpush1.bf16.msra.mxu0 0
      %2645 = vmatprep.subr.bf16.mxu0 0
      %2646 = vmatpush1.bf16.msra.mxu0 0
      %2647 = vmatprep.subr.bf16.mxu0 0
      %2648 = vmatpush1.bf16.msra.mxu0 0
      %2649 = vmatprep.subr.bf16.mxu0 0
      %2650 = vmatpush1.bf16.msra.mxu0 0
      %2651 = vmatprep.mubr.bf16.mxu0 0
      %2652 = vmatmul.mubr.bf16.gmra.mrb[0].mxu0 %v2572
      %v2653 = vpop.f32.mrb[0].mxu0
      %v2654 = vadd.f32 0.0, %v2653
      %v2655 = vpop.f32.mrb[0].mxu0
      %v2656 = vpop.f32.mrb[0].mxu0
      %v2657 = vadd.f32 0.0, %v2656
      %v2658 = vpop.f32.mrb[0].mxu0
      %2659 = vmatprep.mubr.bf16.mxu0 0
      %2660 = vmatmul.mubr.bf16.gmra.mrb[0].mxu0 %v2575
      %v2661 = vpop.f32.mrb[0].mxu0
      %v2662 = vadd.f32 0.0, %v2661
      %v2663 = vpop.f32.mrb[0].mxu0
      %v2664 = vpop.f32.mrb[0].mxu0
      %v2665 = vadd.f32 0.0, %v2664
      %v2666 = vpop.f32.mrb[0].mxu0
      %2667 = vmatprep.mubr.bf16.mxu0 0
      %2668 = vmatmul.mubr.bf16.gmra.mrb[0].mxu0 %v2578
      %v2669 = vpop.f32.mrb[0].mxu0
      %v2670 = vadd.f32 0.0, %v2669
      %v2671 = vpop.f32.mrb[0].mxu0
      %v2672 = vpop.f32.mrb[0].mxu0
      %v2673 = vadd.f32 0.0, %v2672
      %v2674 = vpop.f32.mrb[0].mxu0
      %2675 = vmatprep.mubr.bf16.mxu0 0
      %2676 = vmatmul.mubr.bf16.gmra.mrb[0].mxu0 %v2581
      %v2677 = vpop.f32.mrb[0].mxu0
      %v2678 = vadd.f32 0.0, %v2677
      %v2679 = vpop.f32.mrb[0].mxu0
      %v2680 = vpop.f32.mrb[0].mxu0
      %v2681 = vadd.f32 0.0, %v2680
      %v2682 = vpop.f32.mrb[0].mxu0
      %2683 = vmatprep.mubr.bf16.mxu0 0
      %2684 = vmatmul.mubr.bf16.gmra.mrb[0].mxu0 %v2584
      %v2685 = vpop.f32.mrb[0].mxu0
      %v2686 = vadd.f32 0.0, %v2685
      %v2687 = vpop.f32.mrb[0].mxu0
      %v2688 = vpop.f32.mrb[0].mxu0
      %v2689 = vadd.f32 0.0, %v2688
      %v2690 = vpop.f32.mrb[0].mxu0
      %2691 = vmatprep.mubr.bf16.mxu0 0
      %2692 = vmatmul.mubr.bf16.gmra.mrb[0].mxu0 %v2587
      %v2693 = vpop.f32.mrb[0].mxu0
      %v2694 = vadd.f32 0.0, %v2693
      %v2695 = vpop.f32.mrb[0].mxu0
      %v2696 = vpop.f32.mrb[0].mxu0
      %v2697 = vadd.f32 0.0, %v2696
      %v2698 = vpop.f32.mrb[0].mxu0
      %2699 = vmatprep.mubr.bf16.mxu0 0
      %2700 = vmatmul.mubr.bf16.gmra.mrb[0].mxu0 %v2590
      %v2701 = vpop.f32.mrb[0].mxu0
      %v2702 = vadd.f32 0.0, %v2701
      %v2703 = vpop.f32.mrb[0].mxu0
      %v2704 = vpop.f32.mrb[0].mxu0
      %v2705 = vadd.f32 0.0, %v2704
      %v2706 = vpop.f32.mrb[0].mxu0
      %2707 = vmatprep.mubr.bf16.mxu0 0
      %2708 = vmatmul.mubr.bf16.gmra.mrb[0].mxu0 %v2593
      %v2709 = vpop.f32.mrb[0].mxu0
      %v2710 = vadd.f32 0.0, %v2709
      %v2711 = vpop.f32.mrb[0].mxu0
      %v2712 = vpop.f32.mrb[0].mxu0
      %v2713 = vadd.f32 0.0, %v2712
      %v2714 = vpop.f32.mrb[0].mxu0
      %2715 = vmatprep.mubr.bf16.mxu0 0
      %2716 = vmatmul.mubr.bf16.gmra.mrb[0].mxu0 %v2596
      %v2717 = vpop.f32.mrb[0].mxu0
      %v2718 = vadd.f32 0.0, %v2717
      %v2719 = vpop.f32.mrb[0].mxu0
      %v2720 = vpop.f32.mrb[0].mxu0
      %v2721 = vadd.f32 0.0, %v2720
      %v2722 = vpop.f32.mrb[0].mxu0
      %2723 = vmatprep.mubr.bf16.mxu0 0
      %2724 = vmatmul.mubr.bf16.gmra.mrb[0].mxu0 %v2599
      %v2725 = vpop.f32.mrb[0].mxu0
      %v2726 = vadd.f32 0.0, %v2725
      %v2727 = vpop.f32.mrb[0].mxu0
      %v2728 = vpop.f32.mrb[0].mxu0
      %v2729 = vadd.f32 0.0, %v2728
      %v2730 = vpop.f32.mrb[0].mxu0
      %2731 = vmatprep.mubr.bf16.mxu0 0
      %2732 = vmatmul.mubr.bf16.gmra.mrb[0].mxu0 %v2602
      %v2733 = vpop.f32.mrb[0].mxu0
      %v2734 = vadd.f32 0.0, %v2733
      %v2735 = vpop.f32.mrb[0].mxu0
      %v2736 = vpop.f32.mrb[0].mxu0
      %v2737 = vadd.f32 0.0, %v2736
      %v2738 = vpop.f32.mrb[0].mxu0
      %2739 = vmatprep.mubr.bf16.mxu0 0
      %2740 = vmatmul.mubr.bf16.gmra.mrb[0].mxu0 %v2605
      %v2741 = vpop.f32.mrb[0].mxu0
      %v2742 = vadd.f32 0.0, %v2741
      %v2743 = vpop.f32.mrb[0].mxu0
      %v2744 = vpop.f32.mrb[0].mxu0
      %v2745 = vadd.f32 0.0, %v2744
      %v2746 = vpop.f32.mrb[0].mxu0
      %2747 = vmatprep.mubr.bf16.mxu0 0
      %2748 = vmatmul.mubr.bf16.gmra.mrb[0].mxu0 %v2608
      %v2749 = vpop.f32.mrb[0].mxu0
      %v2750 = vadd.f32 0.0, %v2749
      %v2751 = vpop.f32.mrb[0].mxu0
      %v2752 = vpop.f32.mrb[0].mxu0
      %v2753 = vadd.f32 0.0, %v2752
      %v2754 = vpop.f32.mrb[0].mxu0
      %2755 = vmatprep.mubr.bf16.mxu0 0
      %2756 = vmatmul.mubr.bf16.gmra.mrb[0].mxu0 %v2611
      %v2757 = vpop.f32.mrb[0].mxu0
      %v2758 = vadd.f32 0.0, %v2757
      %v2759 = vpop.f32.mrb[0].mxu0
      %v2760 = vpop.f32.mrb[0].mxu0
      %v2761 = vadd.f32 0.0, %v2760
      %v2762 = vpop.f32.mrb[0].mxu0
      %2763 = vmatprep.mubr.bf16.mxu0 0
      %2764 = vmatmul.mubr.bf16.gmra.mrb[0].mxu0 %v2614
      %v2765 = vpop.f32.mrb[0].mxu0
      %v2766 = vadd.f32 0.0, %v2765
      %v2767 = vpop.f32.mrb[0].mxu0
      %v2768 = vpop.f32.mrb[0].mxu0
      %v2769 = vadd.f32 0.0, %v2768
      %v2770 = vpop.f32.mrb[0].mxu0
      %2771 = vmatprep.mubr.bf16.mxu0 0
      %2772 = vmatmul.mubr.bf16.gmra.mrb[0].mxu0 %v2617
      %v2773 = vpop.f32.mrb[0].mxu0
      %v2774 = vadd.f32 0.0, %v2773
      %v2775 = vpop.f32.mrb[0].mxu0
      %v2776 = vpop.f32.mrb[0].mxu0
      %v2777 = vadd.f32 0.0, %v2776
      %v2778 = vpop.f32.mrb[0].mxu0
      %2779 = vdwg.mxu0
      %v2780 = vadd.f32 %v2050, %v2654
      %v2781 = vadd.f32 %v2051, %v2657
      %v2782 = vadd.f32 %v2052, %v2662
      %v2783 = vadd.f32 %v2053, %v2665
      %v2784 = vadd.f32 %v2054, %v2670
      %v2785 = vadd.f32 %v2055, %v2673
      %v2786 = vadd.f32 %v2056, %v2678
      %v2787 = vadd.f32 %v2057, %v2681
      %v2788 = vadd.f32 %v2058, %v2686
      %v2789 = vadd.f32 %v2059, %v2689
      %v2790 = vadd.f32 %v2060, %v2694
      %v2791 = vadd.f32 %v2061, %v2697
      %v2792 = vadd.f32 %v2062, %v2702
      %v2793 = vadd.f32 %v2063, %v2705
      %v2794 = vadd.f32 %v2064, %v2710
      %v2795 = vadd.f32 %v2065, %v2713
      %v2796 = vadd.f32 %v2066, %v2718
      %v2797 = vadd.f32 %v2067, %v2721
      %v2798 = vadd.f32 %v2068, %v2726
      %v2799 = vadd.f32 %v2069, %v2729
      %v2800 = vadd.f32 %v2070, %v2734
      %v2801 = vadd.f32 %v2071, %v2737
      %v2802 = vadd.f32 %v2072, %v2742
      %v2803 = vadd.f32 %v2073, %v2745
      %v2804 = vadd.f32 %v2074, %v2750
      %v2805 = vadd.f32 %v2075, %v2753
      %v2806 = vadd.f32 %v2076, %v2758
      %v2807 = vadd.f32 %v2077, %v2761
      %v2808 = vadd.f32 %v2078, %v2766
      %v2809 = vadd.f32 %v2079, %v2769
      %v2810 = vadd.f32 %v2080, %v2774
      %v2811 = vadd.f32 %v2081, %v2777
      %v2812 = vld [vmem:[%s1719] sm:$0xe]
      %v2813 = vld [vmem:[%s1719 + $0xc] sm:$0xe]
      %v2814 = vld [vmem:[%s1719 + $0x18] sm:$0xe]
      %v2815 = vld [vmem:[%s1719 + $0x24] sm:$0xe]
      %v2816 = vld [vmem:[%s1719 + $0x30] sm:$0xe]
      %v2817 = vld [vmem:[%s1719 + $0x3c] sm:$0xe]
      %v2818 = vld [vmem:[%s1719 + $0x48] sm:$0xe]
      %v2819 = vld [vmem:[%s1719 + $0x54] sm:$0xe]
      %v2820 = vld [vmem:[%s1719 + $0x60] sm:$0xe]
      %v2821 = vld [vmem:[%s1719 + $0x6c] sm:$0xe]
      %v2822 = vld [vmem:[%s1719 + $0x78] sm:$0xe]
      %v2823 = vld [vmem:[%s1719 + $0x84] sm:$0xe]
      %v2824 = vld [vmem:[%s1719 + $0x90] sm:$0xe]
      %v2825 = vld [vmem:[%s1719 + $0x9c] sm:$0xe]
      %v2826 = vld [vmem:[%s1719 + $0xa8] sm:$0xe]
      %v2827 = vld [vmem:[%s1719 + $0xb4] sm:$0xe]
      %v2876 = vrot.slane %v2812, 5
      %v2877 = vrot.slane %v2876, 4
      %v2878 = vrot.slane %v2083, 5
      %v2879 = vsel %vm1305, %v2877, %v2878
      %v2880 = vrot.slane %v2878, 4
      %v2881 = vrot.slane %v2084, 5
      %v2882 = vsel %vm1305, %v2880, %v2881
      %v2883 = vrot.slane %v2813, 5
      %v2884 = vrot.slane %v2883, 4
      %v2885 = vrot.slane %v2086, 5
      %v2886 = vsel %vm1305, %v2884, %v2885
      %v2887 = vrot.slane %v2885, 4
      %v2888 = vrot.slane %v2087, 5
      %v2889 = vsel %vm1305, %v2887, %v2888
      %v2890 = vrot.slane %v2814, 5
      %v2891 = vrot.slane %v2890, 4
      %v2892 = vrot.slane %v2089, 5
      %v2893 = vsel %vm1305, %v2891, %v2892
      %v2894 = vrot.slane %v2892, 4
      %v2895 = vrot.slane %v2090, 5
      %v2896 = vsel %vm1305, %v2894, %v2895
      %v2897 = vrot.slane %v2815, 5
      %v2898 = vrot.slane %v2897, 4
      %v2899 = vrot.slane %v2092, 5
      %v2900 = vsel %vm1305, %v2898, %v2899
      %v2901 = vrot.slane %v2899, 4
      %v2902 = vrot.slane %v2093, 5
      %v2903 = vsel %vm1305, %v2901, %v2902
      %v2904 = vrot.slane %v2816, 5
      %v2905 = vrot.slane %v2904, 4
      %v2906 = vrot.slane %v2095, 5
      %v2907 = vsel %vm1305, %v2905, %v2906
      %v2908 = vrot.slane %v2906, 4
      %v2909 = vrot.slane %v2096, 5
      %v2910 = vsel %vm1305, %v2908, %v2909
      %v2911 = vrot.slane %v2817, 5
      %v2912 = vrot.slane %v2911, 4
      %v2913 = vrot.slane %v2098, 5
      %v2914 = vsel %vm1305, %v2912, %v2913
      %v2915 = vrot.slane %v2913, 4
      %v2916 = vrot.slane %v2099, 5
      %v2917 = vsel %vm1305, %v2915, %v2916
      %v2918 = vrot.slane %v2818, 5
      %v2919 = vrot.slane %v2918, 4
      %v2920 = vrot.slane %v2101, 5
      %v2921 = vsel %vm1305, %v2919, %v2920
      %v2922 = vrot.slane %v2920, 4
      %v2923 = vrot.slane %v2102, 5
      %v2924 = vsel %vm1305, %v2922, %v2923
      %v2925 = vrot.slane %v2819, 5
      %v2926 = vrot.slane %v2925, 4
      %v2927 = vrot.slane %v2104, 5
      %v2928 = vsel %vm1305, %v2926, %v2927
      %v2929 = vrot.slane %v2927, 4
      %v2930 = vrot.slane %v2105, 5
      %v2931 = vsel %vm1305, %v2929, %v2930
      %v2932 = vrot.slane %v2820, 5
      %v2933 = vrot.slane %v2932, 4
      %v2934 = vrot.slane %v2107, 5
      %v2935 = vsel %vm1305, %v2933, %v2934
      %v2936 = vrot.slane %v2934, 4
      %v2937 = vrot.slane %v2108, 5
      %v2938 = vsel %vm1305, %v2936, %v2937
      %v2939 = vrot.slane %v2821, 5
      %v2940 = vrot.slane %v2939, 4
      %v2941 = vrot.slane %v2110, 5
      %v2942 = vsel %vm1305, %v2940, %v2941
      %v2943 = vrot.slane %v2941, 4
      %v2944 = vrot.slane %v2111, 5
      %v2945 = vsel %vm1305, %v2943, %v2944
      %v2946 = vrot.slane %v2822, 5
      %v2947 = vrot.slane %v2946, 4
      %v2948 = vrot.slane %v2113, 5
      %v2949 = vsel %vm1305, %v2947, %v2948
      %v2950 = vrot.slane %v2948, 4
      %v2951 = vrot.slane %v2114, 5
      %v2952 = vsel %vm1305, %v2950, %v2951
      %v2953 = vrot.slane %v2823, 5
      %v2954 = vrot.slane %v2953, 4
      %v2955 = vrot.slane %v2116, 5
      %v2956 = vsel %vm1305, %v2954, %v2955
      %v2957 = vrot.slane %v2955, 4
      %v2958 = vrot.slane %v2117, 5
      %v2959 = vsel %vm1305, %v2957, %v2958
      %v2960 = vrot.slane %v2824, 5
      %v2961 = vrot.slane %v2960, 4
      %v2962 = vrot.slane %v2119, 5
      %v2963 = vsel %vm1305, %v2961, %v2962
      %v2964 = vrot.slane %v2962, 4
      %v2965 = vrot.slane %v2120, 5
      %v2966 = vsel %vm1305, %v2964, %v2965
      %v2967 = vrot.slane %v2825, 5
      %v2968 = vrot.slane %v2967, 4
      %v2969 = vrot.slane %v2122, 5
      %v2970 = vsel %vm1305, %v2968, %v2969
      %v2971 = vrot.slane %v2969, 4
      %v2972 = vrot.slane %v2123, 5
      %v2973 = vsel %vm1305, %v2971, %v2972
      %v2974 = vrot.slane %v2826, 5
      %v2975 = vrot.slane %v2974, 4
      %v2976 = vrot.slane %v2125, 5
      %v2977 = vsel %vm1305, %v2975, %v2976
      %v2978 = vrot.slane %v2976, 4
      %v2979 = vrot.slane %v2126, 5
      %v2980 = vsel %vm1305, %v2978, %v2979
      %v2981 = vrot.slane %v2827, 5
      %v2982 = vrot.slane %v2981, 4
      %v2983 = vrot.slane %v2128, 5
      %v2984 = vsel %vm1305, %v2982, %v2983
      %v2985 = vrot.slane %v2983, 4
      %v2986 = vrot.slane %v2129, 5
      %v2987 = vsel %vm1305, %v2985, %v2986
      %s2988 = scalar_lea.vmem %s1, 40
      %v2989 = vld [vmem:[%s2988] sm:$0xf]
      %v2990 = vld [vmem:[%s2988 + $0x4] sm:$0xf]
      %v2991 = vunpack.c.l.b16 %v2879
      %v2992 = vunpack.c.l.b16 %v2882
      %v2993 = vunpack.c.l.b16 %v2886
      %v2994 = vunpack.c.l.b16 %v2889
      %v2995 = vunpack.c.l.b16 %v2893
      %v2996 = vunpack.c.l.b16 %v2896
      %v2997 = vunpack.c.l.b16 %v2900
      %v2998 = vunpack.c.l.b16 %v2903
      %v2999 = vunpack.c.l.b16 %v2907
      %v3000 = vunpack.c.l.b16 %v2910
      %v3001 = vunpack.c.l.b16 %v2914
      %v3002 = vunpack.c.l.b16 %v2917
      %v3003 = vunpack.c.l.b16 %v2921
      %v3004 = vunpack.c.l.b16 %v2924
      %v3005 = vunpack.c.l.b16 %v2928
      %v3006 = vunpack.c.l.b16 %v2931
      %v3007 = vunpack.c.l.b16 %v2935
      %v3008 = vunpack.c.l.b16 %v2938
      %v3009 = vunpack.c.l.b16 %v2942
      %v3010 = vunpack.c.l.b16 %v2945
      %v3011 = vunpack.c.l.b16 %v2949
      %v3012 = vunpack.c.l.b16 %v2952
      %v3013 = vunpack.c.l.b16 %v2956
      %v3014 = vunpack.c.l.b16 %v2959
      %v3015 = vunpack.c.l.b16 %v2963
      %v3016 = vunpack.c.l.b16 %v2966
      %v3017 = vunpack.c.l.b16 %v2970
      %v3018 = vunpack.c.l.b16 %v2973
      %v3019 = vunpack.c.l.b16 %v2977
      %v3020 = vunpack.c.l.b16 %v2980
      %v3021 = vunpack.c.l.b16 %v2984
      %v3022 = vunpack.c.l.b16 %v2987
      %v3023 = vpack.c.b16 %v2992, %v2991
      %v3024 = vpack.c.b16 %v2994, %v2993
      %v3025 = vpack.c.b16 %v2996, %v2995
      %v3026 = vpack.c.b16 %v2998, %v2997
      %v3027 = vpack.c.b16 %v3000, %v2999
      %v3028 = vpack.c.b16 %v3002, %v3001
      %v3029 = vpack.c.b16 %v3004, %v3003
      %v3030 = vpack.c.b16 %v3006, %v3005
      %v3031 = vpack.c.b16 %v3008, %v3007
      %v3032 = vpack.c.b16 %v3010, %v3009
      %v3033 = vpack.c.b16 %v3012, %v3011
      %v3034 = vpack.c.b16 %v3014, %v3013
      %v3035 = vpack.c.b16 %v3016, %v3015
      %v3036 = vpack.c.b16 %v3018, %v3017
      %v3037 = vpack.c.b16 %v3020, %v3019
      %v3038 = vpack.c.b16 %v3022, %v3021
      %v3041 = vunpack.c.l.b16 %v2989
      %v3042 = vunpack.c.l.b16 %v2990
      %v3043 = vpack.c.b16 %v3042, %v3041
      %v3046 = vsel %vm750, %v3023, 0
      %v3049 = vsel %vm750, %v3024, 0
      %v3052 = vsel %vm750, %v3025, 0
      %v3055 = vsel %vm750, %v3026, 0
      %v3058 = vsel %vm750, %v3027, 0
      %v3061 = vsel %vm750, %v3028, 0
      %v3064 = vsel %vm750, %v3029, 0
      %v3067 = vsel %vm750, %v3030, 0
      %v3070 = vsel %vm750, %v3031, 0
      %v3073 = vsel %vm750, %v3032, 0
      %v3076 = vsel %vm750, %v3033, 0
      %v3079 = vsel %vm750, %v3034, 0
      %v3082 = vsel %vm750, %v3035, 0
      %v3085 = vsel %vm750, %v3036, 0
      %v3088 = vsel %vm750, %v3037, 0
      %v3091 = vsel %vm750, %v3038, 0
      %3093 = vmatprep.subr.bf16.mxu0 0
      %3094 = vmatpush1.bf16.msra.mxu0 %v3043
      %3095 = vmatprep.subr.bf16.mxu0 0
      %3096 = vmatpush1.bf16.msra.mxu0 0
      %3097 = vmatprep.subr.bf16.mxu0 0
      %3098 = vmatpush1.bf16.msra.mxu0 0
      %3099 = vmatprep.subr.bf16.mxu0 0
      %3100 = vmatpush1.bf16.msra.mxu0 0
      %3101 = vmatprep.subr.bf16.mxu0 0
      %3102 = vmatpush1.bf16.msra.mxu0 0
      %3103 = vmatprep.subr.bf16.mxu0 0
      %3104 = vmatpush1.bf16.msra.mxu0 0
      %3105 = vmatprep.subr.bf16.mxu0 0
      %3106 = vmatpush1.bf16.msra.mxu0 0
      %3107 = vmatprep.subr.bf16.mxu0 0
      %3108 = vmatpush1.bf16.msra.mxu0 0
      %3109 = vmatprep.subr.bf16.mxu0 0
      %3110 = vmatpush1.bf16.msra.mxu0 0
      %3111 = vmatprep.subr.bf16.mxu0 0
      %3112 = vmatpush1.bf16.msra.mxu0 0
      %3113 = vmatprep.subr.bf16.mxu0 0
      %3114 = vmatpush1.bf16.msra.mxu0 0
      %3115 = vmatprep.subr.bf16.mxu0 0
      %3116 = vmatpush1.bf16.msra.mxu0 0
      %3117 = vmatprep.subr.bf16.mxu0 0
      %3118 = vmatpush1.bf16.msra.mxu0 0
      %3119 = vmatprep.subr.bf16.mxu0 0
      %3120 = vmatpush1.bf16.msra.mxu0 0
      %3121 = vmatprep.subr.bf16.mxu0 0
      %3122 = vmatpush1.bf16.msra.mxu0 0
      %3123 = vmatprep.subr.bf16.mxu0 0
      %3124 = vmatpush1.bf16.msra.mxu0 0
      %3125 = vmatprep.mubr.bf16.mxu0 0
      %3126 = vmatmul.mubr.bf16.gmra.mrb[0].mxu0 %v3046
      %v3127 = vpop.f32.mrb[0].mxu0
      %v3128 = vadd.f32 0.0, %v3127
      %v3129 = vpop.f32.mrb[0].mxu0
      %v3130 = vpop.f32.mrb[0].mxu0
      %v3131 = vadd.f32 0.0, %v3130
      %v3132 = vpop.f32.mrb[0].mxu0
      %3133 = vmatprep.mubr.bf16.mxu0 0
      %3134 = vmatmul.mubr.bf16.gmra.mrb[0].mxu0 %v3049
      %v3135 = vpop.f32.mrb[0].mxu0
      %v3136 = vadd.f32 0.0, %v3135
      %v3137 = vpop.f32.mrb[0].mxu0
      %v3138 = vpop.f32.mrb[0].mxu0
      %v3139 = vadd.f32 0.0, %v3138
      %v3140 = vpop.f32.mrb[0].mxu0
      %3141 = vmatprep.mubr.bf16.mxu0 0
      %3142 = vmatmul.mubr.bf16.gmra.mrb[0].mxu0 %v3052
      %v3143 = vpop.f32.mrb[0].mxu0
      %v3144 = vadd.f32 0.0, %v3143
      %v3145 = vpop.f32.mrb[0].mxu0
      %v3146 = vpop.f32.mrb[0].mxu0
      %v3147 = vadd.f32 0.0, %v3146
      %v3148 = vpop.f32.mrb[0].mxu0
      %3149 = vmatprep.mubr.bf16.mxu0 0
      %3150 = vmatmul.mubr.bf16.gmra.mrb[0].mxu0 %v3055
      %v3151 = vpop.f32.mrb[0].mxu0
      %v3152 = vadd.f32 0.0, %v3151
      %v3153 = vpop.f32.mrb[0].mxu0
      %v3154 = vpop.f32.mrb[0].mxu0
      %v3155 = vadd.f32 0.0, %v3154
      %v3156 = vpop.f32.mrb[0].mxu0
      %3157 = vmatprep.mubr.bf16.mxu0 0
      %3158 = vmatmul.mubr.bf16.gmra.mrb[0].mxu0 %v3058
      %v3159 = vpop.f32.mrb[0].mxu0
      %v3160 = vadd.f32 0.0, %v3159
      %v3161 = vpop.f32.mrb[0].mxu0
      %v3162 = vpop.f32.mrb[0].mxu0
      %v3163 = vadd.f32 0.0, %v3162
      %v3164 = vpop.f32.mrb[0].mxu0
      %3165 = vmatprep.mubr.bf16.mxu0 0
      %3166 = vmatmul.mubr.bf16.gmra.mrb[0].mxu0 %v3061
      %v3167 = vpop.f32.mrb[0].mxu0
      %v3168 = vadd.f32 0.0, %v3167
      %v3169 = vpop.f32.mrb[0].mxu0
      %v3170 = vpop.f32.mrb[0].mxu0
      %v3171 = vadd.f32 0.0, %v3170
      %v3172 = vpop.f32.mrb[0].mxu0
      %3173 = vmatprep.mubr.bf16.mxu0 0
      %3174 = vmatmul.mubr.bf16.gmra.mrb[0].mxu0 %v3064
      %v3175 = vpop.f32.mrb[0].mxu0
      %v3176 = vadd.f32 0.0, %v3175
      %v3177 = vpop.f32.mrb[0].mxu0
      %v3178 = vpop.f32.mrb[0].mxu0
      %v3179 = vadd.f32 0.0, %v3178
      %v3180 = vpop.f32.mrb[0].mxu0
      %3181 = vmatprep.mubr.bf16.mxu0 0
      %3182 = vmatmul.mubr.bf16.gmra.mrb[0].mxu0 %v3067
      %v3183 = vpop.f32.mrb[0].mxu0
      %v3184 = vadd.f32 0.0, %v3183
      %v3185 = vpop.f32.mrb[0].mxu0
      %v3186 = vpop.f32.mrb[0].mxu0
      %v3187 = vadd.f32 0.0, %v3186
      %v3188 = vpop.f32.mrb[0].mxu0
      %3189 = vmatprep.mubr.bf16.mxu0 0
      %3190 = vmatmul.mubr.bf16.gmra.mrb[0].mxu0 %v3070
      %v3191 = vpop.f32.mrb[0].mxu0
      %v3192 = vadd.f32 0.0, %v3191
      %v3193 = vpop.f32.mrb[0].mxu0
      %v3194 = vpop.f32.mrb[0].mxu0
      %v3195 = vadd.f32 0.0, %v3194
      %v3196 = vpop.f32.mrb[0].mxu0
      %3197 = vmatprep.mubr.bf16.mxu0 0
      %3198 = vmatmul.mubr.bf16.gmra.mrb[0].mxu0 %v3073
      %v3199 = vpop.f32.mrb[0].mxu0
      %v3200 = vadd.f32 0.0, %v3199
      %v3201 = vpop.f32.mrb[0].mxu0
      %v3202 = vpop.f32.mrb[0].mxu0
      %v3203 = vadd.f32 0.0, %v3202
      %v3204 = vpop.f32.mrb[0].mxu0
      %3205 = vmatprep.mubr.bf16.mxu0 0
      %3206 = vmatmul.mubr.bf16.gmra.mrb[0].mxu0 %v3076
      %v3207 = vpop.f32.mrb[0].mxu0
      %v3208 = vadd.f32 0.0, %v3207
      %v3209 = vpop.f32.mrb[0].mxu0
      %v3210 = vpop.f32.mrb[0].mxu0
      %v3211 = vadd.f32 0.0, %v3210
      %v3212 = vpop.f32.mrb[0].mxu0
      %3213 = vmatprep.mubr.bf16.mxu0 0
      %3214 = vmatmul.mubr.bf16.gmra.mrb[0].mxu0 %v3079
      %v3215 = vpop.f32.mrb[0].mxu0
      %v3216 = vadd.f32 0.0, %v3215
      %v3217 = vpop.f32.mrb[0].mxu0
      %v3218 = vpop.f32.mrb[0].mxu0
      %v3219 = vadd.f32 0.0, %v3218
      %v3220 = vpop.f32.mrb[0].mxu0
      %3221 = vmatprep.mubr.bf16.mxu0 0
      %3222 = vmatmul.mubr.bf16.gmra.mrb[0].mxu0 %v3082
      %v3223 = vpop.f32.mrb[0].mxu0
      %v3224 = vadd.f32 0.0, %v3223
      %v3225 = vpop.f32.mrb[0].mxu0
      %v3226 = vpop.f32.mrb[0].mxu0
      %v3227 = vadd.f32 0.0, %v3226
      %v3228 = vpop.f32.mrb[0].mxu0
      %3229 = vmatprep.mubr.bf16.mxu0 0
      %3230 = vmatmul.mubr.bf16.gmra.mrb[0].mxu0 %v3085
      %v3231 = vpop.f32.mrb[0].mxu0
      %v3232 = vadd.f32 0.0, %v3231
      %v3233 = vpop.f32.mrb[0].mxu0
      %v3234 = vpop.f32.mrb[0].mxu0
      %v3235 = vadd.f32 0.0, %v3234
      %v3236 = vpop.f32.mrb[0].mxu0
      %3237 = vmatprep.mubr.bf16.mxu0 0
      %3238 = vmatmul.mubr.bf16.gmra.mrb[0].mxu0 %v3088
      %v3239 = vpop.f32.mrb[0].mxu0
      %v3240 = vadd.f32 0.0, %v3239
      %v3241 = vpop.f32.mrb[0].mxu0
      %v3242 = vpop.f32.mrb[0].mxu0
      %v3243 = vadd.f32 0.0, %v3242
      %v3244 = vpop.f32.mrb[0].mxu0
      %3245 = vmatprep.mubr.bf16.mxu0 0
      %3246 = vmatmul.mubr.bf16.gmra.mrb[0].mxu0 %v3091
      %v3247 = vpop.f32.mrb[0].mxu0
      %v3248 = vadd.f32 0.0, %v3247
      %v3249 = vpop.f32.mrb[0].mxu0
      %v3250 = vpop.f32.mrb[0].mxu0
      %v3251 = vadd.f32 0.0, %v3250
      %v3252 = vpop.f32.mrb[0].mxu0
      %3253 = vdwg.mxu0
      %v3254 = vadd.f32 %v2780, %v3128
      %v3255 = vadd.f32 %v2781, %v3131
      %v3256 = vadd.f32 %v2782, %v3136
      %v3257 = vadd.f32 %v2783, %v3139
      %v3258 = vadd.f32 %v2784, %v3144
      %v3259 = vadd.f32 %v2785, %v3147
      %v3260 = vadd.f32 %v2786, %v3152
      %v3261 = vadd.f32 %v2787, %v3155
      %v3262 = vadd.f32 %v2788, %v3160
      %v3263 = vadd.f32 %v2789, %v3163
      %v3264 = vadd.f32 %v2790, %v3168
      %v3265 = vadd.f32 %v2791, %v3171
      %v3266 = vadd.f32 %v2792, %v3176
      %v3267 = vadd.f32 %v2793, %v3179
      %v3268 = vadd.f32 %v2794, %v3184
      %v3269 = vadd.f32 %v2795, %v3187
      %v3270 = vadd.f32 %v2796, %v3192
      %v3271 = vadd.f32 %v2797, %v3195
      %v3272 = vadd.f32 %v2798, %v3200
      %v3273 = vadd.f32 %v2799, %v3203
      %v3274 = vadd.f32 %v2800, %v3208
      %v3275 = vadd.f32 %v2801, %v3211
      %v3276 = vadd.f32 %v2802, %v3216
      %v3277 = vadd.f32 %v2803, %v3219
      %v3278 = vadd.f32 %v2804, %v3224
      %v3279 = vadd.f32 %v2805, %v3227
      %v3280 = vadd.f32 %v2806, %v3232
      %v3281 = vadd.f32 %v2807, %v3235
      %v3282 = vadd.f32 %v2808, %v3240
      %v3283 = vadd.f32 %v2809, %v3243
      %v3284 = vadd.f32 %v2810, %v3248
      %v3285 = vadd.f32 %v2811, %v3251
      %s3286 = sadd.s32 %s252, 2
      %s3287 = smul.u32 %s3286, 3
      %s3288 = smul.addr %s3287, 4
      %s3289 = scalar_lea.vmem %s233, %s3288
      %v3290 = vld [vmem:[%s3289] sm:$0xf]
      %v3291 = vld [vmem:[%s3289 + $0x4] sm:$0xf]
      %v3292 = vld [vmem:[%s3289 + $0xc] sm:$0xf]
      %v3293 = vld [vmem:[%s3289 + $0x10] sm:$0xf]
      %v3294 = vld [vmem:[%s3289 + $0x18] sm:$0xf]
      %v3295 = vld [vmem:[%s3289 + $0x1c] sm:$0xf]
      %v3296 = vld [vmem:[%s3289 + $0x24] sm:$0xf]
      %v3297 = vld [vmem:[%s3289 + $0x28] sm:$0xf]
      %v3298 = vld [vmem:[%s3289 + $0x30] sm:$0xf]
      %v3299 = vld [vmem:[%s3289 + $0x34] sm:$0xf]
      %v3300 = vld [vmem:[%s3289 + $0x3c] sm:$0xf]
      %v3301 = vld [vmem:[%s3289 + $0x40] sm:$0xf]
      %v3302 = vld [vmem:[%s3289 + $0x48] sm:$0xf]
      %v3303 = vld [vmem:[%s3289 + $0x4c] sm:$0xf]
      %v3304 = vld [vmem:[%s3289 + $0x54] sm:$0xf]
      %v3305 = vld [vmem:[%s3289 + $0x58] sm:$0xf]
      %v3306 = vld [vmem:[%s3289 + $0x60] sm:$0xf]
      %v3307 = vld [vmem:[%s3289 + $0x64] sm:$0xf]
      %v3308 = vld [vmem:[%s3289 + $0x6c] sm:$0xf]
      %v3309 = vld [vmem:[%s3289 + $0x70] sm:$0xf]
      %v3310 = vld [vmem:[%s3289 + $0x78] sm:$0xf]
      %v3311 = vld [vmem:[%s3289 + $0x7c] sm:$0xf]
      %v3312 = vld [vmem:[%s3289 + $0x84] sm:$0xf]
      %v3313 = vld [vmem:[%s3289 + $0x88] sm:$0xf]
      %v3314 = vld [vmem:[%s3289 + $0x90] sm:$0xf]
      %v3315 = vld [vmem:[%s3289 + $0x94] sm:$0xf]
      %v3316 = vld [vmem:[%s3289 + $0x9c] sm:$0xf]
      %v3317 = vld [vmem:[%s3289 + $0xa0] sm:$0xf]
      %v3318 = vld [vmem:[%s3289 + $0xa8] sm:$0xf]
      %v3319 = vld [vmem:[%s3289 + $0xac] sm:$0xf]
      %v3320 = vld [vmem:[%s3289 + $0xb4] sm:$0xf]
      %v3321 = vld [vmem:[%s3289 + $0xb8] sm:$0xf]
      %s3322 = scalar_lea.vmem %s1, 48
      %v3323 = vld [vmem:[%s3322] sm:$0xf]
      %v3324 = vld [vmem:[%s3322 + $0x4] sm:$0xf]
      %v3357 = vunpack.c.l.b16 %v3290
      %v3358 = vunpack.c.l.b16 %v3291
      %v3359 = vunpack.c.l.b16 %v3292
      %v3360 = vunpack.c.l.b16 %v3293
      %v3361 = vunpack.c.l.b16 %v3294
      %v3362 = vunpack.c.l.b16 %v3295
      %v3363 = vunpack.c.l.b16 %v3296
      %v3364 = vunpack.c.l.b16 %v3297
      %v3365 = vunpack.c.l.b16 %v3298
      %v3366 = vunpack.c.l.b16 %v3299
      %v3367 = vunpack.c.l.b16 %v3300
      %v3368 = vunpack.c.l.b16 %v3301
      %v3369 = vunpack.c.l.b16 %v3302
      %v3370 = vunpack.c.l.b16 %v3303
      %v3371 = vunpack.c.l.b16 %v3304
      %v3372 = vunpack.c.l.b16 %v3305
      %v3373 = vunpack.c.l.b16 %v3306
      %v3374 = vunpack.c.l.b16 %v3307
      %v3375 = vunpack.c.l.b16 %v3308
      %v3376 = vunpack.c.l.b16 %v3309
      %v3377 = vunpack.c.l.b16 %v3310
      %v3378 = vunpack.c.l.b16 %v3311
      %v3379 = vunpack.c.l.b16 %v3312
      %v3380 = vunpack.c.l.b16 %v3313
      %v3381 = vunpack.c.l.b16 %v3314
      %v3382 = vunpack.c.l.b16 %v3315
      %v3383 = vunpack.c.l.b16 %v3316
      %v3384 = vunpack.c.l.b16 %v3317
      %v3385 = vunpack.c.l.b16 %v3318
      %v3386 = vunpack.c.l.b16 %v3319
      %v3387 = vunpack.c.l.b16 %v3320
      %v3388 = vunpack.c.l.b16 %v3321
      %v3389 = vpack.c.b16 %v3358, %v3357
      %v3390 = vpack.c.b16 %v3360, %v3359
      %v3391 = vpack.c.b16 %v3362, %v3361
      %v3392 = vpack.c.b16 %v3364, %v3363
      %v3393 = vpack.c.b16 %v3366, %v3365
      %v3394 = vpack.c.b16 %v3368, %v3367
      %v3395 = vpack.c.b16 %v3370, %v3369
      %v3396 = vpack.c.b16 %v3372, %v3371
      %v3397 = vpack.c.b16 %v3374, %v3373
      %v3398 = vpack.c.b16 %v3376, %v3375
      %v3399 = vpack.c.b16 %v3378, %v3377
      %v3400 = vpack.c.b16 %v3380, %v3379
      %v3401 = vpack.c.b16 %v3382, %v3381
      %v3402 = vpack.c.b16 %v3384, %v3383
      %v3403 = vpack.c.b16 %v3386, %v3385
      %v3404 = vpack.c.b16 %v3388, %v3387
      %v3407 = vunpack.c.l.b16 %v3323
      %v3408 = vunpack.c.l.b16 %v3324
      %v3409 = vpack.c.b16 %v3408, %v3407
      %v3412 = vsel %vm750, %v3389, 0
      %v3415 = vsel %vm750, %v3390, 0
      %v3418 = vsel %vm750, %v3391, 0
      %v3421 = vsel %vm750, %v3392, 0
      %v3424 = vsel %vm750, %v3393, 0
      %v3427 = vsel %vm750, %v3394, 0
      %v3430 = vsel %vm750, %v3395, 0
      %v3433 = vsel %vm750, %v3396, 0
      %v3436 = vsel %vm750, %v3397, 0
      %v3439 = vsel %vm750, %v3398, 0
      %v3442 = vsel %vm750, %v3399, 0
      %v3445 = vsel %vm750, %v3400, 0
      %v3448 = vsel %vm750, %v3401, 0
      %v3451 = vsel %vm750, %v3402, 0
      %v3454 = vsel %vm750, %v3403, 0
      %v3457 = vsel %vm750, %v3404, 0
      %3459 = vmatprep.subr.bf16.mxu0 0
      %3460 = vmatpush1.bf16.msra.mxu0 %v3409
      %3461 = vmatprep.subr.bf16.mxu0 0
      %3462 = vmatpush1.bf16.msra.mxu0 0
      %3463 = vmatprep.subr.bf16.mxu0 0
      %3464 = vmatpush1.bf16.msra.mxu0 0
      %3465 = vmatprep.subr.bf16.mxu0 0
      %3466 = vmatpush1.bf16.msra.mxu0 0
      %3467 = vmatprep.subr.bf16.mxu0 0
      %3468 = vmatpush1.bf16.msra.mxu0 0
      %3469 = vmatprep.subr.bf16.mxu0 0
      %3470 = vmatpush1.bf16.msra.mxu0 0
      %3471 = vmatprep.subr.bf16.mxu0 0
      %3472 = vmatpush1.bf16.msra.mxu0 0
      %3473 = vmatprep.subr.bf16.mxu0 0
      %3474 = vmatpush1.bf16.msra.mxu0 0
      %3475 = vmatprep.subr.bf16.mxu0 0
      %3476 = vmatpush1.bf16.msra.mxu0 0
      %3477 = vmatprep.subr.bf16.mxu0 0
      %3478 = vmatpush1.bf16.msra.mxu0 0
      %3479 = vmatprep.subr.bf16.mxu0 0
      %3480 = vmatpush1.bf16.msra.mxu0 0
      %3481 = vmatprep.subr.bf16.mxu0 0
      %3482 = vmatpush1.bf16.msra.mxu0 0
      %3483 = vmatprep.subr.bf16.mxu0 0
      %3484 = vmatpush1.bf16.msra.mxu0 0
      %3485 = vmatprep.subr.bf16.mxu0 0
      %3486 = vmatpush1.bf16.msra.mxu0 0
      %3487 = vmatprep.subr.bf16.mxu0 0
      %3488 = vmatpush1.bf16.msra.mxu0 0
      %3489 = vmatprep.subr.bf16.mxu0 0
      %3490 = vmatpush1.bf16.msra.mxu0 0
      %3491 = vmatprep.mubr.bf16.mxu0 0
      %3492 = vmatmul.mubr.bf16.gmra.mrb[0].mxu0 %v3412
      %v3493 = vpop.f32.mrb[0].mxu0
      %v3494 = vadd.f32 0.0, %v3493
      %v3495 = vpop.f32.mrb[0].mxu0
      %v3496 = vpop.f32.mrb[0].mxu0
      %v3497 = vadd.f32 0.0, %v3496
      %v3498 = vpop.f32.mrb[0].mxu0
      %3499 = vmatprep.mubr.bf16.mxu0 0
      %3500 = vmatmul.mubr.bf16.gmra.mrb[0].mxu0 %v3415
      %v3501 = vpop.f32.mrb[0].mxu0
      %v3502 = vadd.f32 0.0, %v3501
      %v3503 = vpop.f32.mrb[0].mxu0
      %v3504 = vpop.f32.mrb[0].mxu0
      %v3505 = vadd.f32 0.0, %v3504
      %v3506 = vpop.f32.mrb[0].mxu0
      %3507 = vmatprep.mubr.bf16.mxu0 0
      %3508 = vmatmul.mubr.bf16.gmra.mrb[0].mxu0 %v3418
      %v3509 = vpop.f32.mrb[0].mxu0
      %v3510 = vadd.f32 0.0, %v3509
      %v3511 = vpop.f32.mrb[0].mxu0
      %v3512 = vpop.f32.mrb[0].mxu0
      %v3513 = vadd.f32 0.0, %v3512
      %v3514 = vpop.f32.mrb[0].mxu0
      %3515 = vmatprep.mubr.bf16.mxu0 0
      %3516 = vmatmul.mubr.bf16.gmra.mrb[0].mxu0 %v3421
      %v3517 = vpop.f32.mrb[0].mxu0
      %v3518 = vadd.f32 0.0, %v3517
      %v3519 = vpop.f32.mrb[0].mxu0
      %v3520 = vpop.f32.mrb[0].mxu0
      %v3521 = vadd.f32 0.0, %v3520
      %v3522 = vpop.f32.mrb[0].mxu0
      %3523 = vmatprep.mubr.bf16.mxu0 0
      %3524 = vmatmul.mubr.bf16.gmra.mrb[0].mxu0 %v3424
      %v3525 = vpop.f32.mrb[0].mxu0
      %v3526 = vadd.f32 0.0, %v3525
      %v3527 = vpop.f32.mrb[0].mxu0
      %v3528 = vpop.f32.mrb[0].mxu0
      %v3529 = vadd.f32 0.0, %v3528
      %v3530 = vpop.f32.mrb[0].mxu0
      %3531 = vmatprep.mubr.bf16.mxu0 0
      %3532 = vmatmul.mubr.bf16.gmra.mrb[0].mxu0 %v3427
      %v3533 = vpop.f32.mrb[0].mxu0
      %v3534 = vadd.f32 0.0, %v3533
      %v3535 = vpop.f32.mrb[0].mxu0
      %v3536 = vpop.f32.mrb[0].mxu0
      %v3537 = vadd.f32 0.0, %v3536
      %v3538 = vpop.f32.mrb[0].mxu0
      %3539 = vmatprep.mubr.bf16.mxu0 0
      %3540 = vmatmul.mubr.bf16.gmra.mrb[0].mxu0 %v3430
      %v3541 = vpop.f32.mrb[0].mxu0
      %v3542 = vadd.f32 0.0, %v3541
      %v3543 = vpop.f32.mrb[0].mxu0
      %v3544 = vpop.f32.mrb[0].mxu0
      %v3545 = vadd.f32 0.0, %v3544
      %v3546 = vpop.f32.mrb[0].mxu0
      %3547 = vmatprep.mubr.bf16.mxu0 0
      %3548 = vmatmul.mubr.bf16.gmra.mrb[0].mxu0 %v3433
      %v3549 = vpop.f32.mrb[0].mxu0
      %v3550 = vadd.f32 0.0, %v3549
      %v3551 = vpop.f32.mrb[0].mxu0
      %v3552 = vpop.f32.mrb[0].mxu0
      %v3553 = vadd.f32 0.0, %v3552
      %v3554 = vpop.f32.mrb[0].mxu0
      %3555 = vmatprep.mubr.bf16.mxu0 0
      %3556 = vmatmul.mubr.bf16.gmra.mrb[0].mxu0 %v3436
      %v3557 = vpop.f32.mrb[0].mxu0
      %v3558 = vadd.f32 0.0, %v3557
      %v3559 = vpop.f32.mrb[0].mxu0
      %v3560 = vpop.f32.mrb[0].mxu0
      %v3561 = vadd.f32 0.0, %v3560
      %v3562 = vpop.f32.mrb[0].mxu0
      %3563 = vmatprep.mubr.bf16.mxu0 0
      %3564 = vmatmul.mubr.bf16.gmra.mrb[0].mxu0 %v3439
      %v3565 = vpop.f32.mrb[0].mxu0
      %v3566 = vadd.f32 0.0, %v3565
      %v3567 = vpop.f32.mrb[0].mxu0
      %v3568 = vpop.f32.mrb[0].mxu0
      %v3569 = vadd.f32 0.0, %v3568
      %v3570 = vpop.f32.mrb[0].mxu0
      %3571 = vmatprep.mubr.bf16.mxu0 0
      %3572 = vmatmul.mubr.bf16.gmra.mrb[0].mxu0 %v3442
      %v3573 = vpop.f32.mrb[0].mxu0
      %v3574 = vadd.f32 0.0, %v3573
      %v3575 = vpop.f32.mrb[0].mxu0
      %v3576 = vpop.f32.mrb[0].mxu0
      %v3577 = vadd.f32 0.0, %v3576
      %v3578 = vpop.f32.mrb[0].mxu0
      %3579 = vmatprep.mubr.bf16.mxu0 0
      %3580 = vmatmul.mubr.bf16.gmra.mrb[0].mxu0 %v3445
      %v3581 = vpop.f32.mrb[0].mxu0
      %v3582 = vadd.f32 0.0, %v3581
      %v3583 = vpop.f32.mrb[0].mxu0
      %v3584 = vpop.f32.mrb[0].mxu0
      %v3585 = vadd.f32 0.0, %v3584
      %v3586 = vpop.f32.mrb[0].mxu0
      %3587 = vmatprep.mubr.bf16.mxu0 0
      %3588 = vmatmul.mubr.bf16.gmra.mrb[0].mxu0 %v3448
      %v3589 = vpop.f32.mrb[0].mxu0
      %v3590 = vadd.f32 0.0, %v3589
      %v3591 = vpop.f32.mrb[0].mxu0
      %v3592 = vpop.f32.mrb[0].mxu0
      %v3593 = vadd.f32 0.0, %v3592
      %v3594 = vpop.f32.mrb[0].mxu0
      %3595 = vmatprep.mubr.bf16.mxu0 0
      %3596 = vmatmul.mubr.bf16.gmra.mrb[0].mxu0 %v3451
      %v3597 = vpop.f32.mrb[0].mxu0
      %v3598 = vadd.f32 0.0, %v3597
      %v3599 = vpop.f32.mrb[0].mxu0
      %v3600 = vpop.f32.mrb[0].mxu0
      %v3601 = vadd.f32 0.0, %v3600
      %v3602 = vpop.f32.mrb[0].mxu0
      %3603 = vmatprep.mubr.bf16.mxu0 0
      %3604 = vmatmul.mubr.bf16.gmra.mrb[0].mxu0 %v3454
      %v3605 = vpop.f32.mrb[0].mxu0
      %v3606 = vadd.f32 0.0, %v3605
      %v3607 = vpop.f32.mrb[0].mxu0
      %v3608 = vpop.f32.mrb[0].mxu0
      %v3609 = vadd.f32 0.0, %v3608
      %v3610 = vpop.f32.mrb[0].mxu0
      %3611 = vmatprep.mubr.bf16.mxu0 0
      %3612 = vmatmul.mubr.bf16.gmra.mrb[0].mxu0 %v3457
      %v3613 = vpop.f32.mrb[0].mxu0
      %v3614 = vadd.f32 0.0, %v3613
      %v3615 = vpop.f32.mrb[0].mxu0
      %v3616 = vpop.f32.mrb[0].mxu0
      %v3617 = vadd.f32 0.0, %v3616
      %v3618 = vpop.f32.mrb[0].mxu0
      %3619 = vdwg.mxu0
      %v3620 = vadd.f32 %v3254, %v3494
      %v3621 = vadd.f32 %v3255, %v3497
      %v3622 = vadd.f32 %v3256, %v3502
      %v3623 = vadd.f32 %v3257, %v3505
      %v3624 = vadd.f32 %v3258, %v3510
      %v3625 = vadd.f32 %v3259, %v3513
      %v3626 = vadd.f32 %v3260, %v3518
      %v3627 = vadd.f32 %v3261, %v3521
      %v3628 = vadd.f32 %v3262, %v3526
      %v3629 = vadd.f32 %v3263, %v3529
      %v3630 = vadd.f32 %v3264, %v3534
      %v3631 = vadd.f32 %v3265, %v3537
      %v3632 = vadd.f32 %v3266, %v3542
      %v3633 = vadd.f32 %v3267, %v3545
      %v3634 = vadd.f32 %v3268, %v3550
      %v3635 = vadd.f32 %v3269, %v3553
      %v3636 = vadd.f32 %v3270, %v3558
      %v3637 = vadd.f32 %v3271, %v3561
      %v3638 = vadd.f32 %v3272, %v3566
      %v3639 = vadd.f32 %v3273, %v3569
      %v3640 = vadd.f32 %v3274, %v3574
      %v3641 = vadd.f32 %v3275, %v3577
      %v3642 = vadd.f32 %v3276, %v3582
      %v3643 = vadd.f32 %v3277, %v3585
      %v3644 = vadd.f32 %v3278, %v3590
      %v3645 = vadd.f32 %v3279, %v3593
      %v3646 = vadd.f32 %v3280, %v3598
      %v3647 = vadd.f32 %v3281, %v3601
      %v3648 = vadd.f32 %v3282, %v3606
      %v3649 = vadd.f32 %v3283, %v3609
      %v3650 = vadd.f32 %v3284, %v3614
      %v3651 = vadd.f32 %v3285, %v3617
      %v3652 = vld [vmem:[%s3289] sm:$0xf]
      %v3653 = vld [vmem:[%s3289 + $0x4] sm:$0xf]
      %v3654 = vld [vmem:[%s3289 + $0x8] sm:$0x1]
      %v3655 = vld [vmem:[%s3289 + $0xc] sm:$0xf]
      %v3656 = vld [vmem:[%s3289 + $0x10] sm:$0xf]
      %v3657 = vld [vmem:[%s3289 + $0x14] sm:$0x1]
      %v3658 = vld [vmem:[%s3289 + $0x18] sm:$0xf]
      %v3659 = vld [vmem:[%s3289 + $0x1c] sm:$0xf]
      %v3660 = vld [vmem:[%s3289 + $0x20] sm:$0x1]
      %v3661 = vld [vmem:[%s3289 + $0x24] sm:$0xf]
      %v3662 = vld [vmem:[%s3289 + $0x28] sm:$0xf]
      %v3663 = vld [vmem:[%s3289 + $0x2c] sm:$0x1]
      %v3664 = vld [vmem:[%s3289 + $0x30] sm:$0xf]
      %v3665 = vld [vmem:[%s3289 + $0x34] sm:$0xf]
      %v3666 = vld [vmem:[%s3289 + $0x38] sm:$0x1]
      %v3667 = vld [vmem:[%s3289 + $0x3c] sm:$0xf]
      %v3668 = vld [vmem:[%s3289 + $0x40] sm:$0xf]
      %v3669 = vld [vmem:[%s3289 + $0x44] sm:$0x1]
      %v3670 = vld [vmem:[%s3289 + $0x48] sm:$0xf]
      %v3671 = vld [vmem:[%s3289 + $0x4c] sm:$0xf]
      %v3672 = vld [vmem:[%s3289 + $0x50] sm:$0x1]
      %v3673 = vld [vmem:[%s3289 + $0x54] sm:$0xf]
      %v3674 = vld [vmem:[%s3289 + $0x58] sm:$0xf]
      %v3675 = vld [vmem:[%s3289 + $0x5c] sm:$0x1]
      %v3676 = vld [vmem:[%s3289 + $0x60] sm:$0xf]
      %v3677 = vld [vmem:[%s3289 + $0x64] sm:$0xf]
      %v3678 = vld [vmem:[%s3289 + $0x68] sm:$0x1]
      %v3679 = vld [vmem:[%s3289 + $0x6c] sm:$0xf]
      %v3680 = vld [vmem:[%s3289 + $0x70] sm:$0xf]
      %v3681 = vld [vmem:[%s3289 + $0x74] sm:$0x1]
      %v3682 = vld [vmem:[%s3289 + $0x78] sm:$0xf]
      %v3683 = vld [vmem:[%s3289 + $0x7c] sm:$0xf]
      %v3684 = vld [vmem:[%s3289 + $0x80] sm:$0x1]
      %v3685 = vld [vmem:[%s3289 + $0x84] sm:$0xf]
      %v3686 = vld [vmem:[%s3289 + $0x88] sm:$0xf]
      %v3687 = vld [vmem:[%s3289 + $0x8c] sm:$0x1]
      %v3688 = vld [vmem:[%s3289 + $0x90] sm:$0xf]
      %v3689 = vld [vmem:[%s3289 + $0x94] sm:$0xf]
      %v3690 = vld [vmem:[%s3289 + $0x98] sm:$0x1]
      %v3691 = vld [vmem:[%s3289 + $0x9c] sm:$0xf]
      %v3692 = vld [vmem:[%s3289 + $0xa0] sm:$0xf]
      %v3693 = vld [vmem:[%s3289 + $0xa4] sm:$0x1]
      %v3694 = vld [vmem:[%s3289 + $0xa8] sm:$0xf]
      %v3695 = vld [vmem:[%s3289 + $0xac] sm:$0xf]
      %v3696 = vld [vmem:[%s3289 + $0xb0] sm:$0x1]
      %v3697 = vld [vmem:[%s3289 + $0xb4] sm:$0xf]
      %v3698 = vld [vmem:[%s3289 + $0xb8] sm:$0xf]
      %v3699 = vld [vmem:[%s3289 + $0xbc] sm:$0x1]
      %v3701 = vshrl.u32 %v3652, 16
      %v3703 = vrot.slane %v3701, 4
      %v3704 = vshll.u32 %v3652, 16
      %v3706 = vrot.slane %v3704, 5
      %v3707 = vor.u32 %v3703, %v3706
      %v3708 = vrot.slane %v3707, 4
      %v3710 = vshll.u32 %v3653, 16
      %v3712 = vrot.slane %v3710, 5
      %v3713 = vsel %vm308, %v3708, %v3712
      %v3714 = vshrl.u32 %v3653, 16
      %v3716 = vrot.slane %v3714, 4
      %v3717 = vor.u32 %v3716, %v3712
      %v3718 = vrot.slane %v3717, 4
      %v3720 = vshll.u32 %v3654, 16
      %v3722 = vrot.slane %v3720, 5
      %v3723 = vsel %vm308, %v3718, %v3722
      %v3725 = vshrl.u32 %v3655, 16
      %v3727 = vrot.slane %v3725, 4
      %v3728 = vshll.u32 %v3655, 16
      %v3730 = vrot.slane %v3728, 5
      %v3731 = vor.u32 %v3727, %v3730
      %v3732 = vrot.slane %v3731, 4
      %v3734 = vshll.u32 %v3656, 16
      %v3736 = vrot.slane %v3734, 5
      %v3737 = vsel %vm308, %v3732, %v3736
      %v3738 = vshrl.u32 %v3656, 16
      %v3740 = vrot.slane %v3738, 4
      %v3741 = vor.u32 %v3740, %v3736
      %v3742 = vrot.slane %v3741, 4
      %v3744 = vshll.u32 %v3657, 16
      %v3746 = vrot.slane %v3744, 5
      %v3747 = vsel %vm308, %v3742, %v3746
      %v3749 = vshrl.u32 %v3658, 16
      %v3751 = vrot.slane %v3749, 4
      %v3752 = vshll.u32 %v3658, 16
      %v3754 = vrot.slane %v3752, 5
      %v3755 = vor.u32 %v3751, %v3754
      %v3756 = vrot.slane %v3755, 4
      %v3758 = vshll.u32 %v3659, 16
      %v3760 = vrot.slane %v3758, 5
      %v3761 = vsel %vm308, %v3756, %v3760
      %v3762 = vshrl.u32 %v3659, 16
      %v3764 = vrot.slane %v3762, 4
      %v3765 = vor.u32 %v3764, %v3760
      %v3766 = vrot.slane %v3765, 4
      %v3768 = vshll.u32 %v3660, 16
      %v3770 = vrot.slane %v3768, 5
      %v3771 = vsel %vm308, %v3766, %v3770
      %v3773 = vshrl.u32 %v3661, 16
      %v3775 = vrot.slane %v3773, 4
      %v3776 = vshll.u32 %v3661, 16
      %v3778 = vrot.slane %v3776, 5
      %v3779 = vor.u32 %v3775, %v3778
      %v3780 = vrot.slane %v3779, 4
      %v3782 = vshll.u32 %v3662, 16
      %v3784 = vrot.slane %v3782, 5
      %v3785 = vsel %vm308, %v3780, %v3784
      %v3786 = vshrl.u32 %v3662, 16
      %v3788 = vrot.slane %v3786, 4
      %v3789 = vor.u32 %v3788, %v3784
      %v3790 = vrot.slane %v3789, 4
      %v3792 = vshll.u32 %v3663, 16
      %v3794 = vrot.slane %v3792, 5
      %v3795 = vsel %vm308, %v3790, %v3794
      %v3797 = vshrl.u32 %v3664, 16
      %v3799 = vrot.slane %v3797, 4
      %v3800 = vshll.u32 %v3664, 16
      %v3802 = vrot.slane %v3800, 5
      %v3803 = vor.u32 %v3799, %v3802
      %v3804 = vrot.slane %v3803, 4
      %v3806 = vshll.u32 %v3665, 16
      %v3808 = vrot.slane %v3806, 5
      %v3809 = vsel %vm308, %v3804, %v3808
      %v3810 = vshrl.u32 %v3665, 16
      %v3812 = vrot.slane %v3810, 4
      %v3813 = vor.u32 %v3812, %v3808
      %v3814 = vrot.slane %v3813, 4
      %v3816 = vshll.u32 %v3666, 16
      %v3818 = vrot.slane %v3816, 5
      %v3819 = vsel %vm308, %v3814, %v3818
      %v3821 = vshrl.u32 %v3667, 16
      %v3823 = vrot.slane %v3821, 4
      %v3824 = vshll.u32 %v3667, 16
      %v3826 = vrot.slane %v3824, 5
      %v3827 = vor.u32 %v3823, %v3826
      %v3828 = vrot.slane %v3827, 4
      %v3830 = vshll.u32 %v3668, 16
      %v3832 = vrot.slane %v3830, 5
      %v3833 = vsel %vm308, %v3828, %v3832
      %v3834 = vshrl.u32 %v3668, 16
      %v3836 = vrot.slane %v3834, 4
      %v3837 = vor.u32 %v3836, %v3832
      %v3838 = vrot.slane %v3837, 4
      %v3840 = vshll.u32 %v3669, 16
      %v3842 = vrot.slane %v3840, 5
      %v3843 = vsel %vm308, %v3838, %v3842
      %v3845 = vshrl.u32 %v3670, 16
      %v3847 = vrot.slane %v3845, 4
      %v3848 = vshll.u32 %v3670, 16
      %v3850 = vrot.slane %v3848, 5
      %v3851 = vor.u32 %v3847, %v3850
      %v3852 = vrot.slane %v3851, 4
      %v3854 = vshll.u32 %v3671, 16
      %v3856 = vrot.slane %v3854, 5
      %v3857 = vsel %vm308, %v3852, %v3856
      %v3858 = vshrl.u32 %v3671, 16
      %v3860 = vrot.slane %v3858, 4
      %v3861 = vor.u32 %v3860, %v3856
      %v3862 = vrot.slane %v3861, 4
      %v3864 = vshll.u32 %v3672, 16
      %v3866 = vrot.slane %v3864, 5
      %v3867 = vsel %vm308, %v3862, %v3866
      %v3869 = vshrl.u32 %v3673, 16
      %v3871 = vrot.slane %v3869, 4
      %v3872 = vshll.u32 %v3673, 16
      %v3874 = vrot.slane %v3872, 5
      %v3875 = vor.u32 %v3871, %v3874
      %v3876 = vrot.slane %v3875, 4
      %v3878 = vshll.u32 %v3674, 16
      %v3880 = vrot.slane %v3878, 5
      %v3881 = vsel %vm308, %v3876, %v3880
      %v3882 = vshrl.u32 %v3674, 16
      %v3884 = vrot.slane %v3882, 4
      %v3885 = vor.u32 %v3884, %v3880
      %v3886 = vrot.slane %v3885, 4
      %v3888 = vshll.u32 %v3675, 16
      %v3890 = vrot.slane %v3888, 5
      %v3891 = vsel %vm308, %v3886, %v3890
      %v3893 = vshrl.u32 %v3676, 16
      %v3895 = vrot.slane %v3893, 4
      %v3896 = vshll.u32 %v3676, 16
      %v3898 = vrot.slane %v3896, 5
      %v3899 = vor.u32 %v3895, %v3898
      %v3900 = vrot.slane %v3899, 4
      %v3902 = vshll.u32 %v3677, 16
      %v3904 = vrot.slane %v3902, 5
      %v3905 = vsel %vm308, %v3900, %v3904
      %v3906 = vshrl.u32 %v3677, 16
      %v3908 = vrot.slane %v3906, 4
      %v3909 = vor.u32 %v3908, %v3904
      %v3910 = vrot.slane %v3909, 4
      %v3912 = vshll.u32 %v3678, 16
      %v3914 = vrot.slane %v3912, 5
      %v3915 = vsel %vm308, %v3910, %v3914
      %v3917 = vshrl.u32 %v3679, 16
      %v3919 = vrot.slane %v3917, 4
      %v3920 = vshll.u32 %v3679, 16
      %v3922 = vrot.slane %v3920, 5
      %v3923 = vor.u32 %v3919, %v3922
      %v3924 = vrot.slane %v3923, 4
      %v3926 = vshll.u32 %v3680, 16
      %v3928 = vrot.slane %v3926, 5
      %v3929 = vsel %vm308, %v3924, %v3928
      %v3930 = vshrl.u32 %v3680, 16
      %v3932 = vrot.slane %v3930, 4
      %v3933 = vor.u32 %v3932, %v3928
      %v3934 = vrot.slane %v3933, 4
      %v3936 = vshll.u32 %v3681, 16
      %v3938 = vrot.slane %v3936, 5
      %v3939 = vsel %vm308, %v3934, %v3938
      %v3941 = vshrl.u32 %v3682, 16
      %v3943 = vrot.slane %v3941, 4
      %v3944 = vshll.u32 %v3682, 16
      %v3946 = vrot.slane %v3944, 5
      %v3947 = vor.u32 %v3943, %v3946
      %v3948 = vrot.slane %v3947, 4
      %v3950 = vshll.u32 %v3683, 16
      %v3952 = vrot.slane %v3950, 5
      %v3953 = vsel %vm308, %v3948, %v3952
      %v3954 = vshrl.u32 %v3683, 16
      %v3956 = vrot.slane %v3954, 4
      %v3957 = vor.u32 %v3956, %v3952
      %v3958 = vrot.slane %v3957, 4
      %v3960 = vshll.u32 %v3684, 16
      %v3962 = vrot.slane %v3960, 5
      %v3963 = vsel %vm308, %v3958, %v3962
      %v3965 = vshrl.u32 %v3685, 16
      %v3967 = vrot.slane %v3965, 4
      %v3968 = vshll.u32 %v3685, 16
      %v3970 = vrot.slane %v3968, 5
      %v3971 = vor.u32 %v3967, %v3970
      %v3972 = vrot.slane %v3971, 4
      %v3974 = vshll.u32 %v3686, 16
      %v3976 = vrot.slane %v3974, 5
      %v3977 = vsel %vm308, %v3972, %v3976
      %v3978 = vshrl.u32 %v3686, 16
      %v3980 = vrot.slane %v3978, 4
      %v3981 = vor.u32 %v3980, %v3976
      %v3982 = vrot.slane %v3981, 4
      %v3984 = vshll.u32 %v3687, 16
      %v3986 = vrot.slane %v3984, 5
      %v3987 = vsel %vm308, %v3982, %v3986
      %v3989 = vshrl.u32 %v3688, 16
      %v3991 = vrot.slane %v3989, 4
      %v3992 = vshll.u32 %v3688, 16
      %v3994 = vrot.slane %v3992, 5
      %v3995 = vor.u32 %v3991, %v3994
      %v3996 = vrot.slane %v3995, 4
      %v3998 = vshll.u32 %v3689, 16
      %v4000 = vrot.slane %v3998, 5
      %v4001 = vsel %vm308, %v3996, %v4000
      %v4002 = vshrl.u32 %v3689, 16
      %v4004 = vrot.slane %v4002, 4
      %v4005 = vor.u32 %v4004, %v4000
      %v4006 = vrot.slane %v4005, 4
      %v4008 = vshll.u32 %v3690, 16
      %v4010 = vrot.slane %v4008, 5
      %v4011 = vsel %vm308, %v4006, %v4010
      %v4013 = vshrl.u32 %v3691, 16
      %v4015 = vrot.slane %v4013, 4
      %v4016 = vshll.u32 %v3691, 16
      %v4018 = vrot.slane %v4016, 5
      %v4019 = vor.u32 %v4015, %v4018
      %v4020 = vrot.slane %v4019, 4
      %v4022 = vshll.u32 %v3692, 16
      %v4024 = vrot.slane %v4022, 5
      %v4025 = vsel %vm308, %v4020, %v4024
      %v4026 = vshrl.u32 %v3692, 16
      %v4028 = vrot.slane %v4026, 4
      %v4029 = vor.u32 %v4028, %v4024
      %v4030 = vrot.slane %v4029, 4
      %v4032 = vshll.u32 %v3693, 16
      %v4034 = vrot.slane %v4032, 5
      %v4035 = vsel %vm308, %v4030, %v4034
      %v4037 = vshrl.u32 %v3694, 16
      %v4039 = vrot.slane %v4037, 4
      %v4040 = vshll.u32 %v3694, 16
      %v4042 = vrot.slane %v4040, 5
      %v4043 = vor.u32 %v4039, %v4042
      %v4044 = vrot.slane %v4043, 4
      %v4046 = vshll.u32 %v3695, 16
      %v4048 = vrot.slane %v4046, 5
      %v4049 = vsel %vm308, %v4044, %v4048
      %v4050 = vshrl.u32 %v3695, 16
      %v4052 = vrot.slane %v4050, 4
      %v4053 = vor.u32 %v4052, %v4048
      %v4054 = vrot.slane %v4053, 4
      %v4056 = vshll.u32 %v3696, 16
      %v4058 = vrot.slane %v4056, 5
      %v4059 = vsel %vm308, %v4054, %v4058
      %v4061 = vshrl.u32 %v3697, 16
      %v4063 = vrot.slane %v4061, 4
      %v4064 = vshll.u32 %v3697, 16
      %v4066 = vrot.slane %v4064, 5
      %v4067 = vor.u32 %v4063, %v4066
      %v4068 = vrot.slane %v4067, 4
      %v4070 = vshll.u32 %v3698, 16
      %v4072 = vrot.slane %v4070, 5
      %v4073 = vsel %vm308, %v4068, %v4072
      %v4074 = vshrl.u32 %v3698, 16
      %v4076 = vrot.slane %v4074, 4
      %v4077 = vor.u32 %v4076, %v4072
      %v4078 = vrot.slane %v4077, 4
      %v4080 = vshll.u32 %v3699, 16
      %v4082 = vrot.slane %v4080, 5
      %v4083 = vsel %vm308, %v4078, %v4082
      %s4084 = scalar_lea.vmem %s1, 56
      %v4085 = vld [vmem:[%s4084] sm:$0xf]
      %v4086 = vld [vmem:[%s4084 + $0x4] sm:$0xf]
      %v4087 = vunpack.c.l.b16 %v3713
      %v4088 = vunpack.c.l.b16 %v3723
      %v4089 = vunpack.c.l.b16 %v3737
      %v4090 = vunpack.c.l.b16 %v3747
      %v4091 = vunpack.c.l.b16 %v3761
      %v4092 = vunpack.c.l.b16 %v3771
      %v4093 = vunpack.c.l.b16 %v3785
      %v4094 = vunpack.c.l.b16 %v3795
      %v4095 = vunpack.c.l.b16 %v3809
      %v4096 = vunpack.c.l.b16 %v3819
      %v4097 = vunpack.c.l.b16 %v3833
      %v4098 = vunpack.c.l.b16 %v3843
      %v4099 = vunpack.c.l.b16 %v3857
      %v4100 = vunpack.c.l.b16 %v3867
      %v4101 = vunpack.c.l.b16 %v3881
      %v4102 = vunpack.c.l.b16 %v3891
      %v4103 = vunpack.c.l.b16 %v3905
      %v4104 = vunpack.c.l.b16 %v3915
      %v4105 = vunpack.c.l.b16 %v3929
      %v4106 = vunpack.c.l.b16 %v3939
      %v4107 = vunpack.c.l.b16 %v3953
      %v4108 = vunpack.c.l.b16 %v3963
      %v4109 = vunpack.c.l.b16 %v3977
      %v4110 = vunpack.c.l.b16 %v3987
      %v4111 = vunpack.c.l.b16 %v4001
      %v4112 = vunpack.c.l.b16 %v4011
      %v4113 = vunpack.c.l.b16 %v4025
      %v4114 = vunpack.c.l.b16 %v4035
      %v4115 = vunpack.c.l.b16 %v4049
      %v4116 = vunpack.c.l.b16 %v4059
      %v4117 = vunpack.c.l.b16 %v4073
      %v4118 = vunpack.c.l.b16 %v4083
      %v4119 = vpack.c.b16 %v4088, %v4087
      %v4120 = vpack.c.b16 %v4090, %v4089
      %v4121 = vpack.c.b16 %v4092, %v4091
      %v4122 = vpack.c.b16 %v4094, %v4093
      %v4123 = vpack.c.b16 %v4096, %v4095
      %v4124 = vpack.c.b16 %v4098, %v4097
      %v4125 = vpack.c.b16 %v4100, %v4099
      %v4126 = vpack.c.b16 %v4102, %v4101
      %v4127 = vpack.c.b16 %v4104, %v4103
      %v4128 = vpack.c.b16 %v4106, %v4105
      %v4129 = vpack.c.b16 %v4108, %v4107
      %v4130 = vpack.c.b16 %v4110, %v4109
      %v4131 = vpack.c.b16 %v4112, %v4111
      %v4132 = vpack.c.b16 %v4114, %v4113
      %v4133 = vpack.c.b16 %v4116, %v4115
      %v4134 = vpack.c.b16 %v4118, %v4117
      %v4137 = vunpack.c.l.b16 %v4085
      %v4138 = vunpack.c.l.b16 %v4086
      %v4139 = vpack.c.b16 %v4138, %v4137
      %v4142 = vsel %vm750, %v4119, 0
      %v4145 = vsel %vm750, %v4120, 0
      %v4148 = vsel %vm750, %v4121, 0
      %v4151 = vsel %vm750, %v4122, 0
      %v4154 = vsel %vm750, %v4123, 0
      %v4157 = vsel %vm750, %v4124, 0
      %v4160 = vsel %vm750, %v4125, 0
      %v4163 = vsel %vm750, %v4126, 0
      %v4166 = vsel %vm750, %v4127, 0
      %v4169 = vsel %vm750, %v4128, 0
      %v4172 = vsel %vm750, %v4129, 0
      %v4175 = vsel %vm750, %v4130, 0
      %v4178 = vsel %vm750, %v4131, 0
      %v4181 = vsel %vm750, %v4132, 0
      %v4184 = vsel %vm750, %v4133, 0
      %v4187 = vsel %vm750, %v4134, 0
      %4189 = vmatprep.subr.bf16.mxu0 0
      %4190 = vmatpush1.bf16.msra.mxu0 %v4139
      %4191 = vmatprep.subr.bf16.mxu0 0
      %4192 = vmatpush1.bf16.msra.mxu0 0
      %4193 = vmatprep.subr.bf16.mxu0 0
      %4194 = vmatpush1.bf16.msra.mxu0 0
      %4195 = vmatprep.subr.bf16.mxu0 0
      %4196 = vmatpush1.bf16.msra.mxu0 0
      %4197 = vmatprep.subr.bf16.mxu0 0
      %4198 = vmatpush1.bf16.msra.mxu0 0
      %4199 = vmatprep.subr.bf16.mxu0 0
      %4200 = vmatpush1.bf16.msra.mxu0 0
      %4201 = vmatprep.subr.bf16.mxu0 0
      %4202 = vmatpush1.bf16.msra.mxu0 0
      %4203 = vmatprep.subr.bf16.mxu0 0
      %4204 = vmatpush1.bf16.msra.mxu0 0
      %4205 = vmatprep.subr.bf16.mxu0 0
      %4206 = vmatpush1.bf16.msra.mxu0 0
      %4207 = vmatprep.subr.bf16.mxu0 0
      %4208 = vmatpush1.bf16.msra.mxu0 0
      %4209 = vmatprep.subr.bf16.mxu0 0
      %4210 = vmatpush1.bf16.msra.mxu0 0
      %4211 = vmatprep.subr.bf16.mxu0 0
      %4212 = vmatpush1.bf16.msra.mxu0 0
      %4213 = vmatprep.subr.bf16.mxu0 0
      %4214 = vmatpush1.bf16.msra.mxu0 0
      %4215 = vmatprep.subr.bf16.mxu0 0
      %4216 = vmatpush1.bf16.msra.mxu0 0
      %4217 = vmatprep.subr.bf16.mxu0 0
      %4218 = vmatpush1.bf16.msra.mxu0 0
      %4219 = vmatprep.subr.bf16.mxu0 0
      %4220 = vmatpush1.bf16.msra.mxu0 0
      %4221 = vmatprep.mubr.bf16.mxu0 0
      %4222 = vmatmul.mubr.bf16.gmra.mrb[0].mxu0 %v4142
      %v4223 = vpop.f32.mrb[0].mxu0
      %v4224 = vadd.f32 0.0, %v4223
      %v4225 = vpop.f32.mrb[0].mxu0
      %v4226 = vpop.f32.mrb[0].mxu0
      %v4227 = vadd.f32 0.0, %v4226
      %v4228 = vpop.f32.mrb[0].mxu0
      %4229 = vmatprep.mubr.bf16.mxu0 0
      %4230 = vmatmul.mubr.bf16.gmra.mrb[0].mxu0 %v4145
      %v4231 = vpop.f32.mrb[0].mxu0
      %v4232 = vadd.f32 0.0, %v4231
      %v4233 = vpop.f32.mrb[0].mxu0
      %v4234 = vpop.f32.mrb[0].mxu0
      %v4235 = vadd.f32 0.0, %v4234
      %v4236 = vpop.f32.mrb[0].mxu0
      %4237 = vmatprep.mubr.bf16.mxu0 0
      %4238 = vmatmul.mubr.bf16.gmra.mrb[0].mxu0 %v4148
      %v4239 = vpop.f32.mrb[0].mxu0
      %v4240 = vadd.f32 0.0, %v4239
      %v4241 = vpop.f32.mrb[0].mxu0
      %v4242 = vpop.f32.mrb[0].mxu0
      %v4243 = vadd.f32 0.0, %v4242
      %v4244 = vpop.f32.mrb[0].mxu0
      %4245 = vmatprep.mubr.bf16.mxu0 0
      %4246 = vmatmul.mubr.bf16.gmra.mrb[0].mxu0 %v4151
      %v4247 = vpop.f32.mrb[0].mxu0
      %v4248 = vadd.f32 0.0, %v4247
      %v4249 = vpop.f32.mrb[0].mxu0
      %v4250 = vpop.f32.mrb[0].mxu0
      %v4251 = vadd.f32 0.0, %v4250
      %v4252 = vpop.f32.mrb[0].mxu0
      %4253 = vmatprep.mubr.bf16.mxu0 0
      %4254 = vmatmul.mubr.bf16.gmra.mrb[0].mxu0 %v4154
      %v4255 = vpop.f32.mrb[0].mxu0
      %v4256 = vadd.f32 0.0, %v4255
      %v4257 = vpop.f32.mrb[0].mxu0
      %v4258 = vpop.f32.mrb[0].mxu0
      %v4259 = vadd.f32 0.0, %v4258
      %v4260 = vpop.f32.mrb[0].mxu0
      %4261 = vmatprep.mubr.bf16.mxu0 0
      %4262 = vmatmul.mubr.bf16.gmra.mrb[0].mxu0 %v4157
      %v4263 = vpop.f32.mrb[0].mxu0
      %v4264 = vadd.f32 0.0, %v4263
      %v4265 = vpop.f32.mrb[0].mxu0
      %v4266 = vpop.f32.mrb[0].mxu0
      %v4267 = vadd.f32 0.0, %v4266
      %v4268 = vpop.f32.mrb[0].mxu0
      %4269 = vmatprep.mubr.bf16.mxu0 0
      %4270 = vmatmul.mubr.bf16.gmra.mrb[0].mxu0 %v4160
      %v4271 = vpop.f32.mrb[0].mxu0
      %v4272 = vadd.f32 0.0, %v4271
      %v4273 = vpop.f32.mrb[0].mxu0
      %v4274 = vpop.f32.mrb[0].mxu0
      %v4275 = vadd.f32 0.0, %v4274
      %v4276 = vpop.f32.mrb[0].mxu0
      %4277 = vmatprep.mubr.bf16.mxu0 0
      %4278 = vmatmul.mubr.bf16.gmra.mrb[0].mxu0 %v4163
      %v4279 = vpop.f32.mrb[0].mxu0
      %v4280 = vadd.f32 0.0, %v4279
      %v4281 = vpop.f32.mrb[0].mxu0
      %v4282 = vpop.f32.mrb[0].mxu0
      %v4283 = vadd.f32 0.0, %v4282
      %v4284 = vpop.f32.mrb[0].mxu0
      %4285 = vmatprep.mubr.bf16.mxu0 0
      %4286 = vmatmul.mubr.bf16.gmra.mrb[0].mxu0 %v4166
      %v4287 = vpop.f32.mrb[0].mxu0
      %v4288 = vadd.f32 0.0, %v4287
      %v4289 = vpop.f32.mrb[0].mxu0
      %v4290 = vpop.f32.mrb[0].mxu0
      %v4291 = vadd.f32 0.0, %v4290
      %v4292 = vpop.f32.mrb[0].mxu0
      %4293 = vmatprep.mubr.bf16.mxu0 0
      %4294 = vmatmul.mubr.bf16.gmra.mrb[0].mxu0 %v4169
      %v4295 = vpop.f32.mrb[0].mxu0
      %v4296 = vadd.f32 0.0, %v4295
      %v4297 = vpop.f32.mrb[0].mxu0
      %v4298 = vpop.f32.mrb[0].mxu0
      %v4299 = vadd.f32 0.0, %v4298
      %v4300 = vpop.f32.mrb[0].mxu0
      %4301 = vmatprep.mubr.bf16.mxu0 0
      %4302 = vmatmul.mubr.bf16.gmra.mrb[0].mxu0 %v4172
      %v4303 = vpop.f32.mrb[0].mxu0
      %v4304 = vadd.f32 0.0, %v4303
      %v4305 = vpop.f32.mrb[0].mxu0
      %v4306 = vpop.f32.mrb[0].mxu0
      %v4307 = vadd.f32 0.0, %v4306
      %v4308 = vpop.f32.mrb[0].mxu0
      %4309 = vmatprep.mubr.bf16.mxu0 0
      %4310 = vmatmul.mubr.bf16.gmra.mrb[0].mxu0 %v4175
      %v4311 = vpop.f32.mrb[0].mxu0
      %v4312 = vadd.f32 0.0, %v4311
      %v4313 = vpop.f32.mrb[0].mxu0
      %v4314 = vpop.f32.mrb[0].mxu0
      %v4315 = vadd.f32 0.0, %v4314
      %v4316 = vpop.f32.mrb[0].mxu0
      %4317 = vmatprep.mubr.bf16.mxu0 0
      %4318 = vmatmul.mubr.bf16.gmra.mrb[0].mxu0 %v4178
      %v4319 = vpop.f32.mrb[0].mxu0
      %v4320 = vadd.f32 0.0, %v4319
      %v4321 = vpop.f32.mrb[0].mxu0
      %v4322 = vpop.f32.mrb[0].mxu0
      %v4323 = vadd.f32 0.0, %v4322
      %v4324 = vpop.f32.mrb[0].mxu0
      %4325 = vmatprep.mubr.bf16.mxu0 0
      %4326 = vmatmul.mubr.bf16.gmra.mrb[0].mxu0 %v4181
      %v4327 = vpop.f32.mrb[0].mxu0
      %v4328 = vadd.f32 0.0, %v4327
      %v4329 = vpop.f32.mrb[0].mxu0
      %v4330 = vpop.f32.mrb[0].mxu0
      %v4331 = vadd.f32 0.0, %v4330
      %v4332 = vpop.f32.mrb[0].mxu0
      %4333 = vmatprep.mubr.bf16.mxu0 0
      %4334 = vmatmul.mubr.bf16.gmra.mrb[0].mxu0 %v4184
      %v4335 = vpop.f32.mrb[0].mxu0
      %v4336 = vadd.f32 0.0, %v4335
      %v4337 = vpop.f32.mrb[0].mxu0
      %v4338 = vpop.f32.mrb[0].mxu0
      %v4339 = vadd.f32 0.0, %v4338
      %v4340 = vpop.f32.mrb[0].mxu0
      %4341 = vmatprep.mubr.bf16.mxu0 0
      %4342 = vmatmul.mubr.bf16.gmra.mrb[0].mxu0 %v4187
      %v4343 = vpop.f32.mrb[0].mxu0
      %v4344 = vadd.f32 0.0, %v4343
      %v4345 = vpop.f32.mrb[0].mxu0
      %v4346 = vpop.f32.mrb[0].mxu0
      %v4347 = vadd.f32 0.0, %v4346
      %v4348 = vpop.f32.mrb[0].mxu0
      %4349 = vdwg.mxu0
      %v4350 = vadd.f32 %v3620, %v4224
      %v4351 = vadd.f32 %v3621, %v4227
      %v4352 = vadd.f32 %v3622, %v4232
      %v4353 = vadd.f32 %v3623, %v4235
      %v4354 = vadd.f32 %v3624, %v4240
      %v4355 = vadd.f32 %v3625, %v4243
      %v4356 = vadd.f32 %v3626, %v4248
      %v4357 = vadd.f32 %v3627, %v4251
      %v4358 = vadd.f32 %v3628, %v4256
      %v4359 = vadd.f32 %v3629, %v4259
      %v4360 = vadd.f32 %v3630, %v4264
      %v4361 = vadd.f32 %v3631, %v4267
      %v4362 = vadd.f32 %v3632, %v4272
      %v4363 = vadd.f32 %v3633, %v4275
      %v4364 = vadd.f32 %v3634, %v4280
      %v4365 = vadd.f32 %v3635, %v4283
      %v4366 = vadd.f32 %v3636, %v4288
      %v4367 = vadd.f32 %v3637, %v4291
      %v4368 = vadd.f32 %v3638, %v4296
      %v4369 = vadd.f32 %v3639, %v4299
      %v4370 = vadd.f32 %v3640, %v4304
      %v4371 = vadd.f32 %v3641, %v4307
      %v4372 = vadd.f32 %v3642, %v4312
      %v4373 = vadd.f32 %v3643, %v4315
      %v4374 = vadd.f32 %v3644, %v4320
      %v4375 = vadd.f32 %v3645, %v4323
      %v4376 = vadd.f32 %v3646, %v4328
      %v4377 = vadd.f32 %v3647, %v4331
      %v4378 = vadd.f32 %v3648, %v4336
      %v4379 = vadd.f32 %v3649, %v4339
      %v4380 = vadd.f32 %v3650, %v4344
      %v4381 = vadd.f32 %v3651, %v4347
      %v4382 = vld [vmem:[%s3289] sm:$0xe]
      %v4383 = vld [vmem:[%s3289 + $0xc] sm:$0xe]
      %v4384 = vld [vmem:[%s3289 + $0x18] sm:$0xe]
      %v4385 = vld [vmem:[%s3289 + $0x24] sm:$0xe]
      %v4386 = vld [vmem:[%s3289 + $0x30] sm:$0xe]
      %v4387 = vld [vmem:[%s3289 + $0x3c] sm:$0xe]
      %v4388 = vld [vmem:[%s3289 + $0x48] sm:$0xe]
      %v4389 = vld [vmem:[%s3289 + $0x54] sm:$0xe]
      %v4390 = vld [vmem:[%s3289 + $0x60] sm:$0xe]
      %v4391 = vld [vmem:[%s3289 + $0x6c] sm:$0xe]
      %v4392 = vld [vmem:[%s3289 + $0x78] sm:$0xe]
      %v4393 = vld [vmem:[%s3289 + $0x84] sm:$0xe]
      %v4394 = vld [vmem:[%s3289 + $0x90] sm:$0xe]
      %v4395 = vld [vmem:[%s3289 + $0x9c] sm:$0xe]
      %v4396 = vld [vmem:[%s3289 + $0xa8] sm:$0xe]
      %v4397 = vld [vmem:[%s3289 + $0xb4] sm:$0xe]
      %v4446 = vrot.slane %v4382, 5
      %v4447 = vrot.slane %v4446, 4
      %v4448 = vrot.slane %v3653, 5
      %v4449 = vsel %vm1305, %v4447, %v4448
      %v4450 = vrot.slane %v4448, 4
      %v4451 = vrot.slane %v3654, 5
      %v4452 = vsel %vm1305, %v4450, %v4451
      %v4453 = vrot.slane %v4383, 5
      %v4454 = vrot.slane %v4453, 4
      %v4455 = vrot.slane %v3656, 5
      %v4456 = vsel %vm1305, %v4454, %v4455
      %v4457 = vrot.slane %v4455, 4
      %v4458 = vrot.slane %v3657, 5
      %v4459 = vsel %vm1305, %v4457, %v4458
      %v4460 = vrot.slane %v4384, 5
      %v4461 = vrot.slane %v4460, 4
      %v4462 = vrot.slane %v3659, 5
      %v4463 = vsel %vm1305, %v4461, %v4462
      %v4464 = vrot.slane %v4462, 4
      %v4465 = vrot.slane %v3660, 5
      %v4466 = vsel %vm1305, %v4464, %v4465
      %v4467 = vrot.slane %v4385, 5
      %v4468 = vrot.slane %v4467, 4
      %v4469 = vrot.slane %v3662, 5
      %v4470 = vsel %vm1305, %v4468, %v4469
      %v4471 = vrot.slane %v4469, 4
      %v4472 = vrot.slane %v3663, 5
      %v4473 = vsel %vm1305, %v4471, %v4472
      %v4474 = vrot.slane %v4386, 5
      %v4475 = vrot.slane %v4474, 4
      %v4476 = vrot.slane %v3665, 5
      %v4477 = vsel %vm1305, %v4475, %v4476
      %v4478 = vrot.slane %v4476, 4
      %v4479 = vrot.slane %v3666, 5
      %v4480 = vsel %vm1305, %v4478, %v4479
      %v4481 = vrot.slane %v4387, 5
      %v4482 = vrot.slane %v4481, 4
      %v4483 = vrot.slane %v3668, 5
      %v4484 = vsel %vm1305, %v4482, %v4483
      %v4485 = vrot.slane %v4483, 4
      %v4486 = vrot.slane %v3669, 5
      %v4487 = vsel %vm1305, %v4485, %v4486
      %v4488 = vrot.slane %v4388, 5
      %v4489 = vrot.slane %v4488, 4
      %v4490 = vrot.slane %v3671, 5
      %v4491 = vsel %vm1305, %v4489, %v4490
      %v4492 = vrot.slane %v4490, 4
      %v4493 = vrot.slane %v3672, 5
      %v4494 = vsel %vm1305, %v4492, %v4493
      %v4495 = vrot.slane %v4389, 5
      %v4496 = vrot.slane %v4495, 4
      %v4497 = vrot.slane %v3674, 5
      %v4498 = vsel %vm1305, %v4496, %v4497
      %v4499 = vrot.slane %v4497, 4
      %v4500 = vrot.slane %v3675, 5
      %v4501 = vsel %vm1305, %v4499, %v4500
      %v4502 = vrot.slane %v4390, 5
      %v4503 = vrot.slane %v4502, 4
      %v4504 = vrot.slane %v3677, 5
      %v4505 = vsel %vm1305, %v4503, %v4504
      %v4506 = vrot.slane %v4504, 4
      %v4507 = vrot.slane %v3678, 5
      %v4508 = vsel %vm1305, %v4506, %v4507
      %v4509 = vrot.slane %v4391, 5
      %v4510 = vrot.slane %v4509, 4
      %v4511 = vrot.slane %v3680, 5
      %v4512 = vsel %vm1305, %v4510, %v4511
      %v4513 = vrot.slane %v4511, 4
      %v4514 = vrot.slane %v3681, 5
      %v4515 = vsel %vm1305, %v4513, %v4514
      %v4516 = vrot.slane %v4392, 5
      %v4517 = vrot.slane %v4516, 4
      %v4518 = vrot.slane %v3683, 5
      %v4519 = vsel %vm1305, %v4517, %v4518
      %v4520 = vrot.slane %v4518, 4
      %v4521 = vrot.slane %v3684, 5
      %v4522 = vsel %vm1305, %v4520, %v4521
      %v4523 = vrot.slane %v4393, 5
      %v4524 = vrot.slane %v4523, 4
      %v4525 = vrot.slane %v3686, 5
      %v4526 = vsel %vm1305, %v4524, %v4525
      %v4527 = vrot.slane %v4525, 4
      %v4528 = vrot.slane %v3687, 5
      %v4529 = vsel %vm1305, %v4527, %v4528
      %v4530 = vrot.slane %v4394, 5
      %v4531 = vrot.slane %v4530, 4
      %v4532 = vrot.slane %v3689, 5
      %v4533 = vsel %vm1305, %v4531, %v4532
      %v4534 = vrot.slane %v4532, 4
      %v4535 = vrot.slane %v3690, 5
      %v4536 = vsel %vm1305, %v4534, %v4535
      %v4537 = vrot.slane %v4395, 5
      %v4538 = vrot.slane %v4537, 4
      %v4539 = vrot.slane %v3692, 5
      %v4540 = vsel %vm1305, %v4538, %v4539
      %v4541 = vrot.slane %v4539, 4
      %v4542 = vrot.slane %v3693, 5
      %v4543 = vsel %vm1305, %v4541, %v4542
      %v4544 = vrot.slane %v4396, 5
      %v4545 = vrot.slane %v4544, 4
      %v4546 = vrot.slane %v3695, 5
      %v4547 = vsel %vm1305, %v4545, %v4546
      %v4548 = vrot.slane %v4546, 4
      %v4549 = vrot.slane %v3696, 5
      %v4550 = vsel %vm1305, %v4548, %v4549
      %v4551 = vrot.slane %v4397, 5
      %v4552 = vrot.slane %v4551, 4
      %v4553 = vrot.slane %v3698, 5
      %v4554 = vsel %vm1305, %v4552, %v4553
      %v4555 = vrot.slane %v4553, 4
      %v4556 = vrot.slane %v3699, 5
      %v4557 = vsel %vm1305, %v4555, %v4556
      %s4558 = scalar_lea.vmem %s1, 64
      %v4559 = vld [vmem:[%s4558] sm:$0xf]
      %v4560 = vld [vmem:[%s4558 + $0x4] sm:$0xf]
      %v4561 = vunpack.c.l.b16 %v4449
      %v4562 = vunpack.c.l.b16 %v4452
      %v4563 = vunpack.c.l.b16 %v4456
      %v4564 = vunpack.c.l.b16 %v4459
      %v4565 = vunpack.c.l.b16 %v4463
      %v4566 = vunpack.c.l.b16 %v4466
      %v4567 = vunpack.c.l.b16 %v4470
      %v4568 = vunpack.c.l.b16 %v4473
      %v4569 = vunpack.c.l.b16 %v4477
      %v4570 = vunpack.c.l.b16 %v4480
      %v4571 = vunpack.c.l.b16 %v4484
      %v4572 = vunpack.c.l.b16 %v4487
      %v4573 = vunpack.c.l.b16 %v4491
      %v4574 = vunpack.c.l.b16 %v4494
      %v4575 = vunpack.c.l.b16 %v4498
      %v4576 = vunpack.c.l.b16 %v4501
      %v4577 = vunpack.c.l.b16 %v4505
      %v4578 = vunpack.c.l.b16 %v4508
      %v4579 = vunpack.c.l.b16 %v4512
      %v4580 = vunpack.c.l.b16 %v4515
      %v4581 = vunpack.c.l.b16 %v4519
      %v4582 = vunpack.c.l.b16 %v4522
      %v4583 = vunpack.c.l.b16 %v4526
      %v4584 = vunpack.c.l.b16 %v4529
      %v4585 = vunpack.c.l.b16 %v4533
      %v4586 = vunpack.c.l.b16 %v4536
      %v4587 = vunpack.c.l.b16 %v4540
      %v4588 = vunpack.c.l.b16 %v4543
      %v4589 = vunpack.c.l.b16 %v4547
      %v4590 = vunpack.c.l.b16 %v4550
      %v4591 = vunpack.c.l.b16 %v4554
      %v4592 = vunpack.c.l.b16 %v4557
      %v4593 = vpack.c.b16 %v4562, %v4561
      %v4594 = vpack.c.b16 %v4564, %v4563
      %v4595 = vpack.c.b16 %v4566, %v4565
      %v4596 = vpack.c.b16 %v4568, %v4567
      %v4597 = vpack.c.b16 %v4570, %v4569
      %v4598 = vpack.c.b16 %v4572, %v4571
      %v4599 = vpack.c.b16 %v4574, %v4573
      %v4600 = vpack.c.b16 %v4576, %v4575
      %v4601 = vpack.c.b16 %v4578, %v4577
      %v4602 = vpack.c.b16 %v4580, %v4579
      %v4603 = vpack.c.b16 %v4582, %v4581
      %v4604 = vpack.c.b16 %v4584, %v4583
      %v4605 = vpack.c.b16 %v4586, %v4585
      %v4606 = vpack.c.b16 %v4588, %v4587
      %v4607 = vpack.c.b16 %v4590, %v4589
      %v4608 = vpack.c.b16 %v4592, %v4591
      %v4611 = vunpack.c.l.b16 %v4559
      %v4612 = vunpack.c.l.b16 %v4560
      %v4613 = vpack.c.b16 %v4612, %v4611
      %v4616 = vsel %vm750, %v4593, 0
      %v4619 = vsel %vm750, %v4594, 0
      %v4622 = vsel %vm750, %v4595, 0
      %v4625 = vsel %vm750, %v4596, 0
      %v4628 = vsel %vm750, %v4597, 0
      %v4631 = vsel %vm750, %v4598, 0
      %v4634 = vsel %vm750, %v4599, 0
      %v4637 = vsel %vm750, %v4600, 0
      %v4640 = vsel %vm750, %v4601, 0
      %v4643 = vsel %vm750, %v4602, 0
      %v4646 = vsel %vm750, %v4603, 0
      %v4649 = vsel %vm750, %v4604, 0
      %v4652 = vsel %vm750, %v4605, 0
      %v4655 = vsel %vm750, %v4606, 0
      %v4658 = vsel %vm750, %v4607, 0
      %v4661 = vsel %vm750, %v4608, 0
      %4663 = vmatprep.subr.bf16.mxu0 0
      %4664 = vmatpush1.bf16.msra.mxu0 %v4613
      %4665 = vmatprep.subr.bf16.mxu0 0
      %4666 = vmatpush1.bf16.msra.mxu0 0
      %4667 = vmatprep.subr.bf16.mxu0 0
      %4668 = vmatpush1.bf16.msra.mxu0 0
      %4669 = vmatprep.subr.bf16.mxu0 0
      %4670 = vmatpush1.bf16.msra.mxu0 0
      %4671 = vmatprep.subr.bf16.mxu0 0
      %4672 = vmatpush1.bf16.msra.mxu0 0
      %4673 = vmatprep.subr.bf16.mxu0 0
      %4674 = vmatpush1.bf16.msra.mxu0 0
      %4675 = vmatprep.subr.bf16.mxu0 0
      %4676 = vmatpush1.bf16.msra.mxu0 0
      %4677 = vmatprep.subr.bf16.mxu0 0
      %4678 = vmatpush1.bf16.msra.mxu0 0
      %4679 = vmatprep.subr.bf16.mxu0 0
      %4680 = vmatpush1.bf16.msra.mxu0 0
      %4681 = vmatprep.subr.bf16.mxu0 0
      %4682 = vmatpush1.bf16.msra.mxu0 0
      %4683 = vmatprep.subr.bf16.mxu0 0
      %4684 = vmatpush1.bf16.msra.mxu0 0
      %4685 = vmatprep.subr.bf16.mxu0 0
      %4686 = vmatpush1.bf16.msra.mxu0 0
      %4687 = vmatprep.subr.bf16.mxu0 0
      %4688 = vmatpush1.bf16.msra.mxu0 0
      %4689 = vmatprep.subr.bf16.mxu0 0
      %4690 = vmatpush1.bf16.msra.mxu0 0
      %4691 = vmatprep.subr.bf16.mxu0 0
      %4692 = vmatpush1.bf16.msra.mxu0 0
      %4693 = vmatprep.subr.bf16.mxu0 0
      %4694 = vmatpush1.bf16.msra.mxu0 0
      %4695 = vmatprep.mubr.bf16.mxu0 0
      %4696 = vmatmul.mubr.bf16.gmra.mrb[0].mxu0 %v4616
      %v4697 = vpop.f32.mrb[0].mxu0
      %v4698 = vadd.f32 0.0, %v4697
      %v4699 = vpop.f32.mrb[0].mxu0
      %v4700 = vpop.f32.mrb[0].mxu0
      %v4701 = vadd.f32 0.0, %v4700
      %v4702 = vpop.f32.mrb[0].mxu0
      %4703 = vmatprep.mubr.bf16.mxu0 0
      %4704 = vmatmul.mubr.bf16.gmra.mrb[0].mxu0 %v4619
      %v4705 = vpop.f32.mrb[0].mxu0
      %v4706 = vadd.f32 0.0, %v4705
      %v4707 = vpop.f32.mrb[0].mxu0
      %v4708 = vpop.f32.mrb[0].mxu0
      %v4709 = vadd.f32 0.0, %v4708
      %v4710 = vpop.f32.mrb[0].mxu0
      %4711 = vmatprep.mubr.bf16.mxu0 0
      %4712 = vmatmul.mubr.bf16.gmra.mrb[0].mxu0 %v4622
      %v4713 = vpop.f32.mrb[0].mxu0
      %v4714 = vadd.f32 0.0, %v4713
      %v4715 = vpop.f32.mrb[0].mxu0
      %v4716 = vpop.f32.mrb[0].mxu0
      %v4717 = vadd.f32 0.0, %v4716
      %v4718 = vpop.f32.mrb[0].mxu0
      %4719 = vmatprep.mubr.bf16.mxu0 0
      %4720 = vmatmul.mubr.bf16.gmra.mrb[0].mxu0 %v4625
      %v4721 = vpop.f32.mrb[0].mxu0
      %v4722 = vadd.f32 0.0, %v4721
      %v4723 = vpop.f32.mrb[0].mxu0
      %v4724 = vpop.f32.mrb[0].mxu0
      %v4725 = vadd.f32 0.0, %v4724
      %v4726 = vpop.f32.mrb[0].mxu0
      %4727 = vmatprep.mubr.bf16.mxu0 0
      %4728 = vmatmul.mubr.bf16.gmra.mrb[0].mxu0 %v4628
      %v4729 = vpop.f32.mrb[0].mxu0
      %v4730 = vadd.f32 0.0, %v4729
      %v4731 = vpop.f32.mrb[0].mxu0
      %v4732 = vpop.f32.mrb[0].mxu0
      %v4733 = vadd.f32 0.0, %v4732
      %v4734 = vpop.f32.mrb[0].mxu0
      %4735 = vmatprep.mubr.bf16.mxu0 0
      %4736 = vmatmul.mubr.bf16.gmra.mrb[0].mxu0 %v4631
      %v4737 = vpop.f32.mrb[0].mxu0
      %v4738 = vadd.f32 0.0, %v4737
      %v4739 = vpop.f32.mrb[0].mxu0
      %v4740 = vpop.f32.mrb[0].mxu0
      %v4741 = vadd.f32 0.0, %v4740
      %v4742 = vpop.f32.mrb[0].mxu0
      %4743 = vmatprep.mubr.bf16.mxu0 0
      %4744 = vmatmul.mubr.bf16.gmra.mrb[0].mxu0 %v4634
      %v4745 = vpop.f32.mrb[0].mxu0
      %v4746 = vadd.f32 0.0, %v4745
      %v4747 = vpop.f32.mrb[0].mxu0
      %v4748 = vpop.f32.mrb[0].mxu0
      %v4749 = vadd.f32 0.0, %v4748
      %v4750 = vpop.f32.mrb[0].mxu0
      %4751 = vmatprep.mubr.bf16.mxu0 0
      %4752 = vmatmul.mubr.bf16.gmra.mrb[0].mxu0 %v4637
      %v4753 = vpop.f32.mrb[0].mxu0
      %v4754 = vadd.f32 0.0, %v4753
      %v4755 = vpop.f32.mrb[0].mxu0
      %v4756 = vpop.f32.mrb[0].mxu0
      %v4757 = vadd.f32 0.0, %v4756
      %v4758 = vpop.f32.mrb[0].mxu0
      %4759 = vmatprep.mubr.bf16.mxu0 0
      %4760 = vmatmul.mubr.bf16.gmra.mrb[0].mxu0 %v4640
      %v4761 = vpop.f32.mrb[0].mxu0
      %v4762 = vadd.f32 0.0, %v4761
      %v4763 = vpop.f32.mrb[0].mxu0
      %v4764 = vpop.f32.mrb[0].mxu0
      %v4765 = vadd.f32 0.0, %v4764
      %v4766 = vpop.f32.mrb[0].mxu0
      %4767 = vmatprep.mubr.bf16.mxu0 0
      %4768 = vmatmul.mubr.bf16.gmra.mrb[0].mxu0 %v4643
      %v4769 = vpop.f32.mrb[0].mxu0
      %v4770 = vadd.f32 0.0, %v4769
      %v4771 = vpop.f32.mrb[0].mxu0
      %v4772 = vpop.f32.mrb[0].mxu0
      %v4773 = vadd.f32 0.0, %v4772
      %v4774 = vpop.f32.mrb[0].mxu0
      %4775 = vmatprep.mubr.bf16.mxu0 0
      %4776 = vmatmul.mubr.bf16.gmra.mrb[0].mxu0 %v4646
      %v4777 = vpop.f32.mrb[0].mxu0
      %v4778 = vadd.f32 0.0, %v4777
      %v4779 = vpop.f32.mrb[0].mxu0
      %v4780 = vpop.f32.mrb[0].mxu0
      %v4781 = vadd.f32 0.0, %v4780
      %v4782 = vpop.f32.mrb[0].mxu0
      %4783 = vmatprep.mubr.bf16.mxu0 0
      %4784 = vmatmul.mubr.bf16.gmra.mrb[0].mxu0 %v4649
      %v4785 = vpop.f32.mrb[0].mxu0
      %v4786 = vadd.f32 0.0, %v4785
      %v4787 = vpop.f32.mrb[0].mxu0
      %v4788 = vpop.f32.mrb[0].mxu0
      %v4789 = vadd.f32 0.0, %v4788
      %v4790 = vpop.f32.mrb[0].mxu0
      %4791 = vmatprep.mubr.bf16.mxu0 0
      %4792 = vmatmul.mubr.bf16.gmra.mrb[0].mxu0 %v4652
      %v4793 = vpop.f32.mrb[0].mxu0
      %v4794 = vadd.f32 0.0, %v4793
      %v4795 = vpop.f32.mrb[0].mxu0
      %v4796 = vpop.f32.mrb[0].mxu0
      %v4797 = vadd.f32 0.0, %v4796
      %v4798 = vpop.f32.mrb[0].mxu0
      %4799 = vmatprep.mubr.bf16.mxu0 0
      %4800 = vmatmul.mubr.bf16.gmra.mrb[0].mxu0 %v4655
      %v4801 = vpop.f32.mrb[0].mxu0
      %v4802 = vadd.f32 0.0, %v4801
      %v4803 = vpop.f32.mrb[0].mxu0
      %v4804 = vpop.f32.mrb[0].mxu0
      %v4805 = vadd.f32 0.0, %v4804
      %v4806 = vpop.f32.mrb[0].mxu0
      %4807 = vmatprep.mubr.bf16.mxu0 0
      %4808 = vmatmul.mubr.bf16.gmra.mrb[0].mxu0 %v4658
      %v4809 = vpop.f32.mrb[0].mxu0
      %v4810 = vadd.f32 0.0, %v4809
      %v4811 = vpop.f32.mrb[0].mxu0
      %v4812 = vpop.f32.mrb[0].mxu0
      %v4813 = vadd.f32 0.0, %v4812
      %v4814 = vpop.f32.mrb[0].mxu0
      %4815 = vmatprep.mubr.bf16.mxu0 0
      %4816 = vmatmul.mubr.bf16.gmra.mrb[0].mxu0 %v4661
      %v4817 = vpop.f32.mrb[0].mxu0
      %v4818 = vadd.f32 0.0, %v4817
      %v4819 = vpop.f32.mrb[0].mxu0
      %v4820 = vpop.f32.mrb[0].mxu0
      %v4821 = vadd.f32 0.0, %v4820
      %v4822 = vpop.f32.mrb[0].mxu0
      %4823 = vdwg.mxu0
      %v4824 = vadd.f32 %v4350, %v4698
      %v4825 = vadd.f32 %v4351, %v4701
      %v4826 = vadd.f32 %v4352, %v4706
      %v4827 = vadd.f32 %v4353, %v4709
      %v4828 = vadd.f32 %v4354, %v4714
      %v4829 = vadd.f32 %v4355, %v4717
      %v4830 = vadd.f32 %v4356, %v4722
      %v4831 = vadd.f32 %v4357, %v4725
      %v4832 = vadd.f32 %v4358, %v4730
      %v4833 = vadd.f32 %v4359, %v4733
      %v4834 = vadd.f32 %v4360, %v4738
      %v4835 = vadd.f32 %v4361, %v4741
      %v4836 = vadd.f32 %v4362, %v4746
      %v4837 = vadd.f32 %v4363, %v4749
      %v4838 = vadd.f32 %v4364, %v4754
      %v4839 = vadd.f32 %v4365, %v4757
      %v4840 = vadd.f32 %v4366, %v4762
      %v4841 = vadd.f32 %v4367, %v4765
      %v4842 = vadd.f32 %v4368, %v4770
      %v4843 = vadd.f32 %v4369, %v4773
      %v4844 = vadd.f32 %v4370, %v4778
      %v4845 = vadd.f32 %v4371, %v4781
      %v4846 = vadd.f32 %v4372, %v4786
      %v4847 = vadd.f32 %v4373, %v4789
      %v4848 = vadd.f32 %v4374, %v4794
      %v4849 = vadd.f32 %v4375, %v4797
      %v4850 = vadd.f32 %v4376, %v4802
      %v4851 = vadd.f32 %v4377, %v4805
      %v4852 = vadd.f32 %v4378, %v4810
      %v4853 = vadd.f32 %v4379, %v4813
      %v4854 = vadd.f32 %v4380, %v4818
      %v4855 = vadd.f32 %v4381, %v4821
      %v4856 = vld [vmem:[%s238] sm:$0xff]
      %v4857 = vld [vmem:[%s238 + $0x8] sm:$0xff]
      %v4858 = vld [vmem:[%s238 + $0x10] sm:$0xff]
      %v4859 = vld [vmem:[%s238 + $0x18] sm:$0xff]
      %v4860 = vld [vmem:[%s238 + $0x20] sm:$0xff]
      %v4861 = vld [vmem:[%s238 + $0x28] sm:$0xff]
      %v4862 = vld [vmem:[%s238 + $0x30] sm:$0xff]
      %v4863 = vld [vmem:[%s238 + $0x38] sm:$0xff]
      %v4864 = vld [vmem:[%s238 + $0x40] sm:$0xff]
      %v4865 = vld [vmem:[%s238 + $0x48] sm:$0xff]
      %v4866 = vld [vmem:[%s238 + $0x50] sm:$0xff]
      %v4867 = vld [vmem:[%s238 + $0x58] sm:$0xff]
      %v4868 = vld [vmem:[%s238 + $0x60] sm:$0xff]
      %v4869 = vld [vmem:[%s238 + $0x68] sm:$0xff]
      %v4870 = vld [vmem:[%s238 + $0x70] sm:$0xff]
      %v4871 = vld [vmem:[%s238 + $0x78] sm:$0xff]
      %v4872 = vld [vmem:[%s238 + $0x80] sm:$0xff]
      %v4873 = vld [vmem:[%s238 + $0x88] sm:$0xff]
      %v4874 = vld [vmem:[%s238 + $0x90] sm:$0xff]
      %v4875 = vld [vmem:[%s238 + $0x98] sm:$0xff]
      %v4876 = vld [vmem:[%s238 + $0xa0] sm:$0xff]
      %v4877 = vld [vmem:[%s238 + $0xa8] sm:$0xff]
      %v4878 = vld [vmem:[%s238 + $0xb0] sm:$0xff]
      %v4879 = vld [vmem:[%s238 + $0xb8] sm:$0xff]
      %v4880 = vld [vmem:[%s238 + $0xc0] sm:$0xff]
      %v4881 = vld [vmem:[%s238 + $0xc8] sm:$0xff]
      %v4882 = vld [vmem:[%s238 + $0xd0] sm:$0xff]
      %v4883 = vld [vmem:[%s238 + $0xd8] sm:$0xff]
      %v4884 = vld [vmem:[%s238 + $0xe0] sm:$0xff]
      %v4885 = vld [vmem:[%s238 + $0xe8] sm:$0xff]
      %v4886 = vld [vmem:[%s238 + $0xf0] sm:$0xff]
      %v4887 = vld [vmem:[%s238 + $0xf8] sm:$0xff]
      %4889 = vset.pattern.permute.xlu0 0
      %4890 = vperm.xlu0 %4889, %v4856
      %v4891 = vpop.permute.xlu0 %4890
      %4894 = vset.pattern.permute.xlu0 0
      %4895 = vperm.xlu0 %4894, %v4857
      %v4896 = vpop.permute.xlu0 %4895
      %4899 = vset.pattern.permute.xlu0 0
      %4900 = vperm.xlu0 %4899, %v4858
      %v4901 = vpop.permute.xlu0 %4900
      %4904 = vset.pattern.permute.xlu0 0
      %4905 = vperm.xlu0 %4904, %v4859
      %v4906 = vpop.permute.xlu0 %4905
      %4909 = vset.pattern.permute.xlu0 0
      %4910 = vperm.xlu0 %4909, %v4860
      %v4911 = vpop.permute.xlu0 %4910
      %4914 = vset.pattern.permute.xlu0 0
      %4915 = vperm.xlu0 %4914, %v4861
      %v4916 = vpop.permute.xlu0 %4915
      %4919 = vset.pattern.permute.xlu0 0
      %4920 = vperm.xlu0 %4919, %v4862
      %v4921 = vpop.permute.xlu0 %4920
      %4924 = vset.pattern.permute.xlu0 0
      %4925 = vperm.xlu0 %4924, %v4863
      %v4926 = vpop.permute.xlu0 %4925
      %4929 = vset.pattern.permute.xlu0 0
      %4930 = vperm.xlu0 %4929, %v4864
      %v4931 = vpop.permute.xlu0 %4930
      %4934 = vset.pattern.permute.xlu0 0
      %4935 = vperm.xlu0 %4934, %v4865
      %v4936 = vpop.permute.xlu0 %4935
      %4939 = vset.pattern.permute.xlu0 0
      %4940 = vperm.xlu0 %4939, %v4866
      %v4941 = vpop.permute.xlu0 %4940
      %4944 = vset.pattern.permute.xlu0 0
      %4945 = vperm.xlu0 %4944, %v4867
      %v4946 = vpop.permute.xlu0 %4945
      %4949 = vset.pattern.permute.xlu0 0
      %4950 = vperm.xlu0 %4949, %v4868
      %v4951 = vpop.permute.xlu0 %4950
      %4954 = vset.pattern.permute.xlu0 0
      %4955 = vperm.xlu0 %4954, %v4869
      %v4956 = vpop.permute.xlu0 %4955
      %4959 = vset.pattern.permute.xlu0 0
      %4960 = vperm.xlu0 %4959, %v4870
      %v4961 = vpop.permute.xlu0 %4960
      %4964 = vset.pattern.permute.xlu0 0
      %4965 = vperm.xlu0 %4964, %v4871
      %v4966 = vpop.permute.xlu0 %4965
      %4969 = vset.pattern.permute.xlu0 0
      %4970 = vperm.xlu0 %4969, %v4872
      %v4971 = vpop.permute.xlu0 %4970
      %4974 = vset.pattern.permute.xlu0 0
      %4975 = vperm.xlu0 %4974, %v4873
      %v4976 = vpop.permute.xlu0 %4975
      %4979 = vset.pattern.permute.xlu0 0
      %4980 = vperm.xlu0 %4979, %v4874
      %v4981 = vpop.permute.xlu0 %4980
      %4984 = vset.pattern.permute.xlu0 0
      %4985 = vperm.xlu0 %4984, %v4875
      %v4986 = vpop.permute.xlu0 %4985
      %4989 = vset.pattern.permute.xlu0 0
      %4990 = vperm.xlu0 %4989, %v4876
      %v4991 = vpop.permute.xlu0 %4990
      %4994 = vset.pattern.permute.xlu0 0
      %4995 = vperm.xlu0 %4994, %v4877
      %v4996 = vpop.permute.xlu0 %4995
      %4999 = vset.pattern.permute.xlu0 0
      %5000 = vperm.xlu0 %4999, %v4878
      %v5001 = vpop.permute.xlu0 %5000
      %5004 = vset.pattern.permute.xlu0 0
      %5005 = vperm.xlu0 %5004, %v4879
      %v5006 = vpop.permute.xlu0 %5005
      %5009 = vset.pattern.permute.xlu0 0
      %5010 = vperm.xlu0 %5009, %v4880
      %v5011 = vpop.permute.xlu0 %5010
      %5014 = vset.pattern.permute.xlu0 0
      %5015 = vperm.xlu0 %5014, %v4881
      %v5016 = vpop.permute.xlu0 %5015
      %5019 = vset.pattern.permute.xlu0 0
      %5020 = vperm.xlu0 %5019, %v4882
      %v5021 = vpop.permute.xlu0 %5020
      %5024 = vset.pattern.permute.xlu0 0
      %5025 = vperm.xlu0 %5024, %v4883
      %v5026 = vpop.permute.xlu0 %5025
      %5029 = vset.pattern.permute.xlu0 0
      %5030 = vperm.xlu0 %5029, %v4884
      %v5031 = vpop.permute.xlu0 %5030
      %5034 = vset.pattern.permute.xlu0 0
      %5035 = vperm.xlu0 %5034, %v4885
      %v5036 = vpop.permute.xlu0 %5035
      %5039 = vset.pattern.permute.xlu0 0
      %5040 = vperm.xlu0 %5039, %v4886
      %v5041 = vpop.permute.xlu0 %5040
      %5044 = vset.pattern.permute.xlu0 0
      %5045 = vperm.xlu0 %5044, %v4887
      %v5046 = vpop.permute.xlu0 %5045
      %v5048 = vmul.f32 %v4824, %v4891
      %v5049 = vmul.f32 %v4825, %v4896
      %v5050 = vmul.f32 %v4826, %v4901
      %v5051 = vmul.f32 %v4827, %v4906
      %v5052 = vmul.f32 %v4828, %v4911
      %v5053 = vmul.f32 %v4829, %v4916
      %v5054 = vmul.f32 %v4830, %v4921
      %v5055 = vmul.f32 %v4831, %v4926
      %v5056 = vmul.f32 %v4832, %v4931
      %v5057 = vmul.f32 %v4833, %v4936
      %v5058 = vmul.f32 %v4834, %v4941
      %v5059 = vmul.f32 %v4835, %v4946
      %v5060 = vmul.f32 %v4836, %v4951
      %v5061 = vmul.f32 %v4837, %v4956
      %v5062 = vmul.f32 %v4838, %v4961
      %v5063 = vmul.f32 %v4839, %v4966
      %v5064 = vmul.f32 %v4840, %v4971
      %v5065 = vmul.f32 %v4841, %v4976
      %v5066 = vmul.f32 %v4842, %v4981
      %v5067 = vmul.f32 %v4843, %v4986
      %v5068 = vmul.f32 %v4844, %v4991
      %v5069 = vmul.f32 %v4845, %v4996
      %v5070 = vmul.f32 %v4846, %v5001
      %v5071 = vmul.f32 %v4847, %v5006
      %v5072 = vmul.f32 %v4848, %v5011
      %v5073 = vmul.f32 %v4849, %v5016
      %v5074 = vmul.f32 %v4850, %v5021
      %v5075 = vmul.f32 %v4851, %v5026
      %v5076 = vmul.f32 %v4852, %v5031
      %v5077 = vmul.f32 %v4853, %v5036
      %v5078 = vmul.f32 %v4854, %v5041
      %v5079 = vmul.f32 %v4855, %v5046
      %v5080 = vadd.f32 %v5048, %v5049
      %v5081 = vadd.f32 %v5080, %v5050
      %v5082 = vadd.f32 %v5081, %v5051
      %v5083 = vadd.f32 %v5082, %v5052
      %v5084 = vadd.f32 %v5083, %v5053
      %v5085 = vadd.f32 %v5084, %v5054
      %v5086 = vadd.f32 %v5085, %v5055
      %v5087 = vadd.f32 %v5086, %v5056
      %v5088 = vadd.f32 %v5087, %v5057
      %v5089 = vadd.f32 %v5088, %v5058
      %v5090 = vadd.f32 %v5089, %v5059
      %v5091 = vadd.f32 %v5090, %v5060
      %v5092 = vadd.f32 %v5091, %v5061
      %v5093 = vadd.f32 %v5092, %v5062
      %v5094 = vadd.f32 %v5093, %v5063
      %v5095 = vadd.f32 %v5094, %v5064
      %v5096 = vadd.f32 %v5095, %v5065
      %v5097 = vadd.f32 %v5096, %v5066
      %v5098 = vadd.f32 %v5097, %v5067
      %v5099 = vadd.f32 %v5098, %v5068
      %v5100 = vadd.f32 %v5099, %v5069
      %v5101 = vadd.f32 %v5100, %v5070
      %v5102 = vadd.f32 %v5101, %v5071
      %v5103 = vadd.f32 %v5102, %v5072
      %v5104 = vadd.f32 %v5103, %v5073
      %v5105 = vadd.f32 %v5104, %v5074
      %v5106 = vadd.f32 %v5105, %v5075
      %v5107 = vadd.f32 %v5106, %v5076
      %v5108 = vadd.f32 %v5107, %v5077
      %v5109 = vadd.f32 %v5108, %v5078
      %v5110 = vadd.f32 %v5109, %v5079
      %v5111 = vrot.slane %v5110, 4
      %v5112 = vadd.f32 %v5110, %v5111
      %v5113 = vrot.slane %v5112, 2
      %v5114 = vadd.f32 %v5112, %v5113
      %v5115 = vrot.slane %v5114, 1
      %v5116 = vadd.f32 %v5114, %v5115
      %5117 = vst [vmem:[%s244] sm:$0x1] %v5116
      %v5118 = vmul.f32 %v5048, %v4824
      %v5119 = vmul.f32 %v5049, %v4825
      %v5120 = vmul.f32 %v5050, %v4826
      %v5121 = vmul.f32 %v5051, %v4827
      %v5122 = vmul.f32 %v5052, %v4828
      %v5123 = vmul.f32 %v5053, %v4829
      %v5124 = vmul.f32 %v5054, %v4830
      %v5125 = vmul.f32 %v5055, %v4831
      %v5126 = vmul.f32 %v5056, %v4832
      %v5127 = vmul.f32 %v5057, %v4833
      %v5128 = vmul.f32 %v5058, %v4834
      %v5129 = vmul.f32 %v5059, %v4835
      %v5130 = vmul.f32 %v5060, %v4836
      %v5131 = vmul.f32 %v5061, %v4837
      %v5132 = vmul.f32 %v5062, %v4838
      %v5133 = vmul.f32 %v5063, %v4839
      %v5134 = vmul.f32 %v5064, %v4840
      %v5135 = vmul.f32 %v5065, %v4841
      %v5136 = vmul.f32 %v5066, %v4842
      %v5137 = vmul.f32 %v5067, %v4843
      %v5138 = vmul.f32 %v5068, %v4844
      %v5139 = vmul.f32 %v5069, %v4845
      %v5140 = vmul.f32 %v5070, %v4846
      %v5141 = vmul.f32 %v5071, %v4847
      %v5142 = vmul.f32 %v5072, %v4848
      %v5143 = vmul.f32 %v5073, %v4849
      %v5144 = vmul.f32 %v5074, %v4850
      %v5145 = vmul.f32 %v5075, %v4851
      %v5146 = vmul.f32 %v5076, %v4852
      %v5147 = vmul.f32 %v5077, %v4853
      %v5148 = vmul.f32 %v5078, %v4854
      %v5149 = vmul.f32 %v5079, %v4855
      %v5150 = vadd.f32 %v5118, %v5119
      %v5151 = vadd.f32 %v5150, %v5120
      %v5152 = vadd.f32 %v5151, %v5121
      %v5153 = vadd.f32 %v5152, %v5122
      %v5154 = vadd.f32 %v5153, %v5123
      %v5155 = vadd.f32 %v5154, %v5124
      %v5156 = vadd.f32 %v5155, %v5125
      %v5157 = vadd.f32 %v5156, %v5126
      %v5158 = vadd.f32 %v5157, %v5127
      %v5159 = vadd.f32 %v5158, %v5128
      %v5160 = vadd.f32 %v5159, %v5129
      %v5161 = vadd.f32 %v5160, %v5130
      %v5162 = vadd.f32 %v5161, %v5131
      %v5163 = vadd.f32 %v5162, %v5132
      %v5164 = vadd.f32 %v5163, %v5133
      %v5165 = vadd.f32 %v5164, %v5134
      %v5166 = vadd.f32 %v5165, %v5135
      %v5167 = vadd.f32 %v5166, %v5136
      %v5168 = vadd.f32 %v5167, %v5137
      %v5169 = vadd.f32 %v5168, %v5138
      %v5170 = vadd.f32 %v5169, %v5139
      %v5171 = vadd.f32 %v5170, %v5140
      %v5172 = vadd.f32 %v5171, %v5141
      %v5173 = vadd.f32 %v5172, %v5142
      %v5174 = vadd.f32 %v5173, %v5143
      %v5175 = vadd.f32 %v5174, %v5144
      %v5176 = vadd.f32 %v5175, %v5145
      %v5177 = vadd.f32 %v5176, %v5146
      %v5178 = vadd.f32 %v5177, %v5147
      %v5179 = vadd.f32 %v5178, %v5148
      %v5180 = vadd.f32 %v5179, %v5149
      %v5181 = vrot.slane %v5180, 4
      %v5182 = vadd.f32 %v5180, %v5181
      %v5183 = vrot.slane %v5182, 2
      %v5184 = vadd.f32 %v5182, %v5183
      %v5185 = vrot.slane %v5184, 1
      %v5186 = vadd.f32 %v5184, %v5185
      %5187 = vst [vmem:[%s250] sm:$0x1] %v5186
      %p5188 = scmp.lt.s32.totalorder %s20, 1
      %s5189 = scalar_select %p5188, %s20, 1
      %p5190 = scmp.lt.s32.totalorder %s21, 0
      %s5191 = scalar_select %p5190, %s21, 0
      %s5192 = sadd.s32 %s5191, %s5189
      %s5193 = scalar_lea.vmem %s3, %s5192
      %p5194 = scmp.lt.s32.totalorder %s20, 1
      %s5195 = scalar_select %p5194, %s20, 1
      %p5196 = scmp.lt.s32.totalorder %s21, 0
      %s5197 = scalar_select %p5196, %s21, 0
      %s5198 = sadd.s32 %s5197, %s5195
      %s5199 = scalar_lea.vmem %s4, %s5198
      // Predicated region
      $region33: #{conv_block_forward.2} parent=31 // pred_check
        %p5200 = pneg %p121
      $region34: #{conv_block_forward.2} parent=31 // pred_check_branch
        %5202 = sbr.rel (%p5200) target = $region36
      $region35: #{conv_block_forward.2} parent=31 // pred_region
        _
      $region36: #{conv_block_forward.2} parent=31 // pred_fallthru
        _
      // Predicated region
      $region37: #{conv_block_forward.2} parent=31 // pred_check
        %p5203 = pneg %p149
      $region38: #{conv_block_forward.2} parent=31 // pred_check_branch
        %5205 = sbr.rel (%p5203) target = $region40
      $region39: #{conv_block_forward.2} parent=31 // pred_region
        _
      $region40: #{conv_block_forward.2} parent=31 // pred_fallthru
        _
    $region32: #{conv_block_forward.2} parent=5 // pred_fallthru
      _
    %p5206 = scmp.le.s32.totalorder 2, %s11
    // Predicated region
    $region41: #{conv_block_forward.2} parent=5 // pred_check
      %p5207 = pneg %p5206
    $region42: #{conv_block_forward.2} parent=5 // pred_check_branch
      %5209 = sbr.rel (%p5207) target = $region44
    $region43: #{conv_block_forward.2} parent=5 // pred_region
      %s5210 = ssub.s32 %s11, 2
      // Predicated region
      $region45: #{conv_block_forward.2} parent=43 // pred_check
        %p5211 = pneg %p127
      $region46: #{conv_block_forward.2} parent=43 // pred_check_branch
        %5213 = sbr.rel (%p5211) target = $region48
      $region47: #{conv_block_forward.2} parent=43 // pred_region
        %p5214 = scmp.lt.s32.totalorder %s22, 1
        %s5215 = scalar_select %p5214, %s22, 1
        %p5216 = scmp.lt.s32.totalorder %s23, 0
        %s5217 = scalar_select %p5216, %s23, 0
        %s5218 = sadd.s32 %s5217, %s5215
        %s5219 = scalar_lea.vmem %s3, %s5218
      $region48: #{conv_block_forward.2} parent=43 // pred_fallthru
        _
      // Predicated region
      $region49: #{conv_block_forward.2} parent=43 // pred_check
        %p5220 = pneg %p155
      $region50: #{conv_block_forward.2} parent=43 // pred_check_branch
        %5222 = sbr.rel (%p5220) target = $region52
      $region51: #{conv_block_forward.2} parent=43 // pred_region
        %p5223 = scmp.lt.s32.totalorder %s22, 1
        %s5224 = scalar_select %p5223, %s22, 1
        %p5225 = scmp.lt.s32.totalorder %s23, 0
        %s5226 = scalar_select %p5225, %s23, 0
        %s5227 = sadd.s32 %s5226, %s5224
        %s5228 = scalar_lea.vmem %s4, %s5227
      $region52: #{conv_block_forward.2} parent=43 // pred_fallthru
        _
    $region44: #{conv_block_forward.2} parent=5 // pred_fallthru
      _
  $region6: #{conv_block_forward.2} parent=0 // loop_footer
    %s15 = sadd.s32 1, %s11
  $region7: #{conv_block_forward.2} parent=0 // loop_footer_branch
    %10 = sbr.rel target = $region3
  $region8: #{conv_block_forward.2} parent=0 // loop_exit
    _

// kernel: conv_block_forward.3
$region0: #{conv_block_forward.3}
  #allocation0 [shape = 'u32[]', space=smem, size = 0x4, offset = 0x4, fixed_abs, tag = 'smem constant byte address 0x4 - core index']
  #allocation1 [shape = 'u32[144,128]{1,0:T(1,128)}', space=vmem, size = 0x12000, scoped, tag = 'internal scratch']
  %s0 = inlined_call_operand.vmem [shape: bf16[2,18,18,16], index: 0, kind: input, shape index: {}]
  %s1 = inlined_call_operand.vmem [shape: bf16[3,3,16,128], index: 1, kind: input, shape index: {}]
  %s2 = inlined_call_operand.vmem [shape: f32[1,128], index: 2, kind: input, shape index: {}]
  %s3 = inlined_call_operand.vmem [shape: f32[1,128], index: 3, kind: input, shape index: {}]
  %s4 = inlined_call_operand.vmem [shape: f32[2,8,8,128], index: 4, kind: output, shape index: {}]
  %s5 = sld [smem:[#allocation0]]
  $region49: #{conv_block_forward.3} parent=0
    _
  %s7 = ssub.s32 1, %s5
  %s8 = scalar_select 0, %s7, %s5
  loop: start=0, step=1, limit=4
  $region2: #{conv_block_forward.3} parent=0 // loop_pre_header
    _
  $region3: #{conv_block_forward.3} parent=0 // loop_header
    %s10 = sphi 0, %s14
    %p11 = scmp.ge.s32.totalorder %s10, 4
    %s17 = sphi 0, %s29
    %s18 = sphi 0, %s25
    %s19 = sphi 0, %s17
    %s20 = sphi 0, %s18
    %s21 = sphi 0, %s19
    %s22 = sphi 0, %s20
    %s32 = sphi 0, %s34
    %s35 = sphi 0, %s32
    %s36 = sphi 0, %s35
    %s52 = sphi 0, %s36
    %s56 = sphi 0, %s56
    %s58 = sphi 0, %s56
    %s59 = sphi 0, %s58
    %s73 = sphi 0, %s59
    %s77 = sphi 0, %s77
    %s79 = sphi 0, %s77
    %s80 = sphi 0, %s79
    %s94 = sphi 0, %s80
    %s98 = sphi 0, %s98
    %s100 = sphi 0, %s98
    %s101 = sphi 0, %s100
    %s115 = sphi 0, %s101
    %s123 = sphi 0, %s125
    %s126 = sphi 0, %s123
    %s127 = sphi 0, %s126
    %s143 = sphi 0, %s127
  $region4: #{conv_block_forward.3} parent=0 // loop_header_branch
    %13 = sbr.rel (%p11) target = $region8
  $region5: #{conv_block_forward.3} parent=0 // loop_body
    %s15 = ssub.s32 %s10, 1
    %s16 = ssub.s32 %s10, 2
    %s23 = sadd.s32 1, %s18
    %p24 = scmp.ge.s32.totalorder %s23, 1
    %s25 = scalar_select %p24, 0, %s23
    %s26 = sadd.s32 1, %s17
    %s27 = scalar_select %p24, %s26, %s17
    %p28 = scmp.ge.s32.totalorder %s27, 2
    %s29 = scalar_select %p28, 0, %s27
    %s30 = ssub.s32 %s17, %s29
    %p31 = scmp.eq.s32.totalorder %s30, 0
    %s33 = sadd.s32 %s32, 1
    %s34 = scalar_select %p31, %s32, %s33
    %p37 = pneg %p31
    %p38 = scmp.eq.s32.totalorder %s10, 1
    %p39 = por %p37, %p38
    %p40 = scmp.ne.s32.totalorder %s32, %s35
    %p41 = scmp.eq.s32.totalorder %s10, 0
    %p42 = por %p40, %p41
    %p43 = scmp.ne.s32.totalorder %s32, %s35
    %p44 = scmp.eq.s32.totalorder %s15, 1
    %p45 = por %p43, %p44
    %p46 = scmp.ne.s32.totalorder %s35, %s36
    %p47 = scmp.eq.s32.totalorder %s15, 0
    %p48 = por %p46, %p47
    %p49 = scmp.ne.s32.totalorder %s35, %s36
    %p50 = scmp.eq.s32.totalorder %s16, 1
    %p51 = por %p49, %p50
    %p53 = scmp.ne.s32.totalorder %s36, %s52
    %p54 = scmp.eq.s32.totalorder %s16, 0
    %p55 = por %p53, %p54
    %s57 = sadd.s32 %s56, 1
    %p60 = scmp.eq.s32.totalorder %s10, 1
    %p61 = scmp.ne.s32.totalorder %s56, %s58
    %p62 = scmp.eq.s32.totalorder %s10, 0
    %p63 = por %p61, %p62
    %p64 = scmp.ne.s32.totalorder %s56, %s58
    %p65 = scmp.eq.s32.totalorder %s15, 1
    %p66 = por %p64, %p65
    %p67 = scmp.ne.s32.totalorder %s58, %s59
    %p68 = scmp.eq.s32.totalorder %s15, 0
    %p69 = por %p67, %p68
    %p70 = scmp.ne.s32.totalorder %s58, %s59
    %p71 = scmp.eq.s32.totalorder %s16, 1
    %p72 = por %p70, %p71
    %p74 = scmp.ne.s32.totalorder %s59, %s73
    %p75 = scmp.eq.s32.totalorder %s16, 0
    %p76 = por %p74, %p75
    %s78 = sadd.s32 %s77, 1
    %p81 = scmp.eq.s32.totalorder %s10, 1
    %p82 = scmp.ne.s32.totalorder %s77, %s79
    %p83 = scmp.eq.s32.totalorder %s10, 0
    %p84 = por %p82, %p83
    %p85 = scmp.ne.s32.totalorder %s77, %s79
    %p86 = scmp.eq.s32.totalorder %s15, 1
    %p87 = por %p85, %p86
    %p88 = scmp.ne.s32.totalorder %s79, %s80
    %p89 = scmp.eq.s32.totalorder %s15, 0
    %p90 = por %p88, %p89
    %p91 = scmp.ne.s32.totalorder %s79, %s80
    %p92 = scmp.eq.s32.totalorder %s16, 1
    %p93 = por %p91, %p92
    %p95 = scmp.ne.s32.totalorder %s80, %s94
    %p96 = scmp.eq.s32.totalorder %s16, 0
    %p97 = por %p95, %p96
    %s99 = sadd.s32 %s98, 1
    %p102 = scmp.eq.s32.totalorder %s10, 1
    %p103 = scmp.ne.s32.totalorder %s98, %s100
    %p104 = scmp.eq.s32.totalorder %s10, 0
    %p105 = por %p103, %p104
    %p106 = scmp.ne.s32.totalorder %s98, %s100
    %p107 = scmp.eq.s32.totalorder %s15, 1
    %p108 = por %p106, %p107
    %p109 = scmp.ne.s32.totalorder %s100, %s101
    %p110 = scmp.eq.s32.totalorder %s15, 0
    %p111 = por %p109, %p110
    %p112 = scmp.ne.s32.totalorder %s100, %s101
    %p113 = scmp.eq.s32.totalorder %s16, 1
    %p114 = por %p112, %p113
    %p116 = scmp.ne.s32.totalorder %s101, %s115
    %p117 = scmp.eq.s32.totalorder %s16, 0
    %p118 = por %p116, %p117
    %s119 = ssub.s32 %s17, %s29
    %s120 = ssub.s32 %s18, %s25
    %s121 = sor.u32 %s119, %s120
    %p122 = scmp.eq.s32.totalorder %s121, 0
    %s124 = sadd.s32 %s123, 1
    %s125 = scalar_select %p122, %s123, %s124
    %p128 = pneg %p122
    %p129 = scmp.eq.s32.totalorder %s10, 1
    %p130 = por %p128, %p129
    %p131 = scmp.ne.s32.totalorder %s123, %s126
    %p132 = scmp.eq.s32.totalorder %s10, 0
    %p133 = por %p131, %p132
    %p134 = scmp.ne.s32.totalorder %s123, %s126
    %p135 = scmp.eq.s32.totalorder %s15, 1
    %p136 = por %p134, %p135
    %p137 = scmp.ne.s32.totalorder %s126, %s127
    %p138 = scmp.eq.s32.totalorder %s15, 0
    %p139 = por %p137, %p138
    %p140 = scmp.ne.s32.totalorder %s126, %s127
    %p141 = scmp.eq.s32.totalorder %s16, 1
    %p142 = por %p140, %p141
    %p144 = scmp.ne.s32.totalorder %s127, %s143
    %p145 = scmp.eq.s32.totalorder %s16, 0
    %p146 = por %p144, %p145
    %p147 = scmp.le.s32.totalorder 1, %s10
    %p148 = scmp.lt.s32.totalorder %s10, 3
    %p149 = pnand %p147, %p148
    %p150 = pneg %p149
    // Predicated region
    $region9: #{conv_block_forward.3} parent=5 // pred_check
      _
    $region10: #{conv_block_forward.3} parent=5 // pred_check_branch
      %152 = sbr.rel (%p149) target = $region12
    $region11: #{conv_block_forward.3} parent=5 // pred_region
      %s153 = ssub.s32 %s10, 1
      // Predicated region
      $region13: #{conv_block_forward.3} parent=11 // pred_check
        %p154 = pneg %p69
      $region14: #{conv_block_forward.3} parent=11 // pred_check_branch
        %156 = sbr.rel (%p154) target = $region16
      $region15: #{conv_block_forward.3} parent=11 // pred_region
        _
      $region16: #{conv_block_forward.3} parent=11 // pred_fallthru
        _
      // Predicated region
      $region17: #{conv_block_forward.3} parent=11 // pred_check
        %p157 = pneg %p90
      $region18: #{conv_block_forward.3} parent=11 // pred_check_branch
        %159 = sbr.rel (%p157) target = $region20
      $region19: #{conv_block_forward.3} parent=11 // pred_region
        _
      $region20: #{conv_block_forward.3} parent=11 // pred_fallthru
        _
      // Predicated region
      $region21: #{conv_block_forward.3} parent=11 // pred_check
        %p160 = pneg %p111
      $region22: #{conv_block_forward.3} parent=11 // pred_check_branch
        %162 = sbr.rel (%p160) target = $region24
      $region23: #{conv_block_forward.3} parent=11 // pred_region
        _
      $region24: #{conv_block_forward.3} parent=11 // pred_fallthru
        _
    $region12: #{conv_block_forward.3} parent=5 // pred_fallthru
      _
    %p163 = scmp.lt.s32.totalorder %s10, 2
    // Predicated region
    $region25: #{conv_block_forward.3} parent=5 // pred_check
      %p164 = pneg %p163
    $region26: #{conv_block_forward.3} parent=5 // pred_check_branch
      %166 = sbr.rel (%p164) target = $region28
    $region27: #{conv_block_forward.3} parent=5 // pred_region
      // Predicated region
      $region29: #{conv_block_forward.3} parent=27 // pred_check
        %p167 = pneg %p42
      $region30: #{conv_block_forward.3} parent=27 // pred_check_branch
        %169 = sbr.rel (%p167) target = $region32
      $region31: #{conv_block_forward.3} parent=27 // pred_region
        %p170 = scmp.lt.s32.totalorder %s17, 1
        %s171 = scalar_select %p170, %s17, 1
        %s172 = smul.addr %s171, 54
        %s173 = smul.addr %s172, 4
        %s174 = scalar_lea.vmem %s0, %s173
      $region32: #{conv_block_forward.3} parent=27 // pred_fallthru
        _
    $region28: #{conv_block_forward.3} parent=5 // pred_fallthru
      _
    %p175 = scmp.le.s32.totalorder 1, %s10
    %p176 = scmp.lt.s32.totalorder %s10, 3
    %p177 = pnand %p175, %p176
    %p178 = pneg %p177
    // Predicated region
    $region33: #{conv_block_forward.3} parent=5 // pred_check
      _
    $region34: #{conv_block_forward.3} parent=5 // pred_check_branch
      %180 = sbr.rel (%p177) target = $region36
    $region35: #{conv_block_forward.3} parent=5 // pred_region
      %s181 = ssub.s32 %s10, 1
      %p182 = scmp.lt.s32.totalorder %s19, 1
      %s183 = scalar_select %p182, %s19, 1
      %s184 = smul.addr %s183, 54
      %s185 = smul.addr %s184, 4
      %s186 = scalar_lea.vmem %s0, %s185
      %p187 = pneg %p48
      %p188 = pneg %p45
      %p189 = pneg %p69
      %p190 = pneg %p66
      %p191 = pneg %p90
      %p192 = pneg %p87
      %p193 = pneg %p111
      %p194 = pneg %p108
      %p195 = pneg %p139
      %p196 = pneg %p136
      %s197 = smul.u32 8, %s20
      %p198 = scmp.lt.s32.totalorder %s19, 1
      %s199 = scalar_select %p198, %s19, 1
      %p200 = scmp.lt.s32.totalorder %s197, 7
      %s201 = scalar_select %p200, %s197, 7
      %s202 = smul.addr %s199, 8
      %s203 = sadd.s32 %s201, %s202
      %s204 = smul.addr %s203, 8
      %s205 = scalar_lea.vmem %s4, %s204
      %p206 = scmp.lt.s32.totalorder %s19, 1
      %s207 = scalar_select %p206, %s19, 1
      %s208 = smul.addr %s207, 54
      %s209 = smul.addr %s208, 4
      %s210 = scalar_lea.vmem %s0, %s209
      %s211 = smul.u32 8, %s20
      %p212 = scmp.lt.s32.totalorder %s19, 1
      %s213 = scalar_select %p212, %s19, 1
      %p214 = scmp.lt.s32.totalorder %s211, 7
      %s215 = scalar_select %p214, %s211, 7
      %s216 = smul.addr %s213, 8
      %s217 = sadd.s32 %s215, %s216
      %s218 = smul.addr %s217, 8
      %s219 = scalar_lea.vmem %s4, %s218
      %s220 = smul.u32 8, %s20
      %s222 = smul.u32 %s20, 16
      %s223 = smul.u32 %s222, 3
      %s224 = smul.addr %s223, 4
      %s225 = scalar_lea.vmem %s210, %s224
      %v226 = vld [vmem:[%s225] sm:$0xf]
      %v227 = vld [vmem:[%s225 + $0x4] sm:$0xf]
      %v228 = vld [vmem:[%s225 + $0xc] sm:$0xf]
      %v229 = vld [vmem:[%s225 + $0x10] sm:$0xf]
      %v230 = vld [vmem:[%s225 + $0x18] sm:$0xf]
      %v231 = vld [vmem:[%s225 + $0x1c] sm:$0xf]
      %v232 = vld [vmem:[%s225 + $0x24] sm:$0xf]
      %v233 = vld [vmem:[%s225 + $0x28] sm:$0xf]
      %v234 = vld [vmem:[%s225 + $0x30] sm:$0xf]
      %v235 = vld [vmem:[%s225 + $0x34] sm:$0xf]
      %v236 = vld [vmem:[%s225 + $0x3c] sm:$0xf]
      %v237 = vld [vmem:[%s225 + $0x40] sm:$0xf]
      %v238 = vld [vmem:[%s225 + $0x48] sm:$0xf]
      %v239 = vld [vmem:[%s225 + $0x4c] sm:$0xf]
      %v240 = vld [vmem:[%s225 + $0x54] sm:$0xf]
      %v241 = vld [vmem:[%s225 + $0x58] sm:$0xf]
      %v242 = vld [vmem:[%s225 + $0x60] sm:$0xf]
      %v243 = vld [vmem:[%s225 + $0x64] sm:$0xf]
      %v244 = vld [vmem:[%s225 + $0x6c] sm:$0xf]
      %v245 = vld [vmem:[%s225 + $0x70] sm:$0xf]
      %v246 = vld [vmem:[%s225 + $0x78] sm:$0xf]
      %v247 = vld [vmem:[%s225 + $0x7c] sm:$0xf]
      %v248 = vld [vmem:[%s225 + $0x84] sm:$0xf]
      %v249 = vld [vmem:[%s225 + $0x88] sm:$0xf]
      %v250 = vld [vmem:[%s225 + $0x90] sm:$0xf]
      %v251 = vld [vmem:[%s225 + $0x94] sm:$0xf]
      %v252 = vld [vmem:[%s225 + $0x9c] sm:$0xf]
      %v253 = vld [vmem:[%s225 + $0xa0] sm:$0xf]
      %v254 = vld [vmem:[%s225 + $0xa8] sm:$0xf]
      %v255 = vld [vmem:[%s225 + $0xac] sm:$0xf]
      %v256 = vld [vmem:[%s225 + $0xb4] sm:$0xf]
      %v257 = vld [vmem:[%s225 + $0xb8] sm:$0xf]
      %v258 = vld [vmem:[%s1] sm:$0xf]
      %v259 = vld [vmem:[%s1 + $0x4] sm:$0xf]
      %v260 = vld [vmem:[%s225 + $0x8] sm:$0x1]
      %v261 = vld [vmem:[%s225 + $0x14] sm:$0x1]
      %v262 = vld [vmem:[%s225 + $0x20] sm:$0x1]
      %v263 = vld [vmem:[%s225 + $0x2c] sm:$0x1]
      %v264 = vld [vmem:[%s225 + $0x38] sm:$0x1]
      %v265 = vld [vmem:[%s225 + $0x44] sm:$0x1]
      %v266 = vld [vmem:[%s225 + $0x50] sm:$0x1]
      %v267 = vld [vmem:[%s225 + $0x5c] sm:$0x1]
      %v268 = vld [vmem:[%s225 + $0x68] sm:$0x1]
      %v269 = vld [vmem:[%s225 + $0x74] sm:$0x1]
      %v270 = vld [vmem:[%s225 + $0x80] sm:$0x1]
      %v271 = vld [vmem:[%s225 + $0x8c] sm:$0x1]
      %v272 = vld [vmem:[%s225 + $0x98] sm:$0x1]
      %v273 = vld [vmem:[%s225 + $0xa4] sm:$0x1]
      %v274 = vld [vmem:[%s225 + $0xb0] sm:$0x1]
      %v275 = vld [vmem:[%s225 + $0xbc] sm:$0x1]
      %vm276 = vsmask.f32 3328
      %vm277 = vsmask.f32 7440
      %vm278 = vmor %vm276, %vm277
      %v280 = vshrl.u32 %v226, 16
      %v282 = vrot.slane %v280, 4
      %v283 = vshll.u32 %v226, 16
      %v285 = vrot.slane %v283, 5
      %v286 = vor.u32 %v282, %v285
      %v287 = vrot.slane %v286, 4
      %v289 = vshll.u32 %v227, 16
      %v291 = vrot.slane %v289, 5
      %v292 = vsel %vm278, %v287, %v291
      %v293 = vshrl.u32 %v227, 16
      %v295 = vrot.slane %v293, 4
      %v296 = vor.u32 %v295, %v291
      %v297 = vrot.slane %v296, 4
      %v299 = vshll.u32 %v260, 16
      %v301 = vrot.slane %v299, 5
      %v302 = vsel %vm278, %v297, %v301
      %v304 = vshrl.u32 %v228, 16
      %v306 = vrot.slane %v304, 4
      %v307 = vshll.u32 %v228, 16
      %v309 = vrot.slane %v307, 5
      %v310 = vor.u32 %v306, %v309
      %v311 = vrot.slane %v310, 4
      %v313 = vshll.u32 %v229, 16
      %v315 = vrot.slane %v313, 5
      %v316 = vsel %vm278, %v311, %v315
      %v317 = vshrl.u32 %v229, 16
      %v319 = vrot.slane %v317, 4
      %v320 = vor.u32 %v319, %v315
      %v321 = vrot.slane %v320, 4
      %v323 = vshll.u32 %v261, 16
      %v325 = vrot.slane %v323, 5
      %v326 = vsel %vm278, %v321, %v325
      %v328 = vshrl.u32 %v230, 16
      %v330 = vrot.slane %v328, 4
      %v331 = vshll.u32 %v230, 16
      %v333 = vrot.slane %v331, 5
      %v334 = vor.u32 %v330, %v333
      %v335 = vrot.slane %v334, 4
      %v337 = vshll.u32 %v231, 16
      %v339 = vrot.slane %v337, 5
      %v340 = vsel %vm278, %v335, %v339
      %v341 = vshrl.u32 %v231, 16
      %v343 = vrot.slane %v341, 4
      %v344 = vor.u32 %v343, %v339
      %v345 = vrot.slane %v344, 4
      %v347 = vshll.u32 %v262, 16
      %v349 = vrot.slane %v347, 5
      %v350 = vsel %vm278, %v345, %v349
      %v352 = vshrl.u32 %v232, 16
      %v354 = vrot.slane %v352, 4
      %v355 = vshll.u32 %v232, 16
      %v357 = vrot.slane %v355, 5
      %v358 = vor.u32 %v354, %v357
      %v359 = vrot.slane %v358, 4
      %v361 = vshll.u32 %v233, 16
      %v363 = vrot.slane %v361, 5
      %v364 = vsel %vm278, %v359, %v363
      %v365 = vshrl.u32 %v233, 16
      %v367 = vrot.slane %v365, 4
      %v368 = vor.u32 %v367, %v363
      %v369 = vrot.slane %v368, 4
      %v371 = vshll.u32 %v263, 16
      %v373 = vrot.slane %v371, 5
      %v374 = vsel %vm278, %v369, %v373
      %v376 = vshrl.u32 %v234, 16
      %v378 = vrot.slane %v376, 4
      %v379 = vshll.u32 %v234, 16
      %v381 = vrot.slane %v379, 5
      %v382 = vor.u32 %v378, %v381
      %v383 = vrot.slane %v382, 4
      %v385 = vshll.u32 %v235, 16
      %v387 = vrot.slane %v385, 5
      %v388 = vsel %vm278, %v383, %v387
      %v389 = vshrl.u32 %v235, 16
      %v391 = vrot.slane %v389, 4
      %v392 = vor.u32 %v391, %v387
      %v393 = vrot.slane %v392, 4
      %v395 = vshll.u32 %v264, 16
      %v397 = vrot.slane %v395, 5
      %v398 = vsel %vm278, %v393, %v397
      %v400 = vshrl.u32 %v236, 16
      %v402 = vrot.slane %v400, 4
      %v403 = vshll.u32 %v236, 16
      %v405 = vrot.slane %v403, 5
      %v406 = vor.u32 %v402, %v405
      %v407 = vrot.slane %v406, 4
      %v409 = vshll.u32 %v237, 16
      %v411 = vrot.slane %v409, 5
      %v412 = vsel %vm278, %v407, %v411
      %v413 = vshrl.u32 %v237, 16
      %v415 = vrot.slane %v413, 4
      %v416 = vor.u32 %v415, %v411
      %v417 = vrot.slane %v416, 4
      %v419 = vshll.u32 %v265, 16
      %v421 = vrot.slane %v419, 5
      %v422 = vsel %vm278, %v417, %v421
      %v424 = vshrl.u32 %v238, 16
      %v426 = vrot.slane %v424, 4
      %v427 = vshll.u32 %v238, 16
      %v429 = vrot.slane %v427, 5
      %v430 = vor.u32 %v426, %v429
      %v431 = vrot.slane %v430, 4
      %v433 = vshll.u32 %v239, 16
      %v435 = vrot.slane %v433, 5
      %v436 = vsel %vm278, %v431, %v435
      %v437 = vshrl.u32 %v239, 16
      %v439 = vrot.slane %v437, 4
      %v440 = vor.u32 %v439, %v435
      %v441 = vrot.slane %v440, 4
      %v443 = vshll.u32 %v266, 16
      %v445 = vrot.slane %v443, 5
      %v446 = vsel %vm278, %v441, %v445
      %v448 = vshrl.u32 %v240, 16
      %v450 = vrot.slane %v448, 4
      %v451 = vshll.u32 %v240, 16
      %v453 = vrot.slane %v451, 5
      %v454 = vor.u32 %v450, %v453
      %v455 = vrot.slane %v454, 4
      %v457 = vshll.u32 %v241, 16
      %v459 = vrot.slane %v457, 5
      %v460 = vsel %vm278, %v455, %v459
      %v461 = vshrl.u32 %v241, 16
      %v463 = vrot.slane %v461, 4
      %v464 = vor.u32 %v463, %v459
      %v465 = vrot.slane %v464, 4
      %v467 = vshll.u32 %v267, 16
      %v469 = vrot.slane %v467, 5
      %v470 = vsel %vm278, %v465, %v469
      %v472 = vshrl.u32 %v242, 16
      %v474 = vrot.slane %v472, 4
      %v475 = vshll.u32 %v242, 16
      %v477 = vrot.slane %v475, 5
      %v478 = vor.u32 %v474, %v477
      %v479 = vrot.slane %v478, 4
      %v481 = vshll.u32 %v243, 16
      %v483 = vrot.slane %v481, 5
      %v484 = vsel %vm278, %v479, %v483
      %v485 = vshrl.u32 %v243, 16
      %v487 = vrot.slane %v485, 4
      %v488 = vor.u32 %v487, %v483
      %v489 = vrot.slane %v488, 4
      %v491 = vshll.u32 %v268, 16
      %v493 = vrot.slane %v491, 5
      %v494 = vsel %vm278, %v489, %v493
      %v496 = vshrl.u32 %v244, 16
      %v498 = vrot.slane %v496, 4
      %v499 = vshll.u32 %v244, 16
      %v501 = vrot.slane %v499, 5
      %v502 = vor.u32 %v498, %v501
      %v503 = vrot.slane %v502, 4
      %v505 = vshll.u32 %v245, 16
      %v507 = vrot.slane %v505, 5
      %v508 = vsel %vm278, %v503, %v507
      %v509 = vshrl.u32 %v245, 16
      %v511 = vrot.slane %v509, 4
      %v512 = vor.u32 %v511, %v507
      %v513 = vrot.slane %v512, 4
      %v515 = vshll.u32 %v269, 16
      %v517 = vrot.slane %v515, 5
      %v518 = vsel %vm278, %v513, %v517
      %v520 = vshrl.u32 %v246, 16
      %v522 = vrot.slane %v520, 4
      %v523 = vshll.u32 %v246, 16
      %v525 = vrot.slane %v523, 5
      %v526 = vor.u32 %v522, %v525
      %v527 = vrot.slane %v526, 4
      %v529 = vshll.u32 %v247, 16
      %v531 = vrot.slane %v529, 5
      %v532 = vsel %vm278, %v527, %v531
      %v533 = vshrl.u32 %v247, 16
      %v535 = vrot.slane %v533, 4
      %v536 = vor.u32 %v535, %v531
      %v537 = vrot.slane %v536, 4
      %v539 = vshll.u32 %v270, 16
      %v541 = vrot.slane %v539, 5
      %v542 = vsel %vm278, %v537, %v541
      %v544 = vshrl.u32 %v248, 16
      %v546 = vrot.slane %v544, 4
      %v547 = vshll.u32 %v248, 16
      %v549 = vrot.slane %v547, 5
      %v550 = vor.u32 %v546, %v549
      %v551 = vrot.slane %v550, 4
      %v553 = vshll.u32 %v249, 16
      %v555 = vrot.slane %v553, 5
      %v556 = vsel %vm278, %v551, %v555
      %v557 = vshrl.u32 %v249, 16
      %v559 = vrot.slane %v557, 4
      %v560 = vor.u32 %v559, %v555
      %v561 = vrot.slane %v560, 4
      %v563 = vshll.u32 %v271, 16
      %v565 = vrot.slane %v563, 5
      %v566 = vsel %vm278, %v561, %v565
      %v568 = vshrl.u32 %v250, 16
      %v570 = vrot.slane %v568, 4
      %v571 = vshll.u32 %v250, 16
      %v573 = vrot.slane %v571, 5
      %v574 = vor.u32 %v570, %v573
      %v575 = vrot.slane %v574, 4
      %v577 = vshll.u32 %v251, 16
      %v579 = vrot.slane %v577, 5
      %v580 = vsel %vm278, %v575, %v579
      %v581 = vshrl.u32 %v251, 16
      %v583 = vrot.slane %v581, 4
      %v584 = vor.u32 %v583, %v579
      %v585 = vrot.slane %v584, 4
      %v587 = vshll.u32 %v272, 16
      %v589 = vrot.slane %v587, 5
      %v590 = vsel %vm278, %v585, %v589
      %v592 = vshrl.u32 %v252, 16
      %v594 = vrot.slane %v592, 4
      %v595 = vshll.u32 %v252, 16
      %v597 = vrot.slane %v595, 5
      %v598 = vor.u32 %v594, %v597
      %v599 = vrot.slane %v598, 4
      %v601 = vshll.u32 %v253, 16
      %v603 = vrot.slane %v601, 5
      %v604 = vsel %vm278, %v599, %v603
      %v605 = vshrl.u32 %v253, 16
      %v607 = vrot.slane %v605, 4
      %v608 = vor.u32 %v607, %v603
      %v609 = vrot.slane %v608, 4
      %v611 = vshll.u32 %v273, 16
      %v613 = vrot.slane %v611, 5
      %v614 = vsel %vm278, %v609, %v613
      %v616 = vshrl.u32 %v254, 16
      %v618 = vrot.slane %v616, 4
      %v619 = vshll.u32 %v254, 16
      %v621 = vrot.slane %v619, 5
      %v622 = vor.u32 %v618, %v621
      %v623 = vrot.slane %v622, 4
      %v625 = vshll.u32 %v255, 16
      %v627 = vrot.slane %v625, 5
      %v628 = vsel %vm278, %v623, %v627
      %v629 = vshrl.u32 %v255, 16
      %v631 = vrot.slane %v629, 4
      %v632 = vor.u32 %v631, %v627
      %v633 = vrot.slane %v632, 4
      %v635 = vshll.u32 %v274, 16
      %v637 = vrot.slane %v635, 5
      %v638 = vsel %vm278, %v633, %v637
      %v640 = vshrl.u32 %v256, 16
      %v642 = vrot.slane %v640, 4
      %v643 = vshll.u32 %v256, 16
      %v645 = vrot.slane %v643, 5
      %v646 = vor.u32 %v642, %v645
      %v647 = vrot.slane %v646, 4
      %v649 = vshll.u32 %v257, 16
      %v651 = vrot.slane %v649, 5
      %v652 = vsel %vm278, %v647, %v651
      %v653 = vshrl.u32 %v257, 16
      %v655 = vrot.slane %v653, 4
      %v656 = vor.u32 %v655, %v651
      %v657 = vrot.slane %v656, 4
      %v659 = vshll.u32 %v275, 16
      %v661 = vrot.slane %v659, 5
      %v662 = vsel %vm278, %v657, %v661
      %s663 = scalar_lea.vmem %s1, 8
      %v664 = vld [vmem:[%s663] sm:$0xf]
      %v665 = vld [vmem:[%s663 + $0x4] sm:$0xf]
      %v666 = vunpack.c.l.b16 %v292
      %v667 = vunpack.c.l.b16 %v302
      %v668 = vunpack.c.l.b16 %v316
      %v669 = vunpack.c.l.b16 %v326
      %v670 = vunpack.c.l.b16 %v340
      %v671 = vunpack.c.l.b16 %v350
      %v672 = vunpack.c.l.b16 %v364
      %v673 = vunpack.c.l.b16 %v374
      %v674 = vunpack.c.l.b16 %v388
      %v675 = vunpack.c.l.b16 %v398
      %v676 = vunpack.c.l.b16 %v412
      %v677 = vunpack.c.l.b16 %v422
      %v678 = vunpack.c.l.b16 %v436
      %v679 = vunpack.c.l.b16 %v446
      %v680 = vunpack.c.l.b16 %v460
      %v681 = vunpack.c.l.b16 %v470
      %v682 = vunpack.c.l.b16 %v484
      %v683 = vunpack.c.l.b16 %v494
      %v684 = vunpack.c.l.b16 %v508
      %v685 = vunpack.c.l.b16 %v518
      %v686 = vunpack.c.l.b16 %v532
      %v687 = vunpack.c.l.b16 %v542
      %v688 = vunpack.c.l.b16 %v556
      %v689 = vunpack.c.l.b16 %v566
      %v690 = vunpack.c.l.b16 %v580
      %v691 = vunpack.c.l.b16 %v590
      %v692 = vunpack.c.l.b16 %v604
      %v693 = vunpack.c.l.b16 %v614
      %v694 = vunpack.c.l.b16 %v628
      %v695 = vunpack.c.l.b16 %v638
      %v696 = vunpack.c.l.b16 %v652
      %v697 = vunpack.c.l.b16 %v662
      %v698 = vpack.c.b16 %v667, %v666
      %v699 = vpack.c.b16 %v669, %v668
      %v700 = vpack.c.b16 %v671, %v670
      %v701 = vpack.c.b16 %v673, %v672
      %v702 = vpack.c.b16 %v675, %v674
      %v703 = vpack.c.b16 %v677, %v676
      %v704 = vpack.c.b16 %v679, %v678
      %v705 = vpack.c.b16 %v681, %v680
      %v706 = vpack.c.b16 %v683, %v682
      %v707 = vpack.c.b16 %v685, %v684
      %v708 = vpack.c.b16 %v687, %v686
      %v709 = vpack.c.b16 %v689, %v688
      %v710 = vpack.c.b16 %v691, %v690
      %v711 = vpack.c.b16 %v693, %v692
      %v712 = vpack.c.b16 %v695, %v694
      %v713 = vpack.c.b16 %v697, %v696
      %v716 = vunpack.c.l.b16 %v664
      %v717 = vunpack.c.l.b16 %v665
      %v718 = vpack.c.b16 %v717, %v716
      %vm720 = vcmask 130048
      %v722 = vsel %vm720, %v698, 0
      %v725 = vsel %vm720, %v699, 0
      %v728 = vsel %vm720, %v700, 0
      %v731 = vsel %vm720, %v701, 0
      %v734 = vsel %vm720, %v702, 0
      %v737 = vsel %vm720, %v703, 0
      %v740 = vsel %vm720, %v704, 0
      %v743 = vsel %vm720, %v705, 0
      %v746 = vsel %vm720, %v706, 0
      %v749 = vsel %vm720, %v707, 0
      %v752 = vsel %vm720, %v708, 0
      %v755 = vsel %vm720, %v709, 0
      %v758 = vsel %vm720, %v710, 0
      %v761 = vsel %vm720, %v711, 0
      %v764 = vsel %vm720, %v712, 0
      %v767 = vsel %vm720, %v713, 0
      %769 = vmatprep.subr.bf16.mxu0 0
      %770 = vmatpush1.bf16.msra.mxu0 %v718
      %771 = vmatprep.subr.bf16.mxu0 0
      %772 = vmatpush1.bf16.msra.mxu0 0
      %773 = vmatprep.subr.bf16.mxu0 0
      %774 = vmatpush1.bf16.msra.mxu0 0
      %775 = vmatprep.subr.bf16.mxu0 0
      %776 = vmatpush1.bf16.msra.mxu0 0
      %777 = vmatprep.subr.bf16.mxu0 0
      %778 = vmatpush1.bf16.msra.mxu0 0
      %779 = vmatprep.subr.bf16.mxu0 0
      %780 = vmatpush1.bf16.msra.mxu0 0
      %781 = vmatprep.subr.bf16.mxu0 0
      %782 = vmatpush1.bf16.msra.mxu0 0
      %783 = vmatprep.subr.bf16.mxu0 0
      %784 = vmatpush1.bf16.msra.mxu0 0
      %785 = vmatprep.subr.bf16.mxu0 0
      %786 = vmatpush1.bf16.msra.mxu0 0
      %787 = vmatprep.subr.bf16.mxu0 0
      %788 = vmatpush1.bf16.msra.mxu0 0
      %789 = vmatprep.subr.bf16.mxu0 0
      %790 = vmatpush1.bf16.msra.mxu0 0
      %791 = vmatprep.subr.bf16.mxu0 0
      %792 = vmatpush1.bf16.msra.mxu0 0
      %793 = vmatprep.subr.bf16.mxu0 0
      %794 = vmatpush1.bf16.msra.mxu0 0
      %795 = vmatprep.subr.bf16.mxu0 0
      %796 = vmatpush1.bf16.msra.mxu0 0
      %797 = vmatprep.subr.bf16.mxu0 0
      %798 = vmatpush1.bf16.msra.mxu0 0
      %799 = vmatprep.subr.bf16.mxu0 0
      %800 = vmatpush1.bf16.msra.mxu0 0
      %801 = vmatprep.mubr.bf16.mxu0 0
      %802 = vmatmul.mubr.bf16.gmra.mrb[0].mxu0 %v722
      %v803 = vpop.f32.mrb[0].mxu0
      %v804 = vadd.f32 0.0, %v803
      %v805 = vpop.f32.mrb[0].mxu0
      %v806 = vpop.f32.mrb[0].mxu0
      %v807 = vadd.f32 0.0, %v806
      %v808 = vpop.f32.mrb[0].mxu0
      %809 = vmatprep.mubr.bf16.mxu0 0
      %810 = vmatmul.mubr.bf16.gmra.mrb[0].mxu0 %v725
      %v811 = vpop.f32.mrb[0].mxu0
      %v812 = vadd.f32 0.0, %v811
      %v813 = vpop.f32.mrb[0].mxu0
      %v814 = vpop.f32.mrb[0].mxu0
      %v815 = vadd.f32 0.0, %v814
      %v816 = vpop.f32.mrb[0].mxu0
      %817 = vmatprep.mubr.bf16.mxu0 0
      %818 = vmatmul.mubr.bf16.gmra.mrb[0].mxu0 %v728
      %v819 = vpop.f32.mrb[0].mxu0
      %v820 = vadd.f32 0.0, %v819
      %v821 = vpop.f32.mrb[0].mxu0
      %v822 = vpop.f32.mrb[0].mxu0
      %v823 = vadd.f32 0.0, %v822
      %v824 = vpop.f32.mrb[0].mxu0
      %825 = vmatprep.mubr.bf16.mxu0 0
      %826 = vmatmul.mubr.bf16.gmra.mrb[0].mxu0 %v731
      %v827 = vpop.f32.mrb[0].mxu0
      %v828 = vadd.f32 0.0, %v827
      %v829 = vpop.f32.mrb[0].mxu0
      %v830 = vpop.f32.mrb[0].mxu0
      %v831 = vadd.f32 0.0, %v830
      %v832 = vpop.f32.mrb[0].mxu0
      %833 = vmatprep.mubr.bf16.mxu0 0
      %834 = vmatmul.mubr.bf16.gmra.mrb[0].mxu0 %v734
      %v835 = vpop.f32.mrb[0].mxu0
      %v836 = vadd.f32 0.0, %v835
      %v837 = vpop.f32.mrb[0].mxu0
      %v838 = vpop.f32.mrb[0].mxu0
      %v839 = vadd.f32 0.0, %v838
      %v840 = vpop.f32.mrb[0].mxu0
      %841 = vmatprep.mubr.bf16.mxu0 0
      %842 = vmatmul.mubr.bf16.gmra.mrb[0].mxu0 %v737
      %v843 = vpop.f32.mrb[0].mxu0
      %v844 = vadd.f32 0.0, %v843
      %v845 = vpop.f32.mrb[0].mxu0
      %v846 = vpop.f32.mrb[0].mxu0
      %v847 = vadd.f32 0.0, %v846
      %v848 = vpop.f32.mrb[0].mxu0
      %849 = vmatprep.mubr.bf16.mxu0 0
      %850 = vmatmul.mubr.bf16.gmra.mrb[0].mxu0 %v740
      %v851 = vpop.f32.mrb[0].mxu0
      %v852 = vadd.f32 0.0, %v851
      %v853 = vpop.f32.mrb[0].mxu0
      %v854 = vpop.f32.mrb[0].mxu0
      %v855 = vadd.f32 0.0, %v854
      %v856 = vpop.f32.mrb[0].mxu0
      %857 = vmatprep.mubr.bf16.mxu0 0
      %858 = vmatmul.mubr.bf16.gmra.mrb[0].mxu0 %v743
      %v859 = vpop.f32.mrb[0].mxu0
      %v860 = vadd.f32 0.0, %v859
      %v861 = vpop.f32.mrb[0].mxu0
      %v862 = vpop.f32.mrb[0].mxu0
      %v863 = vadd.f32 0.0, %v862
      %v864 = vpop.f32.mrb[0].mxu0
      %865 = vmatprep.mubr.bf16.mxu0 0
      %866 = vmatmul.mubr.bf16.gmra.mrb[0].mxu0 %v746
      %v867 = vpop.f32.mrb[0].mxu0
      %v868 = vadd.f32 0.0, %v867
      %v869 = vpop.f32.mrb[0].mxu0
      %v870 = vpop.f32.mrb[0].mxu0
      %v871 = vadd.f32 0.0, %v870
      %v872 = vpop.f32.mrb[0].mxu0
      %873 = vmatprep.mubr.bf16.mxu0 0
      %874 = vmatmul.mubr.bf16.gmra.mrb[0].mxu0 %v749
      %v875 = vpop.f32.mrb[0].mxu0
      %v876 = vadd.f32 0.0, %v875
      %v877 = vpop.f32.mrb[0].mxu0
      %v878 = vpop.f32.mrb[0].mxu0
      %v879 = vadd.f32 0.0, %v878
      %v880 = vpop.f32.mrb[0].mxu0
      %881 = vmatprep.mubr.bf16.mxu0 0
      %882 = vmatmul.mubr.bf16.gmra.mrb[0].mxu0 %v752
      %v883 = vpop.f32.mrb[0].mxu0
      %v884 = vadd.f32 0.0, %v883
      %v885 = vpop.f32.mrb[0].mxu0
      %v886 = vpop.f32.mrb[0].mxu0
      %v887 = vadd.f32 0.0, %v886
      %v888 = vpop.f32.mrb[0].mxu0
      %889 = vmatprep.mubr.bf16.mxu0 0
      %890 = vmatmul.mubr.bf16.gmra.mrb[0].mxu0 %v755
      %v891 = vpop.f32.mrb[0].mxu0
      %v892 = vadd.f32 0.0, %v891
      %v893 = vpop.f32.mrb[0].mxu0
      %v894 = vpop.f32.mrb[0].mxu0
      %v895 = vadd.f32 0.0, %v894
      %v896 = vpop.f32.mrb[0].mxu0
      %897 = vmatprep.mubr.bf16.mxu0 0
      %898 = vmatmul.mubr.bf16.gmra.mrb[0].mxu0 %v758
      %v899 = vpop.f32.mrb[0].mxu0
      %v900 = vadd.f32 0.0, %v899
      %v901 = vpop.f32.mrb[0].mxu0
      %v902 = vpop.f32.mrb[0].mxu0
      %v903 = vadd.f32 0.0, %v902
      %v904 = vpop.f32.mrb[0].mxu0
      %905 = vmatprep.mubr.bf16.mxu0 0
      %906 = vmatmul.mubr.bf16.gmra.mrb[0].mxu0 %v761
      %v907 = vpop.f32.mrb[0].mxu0
      %v908 = vadd.f32 0.0, %v907
      %v909 = vpop.f32.mrb[0].mxu0
      %v910 = vpop.f32.mrb[0].mxu0
      %v911 = vadd.f32 0.0, %v910
      %v912 = vpop.f32.mrb[0].mxu0
      %913 = vmatprep.mubr.bf16.mxu0 0
      %914 = vmatmul.mubr.bf16.gmra.mrb[0].mxu0 %v764
      %v915 = vpop.f32.mrb[0].mxu0
      %v916 = vadd.f32 0.0, %v915
      %v917 = vpop.f32.mrb[0].mxu0
      %v918 = vpop.f32.mrb[0].mxu0
      %v919 = vadd.f32 0.0, %v918
      %v920 = vpop.f32.mrb[0].mxu0
      %921 = vmatprep.mubr.bf16.mxu0 0
      %922 = vmatmul.mubr.bf16.gmra.mrb[0].mxu0 %v767
      %v923 = vpop.f32.mrb[0].mxu0
      %v924 = vadd.f32 0.0, %v923
      %v925 = vpop.f32.mrb[0].mxu0
      %v926 = vpop.f32.mrb[0].mxu0
      %v927 = vadd.f32 0.0, %v926
      %v928 = vpop.f32.mrb[0].mxu0
      %929 = vdwg.mxu0
      %v962 = vunpack.c.l.b16 %v226
      %v963 = vunpack.c.l.b16 %v227
      %v964 = vunpack.c.l.b16 %v228
      %v965 = vunpack.c.l.b16 %v229
      %v966 = vunpack.c.l.b16 %v230
      %v967 = vunpack.c.l.b16 %v231
      %v968 = vunpack.c.l.b16 %v232
      %v969 = vunpack.c.l.b16 %v233
      %v970 = vunpack.c.l.b16 %v234
      %v971 = vunpack.c.l.b16 %v235
      %v972 = vunpack.c.l.b16 %v236
      %v973 = vunpack.c.l.b16 %v237
      %v974 = vunpack.c.l.b16 %v238
      %v975 = vunpack.c.l.b16 %v239
      %v976 = vunpack.c.l.b16 %v240
      %v977 = vunpack.c.l.b16 %v241
      %v978 = vunpack.c.l.b16 %v242
      %v979 = vunpack.c.l.b16 %v243
      %v980 = vunpack.c.l.b16 %v244
      %v981 = vunpack.c.l.b16 %v245
      %v982 = vunpack.c.l.b16 %v246
      %v983 = vunpack.c.l.b16 %v247
      %v984 = vunpack.c.l.b16 %v248
      %v985 = vunpack.c.l.b16 %v249
      %v986 = vunpack.c.l.b16 %v250
      %v987 = vunpack.c.l.b16 %v251
      %v988 = vunpack.c.l.b16 %v252
      %v989 = vunpack.c.l.b16 %v253
      %v990 = vunpack.c.l.b16 %v254
      %v991 = vunpack.c.l.b16 %v255
      %v992 = vunpack.c.l.b16 %v256
      %v993 = vunpack.c.l.b16 %v257
      %v994 = vpack.c.b16 %v963, %v962
      %v995 = vpack.c.b16 %v965, %v964
      %v996 = vpack.c.b16 %v967, %v966
      %v997 = vpack.c.b16 %v969, %v968
      %v998 = vpack.c.b16 %v971, %v970
      %v999 = vpack.c.b16 %v973, %v972
      %v1000 = vpack.c.b16 %v975, %v974
      %v1001 = vpack.c.b16 %v977, %v976
      %v1002 = vpack.c.b16 %v979, %v978
      %v1003 = vpack.c.b16 %v981, %v980
      %v1004 = vpack.c.b16 %v983, %v982
      %v1005 = vpack.c.b16 %v985, %v984
      %v1006 = vpack.c.b16 %v987, %v986
      %v1007 = vpack.c.b16 %v989, %v988
      %v1008 = vpack.c.b16 %v991, %v990
      %v1009 = vpack.c.b16 %v993, %v992
      %v1012 = vunpack.c.l.b16 %v258
      %v1013 = vunpack.c.l.b16 %v259
      %v1014 = vpack.c.b16 %v1013, %v1012
      %v1017 = vsel %vm720, %v994, 0
      %v1020 = vsel %vm720, %v995, 0
      %v1023 = vsel %vm720, %v996, 0
      %v1026 = vsel %vm720, %v997, 0
      %v1029 = vsel %vm720, %v998, 0
      %v1032 = vsel %vm720, %v999, 0
      %v1035 = vsel %vm720, %v1000, 0
      %v1038 = vsel %vm720, %v1001, 0
      %v1041 = vsel %vm720, %v1002, 0
      %v1044 = vsel %vm720, %v1003, 0
      %v1047 = vsel %vm720, %v1004, 0
      %v1050 = vsel %vm720, %v1005, 0
      %v1053 = vsel %vm720, %v1006, 0
      %v1056 = vsel %vm720, %v1007, 0
      %v1059 = vsel %vm720, %v1008, 0
      %v1062 = vsel %vm720, %v1009, 0
      %1064 = vmatprep.subr.bf16.mxu0 0
      %1065 = vmatpush1.bf16.msra.mxu0 %v1014
      %1066 = vmatprep.subr.bf16.mxu0 0
      %1067 = vmatpush1.bf16.msra.mxu0 0
      %1068 = vmatprep.subr.bf16.mxu0 0
      %1069 = vmatpush1.bf16.msra.mxu0 0
      %1070 = vmatprep.subr.bf16.mxu0 0
      %1071 = vmatpush1.bf16.msra.mxu0 0
      %1072 = vmatprep.subr.bf16.mxu0 0
      %1073 = vmatpush1.bf16.msra.mxu0 0
      %1074 = vmatprep.subr.bf16.mxu0 0
      %1075 = vmatpush1.bf16.msra.mxu0 0
      %1076 = vmatprep.subr.bf16.mxu0 0
      %1077 = vmatpush1.bf16.msra.mxu0 0
      %1078 = vmatprep.subr.bf16.mxu0 0
      %1079 = vmatpush1.bf16.msra.mxu0 0
      %1080 = vmatprep.subr.bf16.mxu0 0
      %1081 = vmatpush1.bf16.msra.mxu0 0
      %1082 = vmatprep.subr.bf16.mxu0 0
      %1083 = vmatpush1.bf16.msra.mxu0 0
      %1084 = vmatprep.subr.bf16.mxu0 0
      %1085 = vmatpush1.bf16.msra.mxu0 0
      %1086 = vmatprep.subr.bf16.mxu0 0
      %1087 = vmatpush1.bf16.msra.mxu0 0
      %1088 = vmatprep.subr.bf16.mxu0 0
      %1089 = vmatpush1.bf16.msra.mxu0 0
      %1090 = vmatprep.subr.bf16.mxu0 0
      %1091 = vmatpush1.bf16.msra.mxu0 0
      %1092 = vmatprep.subr.bf16.mxu0 0
      %1093 = vmatpush1.bf16.msra.mxu0 0
      %1094 = vmatprep.subr.bf16.mxu0 0
      %1095 = vmatpush1.bf16.msra.mxu0 0
      %1096 = vmatprep.mubr.bf16.mxu0 0
      %1097 = vmatmul.mubr.bf16.gmra.mrb[0].mxu0 %v1017
      %v1098 = vpop.f32.mrb[0].mxu0
      %v1099 = vadd.f32 %v804, %v1098
      %v1100 = vpop.f32.mrb[0].mxu0
      %v1101 = vpop.f32.mrb[0].mxu0
      %v1102 = vadd.f32 %v807, %v1101
      %v1103 = vpop.f32.mrb[0].mxu0
      %1104 = vmatprep.mubr.bf16.mxu0 0
      %1105 = vmatmul.mubr.bf16.gmra.mrb[0].mxu0 %v1020
      %v1106 = vpop.f32.mrb[0].mxu0
      %v1107 = vadd.f32 %v812, %v1106
      %v1108 = vpop.f32.mrb[0].mxu0
      %v1109 = vpop.f32.mrb[0].mxu0
      %v1110 = vadd.f32 %v815, %v1109
      %v1111 = vpop.f32.mrb[0].mxu0
      %1112 = vmatprep.mubr.bf16.mxu0 0
      %1113 = vmatmul.mubr.bf16.gmra.mrb[0].mxu0 %v1023
      %v1114 = vpop.f32.mrb[0].mxu0
      %v1115 = vadd.f32 %v820, %v1114
      %v1116 = vpop.f32.mrb[0].mxu0
      %v1117 = vpop.f32.mrb[0].mxu0
      %v1118 = vadd.f32 %v823, %v1117
      %v1119 = vpop.f32.mrb[0].mxu0
      %1120 = vmatprep.mubr.bf16.mxu0 0
      %1121 = vmatmul.mubr.bf16.gmra.mrb[0].mxu0 %v1026
      %v1122 = vpop.f32.mrb[0].mxu0
      %v1123 = vadd.f32 %v828, %v1122
      %v1124 = vpop.f32.mrb[0].mxu0
      %v1125 = vpop.f32.mrb[0].mxu0
      %v1126 = vadd.f32 %v831, %v1125
      %v1127 = vpop.f32.mrb[0].mxu0
      %1128 = vmatprep.mubr.bf16.mxu0 0
      %1129 = vmatmul.mubr.bf16.gmra.mrb[0].mxu0 %v1029
      %v1130 = vpop.f32.mrb[0].mxu0
      %v1131 = vadd.f32 %v836, %v1130
      %v1132 = vpop.f32.mrb[0].mxu0
      %v1133 = vpop.f32.mrb[0].mxu0
      %v1134 = vadd.f32 %v839, %v1133
      %v1135 = vpop.f32.mrb[0].mxu0
      %1136 = vmatprep.mubr.bf16.mxu0 0
      %1137 = vmatmul.mubr.bf16.gmra.mrb[0].mxu0 %v1032
      %v1138 = vpop.f32.mrb[0].mxu0
      %v1139 = vadd.f32 %v844, %v1138
      %v1140 = vpop.f32.mrb[0].mxu0
      %v1141 = vpop.f32.mrb[0].mxu0
      %v1142 = vadd.f32 %v847, %v1141
      %v1143 = vpop.f32.mrb[0].mxu0
      %1144 = vmatprep.mubr.bf16.mxu0 0
      %1145 = vmatmul.mubr.bf16.gmra.mrb[0].mxu0 %v1035
      %v1146 = vpop.f32.mrb[0].mxu0
      %v1147 = vadd.f32 %v852, %v1146
      %v1148 = vpop.f32.mrb[0].mxu0
      %v1149 = vpop.f32.mrb[0].mxu0
      %v1150 = vadd.f32 %v855, %v1149
      %v1151 = vpop.f32.mrb[0].mxu0
      %1152 = vmatprep.mubr.bf16.mxu0 0
      %1153 = vmatmul.mubr.bf16.gmra.mrb[0].mxu0 %v1038
      %v1154 = vpop.f32.mrb[0].mxu0
      %v1155 = vadd.f32 %v860, %v1154
      %v1156 = vpop.f32.mrb[0].mxu0
      %v1157 = vpop.f32.mrb[0].mxu0
      %v1158 = vadd.f32 %v863, %v1157
      %v1159 = vpop.f32.mrb[0].mxu0
      %1160 = vmatprep.mubr.bf16.mxu0 0
      %1161 = vmatmul.mubr.bf16.gmra.mrb[0].mxu0 %v1041
      %v1162 = vpop.f32.mrb[0].mxu0
      %v1163 = vadd.f32 %v868, %v1162
      %v1164 = vpop.f32.mrb[0].mxu0
      %v1165 = vpop.f32.mrb[0].mxu0
      %v1166 = vadd.f32 %v871, %v1165
      %v1167 = vpop.f32.mrb[0].mxu0
      %1168 = vmatprep.mubr.bf16.mxu0 0
      %1169 = vmatmul.mubr.bf16.gmra.mrb[0].mxu0 %v1044
      %v1170 = vpop.f32.mrb[0].mxu0
      %v1171 = vadd.f32 %v876, %v1170
      %v1172 = vpop.f32.mrb[0].mxu0
      %v1173 = vpop.f32.mrb[0].mxu0
      %v1174 = vadd.f32 %v879, %v1173
      %v1175 = vpop.f32.mrb[0].mxu0
      %1176 = vmatprep.mubr.bf16.mxu0 0
      %1177 = vmatmul.mubr.bf16.gmra.mrb[0].mxu0 %v1047
      %v1178 = vpop.f32.mrb[0].mxu0
      %v1179 = vadd.f32 %v884, %v1178
      %v1180 = vpop.f32.mrb[0].mxu0
      %v1181 = vpop.f32.mrb[0].mxu0
      %v1182 = vadd.f32 %v887, %v1181
      %v1183 = vpop.f32.mrb[0].mxu0
      %1184 = vmatprep.mubr.bf16.mxu0 0
      %1185 = vmatmul.mubr.bf16.gmra.mrb[0].mxu0 %v1050
      %v1186 = vpop.f32.mrb[0].mxu0
      %v1187 = vadd.f32 %v892, %v1186
      %v1188 = vpop.f32.mrb[0].mxu0
      %v1189 = vpop.f32.mrb[0].mxu0
      %v1190 = vadd.f32 %v895, %v1189
      %v1191 = vpop.f32.mrb[0].mxu0
      %1192 = vmatprep.mubr.bf16.mxu0 0
      %1193 = vmatmul.mubr.bf16.gmra.mrb[0].mxu0 %v1053
      %v1194 = vpop.f32.mrb[0].mxu0
      %v1195 = vadd.f32 %v900, %v1194
      %v1196 = vpop.f32.mrb[0].mxu0
      %v1197 = vpop.f32.mrb[0].mxu0
      %v1198 = vadd.f32 %v903, %v1197
      %v1199 = vpop.f32.mrb[0].mxu0
      %1200 = vmatprep.mubr.bf16.mxu0 0
      %1201 = vmatmul.mubr.bf16.gmra.mrb[0].mxu0 %v1056
      %v1202 = vpop.f32.mrb[0].mxu0
      %v1203 = vadd.f32 %v908, %v1202
      %v1204 = vpop.f32.mrb[0].mxu0
      %v1205 = vpop.f32.mrb[0].mxu0
      %v1206 = vadd.f32 %v911, %v1205
      %v1207 = vpop.f32.mrb[0].mxu0
      %1208 = vmatprep.mubr.bf16.mxu0 0
      %1209 = vmatmul.mubr.bf16.gmra.mrb[0].mxu0 %v1059
      %v1210 = vpop.f32.mrb[0].mxu0
      %v1211 = vadd.f32 %v916, %v1210
      %v1212 = vpop.f32.mrb[0].mxu0
      %v1213 = vpop.f32.mrb[0].mxu0
      %v1214 = vadd.f32 %v919, %v1213
      %v1215 = vpop.f32.mrb[0].mxu0
      %1216 = vmatprep.mubr.bf16.mxu0 0
      %1217 = vmatmul.mubr.bf16.gmra.mrb[0].mxu0 %v1062
      %v1218 = vpop.f32.mrb[0].mxu0
      %v1219 = vadd.f32 %v924, %v1218
      %v1220 = vpop.f32.mrb[0].mxu0
      %v1221 = vpop.f32.mrb[0].mxu0
      %v1222 = vadd.f32 %v927, %v1221
      %v1223 = vpop.f32.mrb[0].mxu0
      %1224 = vdwg.mxu0
      %v1225 = vld [vmem:[%s225] sm:$0xe]
      %v1226 = vld [vmem:[%s225 + $0xc] sm:$0xe]
      %v1227 = vld [vmem:[%s225 + $0x18] sm:$0xe]
      %v1228 = vld [vmem:[%s225 + $0x24] sm:$0xe]
      %v1229 = vld [vmem:[%s225 + $0x30] sm:$0xe]
      %v1230 = vld [vmem:[%s225 + $0x3c] sm:$0xe]
      %v1231 = vld [vmem:[%s225 + $0x48] sm:$0xe]
      %v1232 = vld [vmem:[%s225 + $0x54] sm:$0xe]
      %v1233 = vld [vmem:[%s225 + $0x60] sm:$0xe]
      %v1234 = vld [vmem:[%s225 + $0x6c] sm:$0xe]
      %v1235 = vld [vmem:[%s225 + $0x78] sm:$0xe]
      %v1236 = vld [vmem:[%s225 + $0x84] sm:$0xe]
      %v1237 = vld [vmem:[%s225 + $0x90] sm:$0xe]
      %v1238 = vld [vmem:[%s225 + $0x9c] sm:$0xe]
      %v1239 = vld [vmem:[%s225 + $0xa8] sm:$0xe]
      %v1240 = vld [vmem:[%s225 + $0xb4] sm:$0xe]
      %vm1273 = vcmask 1042432
      %vm1274 = vcmask 1046532
      %vm1275 = vmor %vm1273, %vm1274
      %v1276 = vrot.slane %v1225, 5
      %v1277 = vrot.slane %v1276, 4
      %v1278 = vrot.slane %v227, 5
      %v1279 = vsel %vm1275, %v1277, %v1278
      %v1280 = vrot.slane %v1278, 4
      %v1281 = vrot.slane %v260, 5
      %v1282 = vsel %vm1275, %v1280, %v1281
      %v1283 = vrot.slane %v1226, 5
      %v1284 = vrot.slane %v1283, 4
      %v1285 = vrot.slane %v229, 5
      %v1286 = vsel %vm1275, %v1284, %v1285
      %v1287 = vrot.slane %v1285, 4
      %v1288 = vrot.slane %v261, 5
      %v1289 = vsel %vm1275, %v1287, %v1288
      %v1290 = vrot.slane %v1227, 5
      %v1291 = vrot.slane %v1290, 4
      %v1292 = vrot.slane %v231, 5
      %v1293 = vsel %vm1275, %v1291, %v1292
      %v1294 = vrot.slane %v1292, 4
      %v1295 = vrot.slane %v262, 5
      %v1296 = vsel %vm1275, %v1294, %v1295
      %v1297 = vrot.slane %v1228, 5
      %v1298 = vrot.slane %v1297, 4
      %v1299 = vrot.slane %v233, 5
      %v1300 = vsel %vm1275, %v1298, %v1299
      %v1301 = vrot.slane %v1299, 4
      %v1302 = vrot.slane %v263, 5
      %v1303 = vsel %vm1275, %v1301, %v1302
      %v1304 = vrot.slane %v1229, 5
      %v1305 = vrot.slane %v1304, 4
      %v1306 = vrot.slane %v235, 5
      %v1307 = vsel %vm1275, %v1305, %v1306
      %v1308 = vrot.slane %v1306, 4
      %v1309 = vrot.slane %v264, 5
      %v1310 = vsel %vm1275, %v1308, %v1309
      %v1311 = vrot.slane %v1230, 5
      %v1312 = vrot.slane %v1311, 4
      %v1313 = vrot.slane %v237, 5
      %v1314 = vsel %vm1275, %v1312, %v1313
      %v1315 = vrot.slane %v1313, 4
      %v1316 = vrot.slane %v265, 5
      %v1317 = vsel %vm1275, %v1315, %v1316
      %v1318 = vrot.slane %v1231, 5
      %v1319 = vrot.slane %v1318, 4
      %v1320 = vrot.slane %v239, 5
      %v1321 = vsel %vm1275, %v1319, %v1320
      %v1322 = vrot.slane %v1320, 4
      %v1323 = vrot.slane %v266, 5
      %v1324 = vsel %vm1275, %v1322, %v1323
      %v1325 = vrot.slane %v1232, 5
      %v1326 = vrot.slane %v1325, 4
      %v1327 = vrot.slane %v241, 5
      %v1328 = vsel %vm1275, %v1326, %v1327
      %v1329 = vrot.slane %v1327, 4
      %v1330 = vrot.slane %v267, 5
      %v1331 = vsel %vm1275, %v1329, %v1330
      %v1332 = vrot.slane %v1233, 5
      %v1333 = vrot.slane %v1332, 4
      %v1334 = vrot.slane %v243, 5
      %v1335 = vsel %vm1275, %v1333, %v1334
      %v1336 = vrot.slane %v1334, 4
      %v1337 = vrot.slane %v268, 5
      %v1338 = vsel %vm1275, %v1336, %v1337
      %v1339 = vrot.slane %v1234, 5
      %v1340 = vrot.slane %v1339, 4
      %v1341 = vrot.slane %v245, 5
      %v1342 = vsel %vm1275, %v1340, %v1341
      %v1343 = vrot.slane %v1341, 4
      %v1344 = vrot.slane %v269, 5
      %v1345 = vsel %vm1275, %v1343, %v1344
      %v1346 = vrot.slane %v1235, 5
      %v1347 = vrot.slane %v1346, 4
      %v1348 = vrot.slane %v247, 5
      %v1349 = vsel %vm1275, %v1347, %v1348
      %v1350 = vrot.slane %v1348, 4
      %v1351 = vrot.slane %v270, 5
      %v1352 = vsel %vm1275, %v1350, %v1351
      %v1353 = vrot.slane %v1236, 5
      %v1354 = vrot.slane %v1353, 4
      %v1355 = vrot.slane %v249, 5
      %v1356 = vsel %vm1275, %v1354, %v1355
      %v1357 = vrot.slane %v1355, 4
      %v1358 = vrot.slane %v271, 5
      %v1359 = vsel %vm1275, %v1357, %v1358
      %v1360 = vrot.slane %v1237, 5
      %v1361 = vrot.slane %v1360, 4
      %v1362 = vrot.slane %v251, 5
      %v1363 = vsel %vm1275, %v1361, %v1362
      %v1364 = vrot.slane %v1362, 4
      %v1365 = vrot.slane %v272, 5
      %v1366 = vsel %vm1275, %v1364, %v1365
      %v1367 = vrot.slane %v1238, 5
      %v1368 = vrot.slane %v1367, 4
      %v1369 = vrot.slane %v253, 5
      %v1370 = vsel %vm1275, %v1368, %v1369
      %v1371 = vrot.slane %v1369, 4
      %v1372 = vrot.slane %v273, 5
      %v1373 = vsel %vm1275, %v1371, %v1372
      %v1374 = vrot.slane %v1239, 5
      %v1375 = vrot.slane %v1374, 4
      %v1376 = vrot.slane %v255, 5
      %v1377 = vsel %vm1275, %v1375, %v1376
      %v1378 = vrot.slane %v1376, 4
      %v1379 = vrot.slane %v274, 5
      %v1380 = vsel %vm1275, %v1378, %v1379
      %v1381 = vrot.slane %v1240, 5
      %v1382 = vrot.slane %v1381, 4
      %v1383 = vrot.slane %v257, 5
      %v1384 = vsel %vm1275, %v1382, %v1383
      %v1385 = vrot.slane %v1383, 4
      %v1386 = vrot.slane %v275, 5
      %v1387 = vsel %vm1275, %v1385, %v1386
      %s1388 = scalar_lea.vmem %s1, 16
      %v1389 = vld [vmem:[%s1388] sm:$0xf]
      %v1390 = vld [vmem:[%s1388 + $0x4] sm:$0xf]
      %v1391 = vunpack.c.l.b16 %v1279
      %v1392 = vunpack.c.l.b16 %v1282
      %v1393 = vunpack.c.l.b16 %v1286
      %v1394 = vunpack.c.l.b16 %v1289
      %v1395 = vunpack.c.l.b16 %v1293
      %v1396 = vunpack.c.l.b16 %v1296
      %v1397 = vunpack.c.l.b16 %v1300
      %v1398 = vunpack.c.l.b16 %v1303
      %v1399 = vunpack.c.l.b16 %v1307
      %v1400 = vunpack.c.l.b16 %v1310
      %v1401 = vunpack.c.l.b16 %v1314
      %v1402 = vunpack.c.l.b16 %v1317
      %v1403 = vunpack.c.l.b16 %v1321
      %v1404 = vunpack.c.l.b16 %v1324
      %v1405 = vunpack.c.l.b16 %v1328
      %v1406 = vunpack.c.l.b16 %v1331
      %v1407 = vunpack.c.l.b16 %v1335
      %v1408 = vunpack.c.l.b16 %v1338
      %v1409 = vunpack.c.l.b16 %v1342
      %v1410 = vunpack.c.l.b16 %v1345
      %v1411 = vunpack.c.l.b16 %v1349
      %v1412 = vunpack.c.l.b16 %v1352
      %v1413 = vunpack.c.l.b16 %v1356
      %v1414 = vunpack.c.l.b16 %v1359
      %v1415 = vunpack.c.l.b16 %v1363
      %v1416 = vunpack.c.l.b16 %v1366
      %v1417 = vunpack.c.l.b16 %v1370
      %v1418 = vunpack.c.l.b16 %v1373
      %v1419 = vunpack.c.l.b16 %v1377
      %v1420 = vunpack.c.l.b16 %v1380
      %v1421 = vunpack.c.l.b16 %v1384
      %v1422 = vunpack.c.l.b16 %v1387
      %v1423 = vpack.c.b16 %v1392, %v1391
      %v1424 = vpack.c.b16 %v1394, %v1393
      %v1425 = vpack.c.b16 %v1396, %v1395
      %v1426 = vpack.c.b16 %v1398, %v1397
      %v1427 = vpack.c.b16 %v1400, %v1399
      %v1428 = vpack.c.b16 %v1402, %v1401
      %v1429 = vpack.c.b16 %v1404, %v1403
      %v1430 = vpack.c.b16 %v1406, %v1405
      %v1431 = vpack.c.b16 %v1408, %v1407
      %v1432 = vpack.c.b16 %v1410, %v1409
      %v1433 = vpack.c.b16 %v1412, %v1411
      %v1434 = vpack.c.b16 %v1414, %v1413
      %v1435 = vpack.c.b16 %v1416, %v1415
      %v1436 = vpack.c.b16 %v1418, %v1417
      %v1437 = vpack.c.b16 %v1420, %v1419
      %v1438 = vpack.c.b16 %v1422, %v1421
      %v1441 = vunpack.c.l.b16 %v1389
      %v1442 = vunpack.c.l.b16 %v1390
      %v1443 = vpack.c.b16 %v1442, %v1441
      %v1446 = vsel %vm720, %v1423, 0
      %v1449 = vsel %vm720, %v1424, 0
      %v1452 = vsel %vm720, %v1425, 0
      %v1455 = vsel %vm720, %v1426, 0
      %v1458 = vsel %vm720, %v1427, 0
      %v1461 = vsel %vm720, %v1428, 0
      %v1464 = vsel %vm720, %v1429, 0
      %v1467 = vsel %vm720, %v1430, 0
      %v1470 = vsel %vm720, %v1431, 0
      %v1473 = vsel %vm720, %v1432, 0
      %v1476 = vsel %vm720, %v1433, 0
      %v1479 = vsel %vm720, %v1434, 0
      %v1482 = vsel %vm720, %v1435, 0
      %v1485 = vsel %vm720, %v1436, 0
      %v1488 = vsel %vm720, %v1437, 0
      %v1491 = vsel %vm720, %v1438, 0
      %1493 = vmatprep.subr.bf16.mxu0 0
      %1494 = vmatpush1.bf16.msra.mxu0 %v1443
      %1495 = vmatprep.subr.bf16.mxu0 0
      %1496 = vmatpush1.bf16.msra.mxu0 0
      %1497 = vmatprep.subr.bf16.mxu0 0
      %1498 = vmatpush1.bf16.msra.mxu0 0
      %1499 = vmatprep.subr.bf16.mxu0 0
      %1500 = vmatpush1.bf16.msra.mxu0 0
      %1501 = vmatprep.subr.bf16.mxu0 0
      %1502 = vmatpush1.bf16.msra.mxu0 0
      %1503 = vmatprep.subr.bf16.mxu0 0
      %1504 = vmatpush1.bf16.msra.mxu0 0
      %1505 = vmatprep.subr.bf16.mxu0 0
      %1506 = vmatpush1.bf16.msra.mxu0 0
      %1507 = vmatprep.subr.bf16.mxu0 0
      %1508 = vmatpush1.bf16.msra.mxu0 0
      %1509 = vmatprep.subr.bf16.mxu0 0
      %1510 = vmatpush1.bf16.msra.mxu0 0
      %1511 = vmatprep.subr.bf16.mxu0 0
      %1512 = vmatpush1.bf16.msra.mxu0 0
      %1513 = vmatprep.subr.bf16.mxu0 0
      %1514 = vmatpush1.bf16.msra.mxu0 0
      %1515 = vmatprep.subr.bf16.mxu0 0
      %1516 = vmatpush1.bf16.msra.mxu0 0
      %1517 = vmatprep.subr.bf16.mxu0 0
      %1518 = vmatpush1.bf16.msra.mxu0 0
      %1519 = vmatprep.subr.bf16.mxu0 0
      %1520 = vmatpush1.bf16.msra.mxu0 0
      %1521 = vmatprep.subr.bf16.mxu0 0
      %1522 = vmatpush1.bf16.msra.mxu0 0
      %1523 = vmatprep.subr.bf16.mxu0 0
      %1524 = vmatpush1.bf16.msra.mxu0 0
      %1525 = vmatprep.mubr.bf16.mxu0 0
      %1526 = vmatmul.mubr.bf16.gmra.mrb[0].mxu0 %v1446
      %v1527 = vpop.f32.mrb[0].mxu0
      %v1528 = vadd.f32 0.0, %v1527
      %v1529 = vpop.f32.mrb[0].mxu0
      %v1530 = vpop.f32.mrb[0].mxu0
      %v1531 = vadd.f32 0.0, %v1530
      %v1532 = vpop.f32.mrb[0].mxu0
      %1533 = vmatprep.mubr.bf16.mxu0 0
      %1534 = vmatmul.mubr.bf16.gmra.mrb[0].mxu0 %v1449
      %v1535 = vpop.f32.mrb[0].mxu0
      %v1536 = vadd.f32 0.0, %v1535
      %v1537 = vpop.f32.mrb[0].mxu0
      %v1538 = vpop.f32.mrb[0].mxu0
      %v1539 = vadd.f32 0.0, %v1538
      %v1540 = vpop.f32.mrb[0].mxu0
      %1541 = vmatprep.mubr.bf16.mxu0 0
      %1542 = vmatmul.mubr.bf16.gmra.mrb[0].mxu0 %v1452
      %v1543 = vpop.f32.mrb[0].mxu0
      %v1544 = vadd.f32 0.0, %v1543
      %v1545 = vpop.f32.mrb[0].mxu0
      %v1546 = vpop.f32.mrb[0].mxu0
      %v1547 = vadd.f32 0.0, %v1546
      %v1548 = vpop.f32.mrb[0].mxu0
      %1549 = vmatprep.mubr.bf16.mxu0 0
      %1550 = vmatmul.mubr.bf16.gmra.mrb[0].mxu0 %v1455
      %v1551 = vpop.f32.mrb[0].mxu0
      %v1552 = vadd.f32 0.0, %v1551
      %v1553 = vpop.f32.mrb[0].mxu0
      %v1554 = vpop.f32.mrb[0].mxu0
      %v1555 = vadd.f32 0.0, %v1554
      %v1556 = vpop.f32.mrb[0].mxu0
      %1557 = vmatprep.mubr.bf16.mxu0 0
      %1558 = vmatmul.mubr.bf16.gmra.mrb[0].mxu0 %v1458
      %v1559 = vpop.f32.mrb[0].mxu0
      %v1560 = vadd.f32 0.0, %v1559
      %v1561 = vpop.f32.mrb[0].mxu0
      %v1562 = vpop.f32.mrb[0].mxu0
      %v1563 = vadd.f32 0.0, %v1562
      %v1564 = vpop.f32.mrb[0].mxu0
      %1565 = vmatprep.mubr.bf16.mxu0 0
      %1566 = vmatmul.mubr.bf16.gmra.mrb[0].mxu0 %v1461
      %v1567 = vpop.f32.mrb[0].mxu0
      %v1568 = vadd.f32 0.0, %v1567
      %v1569 = vpop.f32.mrb[0].mxu0
      %v1570 = vpop.f32.mrb[0].mxu0
      %v1571 = vadd.f32 0.0, %v1570
      %v1572 = vpop.f32.mrb[0].mxu0
      %1573 = vmatprep.mubr.bf16.mxu0 0
      %1574 = vmatmul.mubr.bf16.gmra.mrb[0].mxu0 %v1464
      %v1575 = vpop.f32.mrb[0].mxu0
      %v1576 = vadd.f32 0.0, %v1575
      %v1577 = vpop.f32.mrb[0].mxu0
      %v1578 = vpop.f32.mrb[0].mxu0
      %v1579 = vadd.f32 0.0, %v1578
      %v1580 = vpop.f32.mrb[0].mxu0
      %1581 = vmatprep.mubr.bf16.mxu0 0
      %1582 = vmatmul.mubr.bf16.gmra.mrb[0].mxu0 %v1467
      %v1583 = vpop.f32.mrb[0].mxu0
      %v1584 = vadd.f32 0.0, %v1583
      %v1585 = vpop.f32.mrb[0].mxu0
      %v1586 = vpop.f32.mrb[0].mxu0
      %v1587 = vadd.f32 0.0, %v1586
      %v1588 = vpop.f32.mrb[0].mxu0
      %1589 = vmatprep.mubr.bf16.mxu0 0
      %1590 = vmatmul.mubr.bf16.gmra.mrb[0].mxu0 %v1470
      %v1591 = vpop.f32.mrb[0].mxu0
      %v1592 = vadd.f32 0.0, %v1591
      %v1593 = vpop.f32.mrb[0].mxu0
      %v1594 = vpop.f32.mrb[0].mxu0
      %v1595 = vadd.f32 0.0, %v1594
      %v1596 = vpop.f32.mrb[0].mxu0
      %1597 = vmatprep.mubr.bf16.mxu0 0
      %1598 = vmatmul.mubr.bf16.gmra.mrb[0].mxu0 %v1473
      %v1599 = vpop.f32.mrb[0].mxu0
      %v1600 = vadd.f32 0.0, %v1599
      %v1601 = vpop.f32.mrb[0].mxu0
      %v1602 = vpop.f32.mrb[0].mxu0
      %v1603 = vadd.f32 0.0, %v1602
      %v1604 = vpop.f32.mrb[0].mxu0
      %1605 = vmatprep.mubr.bf16.mxu0 0
      %1606 = vmatmul.mubr.bf16.gmra.mrb[0].mxu0 %v1476
      %v1607 = vpop.f32.mrb[0].mxu0
      %v1608 = vadd.f32 0.0, %v1607
      %v1609 = vpop.f32.mrb[0].mxu0
      %v1610 = vpop.f32.mrb[0].mxu0
      %v1611 = vadd.f32 0.0, %v1610
      %v1612 = vpop.f32.mrb[0].mxu0
      %1613 = vmatprep.mubr.bf16.mxu0 0
      %1614 = vmatmul.mubr.bf16.gmra.mrb[0].mxu0 %v1479
      %v1615 = vpop.f32.mrb[0].mxu0
      %v1616 = vadd.f32 0.0, %v1615
      %v1617 = vpop.f32.mrb[0].mxu0
      %v1618 = vpop.f32.mrb[0].mxu0
      %v1619 = vadd.f32 0.0, %v1618
      %v1620 = vpop.f32.mrb[0].mxu0
      %1621 = vmatprep.mubr.bf16.mxu0 0
      %1622 = vmatmul.mubr.bf16.gmra.mrb[0].mxu0 %v1482
      %v1623 = vpop.f32.mrb[0].mxu0
      %v1624 = vadd.f32 0.0, %v1623
      %v1625 = vpop.f32.mrb[0].mxu0
      %v1626 = vpop.f32.mrb[0].mxu0
      %v1627 = vadd.f32 0.0, %v1626
      %v1628 = vpop.f32.mrb[0].mxu0
      %1629 = vmatprep.mubr.bf16.mxu0 0
      %1630 = vmatmul.mubr.bf16.gmra.mrb[0].mxu0 %v1485
      %v1631 = vpop.f32.mrb[0].mxu0
      %v1632 = vadd.f32 0.0, %v1631
      %v1633 = vpop.f32.mrb[0].mxu0
      %v1634 = vpop.f32.mrb[0].mxu0
      %v1635 = vadd.f32 0.0, %v1634
      %v1636 = vpop.f32.mrb[0].mxu0
      %1637 = vmatprep.mubr.bf16.mxu0 0
      %1638 = vmatmul.mubr.bf16.gmra.mrb[0].mxu0 %v1488
      %v1639 = vpop.f32.mrb[0].mxu0
      %v1640 = vadd.f32 0.0, %v1639
      %v1641 = vpop.f32.mrb[0].mxu0
      %v1642 = vpop.f32.mrb[0].mxu0
      %v1643 = vadd.f32 0.0, %v1642
      %v1644 = vpop.f32.mrb[0].mxu0
      %1645 = vmatprep.mubr.bf16.mxu0 0
      %1646 = vmatmul.mubr.bf16.gmra.mrb[0].mxu0 %v1491
      %v1647 = vpop.f32.mrb[0].mxu0
      %v1648 = vadd.f32 0.0, %v1647
      %v1649 = vpop.f32.mrb[0].mxu0
      %v1650 = vpop.f32.mrb[0].mxu0
      %v1651 = vadd.f32 0.0, %v1650
      %v1652 = vpop.f32.mrb[0].mxu0
      %1653 = vdwg.mxu0
      %v1654 = vadd.f32 %v1099, %v1528
      %v1655 = vadd.f32 %v1102, %v1531
      %v1656 = vadd.f32 %v1107, %v1536
      %v1657 = vadd.f32 %v1110, %v1539
      %v1658 = vadd.f32 %v1115, %v1544
      %v1659 = vadd.f32 %v1118, %v1547
      %v1660 = vadd.f32 %v1123, %v1552
      %v1661 = vadd.f32 %v1126, %v1555
      %v1662 = vadd.f32 %v1131, %v1560
      %v1663 = vadd.f32 %v1134, %v1563
      %v1664 = vadd.f32 %v1139, %v1568
      %v1665 = vadd.f32 %v1142, %v1571
      %v1666 = vadd.f32 %v1147, %v1576
      %v1667 = vadd.f32 %v1150, %v1579
      %v1668 = vadd.f32 %v1155, %v1584
      %v1669 = vadd.f32 %v1158, %v1587
      %v1670 = vadd.f32 %v1163, %v1592
      %v1671 = vadd.f32 %v1166, %v1595
      %v1672 = vadd.f32 %v1171, %v1600
      %v1673 = vadd.f32 %v1174, %v1603
      %v1674 = vadd.f32 %v1179, %v1608
      %v1675 = vadd.f32 %v1182, %v1611
      %v1676 = vadd.f32 %v1187, %v1616
      %v1677 = vadd.f32 %v1190, %v1619
      %v1678 = vadd.f32 %v1195, %v1624
      %v1679 = vadd.f32 %v1198, %v1627
      %v1680 = vadd.f32 %v1203, %v1632
      %v1681 = vadd.f32 %v1206, %v1635
      %v1682 = vadd.f32 %v1211, %v1640
      %v1683 = vadd.f32 %v1214, %v1643
      %v1684 = vadd.f32 %v1219, %v1648
      %v1685 = vadd.f32 %v1222, %v1651
      %s1686 = sadd.s32 %s222, 1
      %s1687 = smul.u32 %s1686, 3
      %s1688 = smul.addr %s1687, 4
      %s1689 = scalar_lea.vmem %s210, %s1688
      %v1690 = vld [vmem:[%s1689] sm:$0xf]
      %v1691 = vld [vmem:[%s1689 + $0x4] sm:$0xf]
      %v1692 = vld [vmem:[%s1689 + $0xc] sm:$0xf]
      %v1693 = vld [vmem:[%s1689 + $0x10] sm:$0xf]
      %v1694 = vld [vmem:[%s1689 + $0x18] sm:$0xf]
      %v1695 = vld [vmem:[%s1689 + $0x1c] sm:$0xf]
      %v1696 = vld [vmem:[%s1689 + $0x24] sm:$0xf]
      %v1697 = vld [vmem:[%s1689 + $0x28] sm:$0xf]
      %v1698 = vld [vmem:[%s1689 + $0x30] sm:$0xf]
      %v1699 = vld [vmem:[%s1689 + $0x34] sm:$0xf]
      %v1700 = vld [vmem:[%s1689 + $0x3c] sm:$0xf]
      %v1701 = vld [vmem:[%s1689 + $0x40] sm:$0xf]
      %v1702 = vld [vmem:[%s1689 + $0x48] sm:$0xf]
      %v1703 = vld [vmem:[%s1689 + $0x4c] sm:$0xf]
      %v1704 = vld [vmem:[%s1689 + $0x54] sm:$0xf]
      %v1705 = vld [vmem:[%s1689 + $0x58] sm:$0xf]
      %v1706 = vld [vmem:[%s1689 + $0x60] sm:$0xf]
      %v1707 = vld [vmem:[%s1689 + $0x64] sm:$0xf]
      %v1708 = vld [vmem:[%s1689 + $0x6c] sm:$0xf]
      %v1709 = vld [vmem:[%s1689 + $0x70] sm:$0xf]
      %v1710 = vld [vmem:[%s1689 + $0x78] sm:$0xf]
      %v1711 = vld [vmem:[%s1689 + $0x7c] sm:$0xf]
      %v1712 = vld [vmem:[%s1689 + $0x84] sm:$0xf]
      %v1713 = vld [vmem:[%s1689 + $0x88] sm:$0xf]
      %v1714 = vld [vmem:[%s1689 + $0x90] sm:$0xf]
      %v1715 = vld [vmem:[%s1689 + $0x94] sm:$0xf]
      %v1716 = vld [vmem:[%s1689 + $0x9c] sm:$0xf]
      %v1717 = vld [vmem:[%s1689 + $0xa0] sm:$0xf]
      %v1718 = vld [vmem:[%s1689 + $0xa8] sm:$0xf]
      %v1719 = vld [vmem:[%s1689 + $0xac] sm:$0xf]
      %v1720 = vld [vmem:[%s1689 + $0xb4] sm:$0xf]
      %v1721 = vld [vmem:[%s1689 + $0xb8] sm:$0xf]
      %s1722 = scalar_lea.vmem %s1, 24
      %v1723 = vld [vmem:[%s1722] sm:$0xf]
      %v1724 = vld [vmem:[%s1722 + $0x4] sm:$0xf]
      %v1757 = vunpack.c.l.b16 %v1690
      %v1758 = vunpack.c.l.b16 %v1691
      %v1759 = vunpack.c.l.b16 %v1692
      %v1760 = vunpack.c.l.b16 %v1693
      %v1761 = vunpack.c.l.b16 %v1694
      %v1762 = vunpack.c.l.b16 %v1695
      %v1763 = vunpack.c.l.b16 %v1696
      %v1764 = vunpack.c.l.b16 %v1697
      %v1765 = vunpack.c.l.b16 %v1698
      %v1766 = vunpack.c.l.b16 %v1699
      %v1767 = vunpack.c.l.b16 %v1700
      %v1768 = vunpack.c.l.b16 %v1701
      %v1769 = vunpack.c.l.b16 %v1702
      %v1770 = vunpack.c.l.b16 %v1703
      %v1771 = vunpack.c.l.b16 %v1704
      %v1772 = vunpack.c.l.b16 %v1705
      %v1773 = vunpack.c.l.b16 %v1706
      %v1774 = vunpack.c.l.b16 %v1707
      %v1775 = vunpack.c.l.b16 %v1708
      %v1776 = vunpack.c.l.b16 %v1709
      %v1777 = vunpack.c.l.b16 %v1710
      %v1778 = vunpack.c.l.b16 %v1711
      %v1779 = vunpack.c.l.b16 %v1712
      %v1780 = vunpack.c.l.b16 %v1713
      %v1781 = vunpack.c.l.b16 %v1714
      %v1782 = vunpack.c.l.b16 %v1715
      %v1783 = vunpack.c.l.b16 %v1716
      %v1784 = vunpack.c.l.b16 %v1717
      %v1785 = vunpack.c.l.b16 %v1718
      %v1786 = vunpack.c.l.b16 %v1719
      %v1787 = vunpack.c.l.b16 %v1720
      %v1788 = vunpack.c.l.b16 %v1721
      %v1789 = vpack.c.b16 %v1758, %v1757
      %v1790 = vpack.c.b16 %v1760, %v1759
      %v1791 = vpack.c.b16 %v1762, %v1761
      %v1792 = vpack.c.b16 %v1764, %v1763
      %v1793 = vpack.c.b16 %v1766, %v1765
      %v1794 = vpack.c.b16 %v1768, %v1767
      %v1795 = vpack.c.b16 %v1770, %v1769
      %v1796 = vpack.c.b16 %v1772, %v1771
      %v1797 = vpack.c.b16 %v1774, %v1773
      %v1798 = vpack.c.b16 %v1776, %v1775
      %v1799 = vpack.c.b16 %v1778, %v1777
      %v1800 = vpack.c.b16 %v1780, %v1779
      %v1801 = vpack.c.b16 %v1782, %v1781
      %v1802 = vpack.c.b16 %v1784, %v1783
      %v1803 = vpack.c.b16 %v1786, %v1785
      %v1804 = vpack.c.b16 %v1788, %v1787
      %v1807 = vunpack.c.l.b16 %v1723
      %v1808 = vunpack.c.l.b16 %v1724
      %v1809 = vpack.c.b16 %v1808, %v1807
      %v1812 = vsel %vm720, %v1789, 0
      %v1815 = vsel %vm720, %v1790, 0
      %v1818 = vsel %vm720, %v1791, 0
      %v1821 = vsel %vm720, %v1792, 0
      %v1824 = vsel %vm720, %v1793, 0
      %v1827 = vsel %vm720, %v1794, 0
      %v1830 = vsel %vm720, %v1795, 0
      %v1833 = vsel %vm720, %v1796, 0
      %v1836 = vsel %vm720, %v1797, 0
      %v1839 = vsel %vm720, %v1798, 0
      %v1842 = vsel %vm720, %v1799, 0
      %v1845 = vsel %vm720, %v1800, 0
      %v1848 = vsel %vm720, %v1801, 0
      %v1851 = vsel %vm720, %v1802, 0
      %v1854 = vsel %vm720, %v1803, 0
      %v1857 = vsel %vm720, %v1804, 0
      %1859 = vmatprep.subr.bf16.mxu0 0
      %1860 = vmatpush1.bf16.msra.mxu0 %v1809
      %1861 = vmatprep.subr.bf16.mxu0 0
      %1862 = vmatpush1.bf16.msra.mxu0 0
      %1863 = vmatprep.subr.bf16.mxu0 0
      %1864 = vmatpush1.bf16.msra.mxu0 0
      %1865 = vmatprep.subr.bf16.mxu0 0
      %1866 = vmatpush1.bf16.msra.mxu0 0
      %1867 = vmatprep.subr.bf16.mxu0 0
      %1868 = vmatpush1.bf16.msra.mxu0 0
      %1869 = vmatprep.subr.bf16.mxu0 0
      %1870 = vmatpush1.bf16.msra.mxu0 0
      %1871 = vmatprep.subr.bf16.mxu0 0
      %1872 = vmatpush1.bf16.msra.mxu0 0
      %1873 = vmatprep.subr.bf16.mxu0 0
      %1874 = vmatpush1.bf16.msra.mxu0 0
      %1875 = vmatprep.subr.bf16.mxu0 0
      %1876 = vmatpush1.bf16.msra.mxu0 0
      %1877 = vmatprep.subr.bf16.mxu0 0
      %1878 = vmatpush1.bf16.msra.mxu0 0
      %1879 = vmatprep.subr.bf16.mxu0 0
      %1880 = vmatpush1.bf16.msra.mxu0 0
      %1881 = vmatprep.subr.bf16.mxu0 0
      %1882 = vmatpush1.bf16.msra.mxu0 0
      %1883 = vmatprep.subr.bf16.mxu0 0
      %1884 = vmatpush1.bf16.msra.mxu0 0
      %1885 = vmatprep.subr.bf16.mxu0 0
      %1886 = vmatpush1.bf16.msra.mxu0 0
      %1887 = vmatprep.subr.bf16.mxu0 0
      %1888 = vmatpush1.bf16.msra.mxu0 0
      %1889 = vmatprep.subr.bf16.mxu0 0
      %1890 = vmatpush1.bf16.msra.mxu0 0
      %1891 = vmatprep.mubr.bf16.mxu0 0
      %1892 = vmatmul.mubr.bf16.gmra.mrb[0].mxu0 %v1812
      %v1893 = vpop.f32.mrb[0].mxu0
      %v1894 = vadd.f32 0.0, %v1893
      %v1895 = vpop.f32.mrb[0].mxu0
      %v1896 = vpop.f32.mrb[0].mxu0
      %v1897 = vadd.f32 0.0, %v1896
      %v1898 = vpop.f32.mrb[0].mxu0
      %1899 = vmatprep.mubr.bf16.mxu0 0
      %1900 = vmatmul.mubr.bf16.gmra.mrb[0].mxu0 %v1815
      %v1901 = vpop.f32.mrb[0].mxu0
      %v1902 = vadd.f32 0.0, %v1901
      %v1903 = vpop.f32.mrb[0].mxu0
      %v1904 = vpop.f32.mrb[0].mxu0
      %v1905 = vadd.f32 0.0, %v1904
      %v1906 = vpop.f32.mrb[0].mxu0
      %1907 = vmatprep.mubr.bf16.mxu0 0
      %1908 = vmatmul.mubr.bf16.gmra.mrb[0].mxu0 %v1818
      %v1909 = vpop.f32.mrb[0].mxu0
      %v1910 = vadd.f32 0.0, %v1909
      %v1911 = vpop.f32.mrb[0].mxu0
      %v1912 = vpop.f32.mrb[0].mxu0
      %v1913 = vadd.f32 0.0, %v1912
      %v1914 = vpop.f32.mrb[0].mxu0
      %1915 = vmatprep.mubr.bf16.mxu0 0
      %1916 = vmatmul.mubr.bf16.gmra.mrb[0].mxu0 %v1821
      %v1917 = vpop.f32.mrb[0].mxu0
      %v1918 = vadd.f32 0.0, %v1917
      %v1919 = vpop.f32.mrb[0].mxu0
      %v1920 = vpop.f32.mrb[0].mxu0
      %v1921 = vadd.f32 0.0, %v1920
      %v1922 = vpop.f32.mrb[0].mxu0
      %1923 = vmatprep.mubr.bf16.mxu0 0
      %1924 = vmatmul.mubr.bf16.gmra.mrb[0].mxu0 %v1824
      %v1925 = vpop.f32.mrb[0].mxu0
      %v1926 = vadd.f32 0.0, %v1925
      %v1927 = vpop.f32.mrb[0].mxu0
      %v1928 = vpop.f32.mrb[0].mxu0
      %v1929 = vadd.f32 0.0, %v1928
      %v1930 = vpop.f32.mrb[0].mxu0
      %1931 = vmatprep.mubr.bf16.mxu0 0
      %1932 = vmatmul.mubr.bf16.gmra.mrb[0].mxu0 %v1827
      %v1933 = vpop.f32.mrb[0].mxu0
      %v1934 = vadd.f32 0.0, %v1933
      %v1935 = vpop.f32.mrb[0].mxu0
      %v1936 = vpop.f32.mrb[0].mxu0
      %v1937 = vadd.f32 0.0, %v1936
      %v1938 = vpop.f32.mrb[0].mxu0
      %1939 = vmatprep.mubr.bf16.mxu0 0
      %1940 = vmatmul.mubr.bf16.gmra.mrb[0].mxu0 %v1830
      %v1941 = vpop.f32.mrb[0].mxu0
      %v1942 = vadd.f32 0.0, %v1941
      %v1943 = vpop.f32.mrb[0].mxu0
      %v1944 = vpop.f32.mrb[0].mxu0
      %v1945 = vadd.f32 0.0, %v1944
      %v1946 = vpop.f32.mrb[0].mxu0
      %1947 = vmatprep.mubr.bf16.mxu0 0
      %1948 = vmatmul.mubr.bf16.gmra.mrb[0].mxu0 %v1833
      %v1949 = vpop.f32.mrb[0].mxu0
      %v1950 = vadd.f32 0.0, %v1949
      %v1951 = vpop.f32.mrb[0].mxu0
      %v1952 = vpop.f32.mrb[0].mxu0
      %v1953 = vadd.f32 0.0, %v1952
      %v1954 = vpop.f32.mrb[0].mxu0
      %1955 = vmatprep.mubr.bf16.mxu0 0
      %1956 = vmatmul.mubr.bf16.gmra.mrb[0].mxu0 %v1836
      %v1957 = vpop.f32.mrb[0].mxu0
      %v1958 = vadd.f32 0.0, %v1957
      %v1959 = vpop.f32.mrb[0].mxu0
      %v1960 = vpop.f32.mrb[0].mxu0
      %v1961 = vadd.f32 0.0, %v1960
      %v1962 = vpop.f32.mrb[0].mxu0
      %1963 = vmatprep.mubr.bf16.mxu0 0
      %1964 = vmatmul.mubr.bf16.gmra.mrb[0].mxu0 %v1839
      %v1965 = vpop.f32.mrb[0].mxu0
      %v1966 = vadd.f32 0.0, %v1965
      %v1967 = vpop.f32.mrb[0].mxu0
      %v1968 = vpop.f32.mrb[0].mxu0
      %v1969 = vadd.f32 0.0, %v1968
      %v1970 = vpop.f32.mrb[0].mxu0
      %1971 = vmatprep.mubr.bf16.mxu0 0
      %1972 = vmatmul.mubr.bf16.gmra.mrb[0].mxu0 %v1842
      %v1973 = vpop.f32.mrb[0].mxu0
      %v1974 = vadd.f32 0.0, %v1973
      %v1975 = vpop.f32.mrb[0].mxu0
      %v1976 = vpop.f32.mrb[0].mxu0
      %v1977 = vadd.f32 0.0, %v1976
      %v1978 = vpop.f32.mrb[0].mxu0
      %1979 = vmatprep.mubr.bf16.mxu0 0
      %1980 = vmatmul.mubr.bf16.gmra.mrb[0].mxu0 %v1845
      %v1981 = vpop.f32.mrb[0].mxu0
      %v1982 = vadd.f32 0.0, %v1981
      %v1983 = vpop.f32.mrb[0].mxu0
      %v1984 = vpop.f32.mrb[0].mxu0
      %v1985 = vadd.f32 0.0, %v1984
      %v1986 = vpop.f32.mrb[0].mxu0
      %1987 = vmatprep.mubr.bf16.mxu0 0
      %1988 = vmatmul.mubr.bf16.gmra.mrb[0].mxu0 %v1848
      %v1989 = vpop.f32.mrb[0].mxu0
      %v1990 = vadd.f32 0.0, %v1989
      %v1991 = vpop.f32.mrb[0].mxu0
      %v1992 = vpop.f32.mrb[0].mxu0
      %v1993 = vadd.f32 0.0, %v1992
      %v1994 = vpop.f32.mrb[0].mxu0
      %1995 = vmatprep.mubr.bf16.mxu0 0
      %1996 = vmatmul.mubr.bf16.gmra.mrb[0].mxu0 %v1851
      %v1997 = vpop.f32.mrb[0].mxu0
      %v1998 = vadd.f32 0.0, %v1997
      %v1999 = vpop.f32.mrb[0].mxu0
      %v2000 = vpop.f32.mrb[0].mxu0
      %v2001 = vadd.f32 0.0, %v2000
      %v2002 = vpop.f32.mrb[0].mxu0
      %2003 = vmatprep.mubr.bf16.mxu0 0
      %2004 = vmatmul.mubr.bf16.gmra.mrb[0].mxu0 %v1854
      %v2005 = vpop.f32.mrb[0].mxu0
      %v2006 = vadd.f32 0.0, %v2005
      %v2007 = vpop.f32.mrb[0].mxu0
      %v2008 = vpop.f32.mrb[0].mxu0
      %v2009 = vadd.f32 0.0, %v2008
      %v2010 = vpop.f32.mrb[0].mxu0
      %2011 = vmatprep.mubr.bf16.mxu0 0
      %2012 = vmatmul.mubr.bf16.gmra.mrb[0].mxu0 %v1857
      %v2013 = vpop.f32.mrb[0].mxu0
      %v2014 = vadd.f32 0.0, %v2013
      %v2015 = vpop.f32.mrb[0].mxu0
      %v2016 = vpop.f32.mrb[0].mxu0
      %v2017 = vadd.f32 0.0, %v2016
      %v2018 = vpop.f32.mrb[0].mxu0
      %2019 = vdwg.mxu0
      %v2020 = vadd.f32 %v1654, %v1894
      %v2021 = vadd.f32 %v1655, %v1897
      %v2022 = vadd.f32 %v1656, %v1902
      %v2023 = vadd.f32 %v1657, %v1905
      %v2024 = vadd.f32 %v1658, %v1910
      %v2025 = vadd.f32 %v1659, %v1913
      %v2026 = vadd.f32 %v1660, %v1918
      %v2027 = vadd.f32 %v1661, %v1921
      %v2028 = vadd.f32 %v1662, %v1926
      %v2029 = vadd.f32 %v1663, %v1929
      %v2030 = vadd.f32 %v1664, %v1934
      %v2031 = vadd.f32 %v1665, %v1937
      %v2032 = vadd.f32 %v1666, %v1942
      %v2033 = vadd.f32 %v1667, %v1945
      %v2034 = vadd.f32 %v1668, %v1950
      %v2035 = vadd.f32 %v1669, %v1953
      %v2036 = vadd.f32 %v1670, %v1958
      %v2037 = vadd.f32 %v1671, %v1961
      %v2038 = vadd.f32 %v1672, %v1966
      %v2039 = vadd.f32 %v1673, %v1969
      %v2040 = vadd.f32 %v1674, %v1974
      %v2041 = vadd.f32 %v1675, %v1977
      %v2042 = vadd.f32 %v1676, %v1982
      %v2043 = vadd.f32 %v1677, %v1985
      %v2044 = vadd.f32 %v1678, %v1990
      %v2045 = vadd.f32 %v1679, %v1993
      %v2046 = vadd.f32 %v1680, %v1998
      %v2047 = vadd.f32 %v1681, %v2001
      %v2048 = vadd.f32 %v1682, %v2006
      %v2049 = vadd.f32 %v1683, %v2009
      %v2050 = vadd.f32 %v1684, %v2014
      %v2051 = vadd.f32 %v1685, %v2017
      %v2052 = vld [vmem:[%s1689] sm:$0xf]
      %v2053 = vld [vmem:[%s1689 + $0x4] sm:$0xf]
      %v2054 = vld [vmem:[%s1689 + $0x8] sm:$0x1]
      %v2055 = vld [vmem:[%s1689 + $0xc] sm:$0xf]
      %v2056 = vld [vmem:[%s1689 + $0x10] sm:$0xf]
      %v2057 = vld [vmem:[%s1689 + $0x14] sm:$0x1]
      %v2058 = vld [vmem:[%s1689 + $0x18] sm:$0xf]
      %v2059 = vld [vmem:[%s1689 + $0x1c] sm:$0xf]
      %v2060 = vld [vmem:[%s1689 + $0x20] sm:$0x1]
      %v2061 = vld [vmem:[%s1689 + $0x24] sm:$0xf]
      %v2062 = vld [vmem:[%s1689 + $0x28] sm:$0xf]
      %v2063 = vld [vmem:[%s1689 + $0x2c] sm:$0x1]
      %v2064 = vld [vmem:[%s1689 + $0x30] sm:$0xf]
      %v2065 = vld [vmem:[%s1689 + $0x34] sm:$0xf]
      %v2066 = vld [vmem:[%s1689 + $0x38] sm:$0x1]
      %v2067 = vld [vmem:[%s1689 + $0x3c] sm:$0xf]
      %v2068 = vld [vmem:[%s1689 + $0x40] sm:$0xf]
      %v2069 = vld [vmem:[%s1689 + $0x44] sm:$0x1]
      %v2070 = vld [vmem:[%s1689 + $0x48] sm:$0xf]
      %v2071 = vld [vmem:[%s1689 + $0x4c] sm:$0xf]
      %v2072 = vld [vmem:[%s1689 + $0x50] sm:$0x1]
      %v2073 = vld [vmem:[%s1689 + $0x54] sm:$0xf]
      %v2074 = vld [vmem:[%s1689 + $0x58] sm:$0xf]
      %v2075 = vld [vmem:[%s1689 + $0x5c] sm:$0x1]
      %v2076 = vld [vmem:[%s1689 + $0x60] sm:$0xf]
      %v2077 = vld [vmem:[%s1689 + $0x64] sm:$0xf]
      %v2078 = vld [vmem:[%s1689 + $0x68] sm:$0x1]
      %v2079 = vld [vmem:[%s1689 + $0x6c] sm:$0xf]
      %v2080 = vld [vmem:[%s1689 + $0x70] sm:$0xf]
      %v2081 = vld [vmem:[%s1689 + $0x74] sm:$0x1]
      %v2082 = vld [vmem:[%s1689 + $0x78] sm:$0xf]
      %v2083 = vld [vmem:[%s1689 + $0x7c] sm:$0xf]
      %v2084 = vld [vmem:[%s1689 + $0x80] sm:$0x1]
      %v2085 = vld [vmem:[%s1689 + $0x84] sm:$0xf]
      %v2086 = vld [vmem:[%s1689 + $0x88] sm:$0xf]
      %v2087 = vld [vmem:[%s1689 + $0x8c] sm:$0x1]
      %v2088 = vld [vmem:[%s1689 + $0x90] sm:$0xf]
      %v2089 = vld [vmem:[%s1689 + $0x94] sm:$0xf]
      %v2090 = vld [vmem:[%s1689 + $0x98] sm:$0x1]
      %v2091 = vld [vmem:[%s1689 + $0x9c] sm:$0xf]
      %v2092 = vld [vmem:[%s1689 + $0xa0] sm:$0xf]
      %v2093 = vld [vmem:[%s1689 + $0xa4] sm:$0x1]
      %v2094 = vld [vmem:[%s1689 + $0xa8] sm:$0xf]
      %v2095 = vld [vmem:[%s1689 + $0xac] sm:$0xf]
      %v2096 = vld [vmem:[%s1689 + $0xb0] sm:$0x1]
      %v2097 = vld [vmem:[%s1689 + $0xb4] sm:$0xf]
      %v2098 = vld [vmem:[%s1689 + $0xb8] sm:$0xf]
      %v2099 = vld [vmem:[%s1689 + $0xbc] sm:$0x1]
      %v2101 = vshrl.u32 %v2052, 16
      %v2103 = vrot.slane %v2101, 4
      %v2104 = vshll.u32 %v2052, 16
      %v2106 = vrot.slane %v2104, 5
      %v2107 = vor.u32 %v2103, %v2106
      %v2108 = vrot.slane %v2107, 4
      %v2110 = vshll.u32 %v2053, 16
      %v2112 = vrot.slane %v2110, 5
      %v2113 = vsel %vm278, %v2108, %v2112
      %v2114 = vshrl.u32 %v2053, 16
      %v2116 = vrot.slane %v2114, 4
      %v2117 = vor.u32 %v2116, %v2112
      %v2118 = vrot.slane %v2117, 4
      %v2120 = vshll.u32 %v2054, 16
      %v2122 = vrot.slane %v2120, 5
      %v2123 = vsel %vm278, %v2118, %v2122
      %v2125 = vshrl.u32 %v2055, 16
      %v2127 = vrot.slane %v2125, 4
      %v2128 = vshll.u32 %v2055, 16
      %v2130 = vrot.slane %v2128, 5
      %v2131 = vor.u32 %v2127, %v2130
      %v2132 = vrot.slane %v2131, 4
      %v2134 = vshll.u32 %v2056, 16
      %v2136 = vrot.slane %v2134, 5
      %v2137 = vsel %vm278, %v2132, %v2136
      %v2138 = vshrl.u32 %v2056, 16
      %v2140 = vrot.slane %v2138, 4
      %v2141 = vor.u32 %v2140, %v2136
      %v2142 = vrot.slane %v2141, 4
      %v2144 = vshll.u32 %v2057, 16
      %v2146 = vrot.slane %v2144, 5
      %v2147 = vsel %vm278, %v2142, %v2146
      %v2149 = vshrl.u32 %v2058, 16
      %v2151 = vrot.slane %v2149, 4
      %v2152 = vshll.u32 %v2058, 16
      %v2154 = vrot.slane %v2152, 5
      %v2155 = vor.u32 %v2151, %v2154
      %v2156 = vrot.slane %v2155, 4
      %v2158 = vshll.u32 %v2059, 16
      %v2160 = vrot.slane %v2158, 5
      %v2161 = vsel %vm278, %v2156, %v2160
      %v2162 = vshrl.u32 %v2059, 16
      %v2164 = vrot.slane %v2162, 4
      %v2165 = vor.u32 %v2164, %v2160
      %v2166 = vrot.slane %v2165, 4
      %v2168 = vshll.u32 %v2060, 16
      %v2170 = vrot.slane %v2168, 5
      %v2171 = vsel %vm278, %v2166, %v2170
      %v2173 = vshrl.u32 %v2061, 16
      %v2175 = vrot.slane %v2173, 4
      %v2176 = vshll.u32 %v2061, 16
      %v2178 = vrot.slane %v2176, 5
      %v2179 = vor.u32 %v2175, %v2178
      %v2180 = vrot.slane %v2179, 4
      %v2182 = vshll.u32 %v2062, 16
      %v2184 = vrot.slane %v2182, 5
      %v2185 = vsel %vm278, %v2180, %v2184
      %v2186 = vshrl.u32 %v2062, 16
      %v2188 = vrot.slane %v2186, 4
      %v2189 = vor.u32 %v2188, %v2184
      %v2190 = vrot.slane %v2189, 4
      %v2192 = vshll.u32 %v2063, 16
      %v2194 = vrot.slane %v2192, 5
      %v2195 = vsel %vm278, %v2190, %v2194
      %v2197 = vshrl.u32 %v2064, 16
      %v2199 = vrot.slane %v2197, 4
      %v2200 = vshll.u32 %v2064, 16
      %v2202 = vrot.slane %v2200, 5
      %v2203 = vor.u32 %v2199, %v2202
      %v2204 = vrot.slane %v2203, 4
      %v2206 = vshll.u32 %v2065, 16
      %v2208 = vrot.slane %v2206, 5
      %v2209 = vsel %vm278, %v2204, %v2208
      %v2210 = vshrl.u32 %v2065, 16
      %v2212 = vrot.slane %v2210, 4
      %v2213 = vor.u32 %v2212, %v2208
      %v2214 = vrot.slane %v2213, 4
      %v2216 = vshll.u32 %v2066, 16
      %v2218 = vrot.slane %v2216, 5
      %v2219 = vsel %vm278, %v2214, %v2218
      %v2221 = vshrl.u32 %v2067, 16
      %v2223 = vrot.slane %v2221, 4
      %v2224 = vshll.u32 %v2067, 16
      %v2226 = vrot.slane %v2224, 5
      %v2227 = vor.u32 %v2223, %v2226
      %v2228 = vrot.slane %v2227, 4
      %v2230 = vshll.u32 %v2068, 16
      %v2232 = vrot.slane %v2230, 5
      %v2233 = vsel %vm278, %v2228, %v2232
      %v2234 = vshrl.u32 %v2068, 16
      %v2236 = vrot.slane %v2234, 4
      %v2237 = vor.u32 %v2236, %v2232
      %v2238 = vrot.slane %v2237, 4
      %v2240 = vshll.u32 %v2069, 16
      %v2242 = vrot.slane %v2240, 5
      %v2243 = vsel %vm278, %v2238, %v2242
      %v2245 = vshrl.u32 %v2070, 16
      %v2247 = vrot.slane %v2245, 4
      %v2248 = vshll.u32 %v2070, 16
      %v2250 = vrot.slane %v2248, 5
      %v2251 = vor.u32 %v2247, %v2250
      %v2252 = vrot.slane %v2251, 4
      %v2254 = vshll.u32 %v2071, 16
      %v2256 = vrot.slane %v2254, 5
      %v2257 = vsel %vm278, %v2252, %v2256
      %v2258 = vshrl.u32 %v2071, 16
      %v2260 = vrot.slane %v2258, 4
      %v2261 = vor.u32 %v2260, %v2256
      %v2262 = vrot.slane %v2261, 4
      %v2264 = vshll.u32 %v2072, 16
      %v2266 = vrot.slane %v2264, 5
      %v2267 = vsel %vm278, %v2262, %v2266
      %v2269 = vshrl.u32 %v2073, 16
      %v2271 = vrot.slane %v2269, 4
      %v2272 = vshll.u32 %v2073, 16
      %v2274 = vrot.slane %v2272, 5
      %v2275 = vor.u32 %v2271, %v2274
      %v2276 = vrot.slane %v2275, 4
      %v2278 = vshll.u32 %v2074, 16
      %v2280 = vrot.slane %v2278, 5
      %v2281 = vsel %vm278, %v2276, %v2280
      %v2282 = vshrl.u32 %v2074, 16
      %v2284 = vrot.slane %v2282, 4
      %v2285 = vor.u32 %v2284, %v2280
      %v2286 = vrot.slane %v2285, 4
      %v2288 = vshll.u32 %v2075, 16
      %v2290 = vrot.slane %v2288, 5
      %v2291 = vsel %vm278, %v2286, %v2290
      %v2293 = vshrl.u32 %v2076, 16
      %v2295 = vrot.slane %v2293, 4
      %v2296 = vshll.u32 %v2076, 16
      %v2298 = vrot.slane %v2296, 5
      %v2299 = vor.u32 %v2295, %v2298
      %v2300 = vrot.slane %v2299, 4
      %v2302 = vshll.u32 %v2077, 16
      %v2304 = vrot.slane %v2302, 5
      %v2305 = vsel %vm278, %v2300, %v2304
      %v2306 = vshrl.u32 %v2077, 16
      %v2308 = vrot.slane %v2306, 4
      %v2309 = vor.u32 %v2308, %v2304
      %v2310 = vrot.slane %v2309, 4
      %v2312 = vshll.u32 %v2078, 16
      %v2314 = vrot.slane %v2312, 5
      %v2315 = vsel %vm278, %v2310, %v2314
      %v2317 = vshrl.u32 %v2079, 16
      %v2319 = vrot.slane %v2317, 4
      %v2320 = vshll.u32 %v2079, 16
      %v2322 = vrot.slane %v2320, 5
      %v2323 = vor.u32 %v2319, %v2322
      %v2324 = vrot.slane %v2323, 4
      %v2326 = vshll.u32 %v2080, 16
      %v2328 = vrot.slane %v2326, 5
      %v2329 = vsel %vm278, %v2324, %v2328
      %v2330 = vshrl.u32 %v2080, 16
      %v2332 = vrot.slane %v2330, 4
      %v2333 = vor.u32 %v2332, %v2328
      %v2334 = vrot.slane %v2333, 4
      %v2336 = vshll.u32 %v2081, 16
      %v2338 = vrot.slane %v2336, 5
      %v2339 = vsel %vm278, %v2334, %v2338
      %v2341 = vshrl.u32 %v2082, 16
      %v2343 = vrot.slane %v2341, 4
      %v2344 = vshll.u32 %v2082, 16
      %v2346 = vrot.slane %v2344, 5
      %v2347 = vor.u32 %v2343, %v2346
      %v2348 = vrot.slane %v2347, 4
      %v2350 = vshll.u32 %v2083, 16
      %v2352 = vrot.slane %v2350, 5
      %v2353 = vsel %vm278, %v2348, %v2352
      %v2354 = vshrl.u32 %v2083, 16
      %v2356 = vrot.slane %v2354, 4
      %v2357 = vor.u32 %v2356, %v2352
      %v2358 = vrot.slane %v2357, 4
      %v2360 = vshll.u32 %v2084, 16
      %v2362 = vrot.slane %v2360, 5
      %v2363 = vsel %vm278, %v2358, %v2362
      %v2365 = vshrl.u32 %v2085, 16
      %v2367 = vrot.slane %v2365, 4
      %v2368 = vshll.u32 %v2085, 16
      %v2370 = vrot.slane %v2368, 5
      %v2371 = vor.u32 %v2367, %v2370
      %v2372 = vrot.slane %v2371, 4
      %v2374 = vshll.u32 %v2086, 16
      %v2376 = vrot.slane %v2374, 5
      %v2377 = vsel %vm278, %v2372, %v2376
      %v2378 = vshrl.u32 %v2086, 16
      %v2380 = vrot.slane %v2378, 4
      %v2381 = vor.u32 %v2380, %v2376
      %v2382 = vrot.slane %v2381, 4
      %v2384 = vshll.u32 %v2087, 16
      %v2386 = vrot.slane %v2384, 5
      %v2387 = vsel %vm278, %v2382, %v2386
      %v2389 = vshrl.u32 %v2088, 16
      %v2391 = vrot.slane %v2389, 4
      %v2392 = vshll.u32 %v2088, 16
      %v2394 = vrot.slane %v2392, 5
      %v2395 = vor.u32 %v2391, %v2394
      %v2396 = vrot.slane %v2395, 4
      %v2398 = vshll.u32 %v2089, 16
      %v2400 = vrot.slane %v2398, 5
      %v2401 = vsel %vm278, %v2396, %v2400
      %v2402 = vshrl.u32 %v2089, 16
      %v2404 = vrot.slane %v2402, 4
      %v2405 = vor.u32 %v2404, %v2400
      %v2406 = vrot.slane %v2405, 4
      %v2408 = vshll.u32 %v2090, 16
      %v2410 = vrot.slane %v2408, 5
      %v2411 = vsel %vm278, %v2406, %v2410
      %v2413 = vshrl.u32 %v2091, 16
      %v2415 = vrot.slane %v2413, 4
      %v2416 = vshll.u32 %v2091, 16
      %v2418 = vrot.slane %v2416, 5
      %v2419 = vor.u32 %v2415, %v2418
      %v2420 = vrot.slane %v2419, 4
      %v2422 = vshll.u32 %v2092, 16
      %v2424 = vrot.slane %v2422, 5
      %v2425 = vsel %vm278, %v2420, %v2424
      %v2426 = vshrl.u32 %v2092, 16
      %v2428 = vrot.slane %v2426, 4
      %v2429 = vor.u32 %v2428, %v2424
      %v2430 = vrot.slane %v2429, 4
      %v2432 = vshll.u32 %v2093, 16
      %v2434 = vrot.slane %v2432, 5
      %v2435 = vsel %vm278, %v2430, %v2434
      %v2437 = vshrl.u32 %v2094, 16
      %v2439 = vrot.slane %v2437, 4
      %v2440 = vshll.u32 %v2094, 16
      %v2442 = vrot.slane %v2440, 5
      %v2443 = vor.u32 %v2439, %v2442
      %v2444 = vrot.slane %v2443, 4
      %v2446 = vshll.u32 %v2095, 16
      %v2448 = vrot.slane %v2446, 5
      %v2449 = vsel %vm278, %v2444, %v2448
      %v2450 = vshrl.u32 %v2095, 16
      %v2452 = vrot.slane %v2450, 4
      %v2453 = vor.u32 %v2452, %v2448
      %v2454 = vrot.slane %v2453, 4
      %v2456 = vshll.u32 %v2096, 16
      %v2458 = vrot.slane %v2456, 5
      %v2459 = vsel %vm278, %v2454, %v2458
      %v2461 = vshrl.u32 %v2097, 16
      %v2463 = vrot.slane %v2461, 4
      %v2464 = vshll.u32 %v2097, 16
      %v2466 = vrot.slane %v2464, 5
      %v2467 = vor.u32 %v2463, %v2466
      %v2468 = vrot.slane %v2467, 4
      %v2470 = vshll.u32 %v2098, 16
      %v2472 = vrot.slane %v2470, 5
      %v2473 = vsel %vm278, %v2468, %v2472
      %v2474 = vshrl.u32 %v2098, 16
      %v2476 = vrot.slane %v2474, 4
      %v2477 = vor.u32 %v2476, %v2472
      %v2478 = vrot.slane %v2477, 4
      %v2480 = vshll.u32 %v2099, 16
      %v2482 = vrot.slane %v2480, 5
      %v2483 = vsel %vm278, %v2478, %v2482
      %s2484 = scalar_lea.vmem %s1, 32
      %v2485 = vld [vmem:[%s2484] sm:$0xf]
      %v2486 = vld [vmem:[%s2484 + $0x4] sm:$0xf]
      %v2487 = vunpack.c.l.b16 %v2113
      %v2488 = vunpack.c.l.b16 %v2123
      %v2489 = vunpack.c.l.b16 %v2137
      %v2490 = vunpack.c.l.b16 %v2147
      %v2491 = vunpack.c.l.b16 %v2161
      %v2492 = vunpack.c.l.b16 %v2171
      %v2493 = vunpack.c.l.b16 %v2185
      %v2494 = vunpack.c.l.b16 %v2195
      %v2495 = vunpack.c.l.b16 %v2209
      %v2496 = vunpack.c.l.b16 %v2219
      %v2497 = vunpack.c.l.b16 %v2233
      %v2498 = vunpack.c.l.b16 %v2243
      %v2499 = vunpack.c.l.b16 %v2257
      %v2500 = vunpack.c.l.b16 %v2267
      %v2501 = vunpack.c.l.b16 %v2281
      %v2502 = vunpack.c.l.b16 %v2291
      %v2503 = vunpack.c.l.b16 %v2305
      %v2504 = vunpack.c.l.b16 %v2315
      %v2505 = vunpack.c.l.b16 %v2329
      %v2506 = vunpack.c.l.b16 %v2339
      %v2507 = vunpack.c.l.b16 %v2353
      %v2508 = vunpack.c.l.b16 %v2363
      %v2509 = vunpack.c.l.b16 %v2377
      %v2510 = vunpack.c.l.b16 %v2387
      %v2511 = vunpack.c.l.b16 %v2401
      %v2512 = vunpack.c.l.b16 %v2411
      %v2513 = vunpack.c.l.b16 %v2425
      %v2514 = vunpack.c.l.b16 %v2435
      %v2515 = vunpack.c.l.b16 %v2449
      %v2516 = vunpack.c.l.b16 %v2459
      %v2517 = vunpack.c.l.b16 %v2473
      %v2518 = vunpack.c.l.b16 %v2483
      %v2519 = vpack.c.b16 %v2488, %v2487
      %v2520 = vpack.c.b16 %v2490, %v2489
      %v2521 = vpack.c.b16 %v2492, %v2491
      %v2522 = vpack.c.b16 %v2494, %v2493
      %v2523 = vpack.c.b16 %v2496, %v2495
      %v2524 = vpack.c.b16 %v2498, %v2497
      %v2525 = vpack.c.b16 %v2500, %v2499
      %v2526 = vpack.c.b16 %v2502, %v2501
      %v2527 = vpack.c.b16 %v2504, %v2503
      %v2528 = vpack.c.b16 %v2506, %v2505
      %v2529 = vpack.c.b16 %v2508, %v2507
      %v2530 = vpack.c.b16 %v2510, %v2509
      %v2531 = vpack.c.b16 %v2512, %v2511
      %v2532 = vpack.c.b16 %v2514, %v2513
      %v2533 = vpack.c.b16 %v2516, %v2515
      %v2534 = vpack.c.b16 %v2518, %v2517
      %v2537 = vunpack.c.l.b16 %v2485
      %v2538 = vunpack.c.l.b16 %v2486
      %v2539 = vpack.c.b16 %v2538, %v2537
      %v2542 = vsel %vm720, %v2519, 0
      %v2545 = vsel %vm720, %v2520, 0
      %v2548 = vsel %vm720, %v2521, 0
      %v2551 = vsel %vm720, %v2522, 0
      %v2554 = vsel %vm720, %v2523, 0
      %v2557 = vsel %vm720, %v2524, 0
      %v2560 = vsel %vm720, %v2525, 0
      %v2563 = vsel %vm720, %v2526, 0
      %v2566 = vsel %vm720, %v2527, 0
      %v2569 = vsel %vm720, %v2528, 0
      %v2572 = vsel %vm720, %v2529, 0
      %v2575 = vsel %vm720, %v2530, 0
      %v2578 = vsel %vm720, %v2531, 0
      %v2581 = vsel %vm720, %v2532, 0
      %v2584 = vsel %vm720, %v2533, 0
      %v2587 = vsel %vm720, %v2534, 0
      %2589 = vmatprep.subr.bf16.mxu0 0
      %2590 = vmatpush1.bf16.msra.mxu0 %v2539
      %2591 = vmatprep.subr.bf16.mxu0 0
      %2592 = vmatpush1.bf16.msra.mxu0 0
      %2593 = vmatprep.subr.bf16.mxu0 0
      %2594 = vmatpush1.bf16.msra.mxu0 0
      %2595 = vmatprep.subr.bf16.mxu0 0
      %2596 = vmatpush1.bf16.msra.mxu0 0
      %2597 = vmatprep.subr.bf16.mxu0 0
      %2598 = vmatpush1.bf16.msra.mxu0 0
      %2599 = vmatprep.subr.bf16.mxu0 0
      %2600 = vmatpush1.bf16.msra.mxu0 0
      %2601 = vmatprep.subr.bf16.mxu0 0
      %2602 = vmatpush1.bf16.msra.mxu0 0
      %2603 = vmatprep.subr.bf16.mxu0 0
      %2604 = vmatpush1.bf16.msra.mxu0 0
      %2605 = vmatprep.subr.bf16.mxu0 0
      %2606 = vmatpush1.bf16.msra.mxu0 0
      %2607 = vmatprep.subr.bf16.mxu0 0
      %2608 = vmatpush1.bf16.msra.mxu0 0
      %2609 = vmatprep.subr.bf16.mxu0 0
      %2610 = vmatpush1.bf16.msra.mxu0 0
      %2611 = vmatprep.subr.bf16.mxu0 0
      %2612 = vmatpush1.bf16.msra.mxu0 0
      %2613 = vmatprep.subr.bf16.mxu0 0
      %2614 = vmatpush1.bf16.msra.mxu0 0
      %2615 = vmatprep.subr.bf16.mxu0 0
      %2616 = vmatpush1.bf16.msra.mxu0 0
      %2617 = vmatprep.subr.bf16.mxu0 0
      %2618 = vmatpush1.bf16.msra.mxu0 0
      %2619 = vmatprep.subr.bf16.mxu0 0
      %2620 = vmatpush1.bf16.msra.mxu0 0
      %2621 = vmatprep.mubr.bf16.mxu0 0
      %2622 = vmatmul.mubr.bf16.gmra.mrb[0].mxu0 %v2542
      %v2623 = vpop.f32.mrb[0].mxu0
      %v2624 = vadd.f32 0.0, %v2623
      %v2625 = vpop.f32.mrb[0].mxu0
      %v2626 = vpop.f32.mrb[0].mxu0
      %v2627 = vadd.f32 0.0, %v2626
      %v2628 = vpop.f32.mrb[0].mxu0
      %2629 = vmatprep.mubr.bf16.mxu0 0
      %2630 = vmatmul.mubr.bf16.gmra.mrb[0].mxu0 %v2545
      %v2631 = vpop.f32.mrb[0].mxu0
      %v2632 = vadd.f32 0.0, %v2631
      %v2633 = vpop.f32.mrb[0].mxu0
      %v2634 = vpop.f32.mrb[0].mxu0
      %v2635 = vadd.f32 0.0, %v2634
      %v2636 = vpop.f32.mrb[0].mxu0
      %2637 = vmatprep.mubr.bf16.mxu0 0
      %2638 = vmatmul.mubr.bf16.gmra.mrb[0].mxu0 %v2548
      %v2639 = vpop.f32.mrb[0].mxu0
      %v2640 = vadd.f32 0.0, %v2639
      %v2641 = vpop.f32.mrb[0].mxu0
      %v2642 = vpop.f32.mrb[0].mxu0
      %v2643 = vadd.f32 0.0, %v2642
      %v2644 = vpop.f32.mrb[0].mxu0
      %2645 = vmatprep.mubr.bf16.mxu0 0
      %2646 = vmatmul.mubr.bf16.gmra.mrb[0].mxu0 %v2551
      %v2647 = vpop.f32.mrb[0].mxu0
      %v2648 = vadd.f32 0.0, %v2647
      %v2649 = vpop.f32.mrb[0].mxu0
      %v2650 = vpop.f32.mrb[0].mxu0
      %v2651 = vadd.f32 0.0, %v2650
      %v2652 = vpop.f32.mrb[0].mxu0
      %2653 = vmatprep.mubr.bf16.mxu0 0
      %2654 = vmatmul.mubr.bf16.gmra.mrb[0].mxu0 %v2554
      %v2655 = vpop.f32.mrb[0].mxu0
      %v2656 = vadd.f32 0.0, %v2655
      %v2657 = vpop.f32.mrb[0].mxu0
      %v2658 = vpop.f32.mrb[0].mxu0
      %v2659 = vadd.f32 0.0, %v2658
      %v2660 = vpop.f32.mrb[0].mxu0
      %2661 = vmatprep.mubr.bf16.mxu0 0
      %2662 = vmatmul.mubr.bf16.gmra.mrb[0].mxu0 %v2557
      %v2663 = vpop.f32.mrb[0].mxu0
      %v2664 = vadd.f32 0.0, %v2663
      %v2665 = vpop.f32.mrb[0].mxu0
      %v2666 = vpop.f32.mrb[0].mxu0
      %v2667 = vadd.f32 0.0, %v2666
      %v2668 = vpop.f32.mrb[0].mxu0
      %2669 = vmatprep.mubr.bf16.mxu0 0
      %2670 = vmatmul.mubr.bf16.gmra.mrb[0].mxu0 %v2560
      %v2671 = vpop.f32.mrb[0].mxu0
      %v2672 = vadd.f32 0.0, %v2671
      %v2673 = vpop.f32.mrb[0].mxu0
      %v2674 = vpop.f32.mrb[0].mxu0
      %v2675 = vadd.f32 0.0, %v2674
      %v2676 = vpop.f32.mrb[0].mxu0
      %2677 = vmatprep.mubr.bf16.mxu0 0
      %2678 = vmatmul.mubr.bf16.gmra.mrb[0].mxu0 %v2563
      %v2679 = vpop.f32.mrb[0].mxu0
      %v2680 = vadd.f32 0.0, %v2679
      %v2681 = vpop.f32.mrb[0].mxu0
      %v2682 = vpop.f32.mrb[0].mxu0
      %v2683 = vadd.f32 0.0, %v2682
      %v2684 = vpop.f32.mrb[0].mxu0
      %2685 = vmatprep.mubr.bf16.mxu0 0
      %2686 = vmatmul.mubr.bf16.gmra.mrb[0].mxu0 %v2566
      %v2687 = vpop.f32.mrb[0].mxu0
      %v2688 = vadd.f32 0.0, %v2687
      %v2689 = vpop.f32.mrb[0].mxu0
      %v2690 = vpop.f32.mrb[0].mxu0
      %v2691 = vadd.f32 0.0, %v2690
      %v2692 = vpop.f32.mrb[0].mxu0
      %2693 = vmatprep.mubr.bf16.mxu0 0
      %2694 = vmatmul.mubr.bf16.gmra.mrb[0].mxu0 %v2569
      %v2695 = vpop.f32.mrb[0].mxu0
      %v2696 = vadd.f32 0.0, %v2695
      %v2697 = vpop.f32.mrb[0].mxu0
      %v2698 = vpop.f32.mrb[0].mxu0
      %v2699 = vadd.f32 0.0, %v2698
      %v2700 = vpop.f32.mrb[0].mxu0
      %2701 = vmatprep.mubr.bf16.mxu0 0
      %2702 = vmatmul.mubr.bf16.gmra.mrb[0].mxu0 %v2572
      %v2703 = vpop.f32.mrb[0].mxu0
      %v2704 = vadd.f32 0.0, %v2703
      %v2705 = vpop.f32.mrb[0].mxu0
      %v2706 = vpop.f32.mrb[0].mxu0
      %v2707 = vadd.f32 0.0, %v2706
      %v2708 = vpop.f32.mrb[0].mxu0
      %2709 = vmatprep.mubr.bf16.mxu0 0
      %2710 = vmatmul.mubr.bf16.gmra.mrb[0].mxu0 %v2575
      %v2711 = vpop.f32.mrb[0].mxu0
      %v2712 = vadd.f32 0.0, %v2711
      %v2713 = vpop.f32.mrb[0].mxu0
      %v2714 = vpop.f32.mrb[0].mxu0
      %v2715 = vadd.f32 0.0, %v2714
      %v2716 = vpop.f32.mrb[0].mxu0
      %2717 = vmatprep.mubr.bf16.mxu0 0
      %2718 = vmatmul.mubr.bf16.gmra.mrb[0].mxu0 %v2578
      %v2719 = vpop.f32.mrb[0].mxu0
      %v2720 = vadd.f32 0.0, %v2719
      %v2721 = vpop.f32.mrb[0].mxu0
      %v2722 = vpop.f32.mrb[0].mxu0
      %v2723 = vadd.f32 0.0, %v2722
      %v2724 = vpop.f32.mrb[0].mxu0
      %2725 = vmatprep.mubr.bf16.mxu0 0
      %2726 = vmatmul.mubr.bf16.gmra.mrb[0].mxu0 %v2581
      %v2727 = vpop.f32.mrb[0].mxu0
      %v2728 = vadd.f32 0.0, %v2727
      %v2729 = vpop.f32.mrb[0].mxu0
      %v2730 = vpop.f32.mrb[0].mxu0
      %v2731 = vadd.f32 0.0, %v2730
      %v2732 = vpop.f32.mrb[0].mxu0
      %2733 = vmatprep.mubr.bf16.mxu0 0
      %2734 = vmatmul.mubr.bf16.gmra.mrb[0].mxu0 %v2584
      %v2735 = vpop.f32.mrb[0].mxu0
      %v2736 = vadd.f32 0.0, %v2735
      %v2737 = vpop.f32.mrb[0].mxu0
      %v2738 = vpop.f32.mrb[0].mxu0
      %v2739 = vadd.f32 0.0, %v2738
      %v2740 = vpop.f32.mrb[0].mxu0
      %2741 = vmatprep.mubr.bf16.mxu0 0
      %2742 = vmatmul.mubr.bf16.gmra.mrb[0].mxu0 %v2587
      %v2743 = vpop.f32.mrb[0].mxu0
      %v2744 = vadd.f32 0.0, %v2743
      %v2745 = vpop.f32.mrb[0].mxu0
      %v2746 = vpop.f32.mrb[0].mxu0
      %v2747 = vadd.f32 0.0, %v2746
      %v2748 = vpop.f32.mrb[0].mxu0
      %2749 = vdwg.mxu0
      %v2750 = vadd.f32 %v2020, %v2624
      %v2751 = vadd.f32 %v2021, %v2627
      %v2752 = vadd.f32 %v2022, %v2632
      %v2753 = vadd.f32 %v2023, %v2635
      %v2754 = vadd.f32 %v2024, %v2640
      %v2755 = vadd.f32 %v2025, %v2643
      %v2756 = vadd.f32 %v2026, %v2648
      %v2757 = vadd.f32 %v2027, %v2651
      %v2758 = vadd.f32 %v2028, %v2656
      %v2759 = vadd.f32 %v2029, %v2659
      %v2760 = vadd.f32 %v2030, %v2664
      %v2761 = vadd.f32 %v2031, %v2667
      %v2762 = vadd.f32 %v2032, %v2672
      %v2763 = vadd.f32 %v2033, %v2675
      %v2764 = vadd.f32 %v2034, %v2680
      %v2765 = vadd.f32 %v2035, %v2683
      %v2766 = vadd.f32 %v2036, %v2688
      %v2767 = vadd.f32 %v2037, %v2691
      %v2768 = vadd.f32 %v2038, %v2696
      %v2769 = vadd.f32 %v2039, %v2699
      %v2770 = vadd.f32 %v2040, %v2704
      %v2771 = vadd.f32 %v2041, %v2707
      %v2772 = vadd.f32 %v2042, %v2712
      %v2773 = vadd.f32 %v2043, %v2715
      %v2774 = vadd.f32 %v2044, %v2720
      %v2775 = vadd.f32 %v2045, %v2723
      %v2776 = vadd.f32 %v2046, %v2728
      %v2777 = vadd.f32 %v2047, %v2731
      %v2778 = vadd.f32 %v2048, %v2736
      %v2779 = vadd.f32 %v2049, %v2739
      %v2780 = vadd.f32 %v2050, %v2744
      %v2781 = vadd.f32 %v2051, %v2747
      %v2782 = vld [vmem:[%s1689] sm:$0xe]
      %v2783 = vld [vmem:[%s1689 + $0xc] sm:$0xe]
      %v2784 = vld [vmem:[%s1689 + $0x18] sm:$0xe]
      %v2785 = vld [vmem:[%s1689 + $0x24] sm:$0xe]
      %v2786 = vld [vmem:[%s1689 + $0x30] sm:$0xe]
      %v2787 = vld [vmem:[%s1689 + $0x3c] sm:$0xe]
      %v2788 = vld [vmem:[%s1689 + $0x48] sm:$0xe]
      %v2789 = vld [vmem:[%s1689 + $0x54] sm:$0xe]
      %v2790 = vld [vmem:[%s1689 + $0x60] sm:$0xe]
      %v2791 = vld [vmem:[%s1689 + $0x6c] sm:$0xe]
      %v2792 = vld [vmem:[%s1689 + $0x78] sm:$0xe]
      %v2793 = vld [vmem:[%s1689 + $0x84] sm:$0xe]
      %v2794 = vld [vmem:[%s1689 + $0x90] sm:$0xe]
      %v2795 = vld [vmem:[%s1689 + $0x9c] sm:$0xe]
      %v2796 = vld [vmem:[%s1689 + $0xa8] sm:$0xe]
      %v2797 = vld [vmem:[%s1689 + $0xb4] sm:$0xe]
      %v2846 = vrot.slane %v2782, 5
      %v2847 = vrot.slane %v2846, 4
      %v2848 = vrot.slane %v2053, 5
      %v2849 = vsel %vm1275, %v2847, %v2848
      %v2850 = vrot.slane %v2848, 4
      %v2851 = vrot.slane %v2054, 5
      %v2852 = vsel %vm1275, %v2850, %v2851
      %v2853 = vrot.slane %v2783, 5
      %v2854 = vrot.slane %v2853, 4
      %v2855 = vrot.slane %v2056, 5
      %v2856 = vsel %vm1275, %v2854, %v2855
      %v2857 = vrot.slane %v2855, 4
      %v2858 = vrot.slane %v2057, 5
      %v2859 = vsel %vm1275, %v2857, %v2858
      %v2860 = vrot.slane %v2784, 5
      %v2861 = vrot.slane %v2860, 4
      %v2862 = vrot.slane %v2059, 5
      %v2863 = vsel %vm1275, %v2861, %v2862
      %v2864 = vrot.slane %v2862, 4
      %v2865 = vrot.slane %v2060, 5
      %v2866 = vsel %vm1275, %v2864, %v2865
      %v2867 = vrot.slane %v2785, 5
      %v2868 = vrot.slane %v2867, 4
      %v2869 = vrot.slane %v2062, 5
      %v2870 = vsel %vm1275, %v2868, %v2869
      %v2871 = vrot.slane %v2869, 4
      %v2872 = vrot.slane %v2063, 5
      %v2873 = vsel %vm1275, %v2871, %v2872
      %v2874 = vrot.slane %v2786, 5
      %v2875 = vrot.slane %v2874, 4
      %v2876 = vrot.slane %v2065, 5
      %v2877 = vsel %vm1275, %v2875, %v2876
      %v2878 = vrot.slane %v2876, 4
      %v2879 = vrot.slane %v2066, 5
      %v2880 = vsel %vm1275, %v2878, %v2879
      %v2881 = vrot.slane %v2787, 5
      %v2882 = vrot.slane %v2881, 4
      %v2883 = vrot.slane %v2068, 5
      %v2884 = vsel %vm1275, %v2882, %v2883
      %v2885 = vrot.slane %v2883, 4
      %v2886 = vrot.slane %v2069, 5
      %v2887 = vsel %vm1275, %v2885, %v2886
      %v2888 = vrot.slane %v2788, 5
      %v2889 = vrot.slane %v2888, 4
      %v2890 = vrot.slane %v2071, 5
      %v2891 = vsel %vm1275, %v2889, %v2890
      %v2892 = vrot.slane %v2890, 4
      %v2893 = vrot.slane %v2072, 5
      %v2894 = vsel %vm1275, %v2892, %v2893
      %v2895 = vrot.slane %v2789, 5
      %v2896 = vrot.slane %v2895, 4
      %v2897 = vrot.slane %v2074, 5
      %v2898 = vsel %vm1275, %v2896, %v2897
      %v2899 = vrot.slane %v2897, 4
      %v2900 = vrot.slane %v2075, 5
      %v2901 = vsel %vm1275, %v2899, %v2900
      %v2902 = vrot.slane %v2790, 5
      %v2903 = vrot.slane %v2902, 4
      %v2904 = vrot.slane %v2077, 5
      %v2905 = vsel %vm1275, %v2903, %v2904
      %v2906 = vrot.slane %v2904, 4
      %v2907 = vrot.slane %v2078, 5
      %v2908 = vsel %vm1275, %v2906, %v2907
      %v2909 = vrot.slane %v2791, 5
      %v2910 = vrot.slane %v2909, 4
      %v2911 = vrot.slane %v2080, 5
      %v2912 = vsel %vm1275, %v2910, %v2911
      %v2913 = vrot.slane %v2911, 4
      %v2914 = vrot.slane %v2081, 5
      %v2915 = vsel %vm1275, %v2913, %v2914
      %v2916 = vrot.slane %v2792, 5
      %v2917 = vrot.slane %v2916, 4
      %v2918 = vrot.slane %v2083, 5
      %v2919 = vsel %vm1275, %v2917, %v2918
      %v2920 = vrot.slane %v2918, 4
      %v2921 = vrot.slane %v2084, 5
      %v2922 = vsel %vm1275, %v2920, %v2921
      %v2923 = vrot.slane %v2793, 5
      %v2924 = vrot.slane %v2923, 4
      %v2925 = vrot.slane %v2086, 5
      %v2926 = vsel %vm1275, %v2924, %v2925
      %v2927 = vrot.slane %v2925, 4
      %v2928 = vrot.slane %v2087, 5
      %v2929 = vsel %vm1275, %v2927, %v2928
      %v2930 = vrot.slane %v2794, 5
      %v2931 = vrot.slane %v2930, 4
      %v2932 = vrot.slane %v2089, 5
      %v2933 = vsel %vm1275, %v2931, %v2932
      %v2934 = vrot.slane %v2932, 4
      %v2935 = vrot.slane %v2090, 5
      %v2936 = vsel %vm1275, %v2934, %v2935
      %v2937 = vrot.slane %v2795, 5
      %v2938 = vrot.slane %v2937, 4
      %v2939 = vrot.slane %v2092, 5
      %v2940 = vsel %vm1275, %v2938, %v2939
      %v2941 = vrot.slane %v2939, 4
      %v2942 = vrot.slane %v2093, 5
      %v2943 = vsel %vm1275, %v2941, %v2942
      %v2944 = vrot.slane %v2796, 5
      %v2945 = vrot.slane %v2944, 4
      %v2946 = vrot.slane %v2095, 5
      %v2947 = vsel %vm1275, %v2945, %v2946
      %v2948 = vrot.slane %v2946, 4
      %v2949 = vrot.slane %v2096, 5
      %v2950 = vsel %vm1275, %v2948, %v2949
      %v2951 = vrot.slane %v2797, 5
      %v2952 = vrot.slane %v2951, 4
      %v2953 = vrot.slane %v2098, 5
      %v2954 = vsel %vm1275, %v2952, %v2953
      %v2955 = vrot.slane %v2953, 4
      %v2956 = vrot.slane %v2099, 5
      %v2957 = vsel %vm1275, %v2955, %v2956
      %s2958 = scalar_lea.vmem %s1, 40
      %v2959 = vld [vmem:[%s2958] sm:$0xf]
      %v2960 = vld [vmem:[%s2958 + $0x4] sm:$0xf]
      %v2961 = vunpack.c.l.b16 %v2849
      %v2962 = vunpack.c.l.b16 %v2852
      %v2963 = vunpack.c.l.b16 %v2856
      %v2964 = vunpack.c.l.b16 %v2859
      %v2965 = vunpack.c.l.b16 %v2863
      %v2966 = vunpack.c.l.b16 %v2866
      %v2967 = vunpack.c.l.b16 %v2870
      %v2968 = vunpack.c.l.b16 %v2873
      %v2969 = vunpack.c.l.b16 %v2877
      %v2970 = vunpack.c.l.b16 %v2880
      %v2971 = vunpack.c.l.b16 %v2884
      %v2972 = vunpack.c.l.b16 %v2887
      %v2973 = vunpack.c.l.b16 %v2891
      %v2974 = vunpack.c.l.b16 %v2894
      %v2975 = vunpack.c.l.b16 %v2898
      %v2976 = vunpack.c.l.b16 %v2901
      %v2977 = vunpack.c.l.b16 %v2905
      %v2978 = vunpack.c.l.b16 %v2908
      %v2979 = vunpack.c.l.b16 %v2912
      %v2980 = vunpack.c.l.b16 %v2915
      %v2981 = vunpack.c.l.b16 %v2919
      %v2982 = vunpack.c.l.b16 %v2922
      %v2983 = vunpack.c.l.b16 %v2926
      %v2984 = vunpack.c.l.b16 %v2929
      %v2985 = vunpack.c.l.b16 %v2933
      %v2986 = vunpack.c.l.b16 %v2936
      %v2987 = vunpack.c.l.b16 %v2940
      %v2988 = vunpack.c.l.b16 %v2943
      %v2989 = vunpack.c.l.b16 %v2947
      %v2990 = vunpack.c.l.b16 %v2950
      %v2991 = vunpack.c.l.b16 %v2954
      %v2992 = vunpack.c.l.b16 %v2957
      %v2993 = vpack.c.b16 %v2962, %v2961
      %v2994 = vpack.c.b16 %v2964, %v2963
      %v2995 = vpack.c.b16 %v2966, %v2965
      %v2996 = vpack.c.b16 %v2968, %v2967
      %v2997 = vpack.c.b16 %v2970, %v2969
      %v2998 = vpack.c.b16 %v2972, %v2971
      %v2999 = vpack.c.b16 %v2974, %v2973
      %v3000 = vpack.c.b16 %v2976, %v2975
      %v3001 = vpack.c.b16 %v2978, %v2977
      %v3002 = vpack.c.b16 %v2980, %v2979
      %v3003 = vpack.c.b16 %v2982, %v2981
      %v3004 = vpack.c.b16 %v2984, %v2983
      %v3005 = vpack.c.b16 %v2986, %v2985
      %v3006 = vpack.c.b16 %v2988, %v2987
      %v3007 = vpack.c.b16 %v2990, %v2989
      %v3008 = vpack.c.b16 %v2992, %v2991
      %v3011 = vunpack.c.l.b16 %v2959
      %v3012 = vunpack.c.l.b16 %v2960
      %v3013 = vpack.c.b16 %v3012, %v3011
      %v3016 = vsel %vm720, %v2993, 0
      %v3019 = vsel %vm720, %v2994, 0
      %v3022 = vsel %vm720, %v2995, 0
      %v3025 = vsel %vm720, %v2996, 0
      %v3028 = vsel %vm720, %v2997, 0
      %v3031 = vsel %vm720, %v2998, 0
      %v3034 = vsel %vm720, %v2999, 0
      %v3037 = vsel %vm720, %v3000, 0
      %v3040 = vsel %vm720, %v3001, 0
      %v3043 = vsel %vm720, %v3002, 0
      %v3046 = vsel %vm720, %v3003, 0
      %v3049 = vsel %vm720, %v3004, 0
      %v3052 = vsel %vm720, %v3005, 0
      %v3055 = vsel %vm720, %v3006, 0
      %v3058 = vsel %vm720, %v3007, 0
      %v3061 = vsel %vm720, %v3008, 0
      %3063 = vmatprep.subr.bf16.mxu0 0
      %3064 = vmatpush1.bf16.msra.mxu0 %v3013
      %3065 = vmatprep.subr.bf16.mxu0 0
      %3066 = vmatpush1.bf16.msra.mxu0 0
      %3067 = vmatprep.subr.bf16.mxu0 0
      %3068 = vmatpush1.bf16.msra.mxu0 0
      %3069 = vmatprep.subr.bf16.mxu0 0
      %3070 = vmatpush1.bf16.msra.mxu0 0
      %3071 = vmatprep.subr.bf16.mxu0 0
      %3072 = vmatpush1.bf16.msra.mxu0 0
      %3073 = vmatprep.subr.bf16.mxu0 0
      %3074 = vmatpush1.bf16.msra.mxu0 0
      %3075 = vmatprep.subr.bf16.mxu0 0
      %3076 = vmatpush1.bf16.msra.mxu0 0
      %3077 = vmatprep.subr.bf16.mxu0 0
      %3078 = vmatpush1.bf16.msra.mxu0 0
      %3079 = vmatprep.subr.bf16.mxu0 0
      %3080 = vmatpush1.bf16.msra.mxu0 0
      %3081 = vmatprep.subr.bf16.mxu0 0
      %3082 = vmatpush1.bf16.msra.mxu0 0
      %3083 = vmatprep.subr.bf16.mxu0 0
      %3084 = vmatpush1.bf16.msra.mxu0 0
      %3085 = vmatprep.subr.bf16.mxu0 0
      %3086 = vmatpush1.bf16.msra.mxu0 0
      %3087 = vmatprep.subr.bf16.mxu0 0
      %3088 = vmatpush1.bf16.msra.mxu0 0
      %3089 = vmatprep.subr.bf16.mxu0 0
      %3090 = vmatpush1.bf16.msra.mxu0 0
      %3091 = vmatprep.subr.bf16.mxu0 0
      %3092 = vmatpush1.bf16.msra.mxu0 0
      %3093 = vmatprep.subr.bf16.mxu0 0
      %3094 = vmatpush1.bf16.msra.mxu0 0
      %3095 = vmatprep.mubr.bf16.mxu0 0
      %3096 = vmatmul.mubr.bf16.gmra.mrb[0].mxu0 %v3016
      %v3097 = vpop.f32.mrb[0].mxu0
      %v3098 = vadd.f32 0.0, %v3097
      %v3099 = vpop.f32.mrb[0].mxu0
      %v3100 = vpop.f32.mrb[0].mxu0
      %v3101 = vadd.f32 0.0, %v3100
      %v3102 = vpop.f32.mrb[0].mxu0
      %3103 = vmatprep.mubr.bf16.mxu0 0
      %3104 = vmatmul.mubr.bf16.gmra.mrb[0].mxu0 %v3019
      %v3105 = vpop.f32.mrb[0].mxu0
      %v3106 = vadd.f32 0.0, %v3105
      %v3107 = vpop.f32.mrb[0].mxu0
      %v3108 = vpop.f32.mrb[0].mxu0
      %v3109 = vadd.f32 0.0, %v3108
      %v3110 = vpop.f32.mrb[0].mxu0
      %3111 = vmatprep.mubr.bf16.mxu0 0
      %3112 = vmatmul.mubr.bf16.gmra.mrb[0].mxu0 %v3022
      %v3113 = vpop.f32.mrb[0].mxu0
      %v3114 = vadd.f32 0.0, %v3113
      %v3115 = vpop.f32.mrb[0].mxu0
      %v3116 = vpop.f32.mrb[0].mxu0
      %v3117 = vadd.f32 0.0, %v3116
      %v3118 = vpop.f32.mrb[0].mxu0
      %3119 = vmatprep.mubr.bf16.mxu0 0
      %3120 = vmatmul.mubr.bf16.gmra.mrb[0].mxu0 %v3025
      %v3121 = vpop.f32.mrb[0].mxu0
      %v3122 = vadd.f32 0.0, %v3121
      %v3123 = vpop.f32.mrb[0].mxu0
      %v3124 = vpop.f32.mrb[0].mxu0
      %v3125 = vadd.f32 0.0, %v3124
      %v3126 = vpop.f32.mrb[0].mxu0
      %3127 = vmatprep.mubr.bf16.mxu0 0
      %3128 = vmatmul.mubr.bf16.gmra.mrb[0].mxu0 %v3028
      %v3129 = vpop.f32.mrb[0].mxu0
      %v3130 = vadd.f32 0.0, %v3129
      %v3131 = vpop.f32.mrb[0].mxu0
      %v3132 = vpop.f32.mrb[0].mxu0
      %v3133 = vadd.f32 0.0, %v3132
      %v3134 = vpop.f32.mrb[0].mxu0
      %3135 = vmatprep.mubr.bf16.mxu0 0
      %3136 = vmatmul.mubr.bf16.gmra.mrb[0].mxu0 %v3031
      %v3137 = vpop.f32.mrb[0].mxu0
      %v3138 = vadd.f32 0.0, %v3137
      %v3139 = vpop.f32.mrb[0].mxu0
      %v3140 = vpop.f32.mrb[0].mxu0
      %v3141 = vadd.f32 0.0, %v3140
      %v3142 = vpop.f32.mrb[0].mxu0
      %3143 = vmatprep.mubr.bf16.mxu0 0
      %3144 = vmatmul.mubr.bf16.gmra.mrb[0].mxu0 %v3034
      %v3145 = vpop.f32.mrb[0].mxu0
      %v3146 = vadd.f32 0.0, %v3145
      %v3147 = vpop.f32.mrb[0].mxu0
      %v3148 = vpop.f32.mrb[0].mxu0
      %v3149 = vadd.f32 0.0, %v3148
      %v3150 = vpop.f32.mrb[0].mxu0
      %3151 = vmatprep.mubr.bf16.mxu0 0
      %3152 = vmatmul.mubr.bf16.gmra.mrb[0].mxu0 %v3037
      %v3153 = vpop.f32.mrb[0].mxu0
      %v3154 = vadd.f32 0.0, %v3153
      %v3155 = vpop.f32.mrb[0].mxu0
      %v3156 = vpop.f32.mrb[0].mxu0
      %v3157 = vadd.f32 0.0, %v3156
      %v3158 = vpop.f32.mrb[0].mxu0
      %3159 = vmatprep.mubr.bf16.mxu0 0
      %3160 = vmatmul.mubr.bf16.gmra.mrb[0].mxu0 %v3040
      %v3161 = vpop.f32.mrb[0].mxu0
      %v3162 = vadd.f32 0.0, %v3161
      %v3163 = vpop.f32.mrb[0].mxu0
      %v3164 = vpop.f32.mrb[0].mxu0
      %v3165 = vadd.f32 0.0, %v3164
      %v3166 = vpop.f32.mrb[0].mxu0
      %3167 = vmatprep.mubr.bf16.mxu0 0
      %3168 = vmatmul.mubr.bf16.gmra.mrb[0].mxu0 %v3043
      %v3169 = vpop.f32.mrb[0].mxu0
      %v3170 = vadd.f32 0.0, %v3169
      %v3171 = vpop.f32.mrb[0].mxu0
      %v3172 = vpop.f32.mrb[0].mxu0
      %v3173 = vadd.f32 0.0, %v3172
      %v3174 = vpop.f32.mrb[0].mxu0
      %3175 = vmatprep.mubr.bf16.mxu0 0
      %3176 = vmatmul.mubr.bf16.gmra.mrb[0].mxu0 %v3046
      %v3177 = vpop.f32.mrb[0].mxu0
      %v3178 = vadd.f32 0.0, %v3177
      %v3179 = vpop.f32.mrb[0].mxu0
      %v3180 = vpop.f32.mrb[0].mxu0
      %v3181 = vadd.f32 0.0, %v3180
      %v3182 = vpop.f32.mrb[0].mxu0
      %3183 = vmatprep.mubr.bf16.mxu0 0
      %3184 = vmatmul.mubr.bf16.gmra.mrb[0].mxu0 %v3049
      %v3185 = vpop.f32.mrb[0].mxu0
      %v3186 = vadd.f32 0.0, %v3185
      %v3187 = vpop.f32.mrb[0].mxu0
      %v3188 = vpop.f32.mrb[0].mxu0
      %v3189 = vadd.f32 0.0, %v3188
      %v3190 = vpop.f32.mrb[0].mxu0
      %3191 = vmatprep.mubr.bf16.mxu0 0
      %3192 = vmatmul.mubr.bf16.gmra.mrb[0].mxu0 %v3052
      %v3193 = vpop.f32.mrb[0].mxu0
      %v3194 = vadd.f32 0.0, %v3193
      %v3195 = vpop.f32.mrb[0].mxu0
      %v3196 = vpop.f32.mrb[0].mxu0
      %v3197 = vadd.f32 0.0, %v3196
      %v3198 = vpop.f32.mrb[0].mxu0
      %3199 = vmatprep.mubr.bf16.mxu0 0
      %3200 = vmatmul.mubr.bf16.gmra.mrb[0].mxu0 %v3055
      %v3201 = vpop.f32.mrb[0].mxu0
      %v3202 = vadd.f32 0.0, %v3201
      %v3203 = vpop.f32.mrb[0].mxu0
      %v3204 = vpop.f32.mrb[0].mxu0
      %v3205 = vadd.f32 0.0, %v3204
      %v3206 = vpop.f32.mrb[0].mxu0
      %3207 = vmatprep.mubr.bf16.mxu0 0
      %3208 = vmatmul.mubr.bf16.gmra.mrb[0].mxu0 %v3058
      %v3209 = vpop.f32.mrb[0].mxu0
      %v3210 = vadd.f32 0.0, %v3209
      %v3211 = vpop.f32.mrb[0].mxu0
      %v3212 = vpop.f32.mrb[0].mxu0
      %v3213 = vadd.f32 0.0, %v3212
      %v3214 = vpop.f32.mrb[0].mxu0
      %3215 = vmatprep.mubr.bf16.mxu0 0
      %3216 = vmatmul.mubr.bf16.gmra.mrb[0].mxu0 %v3061
      %v3217 = vpop.f32.mrb[0].mxu0
      %v3218 = vadd.f32 0.0, %v3217
      %v3219 = vpop.f32.mrb[0].mxu0
      %v3220 = vpop.f32.mrb[0].mxu0
      %v3221 = vadd.f32 0.0, %v3220
      %v3222 = vpop.f32.mrb[0].mxu0
      %3223 = vdwg.mxu0
      %v3224 = vadd.f32 %v2750, %v3098
      %v3225 = vadd.f32 %v2751, %v3101
      %v3226 = vadd.f32 %v2752, %v3106
      %v3227 = vadd.f32 %v2753, %v3109
      %v3228 = vadd.f32 %v2754, %v3114
      %v3229 = vadd.f32 %v2755, %v3117
      %v3230 = vadd.f32 %v2756, %v3122
      %v3231 = vadd.f32 %v2757, %v3125
      %v3232 = vadd.f32 %v2758, %v3130
      %v3233 = vadd.f32 %v2759, %v3133
      %v3234 = vadd.f32 %v2760, %v3138
      %v3235 = vadd.f32 %v2761, %v3141
      %v3236 = vadd.f32 %v2762, %v3146
      %v3237 = vadd.f32 %v2763, %v3149
      %v3238 = vadd.f32 %v2764, %v3154
      %v3239 = vadd.f32 %v2765, %v3157
      %v3240 = vadd.f32 %v2766, %v3162
      %v3241 = vadd.f32 %v2767, %v3165
      %v3242 = vadd.f32 %v2768, %v3170
      %v3243 = vadd.f32 %v2769, %v3173
      %v3244 = vadd.f32 %v2770, %v3178
      %v3245 = vadd.f32 %v2771, %v3181
      %v3246 = vadd.f32 %v2772, %v3186
      %v3247 = vadd.f32 %v2773, %v3189
      %v3248 = vadd.f32 %v2774, %v3194
      %v3249 = vadd.f32 %v2775, %v3197
      %v3250 = vadd.f32 %v2776, %v3202
      %v3251 = vadd.f32 %v2777, %v3205
      %v3252 = vadd.f32 %v2778, %v3210
      %v3253 = vadd.f32 %v2779, %v3213
      %v3254 = vadd.f32 %v2780, %v3218
      %v3255 = vadd.f32 %v2781, %v3221
      %s3256 = sadd.s32 %s222, 2
      %s3257 = smul.u32 %s3256, 3
      %s3258 = smul.addr %s3257, 4
      %s3259 = scalar_lea.vmem %s210, %s3258
      %v3260 = vld [vmem:[%s3259] sm:$0xf]
      %v3261 = vld [vmem:[%s3259 + $0x4] sm:$0xf]
      %v3262 = vld [vmem:[%s3259 + $0xc] sm:$0xf]
      %v3263 = vld [vmem:[%s3259 + $0x10] sm:$0xf]
      %v3264 = vld [vmem:[%s3259 + $0x18] sm:$0xf]
      %v3265 = vld [vmem:[%s3259 + $0x1c] sm:$0xf]
      %v3266 = vld [vmem:[%s3259 + $0x24] sm:$0xf]
      %v3267 = vld [vmem:[%s3259 + $0x28] sm:$0xf]
      %v3268 = vld [vmem:[%s3259 + $0x30] sm:$0xf]
      %v3269 = vld [vmem:[%s3259 + $0x34] sm:$0xf]
      %v3270 = vld [vmem:[%s3259 + $0x3c] sm:$0xf]
      %v3271 = vld [vmem:[%s3259 + $0x40] sm:$0xf]
      %v3272 = vld [vmem:[%s3259 + $0x48] sm:$0xf]
      %v3273 = vld [vmem:[%s3259 + $0x4c] sm:$0xf]
      %v3274 = vld [vmem:[%s3259 + $0x54] sm:$0xf]
      %v3275 = vld [vmem:[%s3259 + $0x58] sm:$0xf]
      %v3276 = vld [vmem:[%s3259 + $0x60] sm:$0xf]
      %v3277 = vld [vmem:[%s3259 + $0x64] sm:$0xf]
      %v3278 = vld [vmem:[%s3259 + $0x6c] sm:$0xf]
      %v3279 = vld [vmem:[%s3259 + $0x70] sm:$0xf]
      %v3280 = vld [vmem:[%s3259 + $0x78] sm:$0xf]
      %v3281 = vld [vmem:[%s3259 + $0x7c] sm:$0xf]
      %v3282 = vld [vmem:[%s3259 + $0x84] sm:$0xf]
      %v3283 = vld [vmem:[%s3259 + $0x88] sm:$0xf]
      %v3284 = vld [vmem:[%s3259 + $0x90] sm:$0xf]
      %v3285 = vld [vmem:[%s3259 + $0x94] sm:$0xf]
      %v3286 = vld [vmem:[%s3259 + $0x9c] sm:$0xf]
      %v3287 = vld [vmem:[%s3259 + $0xa0] sm:$0xf]
      %v3288 = vld [vmem:[%s3259 + $0xa8] sm:$0xf]
      %v3289 = vld [vmem:[%s3259 + $0xac] sm:$0xf]
      %v3290 = vld [vmem:[%s3259 + $0xb4] sm:$0xf]
      %v3291 = vld [vmem:[%s3259 + $0xb8] sm:$0xf]
      %s3292 = scalar_lea.vmem %s1, 48
      %v3293 = vld [vmem:[%s3292] sm:$0xf]
      %v3294 = vld [vmem:[%s3292 + $0x4] sm:$0xf]
      %v3327 = vunpack.c.l.b16 %v3260
      %v3328 = vunpack.c.l.b16 %v3261
      %v3329 = vunpack.c.l.b16 %v3262
      %v3330 = vunpack.c.l.b16 %v3263
      %v3331 = vunpack.c.l.b16 %v3264
      %v3332 = vunpack.c.l.b16 %v3265
      %v3333 = vunpack.c.l.b16 %v3266
      %v3334 = vunpack.c.l.b16 %v3267
      %v3335 = vunpack.c.l.b16 %v3268
      %v3336 = vunpack.c.l.b16 %v3269
      %v3337 = vunpack.c.l.b16 %v3270
      %v3338 = vunpack.c.l.b16 %v3271
      %v3339 = vunpack.c.l.b16 %v3272
      %v3340 = vunpack.c.l.b16 %v3273
      %v3341 = vunpack.c.l.b16 %v3274
      %v3342 = vunpack.c.l.b16 %v3275
      %v3343 = vunpack.c.l.b16 %v3276
      %v3344 = vunpack.c.l.b16 %v3277
      %v3345 = vunpack.c.l.b16 %v3278
      %v3346 = vunpack.c.l.b16 %v3279
      %v3347 = vunpack.c.l.b16 %v3280
      %v3348 = vunpack.c.l.b16 %v3281
      %v3349 = vunpack.c.l.b16 %v3282
      %v3350 = vunpack.c.l.b16 %v3283
      %v3351 = vunpack.c.l.b16 %v3284
      %v3352 = vunpack.c.l.b16 %v3285
      %v3353 = vunpack.c.l.b16 %v3286
      %v3354 = vunpack.c.l.b16 %v3287
      %v3355 = vunpack.c.l.b16 %v3288
      %v3356 = vunpack.c.l.b16 %v3289
      %v3357 = vunpack.c.l.b16 %v3290
      %v3358 = vunpack.c.l.b16 %v3291
      %v3359 = vpack.c.b16 %v3328, %v3327
      %v3360 = vpack.c.b16 %v3330, %v3329
      %v3361 = vpack.c.b16 %v3332, %v3331
      %v3362 = vpack.c.b16 %v3334, %v3333
      %v3363 = vpack.c.b16 %v3336, %v3335
      %v3364 = vpack.c.b16 %v3338, %v3337
      %v3365 = vpack.c.b16 %v3340, %v3339
      %v3366 = vpack.c.b16 %v3342, %v3341
      %v3367 = vpack.c.b16 %v3344, %v3343
      %v3368 = vpack.c.b16 %v3346, %v3345
      %v3369 = vpack.c.b16 %v3348, %v3347
      %v3370 = vpack.c.b16 %v3350, %v3349
      %v3371 = vpack.c.b16 %v3352, %v3351
      %v3372 = vpack.c.b16 %v3354, %v3353
      %v3373 = vpack.c.b16 %v3356, %v3355
      %v3374 = vpack.c.b16 %v3358, %v3357
      %v3377 = vunpack.c.l.b16 %v3293
      %v3378 = vunpack.c.l.b16 %v3294
      %v3379 = vpack.c.b16 %v3378, %v3377
      %v3382 = vsel %vm720, %v3359, 0
      %v3385 = vsel %vm720, %v3360, 0
      %v3388 = vsel %vm720, %v3361, 0
      %v3391 = vsel %vm720, %v3362, 0
      %v3394 = vsel %vm720, %v3363, 0
      %v3397 = vsel %vm720, %v3364, 0
      %v3400 = vsel %vm720, %v3365, 0
      %v3403 = vsel %vm720, %v3366, 0
      %v3406 = vsel %vm720, %v3367, 0
      %v3409 = vsel %vm720, %v3368, 0
      %v3412 = vsel %vm720, %v3369, 0
      %v3415 = vsel %vm720, %v3370, 0
      %v3418 = vsel %vm720, %v3371, 0
      %v3421 = vsel %vm720, %v3372, 0
      %v3424 = vsel %vm720, %v3373, 0
      %v3427 = vsel %vm720, %v3374, 0
      %3429 = vmatprep.subr.bf16.mxu0 0
      %3430 = vmatpush1.bf16.msra.mxu0 %v3379
      %3431 = vmatprep.subr.bf16.mxu0 0
      %3432 = vmatpush1.bf16.msra.mxu0 0
      %3433 = vmatprep.subr.bf16.mxu0 0
      %3434 = vmatpush1.bf16.msra.mxu0 0
      %3435 = vmatprep.subr.bf16.mxu0 0
      %3436 = vmatpush1.bf16.msra.mxu0 0
      %3437 = vmatprep.subr.bf16.mxu0 0
      %3438 = vmatpush1.bf16.msra.mxu0 0
      %3439 = vmatprep.subr.bf16.mxu0 0
      %3440 = vmatpush1.bf16.msra.mxu0 0
      %3441 = vmatprep.subr.bf16.mxu0 0
      %3442 = vmatpush1.bf16.msra.mxu0 0
      %3443 = vmatprep.subr.bf16.mxu0 0
      %3444 = vmatpush1.bf16.msra.mxu0 0
      %3445 = vmatprep.subr.bf16.mxu0 0
      %3446 = vmatpush1.bf16.msra.mxu0 0
      %3447 = vmatprep.subr.bf16.mxu0 0
      %3448 = vmatpush1.bf16.msra.mxu0 0
      %3449 = vmatprep.subr.bf16.mxu0 0
      %3450 = vmatpush1.bf16.msra.mxu0 0
      %3451 = vmatprep.subr.bf16.mxu0 0
      %3452 = vmatpush1.bf16.msra.mxu0 0
      %3453 = vmatprep.subr.bf16.mxu0 0
      %3454 = vmatpush1.bf16.msra.mxu0 0
      %3455 = vmatprep.subr.bf16.mxu0 0
      %3456 = vmatpush1.bf16.msra.mxu0 0
      %3457 = vmatprep.subr.bf16.mxu0 0
      %3458 = vmatpush1.bf16.msra.mxu0 0
      %3459 = vmatprep.subr.bf16.mxu0 0
      %3460 = vmatpush1.bf16.msra.mxu0 0
      %3461 = vmatprep.mubr.bf16.mxu0 0
      %3462 = vmatmul.mubr.bf16.gmra.mrb[0].mxu0 %v3382
      %v3463 = vpop.f32.mrb[0].mxu0
      %v3464 = vadd.f32 0.0, %v3463
      %v3465 = vpop.f32.mrb[0].mxu0
      %v3466 = vpop.f32.mrb[0].mxu0
      %v3467 = vadd.f32 0.0, %v3466
      %v3468 = vpop.f32.mrb[0].mxu0
      %3469 = vmatprep.mubr.bf16.mxu0 0
      %3470 = vmatmul.mubr.bf16.gmra.mrb[0].mxu0 %v3385
      %v3471 = vpop.f32.mrb[0].mxu0
      %v3472 = vadd.f32 0.0, %v3471
      %v3473 = vpop.f32.mrb[0].mxu0
      %v3474 = vpop.f32.mrb[0].mxu0
      %v3475 = vadd.f32 0.0, %v3474
      %v3476 = vpop.f32.mrb[0].mxu0
      %3477 = vmatprep.mubr.bf16.mxu0 0
      %3478 = vmatmul.mubr.bf16.gmra.mrb[0].mxu0 %v3388
      %v3479 = vpop.f32.mrb[0].mxu0
      %v3480 = vadd.f32 0.0, %v3479
      %v3481 = vpop.f32.mrb[0].mxu0
      %v3482 = vpop.f32.mrb[0].mxu0
      %v3483 = vadd.f32 0.0, %v3482
      %v3484 = vpop.f32.mrb[0].mxu0
      %3485 = vmatprep.mubr.bf16.mxu0 0
      %3486 = vmatmul.mubr.bf16.gmra.mrb[0].mxu0 %v3391
      %v3487 = vpop.f32.mrb[0].mxu0
      %v3488 = vadd.f32 0.0, %v3487
      %v3489 = vpop.f32.mrb[0].mxu0
      %v3490 = vpop.f32.mrb[0].mxu0
      %v3491 = vadd.f32 0.0, %v3490
      %v3492 = vpop.f32.mrb[0].mxu0
      %3493 = vmatprep.mubr.bf16.mxu0 0
      %3494 = vmatmul.mubr.bf16.gmra.mrb[0].mxu0 %v3394
      %v3495 = vpop.f32.mrb[0].mxu0
      %v3496 = vadd.f32 0.0, %v3495
      %v3497 = vpop.f32.mrb[0].mxu0
      %v3498 = vpop.f32.mrb[0].mxu0
      %v3499 = vadd.f32 0.0, %v3498
      %v3500 = vpop.f32.mrb[0].mxu0
      %3501 = vmatprep.mubr.bf16.mxu0 0
      %3502 = vmatmul.mubr.bf16.gmra.mrb[0].mxu0 %v3397
      %v3503 = vpop.f32.mrb[0].mxu0
      %v3504 = vadd.f32 0.0, %v3503
      %v3505 = vpop.f32.mrb[0].mxu0
      %v3506 = vpop.f32.mrb[0].mxu0
      %v3507 = vadd.f32 0.0, %v3506
      %v3508 = vpop.f32.mrb[0].mxu0
      %3509 = vmatprep.mubr.bf16.mxu0 0
      %3510 = vmatmul.mubr.bf16.gmra.mrb[0].mxu0 %v3400
      %v3511 = vpop.f32.mrb[0].mxu0
      %v3512 = vadd.f32 0.0, %v3511
      %v3513 = vpop.f32.mrb[0].mxu0
      %v3514 = vpop.f32.mrb[0].mxu0
      %v3515 = vadd.f32 0.0, %v3514
      %v3516 = vpop.f32.mrb[0].mxu0
      %3517 = vmatprep.mubr.bf16.mxu0 0
      %3518 = vmatmul.mubr.bf16.gmra.mrb[0].mxu0 %v3403
      %v3519 = vpop.f32.mrb[0].mxu0
      %v3520 = vadd.f32 0.0, %v3519
      %v3521 = vpop.f32.mrb[0].mxu0
      %v3522 = vpop.f32.mrb[0].mxu0
      %v3523 = vadd.f32 0.0, %v3522
      %v3524 = vpop.f32.mrb[0].mxu0
      %3525 = vmatprep.mubr.bf16.mxu0 0
      %3526 = vmatmul.mubr.bf16.gmra.mrb[0].mxu0 %v3406
      %v3527 = vpop.f32.mrb[0].mxu0
      %v3528 = vadd.f32 0.0, %v3527
      %v3529 = vpop.f32.mrb[0].mxu0
      %v3530 = vpop.f32.mrb[0].mxu0
      %v3531 = vadd.f32 0.0, %v3530
      %v3532 = vpop.f32.mrb[0].mxu0
      %3533 = vmatprep.mubr.bf16.mxu0 0
      %3534 = vmatmul.mubr.bf16.gmra.mrb[0].mxu0 %v3409
      %v3535 = vpop.f32.mrb[0].mxu0
      %v3536 = vadd.f32 0.0, %v3535
      %v3537 = vpop.f32.mrb[0].mxu0
      %v3538 = vpop.f32.mrb[0].mxu0
      %v3539 = vadd.f32 0.0, %v3538
      %v3540 = vpop.f32.mrb[0].mxu0
      %3541 = vmatprep.mubr.bf16.mxu0 0
      %3542 = vmatmul.mubr.bf16.gmra.mrb[0].mxu0 %v3412
      %v3543 = vpop.f32.mrb[0].mxu0
      %v3544 = vadd.f32 0.0, %v3543
      %v3545 = vpop.f32.mrb[0].mxu0
      %v3546 = vpop.f32.mrb[0].mxu0
      %v3547 = vadd.f32 0.0, %v3546
      %v3548 = vpop.f32.mrb[0].mxu0
      %3549 = vmatprep.mubr.bf16.mxu0 0
      %3550 = vmatmul.mubr.bf16.gmra.mrb[0].mxu0 %v3415
      %v3551 = vpop.f32.mrb[0].mxu0
      %v3552 = vadd.f32 0.0, %v3551
      %v3553 = vpop.f32.mrb[0].mxu0
      %v3554 = vpop.f32.mrb[0].mxu0
      %v3555 = vadd.f32 0.0, %v3554
      %v3556 = vpop.f32.mrb[0].mxu0
      %3557 = vmatprep.mubr.bf16.mxu0 0
      %3558 = vmatmul.mubr.bf16.gmra.mrb[0].mxu0 %v3418
      %v3559 = vpop.f32.mrb[0].mxu0
      %v3560 = vadd.f32 0.0, %v3559
      %v3561 = vpop.f32.mrb[0].mxu0
      %v3562 = vpop.f32.mrb[0].mxu0
      %v3563 = vadd.f32 0.0, %v3562
      %v3564 = vpop.f32.mrb[0].mxu0
      %3565 = vmatprep.mubr.bf16.mxu0 0
      %3566 = vmatmul.mubr.bf16.gmra.mrb[0].mxu0 %v3421
      %v3567 = vpop.f32.mrb[0].mxu0
      %v3568 = vadd.f32 0.0, %v3567
      %v3569 = vpop.f32.mrb[0].mxu0
      %v3570 = vpop.f32.mrb[0].mxu0
      %v3571 = vadd.f32 0.0, %v3570
      %v3572 = vpop.f32.mrb[0].mxu0
      %3573 = vmatprep.mubr.bf16.mxu0 0
      %3574 = vmatmul.mubr.bf16.gmra.mrb[0].mxu0 %v3424
      %v3575 = vpop.f32.mrb[0].mxu0
      %v3576 = vadd.f32 0.0, %v3575
      %v3577 = vpop.f32.mrb[0].mxu0
      %v3578 = vpop.f32.mrb[0].mxu0
      %v3579 = vadd.f32 0.0, %v3578
      %v3580 = vpop.f32.mrb[0].mxu0
      %3581 = vmatprep.mubr.bf16.mxu0 0
      %3582 = vmatmul.mubr.bf16.gmra.mrb[0].mxu0 %v3427
      %v3583 = vpop.f32.mrb[0].mxu0
      %v3584 = vadd.f32 0.0, %v3583
      %v3585 = vpop.f32.mrb[0].mxu0
      %v3586 = vpop.f32.mrb[0].mxu0
      %v3587 = vadd.f32 0.0, %v3586
      %v3588 = vpop.f32.mrb[0].mxu0
      %3589 = vdwg.mxu0
      %v3590 = vadd.f32 %v3224, %v3464
      %v3591 = vadd.f32 %v3225, %v3467
      %v3592 = vadd.f32 %v3226, %v3472
      %v3593 = vadd.f32 %v3227, %v3475
      %v3594 = vadd.f32 %v3228, %v3480
      %v3595 = vadd.f32 %v3229, %v3483
      %v3596 = vadd.f32 %v3230, %v3488
      %v3597 = vadd.f32 %v3231, %v3491
      %v3598 = vadd.f32 %v3232, %v3496
      %v3599 = vadd.f32 %v3233, %v3499
      %v3600 = vadd.f32 %v3234, %v3504
      %v3601 = vadd.f32 %v3235, %v3507
      %v3602 = vadd.f32 %v3236, %v3512
      %v3603 = vadd.f32 %v3237, %v3515
      %v3604 = vadd.f32 %v3238, %v3520
      %v3605 = vadd.f32 %v3239, %v3523
      %v3606 = vadd.f32 %v3240, %v3528
      %v3607 = vadd.f32 %v3241, %v3531
      %v3608 = vadd.f32 %v3242, %v3536
      %v3609 = vadd.f32 %v3243, %v3539
      %v3610 = vadd.f32 %v3244, %v3544
      %v3611 = vadd.f32 %v3245, %v3547
      %v3612 = vadd.f32 %v3246, %v3552
      %v3613 = vadd.f32 %v3247, %v3555
      %v3614 = vadd.f32 %v3248, %v3560
      %v3615 = vadd.f32 %v3249, %v3563
      %v3616 = vadd.f32 %v3250, %v3568
      %v3617 = vadd.f32 %v3251, %v3571
      %v3618 = vadd.f32 %v3252, %v3576
      %v3619 = vadd.f32 %v3253, %v3579
      %v3620 = vadd.f32 %v3254, %v3584
      %v3621 = vadd.f32 %v3255, %v3587
      %v3622 = vld [vmem:[%s3259] sm:$0xf]
      %v3623 = vld [vmem:[%s3259 + $0x4] sm:$0xf]
      %v3624 = vld [vmem:[%s3259 + $0x8] sm:$0x1]
      %v3625 = vld [vmem:[%s3259 + $0xc] sm:$0xf]
      %v3626 = vld [vmem:[%s3259 + $0x10] sm:$0xf]
      %v3627 = vld [vmem:[%s3259 + $0x14] sm:$0x1]
      %v3628 = vld [vmem:[%s3259 + $0x18] sm:$0xf]
      %v3629 = vld [vmem:[%s3259 + $0x1c] sm:$0xf]
      %v3630 = vld [vmem:[%s3259 + $0x20] sm:$0x1]
      %v3631 = vld [vmem:[%s3259 + $0x24] sm:$0xf]
      %v3632 = vld [vmem:[%s3259 + $0x28] sm:$0xf]
      %v3633 = vld [vmem:[%s3259 + $0x2c] sm:$0x1]
      %v3634 = vld [vmem:[%s3259 + $0x30] sm:$0xf]
      %v3635 = vld [vmem:[%s3259 + $0x34] sm:$0xf]
      %v3636 = vld [vmem:[%s3259 + $0x38] sm:$0x1]
      %v3637 = vld [vmem:[%s3259 + $0x3c] sm:$0xf]
      %v3638 = vld [vmem:[%s3259 + $0x40] sm:$0xf]
      %v3639 = vld [vmem:[%s3259 + $0x44] sm:$0x1]
      %v3640 = vld [vmem:[%s3259 + $0x48] sm:$0xf]
      %v3641 = vld [vmem:[%s3259 + $0x4c] sm:$0xf]
      %v3642 = vld [vmem:[%s3259 + $0x50] sm:$0x1]
      %v3643 = vld [vmem:[%s3259 + $0x54] sm:$0xf]
      %v3644 = vld [vmem:[%s3259 + $0x58] sm:$0xf]
      %v3645 = vld [vmem:[%s3259 + $0x5c] sm:$0x1]
      %v3646 = vld [vmem:[%s3259 + $0x60] sm:$0xf]
      %v3647 = vld [vmem:[%s3259 + $0x64] sm:$0xf]
      %v3648 = vld [vmem:[%s3259 + $0x68] sm:$0x1]
      %v3649 = vld [vmem:[%s3259 + $0x6c] sm:$0xf]
      %v3650 = vld [vmem:[%s3259 + $0x70] sm:$0xf]
      %v3651 = vld [vmem:[%s3259 + $0x74] sm:$0x1]
      %v3652 = vld [vmem:[%s3259 + $0x78] sm:$0xf]
      %v3653 = vld [vmem:[%s3259 + $0x7c] sm:$0xf]
      %v3654 = vld [vmem:[%s3259 + $0x80] sm:$0x1]
      %v3655 = vld [vmem:[%s3259 + $0x84] sm:$0xf]
      %v3656 = vld [vmem:[%s3259 + $0x88] sm:$0xf]
      %v3657 = vld [vmem:[%s3259 + $0x8c] sm:$0x1]
      %v3658 = vld [vmem:[%s3259 + $0x90] sm:$0xf]
      %v3659 = vld [vmem:[%s3259 + $0x94] sm:$0xf]
      %v3660 = vld [vmem:[%s3259 + $0x98] sm:$0x1]
      %v3661 = vld [vmem:[%s3259 + $0x9c] sm:$0xf]
      %v3662 = vld [vmem:[%s3259 + $0xa0] sm:$0xf]
      %v3663 = vld [vmem:[%s3259 + $0xa4] sm:$0x1]
      %v3664 = vld [vmem:[%s3259 + $0xa8] sm:$0xf]
      %v3665 = vld [vmem:[%s3259 + $0xac] sm:$0xf]
      %v3666 = vld [vmem:[%s3259 + $0xb0] sm:$0x1]
      %v3667 = vld [vmem:[%s3259 + $0xb4] sm:$0xf]
      %v3668 = vld [vmem:[%s3259 + $0xb8] sm:$0xf]
      %v3669 = vld [vmem:[%s3259 + $0xbc] sm:$0x1]
      %v3671 = vshrl.u32 %v3622, 16
      %v3673 = vrot.slane %v3671, 4
      %v3674 = vshll.u32 %v3622, 16
      %v3676 = vrot.slane %v3674, 5
      %v3677 = vor.u32 %v3673, %v3676
      %v3678 = vrot.slane %v3677, 4
      %v3680 = vshll.u32 %v3623, 16
      %v3682 = vrot.slane %v3680, 5
      %v3683 = vsel %vm278, %v3678, %v3682
      %v3684 = vshrl.u32 %v3623, 16
      %v3686 = vrot.slane %v3684, 4
      %v3687 = vor.u32 %v3686, %v3682
      %v3688 = vrot.slane %v3687, 4
      %v3690 = vshll.u32 %v3624, 16
      %v3692 = vrot.slane %v3690, 5
      %v3693 = vsel %vm278, %v3688, %v3692
      %v3695 = vshrl.u32 %v3625, 16
      %v3697 = vrot.slane %v3695, 4
      %v3698 = vshll.u32 %v3625, 16
      %v3700 = vrot.slane %v3698, 5
      %v3701 = vor.u32 %v3697, %v3700
      %v3702 = vrot.slane %v3701, 4
      %v3704 = vshll.u32 %v3626, 16
      %v3706 = vrot.slane %v3704, 5
      %v3707 = vsel %vm278, %v3702, %v3706
      %v3708 = vshrl.u32 %v3626, 16
      %v3710 = vrot.slane %v3708, 4
      %v3711 = vor.u32 %v3710, %v3706
      %v3712 = vrot.slane %v3711, 4
      %v3714 = vshll.u32 %v3627, 16
      %v3716 = vrot.slane %v3714, 5
      %v3717 = vsel %vm278, %v3712, %v3716
      %v3719 = vshrl.u32 %v3628, 16
      %v3721 = vrot.slane %v3719, 4
      %v3722 = vshll.u32 %v3628, 16
      %v3724 = vrot.slane %v3722, 5
      %v3725 = vor.u32 %v3721, %v3724
      %v3726 = vrot.slane %v3725, 4
      %v3728 = vshll.u32 %v3629, 16
      %v3730 = vrot.slane %v3728, 5
      %v3731 = vsel %vm278, %v3726, %v3730
      %v3732 = vshrl.u32 %v3629, 16
      %v3734 = vrot.slane %v3732, 4
      %v3735 = vor.u32 %v3734, %v3730
      %v3736 = vrot.slane %v3735, 4
      %v3738 = vshll.u32 %v3630, 16
      %v3740 = vrot.slane %v3738, 5
      %v3741 = vsel %vm278, %v3736, %v3740
      %v3743 = vshrl.u32 %v3631, 16
      %v3745 = vrot.slane %v3743, 4
      %v3746 = vshll.u32 %v3631, 16
      %v3748 = vrot.slane %v3746, 5
      %v3749 = vor.u32 %v3745, %v3748
      %v3750 = vrot.slane %v3749, 4
      %v3752 = vshll.u32 %v3632, 16
      %v3754 = vrot.slane %v3752, 5
      %v3755 = vsel %vm278, %v3750, %v3754
      %v3756 = vshrl.u32 %v3632, 16
      %v3758 = vrot.slane %v3756, 4
      %v3759 = vor.u32 %v3758, %v3754
      %v3760 = vrot.slane %v3759, 4
      %v3762 = vshll.u32 %v3633, 16
      %v3764 = vrot.slane %v3762, 5
      %v3765 = vsel %vm278, %v3760, %v3764
      %v3767 = vshrl.u32 %v3634, 16
      %v3769 = vrot.slane %v3767, 4
      %v3770 = vshll.u32 %v3634, 16
      %v3772 = vrot.slane %v3770, 5
      %v3773 = vor.u32 %v3769, %v3772
      %v3774 = vrot.slane %v3773, 4
      %v3776 = vshll.u32 %v3635, 16
      %v3778 = vrot.slane %v3776, 5
      %v3779 = vsel %vm278, %v3774, %v3778
      %v3780 = vshrl.u32 %v3635, 16
      %v3782 = vrot.slane %v3780, 4
      %v3783 = vor.u32 %v3782, %v3778
      %v3784 = vrot.slane %v3783, 4
      %v3786 = vshll.u32 %v3636, 16
      %v3788 = vrot.slane %v3786, 5
      %v3789 = vsel %vm278, %v3784, %v3788
      %v3791 = vshrl.u32 %v3637, 16
      %v3793 = vrot.slane %v3791, 4
      %v3794 = vshll.u32 %v3637, 16
      %v3796 = vrot.slane %v3794, 5
      %v3797 = vor.u32 %v3793, %v3796
      %v3798 = vrot.slane %v3797, 4
      %v3800 = vshll.u32 %v3638, 16
      %v3802 = vrot.slane %v3800, 5
      %v3803 = vsel %vm278, %v3798, %v3802
      %v3804 = vshrl.u32 %v3638, 16
      %v3806 = vrot.slane %v3804, 4
      %v3807 = vor.u32 %v3806, %v3802
      %v3808 = vrot.slane %v3807, 4
      %v3810 = vshll.u32 %v3639, 16
      %v3812 = vrot.slane %v3810, 5
      %v3813 = vsel %vm278, %v3808, %v3812
      %v3815 = vshrl.u32 %v3640, 16
      %v3817 = vrot.slane %v3815, 4
      %v3818 = vshll.u32 %v3640, 16
      %v3820 = vrot.slane %v3818, 5
      %v3821 = vor.u32 %v3817, %v3820
      %v3822 = vrot.slane %v3821, 4
      %v3824 = vshll.u32 %v3641, 16
      %v3826 = vrot.slane %v3824, 5
      %v3827 = vsel %vm278, %v3822, %v3826
      %v3828 = vshrl.u32 %v3641, 16
      %v3830 = vrot.slane %v3828, 4
      %v3831 = vor.u32 %v3830, %v3826
      %v3832 = vrot.slane %v3831, 4
      %v3834 = vshll.u32 %v3642, 16
      %v3836 = vrot.slane %v3834, 5
      %v3837 = vsel %vm278, %v3832, %v3836
      %v3839 = vshrl.u32 %v3643, 16
      %v3841 = vrot.slane %v3839, 4
      %v3842 = vshll.u32 %v3643, 16
      %v3844 = vrot.slane %v3842, 5
      %v3845 = vor.u32 %v3841, %v3844
      %v3846 = vrot.slane %v3845, 4
      %v3848 = vshll.u32 %v3644, 16
      %v3850 = vrot.slane %v3848, 5
      %v3851 = vsel %vm278, %v3846, %v3850
      %v3852 = vshrl.u32 %v3644, 16
      %v3854 = vrot.slane %v3852, 4
      %v3855 = vor.u32 %v3854, %v3850
      %v3856 = vrot.slane %v3855, 4
      %v3858 = vshll.u32 %v3645, 16
      %v3860 = vrot.slane %v3858, 5
      %v3861 = vsel %vm278, %v3856, %v3860
      %v3863 = vshrl.u32 %v3646, 16
      %v3865 = vrot.slane %v3863, 4
      %v3866 = vshll.u32 %v3646, 16
      %v3868 = vrot.slane %v3866, 5
      %v3869 = vor.u32 %v3865, %v3868
      %v3870 = vrot.slane %v3869, 4
      %v3872 = vshll.u32 %v3647, 16
      %v3874 = vrot.slane %v3872, 5
      %v3875 = vsel %vm278, %v3870, %v3874
      %v3876 = vshrl.u32 %v3647, 16
      %v3878 = vrot.slane %v3876, 4
      %v3879 = vor.u32 %v3878, %v3874
      %v3880 = vrot.slane %v3879, 4
      %v3882 = vshll.u32 %v3648, 16
      %v3884 = vrot.slane %v3882, 5
      %v3885 = vsel %vm278, %v3880, %v3884
      %v3887 = vshrl.u32 %v3649, 16
      %v3889 = vrot.slane %v3887, 4
      %v3890 = vshll.u32 %v3649, 16
      %v3892 = vrot.slane %v3890, 5
      %v3893 = vor.u32 %v3889, %v3892
      %v3894 = vrot.slane %v3893, 4
      %v3896 = vshll.u32 %v3650, 16
      %v3898 = vrot.slane %v3896, 5
      %v3899 = vsel %vm278, %v3894, %v3898
      %v3900 = vshrl.u32 %v3650, 16
      %v3902 = vrot.slane %v3900, 4
      %v3903 = vor.u32 %v3902, %v3898
      %v3904 = vrot.slane %v3903, 4
      %v3906 = vshll.u32 %v3651, 16
      %v3908 = vrot.slane %v3906, 5
      %v3909 = vsel %vm278, %v3904, %v3908
      %v3911 = vshrl.u32 %v3652, 16
      %v3913 = vrot.slane %v3911, 4
      %v3914 = vshll.u32 %v3652, 16
      %v3916 = vrot.slane %v3914, 5
      %v3917 = vor.u32 %v3913, %v3916
      %v3918 = vrot.slane %v3917, 4
      %v3920 = vshll.u32 %v3653, 16
      %v3922 = vrot.slane %v3920, 5
      %v3923 = vsel %vm278, %v3918, %v3922
      %v3924 = vshrl.u32 %v3653, 16
      %v3926 = vrot.slane %v3924, 4
      %v3927 = vor.u32 %v3926, %v3922
      %v3928 = vrot.slane %v3927, 4
      %v3930 = vshll.u32 %v3654, 16
      %v3932 = vrot.slane %v3930, 5
      %v3933 = vsel %vm278, %v3928, %v3932
      %v3935 = vshrl.u32 %v3655, 16
      %v3937 = vrot.slane %v3935, 4
      %v3938 = vshll.u32 %v3655, 16
      %v3940 = vrot.slane %v3938, 5
      %v3941 = vor.u32 %v3937, %v3940
      %v3942 = vrot.slane %v3941, 4
      %v3944 = vshll.u32 %v3656, 16
      %v3946 = vrot.slane %v3944, 5
      %v3947 = vsel %vm278, %v3942, %v3946
      %v3948 = vshrl.u32 %v3656, 16
      %v3950 = vrot.slane %v3948, 4
      %v3951 = vor.u32 %v3950, %v3946
      %v3952 = vrot.slane %v3951, 4
      %v3954 = vshll.u32 %v3657, 16
      %v3956 = vrot.slane %v3954, 5
      %v3957 = vsel %vm278, %v3952, %v3956
      %v3959 = vshrl.u32 %v3658, 16
      %v3961 = vrot.slane %v3959, 4
      %v3962 = vshll.u32 %v3658, 16
      %v3964 = vrot.slane %v3962, 5
      %v3965 = vor.u32 %v3961, %v3964
      %v3966 = vrot.slane %v3965, 4
      %v3968 = vshll.u32 %v3659, 16
      %v3970 = vrot.slane %v3968, 5
      %v3971 = vsel %vm278, %v3966, %v3970
      %v3972 = vshrl.u32 %v3659, 16
      %v3974 = vrot.slane %v3972, 4
      %v3975 = vor.u32 %v3974, %v3970
      %v3976 = vrot.slane %v3975, 4
      %v3978 = vshll.u32 %v3660, 16
      %v3980 = vrot.slane %v3978, 5
      %v3981 = vsel %vm278, %v3976, %v3980
      %v3983 = vshrl.u32 %v3661, 16
      %v3985 = vrot.slane %v3983, 4
      %v3986 = vshll.u32 %v3661, 16
      %v3988 = vrot.slane %v3986, 5
      %v3989 = vor.u32 %v3985, %v3988
      %v3990 = vrot.slane %v3989, 4
      %v3992 = vshll.u32 %v3662, 16
      %v3994 = vrot.slane %v3992, 5
      %v3995 = vsel %vm278, %v3990, %v3994
      %v3996 = vshrl.u32 %v3662, 16
      %v3998 = vrot.slane %v3996, 4
      %v3999 = vor.u32 %v3998, %v3994
      %v4000 = vrot.slane %v3999, 4
      %v4002 = vshll.u32 %v3663, 16
      %v4004 = vrot.slane %v4002, 5
      %v4005 = vsel %vm278, %v4000, %v4004
      %v4007 = vshrl.u32 %v3664, 16
      %v4009 = vrot.slane %v4007, 4
      %v4010 = vshll.u32 %v3664, 16
      %v4012 = vrot.slane %v4010, 5
      %v4013 = vor.u32 %v4009, %v4012
      %v4014 = vrot.slane %v4013, 4
      %v4016 = vshll.u32 %v3665, 16
      %v4018 = vrot.slane %v4016, 5
      %v4019 = vsel %vm278, %v4014, %v4018
      %v4020 = vshrl.u32 %v3665, 16
      %v4022 = vrot.slane %v4020, 4
      %v4023 = vor.u32 %v4022, %v4018
      %v4024 = vrot.slane %v4023, 4
      %v4026 = vshll.u32 %v3666, 16
      %v4028 = vrot.slane %v4026, 5
      %v4029 = vsel %vm278, %v4024, %v4028
      %v4031 = vshrl.u32 %v3667, 16
      %v4033 = vrot.slane %v4031, 4
      %v4034 = vshll.u32 %v3667, 16
      %v4036 = vrot.slane %v4034, 5
      %v4037 = vor.u32 %v4033, %v4036
      %v4038 = vrot.slane %v4037, 4
      %v4040 = vshll.u32 %v3668, 16
      %v4042 = vrot.slane %v4040, 5
      %v4043 = vsel %vm278, %v4038, %v4042
      %v4044 = vshrl.u32 %v3668, 16
      %v4046 = vrot.slane %v4044, 4
      %v4047 = vor.u32 %v4046, %v4042
      %v4048 = vrot.slane %v4047, 4
      %v4050 = vshll.u32 %v3669, 16
      %v4052 = vrot.slane %v4050, 5
      %v4053 = vsel %vm278, %v4048, %v4052
      %s4054 = scalar_lea.vmem %s1, 56
      %v4055 = vld [vmem:[%s4054] sm:$0xf]
      %v4056 = vld [vmem:[%s4054 + $0x4] sm:$0xf]
      %v4057 = vunpack.c.l.b16 %v3683
      %v4058 = vunpack.c.l.b16 %v3693
      %v4059 = vunpack.c.l.b16 %v3707
      %v4060 = vunpack.c.l.b16 %v3717
      %v4061 = vunpack.c.l.b16 %v3731
      %v4062 = vunpack.c.l.b16 %v3741
      %v4063 = vunpack.c.l.b16 %v3755
      %v4064 = vunpack.c.l.b16 %v3765
      %v4065 = vunpack.c.l.b16 %v3779
      %v4066 = vunpack.c.l.b16 %v3789
      %v4067 = vunpack.c.l.b16 %v3803
      %v4068 = vunpack.c.l.b16 %v3813
      %v4069 = vunpack.c.l.b16 %v3827
      %v4070 = vunpack.c.l.b16 %v3837
      %v4071 = vunpack.c.l.b16 %v3851
      %v4072 = vunpack.c.l.b16 %v3861
      %v4073 = vunpack.c.l.b16 %v3875
      %v4074 = vunpack.c.l.b16 %v3885
      %v4075 = vunpack.c.l.b16 %v3899
      %v4076 = vunpack.c.l.b16 %v3909
      %v4077 = vunpack.c.l.b16 %v3923
      %v4078 = vunpack.c.l.b16 %v3933
      %v4079 = vunpack.c.l.b16 %v3947
      %v4080 = vunpack.c.l.b16 %v3957
      %v4081 = vunpack.c.l.b16 %v3971
      %v4082 = vunpack.c.l.b16 %v3981
      %v4083 = vunpack.c.l.b16 %v3995
      %v4084 = vunpack.c.l.b16 %v4005
      %v4085 = vunpack.c.l.b16 %v4019
      %v4086 = vunpack.c.l.b16 %v4029
      %v4087 = vunpack.c.l.b16 %v4043
      %v4088 = vunpack.c.l.b16 %v4053
      %v4089 = vpack.c.b16 %v4058, %v4057
      %v4090 = vpack.c.b16 %v4060, %v4059
      %v4091 = vpack.c.b16 %v4062, %v4061
      %v4092 = vpack.c.b16 %v4064, %v4063
      %v4093 = vpack.c.b16 %v4066, %v4065
      %v4094 = vpack.c.b16 %v4068, %v4067
      %v4095 = vpack.c.b16 %v4070, %v4069
      %v4096 = vpack.c.b16 %v4072, %v4071
      %v4097 = vpack.c.b16 %v4074, %v4073
      %v4098 = vpack.c.b16 %v4076, %v4075
      %v4099 = vpack.c.b16 %v4078, %v4077
      %v4100 = vpack.c.b16 %v4080, %v4079
      %v4101 = vpack.c.b16 %v4082, %v4081
      %v4102 = vpack.c.b16 %v4084, %v4083
      %v4103 = vpack.c.b16 %v4086, %v4085
      %v4104 = vpack.c.b16 %v4088, %v4087
      %v4107 = vunpack.c.l.b16 %v4055
      %v4108 = vunpack.c.l.b16 %v4056
      %v4109 = vpack.c.b16 %v4108, %v4107
      %v4112 = vsel %vm720, %v4089, 0
      %v4115 = vsel %vm720, %v4090, 0
      %v4118 = vsel %vm720, %v4091, 0
      %v4121 = vsel %vm720, %v4092, 0
      %v4124 = vsel %vm720, %v4093, 0
      %v4127 = vsel %vm720, %v4094, 0
      %v4130 = vsel %vm720, %v4095, 0
      %v4133 = vsel %vm720, %v4096, 0
      %v4136 = vsel %vm720, %v4097, 0
      %v4139 = vsel %vm720, %v4098, 0
      %v4142 = vsel %vm720, %v4099, 0
      %v4145 = vsel %vm720, %v4100, 0
      %v4148 = vsel %vm720, %v4101, 0
      %v4151 = vsel %vm720, %v4102, 0
      %v4154 = vsel %vm720, %v4103, 0
      %v4157 = vsel %vm720, %v4104, 0
      %4159 = vmatprep.subr.bf16.mxu0 0
      %4160 = vmatpush1.bf16.msra.mxu0 %v4109
      %4161 = vmatprep.subr.bf16.mxu0 0
      %4162 = vmatpush1.bf16.msra.mxu0 0
      %4163 = vmatprep.subr.bf16.mxu0 0
      %4164 = vmatpush1.bf16.msra.mxu0 0
      %4165 = vmatprep.subr.bf16.mxu0 0
      %4166 = vmatpush1.bf16.msra.mxu0 0
      %4167 = vmatprep.subr.bf16.mxu0 0
      %4168 = vmatpush1.bf16.msra.mxu0 0
      %4169 = vmatprep.subr.bf16.mxu0 0
      %4170 = vmatpush1.bf16.msra.mxu0 0
      %4171 = vmatprep.subr.bf16.mxu0 0
      %4172 = vmatpush1.bf16.msra.mxu0 0
      %4173 = vmatprep.subr.bf16.mxu0 0
      %4174 = vmatpush1.bf16.msra.mxu0 0
      %4175 = vmatprep.subr.bf16.mxu0 0
      %4176 = vmatpush1.bf16.msra.mxu0 0
      %4177 = vmatprep.subr.bf16.mxu0 0
      %4178 = vmatpush1.bf16.msra.mxu0 0
      %4179 = vmatprep.subr.bf16.mxu0 0
      %4180 = vmatpush1.bf16.msra.mxu0 0
      %4181 = vmatprep.subr.bf16.mxu0 0
      %4182 = vmatpush1.bf16.msra.mxu0 0
      %4183 = vmatprep.subr.bf16.mxu0 0
      %4184 = vmatpush1.bf16.msra.mxu0 0
      %4185 = vmatprep.subr.bf16.mxu0 0
      %4186 = vmatpush1.bf16.msra.mxu0 0
      %4187 = vmatprep.subr.bf16.mxu0 0
      %4188 = vmatpush1.bf16.msra.mxu0 0
      %4189 = vmatprep.subr.bf16.mxu0 0
      %4190 = vmatpush1.bf16.msra.mxu0 0
      %4191 = vmatprep.mubr.bf16.mxu0 0
      %4192 = vmatmul.mubr.bf16.gmra.mrb[0].mxu0 %v4112
      %v4193 = vpop.f32.mrb[0].mxu0
      %v4194 = vadd.f32 0.0, %v4193
      %v4195 = vpop.f32.mrb[0].mxu0
      %v4196 = vpop.f32.mrb[0].mxu0
      %v4197 = vadd.f32 0.0, %v4196
      %v4198 = vpop.f32.mrb[0].mxu0
      %4199 = vmatprep.mubr.bf16.mxu0 0
      %4200 = vmatmul.mubr.bf16.gmra.mrb[0].mxu0 %v4115
      %v4201 = vpop.f32.mrb[0].mxu0
      %v4202 = vadd.f32 0.0, %v4201
      %v4203 = vpop.f32.mrb[0].mxu0
      %v4204 = vpop.f32.mrb[0].mxu0
      %v4205 = vadd.f32 0.0, %v4204
      %v4206 = vpop.f32.mrb[0].mxu0
      %4207 = vmatprep.mubr.bf16.mxu0 0
      %4208 = vmatmul.mubr.bf16.gmra.mrb[0].mxu0 %v4118
      %v4209 = vpop.f32.mrb[0].mxu0
      %v4210 = vadd.f32 0.0, %v4209
      %v4211 = vpop.f32.mrb[0].mxu0
      %v4212 = vpop.f32.mrb[0].mxu0
      %v4213 = vadd.f32 0.0, %v4212
      %v4214 = vpop.f32.mrb[0].mxu0
      %4215 = vmatprep.mubr.bf16.mxu0 0
      %4216 = vmatmul.mubr.bf16.gmra.mrb[0].mxu0 %v4121
      %v4217 = vpop.f32.mrb[0].mxu0
      %v4218 = vadd.f32 0.0, %v4217
      %v4219 = vpop.f32.mrb[0].mxu0
      %v4220 = vpop.f32.mrb[0].mxu0
      %v4221 = vadd.f32 0.0, %v4220
      %v4222 = vpop.f32.mrb[0].mxu0
      %4223 = vmatprep.mubr.bf16.mxu0 0
      %4224 = vmatmul.mubr.bf16.gmra.mrb[0].mxu0 %v4124
      %v4225 = vpop.f32.mrb[0].mxu0
      %v4226 = vadd.f32 0.0, %v4225
      %v4227 = vpop.f32.mrb[0].mxu0
      %v4228 = vpop.f32.mrb[0].mxu0
      %v4229 = vadd.f32 0.0, %v4228
      %v4230 = vpop.f32.mrb[0].mxu0
      %4231 = vmatprep.mubr.bf16.mxu0 0
      %4232 = vmatmul.mubr.bf16.gmra.mrb[0].mxu0 %v4127
      %v4233 = vpop.f32.mrb[0].mxu0
      %v4234 = vadd.f32 0.0, %v4233
      %v4235 = vpop.f32.mrb[0].mxu0
      %v4236 = vpop.f32.mrb[0].mxu0
      %v4237 = vadd.f32 0.0, %v4236
      %v4238 = vpop.f32.mrb[0].mxu0
      %4239 = vmatprep.mubr.bf16.mxu0 0
      %4240 = vmatmul.mubr.bf16.gmra.mrb[0].mxu0 %v4130
      %v4241 = vpop.f32.mrb[0].mxu0
      %v4242 = vadd.f32 0.0, %v4241
      %v4243 = vpop.f32.mrb[0].mxu0
      %v4244 = vpop.f32.mrb[0].mxu0
      %v4245 = vadd.f32 0.0, %v4244
      %v4246 = vpop.f32.mrb[0].mxu0
      %4247 = vmatprep.mubr.bf16.mxu0 0
      %4248 = vmatmul.mubr.bf16.gmra.mrb[0].mxu0 %v4133
      %v4249 = vpop.f32.mrb[0].mxu0
      %v4250 = vadd.f32 0.0, %v4249
      %v4251 = vpop.f32.mrb[0].mxu0
      %v4252 = vpop.f32.mrb[0].mxu0
      %v4253 = vadd.f32 0.0, %v4252
      %v4254 = vpop.f32.mrb[0].mxu0
      %4255 = vmatprep.mubr.bf16.mxu0 0
      %4256 = vmatmul.mubr.bf16.gmra.mrb[0].mxu0 %v4136
      %v4257 = vpop.f32.mrb[0].mxu0
      %v4258 = vadd.f32 0.0, %v4257
      %v4259 = vpop.f32.mrb[0].mxu0
      %v4260 = vpop.f32.mrb[0].mxu0
      %v4261 = vadd.f32 0.0, %v4260
      %v4262 = vpop.f32.mrb[0].mxu0
      %4263 = vmatprep.mubr.bf16.mxu0 0
      %4264 = vmatmul.mubr.bf16.gmra.mrb[0].mxu0 %v4139
      %v4265 = vpop.f32.mrb[0].mxu0
      %v4266 = vadd.f32 0.0, %v4265
      %v4267 = vpop.f32.mrb[0].mxu0
      %v4268 = vpop.f32.mrb[0].mxu0
      %v4269 = vadd.f32 0.0, %v4268
      %v4270 = vpop.f32.mrb[0].mxu0
      %4271 = vmatprep.mubr.bf16.mxu0 0
      %4272 = vmatmul.mubr.bf16.gmra.mrb[0].mxu0 %v4142
      %v4273 = vpop.f32.mrb[0].mxu0
      %v4274 = vadd.f32 0.0, %v4273
      %v4275 = vpop.f32.mrb[0].mxu0
      %v4276 = vpop.f32.mrb[0].mxu0
      %v4277 = vadd.f32 0.0, %v4276
      %v4278 = vpop.f32.mrb[0].mxu0
      %4279 = vmatprep.mubr.bf16.mxu0 0
      %4280 = vmatmul.mubr.bf16.gmra.mrb[0].mxu0 %v4145
      %v4281 = vpop.f32.mrb[0].mxu0
      %v4282 = vadd.f32 0.0, %v4281
      %v4283 = vpop.f32.mrb[0].mxu0
      %v4284 = vpop.f32.mrb[0].mxu0
      %v4285 = vadd.f32 0.0, %v4284
      %v4286 = vpop.f32.mrb[0].mxu0
      %4287 = vmatprep.mubr.bf16.mxu0 0
      %4288 = vmatmul.mubr.bf16.gmra.mrb[0].mxu0 %v4148
      %v4289 = vpop.f32.mrb[0].mxu0
      %v4290 = vadd.f32 0.0, %v4289
      %v4291 = vpop.f32.mrb[0].mxu0
      %v4292 = vpop.f32.mrb[0].mxu0
      %v4293 = vadd.f32 0.0, %v4292
      %v4294 = vpop.f32.mrb[0].mxu0
      %4295 = vmatprep.mubr.bf16.mxu0 0
      %4296 = vmatmul.mubr.bf16.gmra.mrb[0].mxu0 %v4151
      %v4297 = vpop.f32.mrb[0].mxu0
      %v4298 = vadd.f32 0.0, %v4297
      %v4299 = vpop.f32.mrb[0].mxu0
      %v4300 = vpop.f32.mrb[0].mxu0
      %v4301 = vadd.f32 0.0, %v4300
      %v4302 = vpop.f32.mrb[0].mxu0
      %4303 = vmatprep.mubr.bf16.mxu0 0
      %4304 = vmatmul.mubr.bf16.gmra.mrb[0].mxu0 %v4154
      %v4305 = vpop.f32.mrb[0].mxu0
      %v4306 = vadd.f32 0.0, %v4305
      %v4307 = vpop.f32.mrb[0].mxu0
      %v4308 = vpop.f32.mrb[0].mxu0
      %v4309 = vadd.f32 0.0, %v4308
      %v4310 = vpop.f32.mrb[0].mxu0
      %4311 = vmatprep.mubr.bf16.mxu0 0
      %4312 = vmatmul.mubr.bf16.gmra.mrb[0].mxu0 %v4157
      %v4313 = vpop.f32.mrb[0].mxu0
      %v4314 = vadd.f32 0.0, %v4313
      %v4315 = vpop.f32.mrb[0].mxu0
      %v4316 = vpop.f32.mrb[0].mxu0
      %v4317 = vadd.f32 0.0, %v4316
      %v4318 = vpop.f32.mrb[0].mxu0
      %4319 = vdwg.mxu0
      %v4320 = vadd.f32 %v3590, %v4194
      %v4321 = vadd.f32 %v3591, %v4197
      %v4322 = vadd.f32 %v3592, %v4202
      %v4323 = vadd.f32 %v3593, %v4205
      %v4324 = vadd.f32 %v3594, %v4210
      %v4325 = vadd.f32 %v3595, %v4213
      %v4326 = vadd.f32 %v3596, %v4218
      %v4327 = vadd.f32 %v3597, %v4221
      %v4328 = vadd.f32 %v3598, %v4226
      %v4329 = vadd.f32 %v3599, %v4229
      %v4330 = vadd.f32 %v3600, %v4234
      %v4331 = vadd.f32 %v3601, %v4237
      %v4332 = vadd.f32 %v3602, %v4242
      %v4333 = vadd.f32 %v3603, %v4245
      %v4334 = vadd.f32 %v3604, %v4250
      %v4335 = vadd.f32 %v3605, %v4253
      %v4336 = vadd.f32 %v3606, %v4258
      %v4337 = vadd.f32 %v3607, %v4261
      %v4338 = vadd.f32 %v3608, %v4266
      %v4339 = vadd.f32 %v3609, %v4269
      %v4340 = vadd.f32 %v3610, %v4274
      %v4341 = vadd.f32 %v3611, %v4277
      %v4342 = vadd.f32 %v3612, %v4282
      %v4343 = vadd.f32 %v3613, %v4285
      %v4344 = vadd.f32 %v3614, %v4290
      %v4345 = vadd.f32 %v3615, %v4293
      %v4346 = vadd.f32 %v3616, %v4298
      %v4347 = vadd.f32 %v3617, %v4301
      %v4348 = vadd.f32 %v3618, %v4306
      %v4349 = vadd.f32 %v3619, %v4309
      %v4350 = vadd.f32 %v3620, %v4314
      %v4351 = vadd.f32 %v3621, %v4317
      %v4352 = vld [vmem:[%s3259] sm:$0xe]
      %v4353 = vld [vmem:[%s3259 + $0xc] sm:$0xe]
      %v4354 = vld [vmem:[%s3259 + $0x18] sm:$0xe]
      %v4355 = vld [vmem:[%s3259 + $0x24] sm:$0xe]
      %v4356 = vld [vmem:[%s3259 + $0x30] sm:$0xe]
      %v4357 = vld [vmem:[%s3259 + $0x3c] sm:$0xe]
      %v4358 = vld [vmem:[%s3259 + $0x48] sm:$0xe]
      %v4359 = vld [vmem:[%s3259 + $0x54] sm:$0xe]
      %v4360 = vld [vmem:[%s3259 + $0x60] sm:$0xe]
      %v4361 = vld [vmem:[%s3259 + $0x6c] sm:$0xe]
      %v4362 = vld [vmem:[%s3259 + $0x78] sm:$0xe]
      %v4363 = vld [vmem:[%s3259 + $0x84] sm:$0xe]
      %v4364 = vld [vmem:[%s3259 + $0x90] sm:$0xe]
      %v4365 = vld [vmem:[%s3259 + $0x9c] sm:$0xe]
      %v4366 = vld [vmem:[%s3259 + $0xa8] sm:$0xe]
      %v4367 = vld [vmem:[%s3259 + $0xb4] sm:$0xe]
      %v4416 = vrot.slane %v4352, 5
      %v4417 = vrot.slane %v4416, 4
      %v4418 = vrot.slane %v3623, 5
      %v4419 = vsel %vm1275, %v4417, %v4418
      %v4420 = vrot.slane %v4418, 4
      %v4421 = vrot.slane %v3624, 5
      %v4422 = vsel %vm1275, %v4420, %v4421
      %v4423 = vrot.slane %v4353, 5
      %v4424 = vrot.slane %v4423, 4
      %v4425 = vrot.slane %v3626, 5
      %v4426 = vsel %vm1275, %v4424, %v4425
      %v4427 = vrot.slane %v4425, 4
      %v4428 = vrot.slane %v3627, 5
      %v4429 = vsel %vm1275, %v4427, %v4428
      %v4430 = vrot.slane %v4354, 5
      %v4431 = vrot.slane %v4430, 4
      %v4432 = vrot.slane %v3629, 5
      %v4433 = vsel %vm1275, %v4431, %v4432
      %v4434 = vrot.slane %v4432, 4
      %v4435 = vrot.slane %v3630, 5
      %v4436 = vsel %vm1275, %v4434, %v4435
      %v4437 = vrot.slane %v4355, 5
      %v4438 = vrot.slane %v4437, 4
      %v4439 = vrot.slane %v3632, 5
      %v4440 = vsel %vm1275, %v4438, %v4439
      %v4441 = vrot.slane %v4439, 4
      %v4442 = vrot.slane %v3633, 5
      %v4443 = vsel %vm1275, %v4441, %v4442
      %v4444 = vrot.slane %v4356, 5
      %v4445 = vrot.slane %v4444, 4
      %v4446 = vrot.slane %v3635, 5
      %v4447 = vsel %vm1275, %v4445, %v4446
      %v4448 = vrot.slane %v4446, 4
      %v4449 = vrot.slane %v3636, 5
      %v4450 = vsel %vm1275, %v4448, %v4449
      %v4451 = vrot.slane %v4357, 5
      %v4452 = vrot.slane %v4451, 4
      %v4453 = vrot.slane %v3638, 5
      %v4454 = vsel %vm1275, %v4452, %v4453
      %v4455 = vrot.slane %v4453, 4
      %v4456 = vrot.slane %v3639, 5
      %v4457 = vsel %vm1275, %v4455, %v4456
      %v4458 = vrot.slane %v4358, 5
      %v4459 = vrot.slane %v4458, 4
      %v4460 = vrot.slane %v3641, 5
      %v4461 = vsel %vm1275, %v4459, %v4460
      %v4462 = vrot.slane %v4460, 4
      %v4463 = vrot.slane %v3642, 5
      %v4464 = vsel %vm1275, %v4462, %v4463
      %v4465 = vrot.slane %v4359, 5
      %v4466 = vrot.slane %v4465, 4
      %v4467 = vrot.slane %v3644, 5
      %v4468 = vsel %vm1275, %v4466, %v4467
      %v4469 = vrot.slane %v4467, 4
      %v4470 = vrot.slane %v3645, 5
      %v4471 = vsel %vm1275, %v4469, %v4470
      %v4472 = vrot.slane %v4360, 5
      %v4473 = vrot.slane %v4472, 4
      %v4474 = vrot.slane %v3647, 5
      %v4475 = vsel %vm1275, %v4473, %v4474
      %v4476 = vrot.slane %v4474, 4
      %v4477 = vrot.slane %v3648, 5
      %v4478 = vsel %vm1275, %v4476, %v4477
      %v4479 = vrot.slane %v4361, 5
      %v4480 = vrot.slane %v4479, 4
      %v4481 = vrot.slane %v3650, 5
      %v4482 = vsel %vm1275, %v4480, %v4481
      %v4483 = vrot.slane %v4481, 4
      %v4484 = vrot.slane %v3651, 5
      %v4485 = vsel %vm1275, %v4483, %v4484
      %v4486 = vrot.slane %v4362, 5
      %v4487 = vrot.slane %v4486, 4
      %v4488 = vrot.slane %v3653, 5
      %v4489 = vsel %vm1275, %v4487, %v4488
      %v4490 = vrot.slane %v4488, 4
      %v4491 = vrot.slane %v3654, 5
      %v4492 = vsel %vm1275, %v4490, %v4491
      %v4493 = vrot.slane %v4363, 5
      %v4494 = vrot.slane %v4493, 4
      %v4495 = vrot.slane %v3656, 5
      %v4496 = vsel %vm1275, %v4494, %v4495
      %v4497 = vrot.slane %v4495, 4
      %v4498 = vrot.slane %v3657, 5
      %v4499 = vsel %vm1275, %v4497, %v4498
      %v4500 = vrot.slane %v4364, 5
      %v4501 = vrot.slane %v4500, 4
      %v4502 = vrot.slane %v3659, 5
      %v4503 = vsel %vm1275, %v4501, %v4502
      %v4504 = vrot.slane %v4502, 4
      %v4505 = vrot.slane %v3660, 5
      %v4506 = vsel %vm1275, %v4504, %v4505
      %v4507 = vrot.slane %v4365, 5
      %v4508 = vrot.slane %v4507, 4
      %v4509 = vrot.slane %v3662, 5
      %v4510 = vsel %vm1275, %v4508, %v4509
      %v4511 = vrot.slane %v4509, 4
      %v4512 = vrot.slane %v3663, 5
      %v4513 = vsel %vm1275, %v4511, %v4512
      %v4514 = vrot.slane %v4366, 5
      %v4515 = vrot.slane %v4514, 4
      %v4516 = vrot.slane %v3665, 5
      %v4517 = vsel %vm1275, %v4515, %v4516
      %v4518 = vrot.slane %v4516, 4
      %v4519 = vrot.slane %v3666, 5
      %v4520 = vsel %vm1275, %v4518, %v4519
      %v4521 = vrot.slane %v4367, 5
      %v4522 = vrot.slane %v4521, 4
      %v4523 = vrot.slane %v3668, 5
      %v4524 = vsel %vm1275, %v4522, %v4523
      %v4525 = vrot.slane %v4523, 4
      %v4526 = vrot.slane %v3669, 5
      %v4527 = vsel %vm1275, %v4525, %v4526
      %s4528 = scalar_lea.vmem %s1, 64
      %v4529 = vld [vmem:[%s4528] sm:$0xf]
      %v4530 = vld [vmem:[%s4528 + $0x4] sm:$0xf]
      %v4531 = vunpack.c.l.b16 %v4419
      %v4532 = vunpack.c.l.b16 %v4422
      %v4533 = vunpack.c.l.b16 %v4426
      %v4534 = vunpack.c.l.b16 %v4429
      %v4535 = vunpack.c.l.b16 %v4433
      %v4536 = vunpack.c.l.b16 %v4436
      %v4537 = vunpack.c.l.b16 %v4440
      %v4538 = vunpack.c.l.b16 %v4443
      %v4539 = vunpack.c.l.b16 %v4447
      %v4540 = vunpack.c.l.b16 %v4450
      %v4541 = vunpack.c.l.b16 %v4454
      %v4542 = vunpack.c.l.b16 %v4457
      %v4543 = vunpack.c.l.b16 %v4461
      %v4544 = vunpack.c.l.b16 %v4464
      %v4545 = vunpack.c.l.b16 %v4468
      %v4546 = vunpack.c.l.b16 %v4471
      %v4547 = vunpack.c.l.b16 %v4475
      %v4548 = vunpack.c.l.b16 %v4478
      %v4549 = vunpack.c.l.b16 %v4482
      %v4550 = vunpack.c.l.b16 %v4485
      %v4551 = vunpack.c.l.b16 %v4489
      %v4552 = vunpack.c.l.b16 %v4492
      %v4553 = vunpack.c.l.b16 %v4496
      %v4554 = vunpack.c.l.b16 %v4499
      %v4555 = vunpack.c.l.b16 %v4503
      %v4556 = vunpack.c.l.b16 %v4506
      %v4557 = vunpack.c.l.b16 %v4510
      %v4558 = vunpack.c.l.b16 %v4513
      %v4559 = vunpack.c.l.b16 %v4517
      %v4560 = vunpack.c.l.b16 %v4520
      %v4561 = vunpack.c.l.b16 %v4524
      %v4562 = vunpack.c.l.b16 %v4527
      %v4563 = vpack.c.b16 %v4532, %v4531
      %v4564 = vpack.c.b16 %v4534, %v4533
      %v4565 = vpack.c.b16 %v4536, %v4535
      %v4566 = vpack.c.b16 %v4538, %v4537
      %v4567 = vpack.c.b16 %v4540, %v4539
      %v4568 = vpack.c.b16 %v4542, %v4541
      %v4569 = vpack.c.b16 %v4544, %v4543
      %v4570 = vpack.c.b16 %v4546, %v4545
      %v4571 = vpack.c.b16 %v4548, %v4547
      %v4572 = vpack.c.b16 %v4550, %v4549
      %v4573 = vpack.c.b16 %v4552, %v4551
      %v4574 = vpack.c.b16 %v4554, %v4553
      %v4575 = vpack.c.b16 %v4556, %v4555
      %v4576 = vpack.c.b16 %v4558, %v4557
      %v4577 = vpack.c.b16 %v4560, %v4559
      %v4578 = vpack.c.b16 %v4562, %v4561
      %v4581 = vunpack.c.l.b16 %v4529
      %v4582 = vunpack.c.l.b16 %v4530
      %v4583 = vpack.c.b16 %v4582, %v4581
      %v4586 = vsel %vm720, %v4563, 0
      %v4589 = vsel %vm720, %v4564, 0
      %v4592 = vsel %vm720, %v4565, 0
      %v4595 = vsel %vm720, %v4566, 0
      %v4598 = vsel %vm720, %v4567, 0
      %v4601 = vsel %vm720, %v4568, 0
      %v4604 = vsel %vm720, %v4569, 0
      %v4607 = vsel %vm720, %v4570, 0
      %v4610 = vsel %vm720, %v4571, 0
      %v4613 = vsel %vm720, %v4572, 0
      %v4616 = vsel %vm720, %v4573, 0
      %v4619 = vsel %vm720, %v4574, 0
      %v4622 = vsel %vm720, %v4575, 0
      %v4625 = vsel %vm720, %v4576, 0
      %v4628 = vsel %vm720, %v4577, 0
      %v4631 = vsel %vm720, %v4578, 0
      %4633 = vmatprep.subr.bf16.mxu0 0
      %4634 = vmatpush1.bf16.msra.mxu0 %v4583
      %4635 = vmatprep.subr.bf16.mxu0 0
      %4636 = vmatpush1.bf16.msra.mxu0 0
      %4637 = vmatprep.subr.bf16.mxu0 0
      %4638 = vmatpush1.bf16.msra.mxu0 0
      %4639 = vmatprep.subr.bf16.mxu0 0
      %4640 = vmatpush1.bf16.msra.mxu0 0
      %4641 = vmatprep.subr.bf16.mxu0 0
      %4642 = vmatpush1.bf16.msra.mxu0 0
      %4643 = vmatprep.subr.bf16.mxu0 0
      %4644 = vmatpush1.bf16.msra.mxu0 0
      %4645 = vmatprep.subr.bf16.mxu0 0
      %4646 = vmatpush1.bf16.msra.mxu0 0
      %4647 = vmatprep.subr.bf16.mxu0 0
      %4648 = vmatpush1.bf16.msra.mxu0 0
      %4649 = vmatprep.subr.bf16.mxu0 0
      %4650 = vmatpush1.bf16.msra.mxu0 0
      %4651 = vmatprep.subr.bf16.mxu0 0
      %4652 = vmatpush1.bf16.msra.mxu0 0
      %4653 = vmatprep.subr.bf16.mxu0 0
      %4654 = vmatpush1.bf16.msra.mxu0 0
      %4655 = vmatprep.subr.bf16.mxu0 0
      %4656 = vmatpush1.bf16.msra.mxu0 0
      %4657 = vmatprep.subr.bf16.mxu0 0
      %4658 = vmatpush1.bf16.msra.mxu0 0
      %4659 = vmatprep.subr.bf16.mxu0 0
      %4660 = vmatpush1.bf16.msra.mxu0 0
      %4661 = vmatprep.subr.bf16.mxu0 0
      %4662 = vmatpush1.bf16.msra.mxu0 0
      %4663 = vmatprep.subr.bf16.mxu0 0
      %4664 = vmatpush1.bf16.msra.mxu0 0
      %4665 = vmatprep.mubr.bf16.mxu0 0
      %4666 = vmatmul.mubr.bf16.gmra.mrb[0].mxu0 %v4586
      %v4667 = vpop.f32.mrb[0].mxu0
      %v4668 = vadd.f32 0.0, %v4667
      %v4669 = vpop.f32.mrb[0].mxu0
      %v4670 = vpop.f32.mrb[0].mxu0
      %v4671 = vadd.f32 0.0, %v4670
      %v4672 = vpop.f32.mrb[0].mxu0
      %4673 = vmatprep.mubr.bf16.mxu0 0
      %4674 = vmatmul.mubr.bf16.gmra.mrb[0].mxu0 %v4589
      %v4675 = vpop.f32.mrb[0].mxu0
      %v4676 = vadd.f32 0.0, %v4675
      %v4677 = vpop.f32.mrb[0].mxu0
      %v4678 = vpop.f32.mrb[0].mxu0
      %v4679 = vadd.f32 0.0, %v4678
      %v4680 = vpop.f32.mrb[0].mxu0
      %4681 = vmatprep.mubr.bf16.mxu0 0
      %4682 = vmatmul.mubr.bf16.gmra.mrb[0].mxu0 %v4592
      %v4683 = vpop.f32.mrb[0].mxu0
      %v4684 = vadd.f32 0.0, %v4683
      %v4685 = vpop.f32.mrb[0].mxu0
      %v4686 = vpop.f32.mrb[0].mxu0
      %v4687 = vadd.f32 0.0, %v4686
      %v4688 = vpop.f32.mrb[0].mxu0
      %4689 = vmatprep.mubr.bf16.mxu0 0
      %4690 = vmatmul.mubr.bf16.gmra.mrb[0].mxu0 %v4595
      %v4691 = vpop.f32.mrb[0].mxu0
      %v4692 = vadd.f32 0.0, %v4691
      %v4693 = vpop.f32.mrb[0].mxu0
      %v4694 = vpop.f32.mrb[0].mxu0
      %v4695 = vadd.f32 0.0, %v4694
      %v4696 = vpop.f32.mrb[0].mxu0
      %4697 = vmatprep.mubr.bf16.mxu0 0
      %4698 = vmatmul.mubr.bf16.gmra.mrb[0].mxu0 %v4598
      %v4699 = vpop.f32.mrb[0].mxu0
      %v4700 = vadd.f32 0.0, %v4699
      %v4701 = vpop.f32.mrb[0].mxu0
      %v4702 = vpop.f32.mrb[0].mxu0
      %v4703 = vadd.f32 0.0, %v4702
      %v4704 = vpop.f32.mrb[0].mxu0
      %4705 = vmatprep.mubr.bf16.mxu0 0
      %4706 = vmatmul.mubr.bf16.gmra.mrb[0].mxu0 %v4601
      %v4707 = vpop.f32.mrb[0].mxu0
      %v4708 = vadd.f32 0.0, %v4707
      %v4709 = vpop.f32.mrb[0].mxu0
      %v4710 = vpop.f32.mrb[0].mxu0
      %v4711 = vadd.f32 0.0, %v4710
      %v4712 = vpop.f32.mrb[0].mxu0
      %4713 = vmatprep.mubr.bf16.mxu0 0
      %4714 = vmatmul.mubr.bf16.gmra.mrb[0].mxu0 %v4604
      %v4715 = vpop.f32.mrb[0].mxu0
      %v4716 = vadd.f32 0.0, %v4715
      %v4717 = vpop.f32.mrb[0].mxu0
      %v4718 = vpop.f32.mrb[0].mxu0
      %v4719 = vadd.f32 0.0, %v4718
      %v4720 = vpop.f32.mrb[0].mxu0
      %4721 = vmatprep.mubr.bf16.mxu0 0
      %4722 = vmatmul.mubr.bf16.gmra.mrb[0].mxu0 %v4607
      %v4723 = vpop.f32.mrb[0].mxu0
      %v4724 = vadd.f32 0.0, %v4723
      %v4725 = vpop.f32.mrb[0].mxu0
      %v4726 = vpop.f32.mrb[0].mxu0
      %v4727 = vadd.f32 0.0, %v4726
      %v4728 = vpop.f32.mrb[0].mxu0
      %4729 = vmatprep.mubr.bf16.mxu0 0
      %4730 = vmatmul.mubr.bf16.gmra.mrb[0].mxu0 %v4610
      %v4731 = vpop.f32.mrb[0].mxu0
      %v4732 = vadd.f32 0.0, %v4731
      %v4733 = vpop.f32.mrb[0].mxu0
      %v4734 = vpop.f32.mrb[0].mxu0
      %v4735 = vadd.f32 0.0, %v4734
      %v4736 = vpop.f32.mrb[0].mxu0
      %4737 = vmatprep.mubr.bf16.mxu0 0
      %4738 = vmatmul.mubr.bf16.gmra.mrb[0].mxu0 %v4613
      %v4739 = vpop.f32.mrb[0].mxu0
      %v4740 = vadd.f32 0.0, %v4739
      %v4741 = vpop.f32.mrb[0].mxu0
      %v4742 = vpop.f32.mrb[0].mxu0
      %v4743 = vadd.f32 0.0, %v4742
      %v4744 = vpop.f32.mrb[0].mxu0
      %4745 = vmatprep.mubr.bf16.mxu0 0
      %4746 = vmatmul.mubr.bf16.gmra.mrb[0].mxu0 %v4616
      %v4747 = vpop.f32.mrb[0].mxu0
      %v4748 = vadd.f32 0.0, %v4747
      %v4749 = vpop.f32.mrb[0].mxu0
      %v4750 = vpop.f32.mrb[0].mxu0
      %v4751 = vadd.f32 0.0, %v4750
      %v4752 = vpop.f32.mrb[0].mxu0
      %4753 = vmatprep.mubr.bf16.mxu0 0
      %4754 = vmatmul.mubr.bf16.gmra.mrb[0].mxu0 %v4619
      %v4755 = vpop.f32.mrb[0].mxu0
      %v4756 = vadd.f32 0.0, %v4755
      %v4757 = vpop.f32.mrb[0].mxu0
      %v4758 = vpop.f32.mrb[0].mxu0
      %v4759 = vadd.f32 0.0, %v4758
      %v4760 = vpop.f32.mrb[0].mxu0
      %4761 = vmatprep.mubr.bf16.mxu0 0
      %4762 = vmatmul.mubr.bf16.gmra.mrb[0].mxu0 %v4622
      %v4763 = vpop.f32.mrb[0].mxu0
      %v4764 = vadd.f32 0.0, %v4763
      %v4765 = vpop.f32.mrb[0].mxu0
      %v4766 = vpop.f32.mrb[0].mxu0
      %v4767 = vadd.f32 0.0, %v4766
      %v4768 = vpop.f32.mrb[0].mxu0
      %4769 = vmatprep.mubr.bf16.mxu0 0
      %4770 = vmatmul.mubr.bf16.gmra.mrb[0].mxu0 %v4625
      %v4771 = vpop.f32.mrb[0].mxu0
      %v4772 = vadd.f32 0.0, %v4771
      %v4773 = vpop.f32.mrb[0].mxu0
      %v4774 = vpop.f32.mrb[0].mxu0
      %v4775 = vadd.f32 0.0, %v4774
      %v4776 = vpop.f32.mrb[0].mxu0
      %4777 = vmatprep.mubr.bf16.mxu0 0
      %4778 = vmatmul.mubr.bf16.gmra.mrb[0].mxu0 %v4628
      %v4779 = vpop.f32.mrb[0].mxu0
      %v4780 = vadd.f32 0.0, %v4779
      %v4781 = vpop.f32.mrb[0].mxu0
      %v4782 = vpop.f32.mrb[0].mxu0
      %v4783 = vadd.f32 0.0, %v4782
      %v4784 = vpop.f32.mrb[0].mxu0
      %4785 = vmatprep.mubr.bf16.mxu0 0
      %4786 = vmatmul.mubr.bf16.gmra.mrb[0].mxu0 %v4631
      %v4787 = vpop.f32.mrb[0].mxu0
      %v4788 = vadd.f32 0.0, %v4787
      %v4789 = vpop.f32.mrb[0].mxu0
      %v4790 = vpop.f32.mrb[0].mxu0
      %v4791 = vadd.f32 0.0, %v4790
      %v4792 = vpop.f32.mrb[0].mxu0
      %4793 = vdwg.mxu0
      %v4794 = vadd.f32 %v4320, %v4668
      %v4795 = vadd.f32 %v4321, %v4671
      %v4796 = vadd.f32 %v4322, %v4676
      %v4797 = vadd.f32 %v4323, %v4679
      %v4798 = vadd.f32 %v4324, %v4684
      %v4799 = vadd.f32 %v4325, %v4687
      %v4800 = vadd.f32 %v4326, %v4692
      %v4801 = vadd.f32 %v4327, %v4695
      %v4802 = vadd.f32 %v4328, %v4700
      %v4803 = vadd.f32 %v4329, %v4703
      %v4804 = vadd.f32 %v4330, %v4708
      %v4805 = vadd.f32 %v4331, %v4711
      %v4806 = vadd.f32 %v4332, %v4716
      %v4807 = vadd.f32 %v4333, %v4719
      %v4808 = vadd.f32 %v4334, %v4724
      %v4809 = vadd.f32 %v4335, %v4727
      %v4810 = vadd.f32 %v4336, %v4732
      %v4811 = vadd.f32 %v4337, %v4735
      %v4812 = vadd.f32 %v4338, %v4740
      %v4813 = vadd.f32 %v4339, %v4743
      %v4814 = vadd.f32 %v4340, %v4748
      %v4815 = vadd.f32 %v4341, %v4751
      %v4816 = vadd.f32 %v4342, %v4756
      %v4817 = vadd.f32 %v4343, %v4759
      %v4818 = vadd.f32 %v4344, %v4764
      %v4819 = vadd.f32 %v4345, %v4767
      %v4820 = vadd.f32 %v4346, %v4772
      %v4821 = vadd.f32 %v4347, %v4775
      %v4822 = vadd.f32 %v4348, %v4780
      %v4823 = vadd.f32 %v4349, %v4783
      %v4824 = vadd.f32 %v4350, %v4788
      %v4825 = vadd.f32 %v4351, %v4791
      %v4826 = vld [vmem:[%s2] sm:$0x1]
      %v4828 = vlaneseq
      %v4829 = vshrl.u32 %v4828, 7
      %v4830 = vsub.s32 0, %v4829
      %v4831 = vrot.slane %v4826, %v4830
      %v4833 = vmul.f32 %v4794, %v4831
      %v4834 = vmul.f32 %v4795, %v4831
      %v4835 = vmul.f32 %v4796, %v4831
      %v4836 = vmul.f32 %v4797, %v4831
      %v4837 = vmul.f32 %v4798, %v4831
      %v4838 = vmul.f32 %v4799, %v4831
      %v4839 = vmul.f32 %v4800, %v4831
      %v4840 = vmul.f32 %v4801, %v4831
      %v4841 = vmul.f32 %v4802, %v4831
      %v4842 = vmul.f32 %v4803, %v4831
      %v4843 = vmul.f32 %v4804, %v4831
      %v4844 = vmul.f32 %v4805, %v4831
      %v4845 = vmul.f32 %v4806, %v4831
      %v4846 = vmul.f32 %v4807, %v4831
      %v4847 = vmul.f32 %v4808, %v4831
      %v4848 = vmul.f32 %v4809, %v4831
      %v4849 = vmul.f32 %v4810, %v4831
      %v4850 = vmul.f32 %v4811, %v4831
      %v4851 = vmul.f32 %v4812, %v4831
      %v4852 = vmul.f32 %v4813, %v4831
      %v4853 = vmul.f32 %v4814, %v4831
      %v4854 = vmul.f32 %v4815, %v4831
      %v4855 = vmul.f32 %v4816, %v4831
      %v4856 = vmul.f32 %v4817, %v4831
      %v4857 = vmul.f32 %v4818, %v4831
      %v4858 = vmul.f32 %v4819, %v4831
      %v4859 = vmul.f32 %v4820, %v4831
      %v4860 = vmul.f32 %v4821, %v4831
      %v4861 = vmul.f32 %v4822, %v4831
      %v4862 = vmul.f32 %v4823, %v4831
      %v4863 = vmul.f32 %v4824, %v4831
      %v4864 = vmul.f32 %v4825, %v4831
      %v4865 = vld [vmem:[%s3] sm:$0x1]
      %v4867 = vlaneseq
      %v4868 = vshrl.u32 %v4867, 7
      %v4869 = vsub.s32 0, %v4868
      %v4870 = vrot.slane %v4865, %v4869
      %v4872 = vadd.f32 %v4833, %v4870
      %v4873 = vadd.f32 %v4834, %v4870
      %v4874 = vadd.f32 %v4835, %v4870
      %v4875 = vadd.f32 %v4836, %v4870
      %v4876 = vadd.f32 %v4837, %v4870
      %v4877 = vadd.f32 %v4838, %v4870
      %v4878 = vadd.f32 %v4839, %v4870
      %v4879 = vadd.f32 %v4840, %v4870
      %v4880 = vadd.f32 %v4841, %v4870
      %v4881 = vadd.f32 %v4842, %v4870
      %v4882 = vadd.f32 %v4843, %v4870
      %v4883 = vadd.f32 %v4844, %v4870
      %v4884 = vadd.f32 %v4845, %v4870
      %v4885 = vadd.f32 %v4846, %v4870
      %v4886 = vadd.f32 %v4847, %v4870
      %v4887 = vadd.f32 %v4848, %v4870
      %v4888 = vadd.f32 %v4849, %v4870
      %v4889 = vadd.f32 %v4850, %v4870
      %v4890 = vadd.f32 %v4851, %v4870
      %v4891 = vadd.f32 %v4852, %v4870
      %v4892 = vadd.f32 %v4853, %v4870
      %v4893 = vadd.f32 %v4854, %v4870
      %v4894 = vadd.f32 %v4855, %v4870
      %v4895 = vadd.f32 %v4856, %v4870
      %v4896 = vadd.f32 %v4857, %v4870
      %v4897 = vadd.f32 %v4858, %v4870
      %v4898 = vadd.f32 %v4859, %v4870
      %v4899 = vadd.f32 %v4860, %v4870
      %v4900 = vadd.f32 %v4861, %v4870
      %v4901 = vadd.f32 %v4862, %v4870
      %v4902 = vadd.f32 %v4863, %v4870
      %v4903 = vadd.f32 %v4864, %v4870
      %v4904 = vmax.f32 %v4872, 0.0
      %v4905 = vmax.f32 %v4873, 0.0
      %v4906 = vmax.f32 %v4874, 0.0
      %v4907 = vmax.f32 %v4875, 0.0
      %v4908 = vmax.f32 %v4876, 0.0
      %v4909 = vmax.f32 %v4877, 0.0
      %v4910 = vmax.f32 %v4878, 0.0
      %v4911 = vmax.f32 %v4879, 0.0
      %v4912 = vmax.f32 %v4880, 0.0
      %v4913 = vmax.f32 %v4881, 0.0
      %v4914 = vmax.f32 %v4882, 0.0
      %v4915 = vmax.f32 %v4883, 0.0
      %v4916 = vmax.f32 %v4884, 0.0
      %v4917 = vmax.f32 %v4885, 0.0
      %v4918 = vmax.f32 %v4886, 0.0
      %v4919 = vmax.f32 %v4887, 0.0
      %v4920 = vmax.f32 %v4888, 0.0
      %v4921 = vmax.f32 %v4889, 0.0
      %v4922 = vmax.f32 %v4890, 0.0
      %v4923 = vmax.f32 %v4891, 0.0
      %v4924 = vmax.f32 %v4892, 0.0
      %v4925 = vmax.f32 %v4893, 0.0
      %v4926 = vmax.f32 %v4894, 0.0
      %v4927 = vmax.f32 %v4895, 0.0
      %v4928 = vmax.f32 %v4896, 0.0
      %v4929 = vmax.f32 %v4897, 0.0
      %v4930 = vmax.f32 %v4898, 0.0
      %v4931 = vmax.f32 %v4899, 0.0
      %v4932 = vmax.f32 %v4900, 0.0
      %v4933 = vmax.f32 %v4901, 0.0
      %v4934 = vmax.f32 %v4902, 0.0
      %v4935 = vmax.f32 %v4903, 0.0
      %v4936 = vmax.f32 %v4904, %v4906
      %v4937 = vmax.f32 %v4905, %v4907
      %v4938 = vmax.f32 %v4908, %v4910
      %v4939 = vmax.f32 %v4909, %v4911
      %v4940 = vmax.f32 %v4912, %v4914
      %v4941 = vmax.f32 %v4913, %v4915
      %v4942 = vmax.f32 %v4916, %v4918
      %v4943 = vmax.f32 %v4917, %v4919
      %v4944 = vmax.f32 %v4920, %v4922
      %v4945 = vmax.f32 %v4921, %v4923
      %v4946 = vmax.f32 %v4924, %v4926
      %v4947 = vmax.f32 %v4925, %v4927
      %v4948 = vmax.f32 %v4928, %v4930
      %v4949 = vmax.f32 %v4929, %v4931
      %v4950 = vmax.f32 %v4932, %v4934
      %v4951 = vmax.f32 %v4933, %v4935
      %v4968 = vcombine.high %v4936, %v4936
      %v4970 = vunpack.c.l.s4 1983009808
      %v4971 = vunpack.c.0.s8 %v4970
      %v4972 = vlaneseq
      %v4973 = vshrl.u32 %v4972, 7
      %v4974 = vsub.s32 %v4971, %v4973
      %v4975 = vrot.slane %v4936, %v4974
      %v4977 = vunpack.c.l.s4 1983009808
      %v4978 = vunpack.c.0.s8 %v4977
      %v4979 = vlaneseq
      %v4980 = vshrl.u32 %v4979, 7
      %v4981 = vsub.s32 %v4978, %v4980
      %v4982 = vrot.slane %v4968, %v4981
      %v4983 = vcombine.high %v4975, %v4975
      %v4984 = vcombine.high %v4982, %v4982
      %v4985 = vcombine.high %v4937, %v4937
      %v4987 = vunpack.c.l.s4 1983009808
      %v4988 = vunpack.c.0.s8 %v4987
      %v4989 = vlaneseq
      %v4990 = vshrl.u32 %v4989, 7
      %v4991 = vsub.s32 %v4988, %v4990
      %v4992 = vrot.slane %v4937, %v4991
      %v4994 = vunpack.c.l.s4 1983009808
      %v4995 = vunpack.c.0.s8 %v4994
      %v4996 = vlaneseq
      %v4997 = vshrl.u32 %v4996, 7
      %v4998 = vsub.s32 %v4995, %v4997
      %v4999 = vrot.slane %v4985, %v4998
      %v5000 = vcombine.high %v4992, %v4992
      %v5001 = vcombine.high %v4999, %v4999
      %v5002 = vcombine.high %v4938, %v4938
      %v5004 = vunpack.c.l.s4 1983009808
      %v5005 = vunpack.c.0.s8 %v5004
      %v5006 = vlaneseq
      %v5007 = vshrl.u32 %v5006, 7
      %v5008 = vsub.s32 %v5005, %v5007
      %v5009 = vrot.slane %v4938, %v5008
      %v5011 = vunpack.c.l.s4 1983009808
      %v5012 = vunpack.c.0.s8 %v5011
      %v5013 = vlaneseq
      %v5014 = vshrl.u32 %v5013, 7
      %v5015 = vsub.s32 %v5012, %v5014
      %v5016 = vrot.slane %v5002, %v5015
      %v5017 = vcombine.high %v5009, %v5009
      %v5018 = vcombine.high %v5016, %v5016
      %v5019 = vcombine.high %v4939, %v4939
      %v5021 = vunpack.c.l.s4 1983009808
      %v5022 = vunpack.c.0.s8 %v5021
      %v5023 = vlaneseq
      %v5024 = vshrl.u32 %v5023, 7
      %v5025 = vsub.s32 %v5022, %v5024
      %v5026 = vrot.slane %v4939, %v5025
      %v5028 = vunpack.c.l.s4 1983009808
      %v5029 = vunpack.c.0.s8 %v5028
      %v5030 = vlaneseq
      %v5031 = vshrl.u32 %v5030, 7
      %v5032 = vsub.s32 %v5029, %v5031
      %v5033 = vrot.slane %v5019, %v5032
      %v5034 = vcombine.high %v5026, %v5026
      %v5035 = vcombine.high %v5033, %v5033
      %v5036 = vcombine.high %v4940, %v4940
      %v5038 = vunpack.c.l.s4 1983009808
      %v5039 = vunpack.c.0.s8 %v5038
      %v5040 = vlaneseq
      %v5041 = vshrl.u32 %v5040, 7
      %v5042 = vsub.s32 %v5039, %v5041
      %v5043 = vrot.slane %v4940, %v5042
      %v5045 = vunpack.c.l.s4 1983009808
      %v5046 = vunpack.c.0.s8 %v5045
      %v5047 = vlaneseq
      %v5048 = vshrl.u32 %v5047, 7
      %v5049 = vsub.s32 %v5046, %v5048
      %v5050 = vrot.slane %v5036, %v5049
      %v5051 = vcombine.high %v5043, %v5043
      %v5052 = vcombine.high %v5050, %v5050
      %v5053 = vcombine.high %v4941, %v4941
      %v5055 = vunpack.c.l.s4 1983009808
      %v5056 = vunpack.c.0.s8 %v5055
      %v5057 = vlaneseq
      %v5058 = vshrl.u32 %v5057, 7
      %v5059 = vsub.s32 %v5056, %v5058
      %v5060 = vrot.slane %v4941, %v5059
      %v5062 = vunpack.c.l.s4 1983009808
      %v5063 = vunpack.c.0.s8 %v5062
      %v5064 = vlaneseq
      %v5065 = vshrl.u32 %v5064, 7
      %v5066 = vsub.s32 %v5063, %v5065
      %v5067 = vrot.slane %v5053, %v5066
      %v5068 = vcombine.high %v5060, %v5060
      %v5069 = vcombine.high %v5067, %v5067
      %v5070 = vcombine.high %v4942, %v4942
      %v5072 = vunpack.c.l.s4 1983009808
      %v5073 = vunpack.c.0.s8 %v5072
      %v5074 = vlaneseq
      %v5075 = vshrl.u32 %v5074, 7
      %v5076 = vsub.s32 %v5073, %v5075
      %v5077 = vrot.slane %v4942, %v5076
      %v5079 = vunpack.c.l.s4 1983009808
      %v5080 = vunpack.c.0.s8 %v5079
      %v5081 = vlaneseq
      %v5082 = vshrl.u32 %v5081, 7
      %v5083 = vsub.s32 %v5080, %v5082
      %v5084 = vrot.slane %v5070, %v5083
      %v5085 = vcombine.high %v5077, %v5077
      %v5086 = vcombine.high %v5084, %v5084
      %v5087 = vcombine.high %v4943, %v4943
      %v5089 = vunpack.c.l.s4 1983009808
      %v5090 = vunpack.c.0.s8 %v5089
      %v5091 = vlaneseq
      %v5092 = vshrl.u32 %v5091, 7
      %v5093 = vsub.s32 %v5090, %v5092
      %v5094 = vrot.slane %v4943, %v5093
      %v5096 = vunpack.c.l.s4 1983009808
      %v5097 = vunpack.c.0.s8 %v5096
      %v5098 = vlaneseq
      %v5099 = vshrl.u32 %v5098, 7
      %v5100 = vsub.s32 %v5097, %v5099
      %v5101 = vrot.slane %v5087, %v5100
      %v5102 = vcombine.high %v5094, %v5094
      %v5103 = vcombine.high %v5101, %v5101
      %v5104 = vcombine.high %v4944, %v4944
      %v5106 = vunpack.c.l.s4 1983009808
      %v5107 = vunpack.c.0.s8 %v5106
      %v5108 = vlaneseq
      %v5109 = vshrl.u32 %v5108, 7
      %v5110 = vsub.s32 %v5107, %v5109
      %v5111 = vrot.slane %v4944, %v5110
      %v5113 = vunpack.c.l.s4 1983009808
      %v5114 = vunpack.c.0.s8 %v5113
      %v5115 = vlaneseq
      %v5116 = vshrl.u32 %v5115, 7
      %v5117 = vsub.s32 %v5114, %v5116
      %v5118 = vrot.slane %v5104, %v5117
      %v5119 = vcombine.high %v5111, %v5111
      %v5120 = vcombine.high %v5118, %v5118
      %v5121 = vcombine.high %v4945, %v4945
      %v5123 = vunpack.c.l.s4 1983009808
      %v5124 = vunpack.c.0.s8 %v5123
      %v5125 = vlaneseq
      %v5126 = vshrl.u32 %v5125, 7
      %v5127 = vsub.s32 %v5124, %v5126
      %v5128 = vrot.slane %v4945, %v5127
      %v5130 = vunpack.c.l.s4 1983009808
      %v5131 = vunpack.c.0.s8 %v5130
      %v5132 = vlaneseq
      %v5133 = vshrl.u32 %v5132, 7
      %v5134 = vsub.s32 %v5131, %v5133
      %v5135 = vrot.slane %v5121, %v5134
      %v5136 = vcombine.high %v5128, %v5128
      %v5137 = vcombine.high %v5135, %v5135
      %v5138 = vcombine.high %v4946, %v4946
      %v5140 = vunpack.c.l.s4 1983009808
      %v5141 = vunpack.c.0.s8 %v5140
      %v5142 = vlaneseq
      %v5143 = vshrl.u32 %v5142, 7
      %v5144 = vsub.s32 %v5141, %v5143
      %v5145 = vrot.slane %v4946, %v5144
      %v5147 = vunpack.c.l.s4 1983009808
      %v5148 = vunpack.c.0.s8 %v5147
      %v5149 = vlaneseq
      %v5150 = vshrl.u32 %v5149, 7
      %v5151 = vsub.s32 %v5148, %v5150
      %v5152 = vrot.slane %v5138, %v5151
      %v5153 = vcombine.high %v5145, %v5145
      %v5154 = vcombine.high %v5152, %v5152
      %v5155 = vcombine.high %v4947, %v4947
      %v5157 = vunpack.c.l.s4 1983009808
      %v5158 = vunpack.c.0.s8 %v5157
      %v5159 = vlaneseq
      %v5160 = vshrl.u32 %v5159, 7
      %v5161 = vsub.s32 %v5158, %v5160
      %v5162 = vrot.slane %v4947, %v5161
      %v5164 = vunpack.c.l.s4 1983009808
      %v5165 = vunpack.c.0.s8 %v5164
      %v5166 = vlaneseq
      %v5167 = vshrl.u32 %v5166, 7
      %v5168 = vsub.s32 %v5165, %v5167
      %v5169 = vrot.slane %v5155, %v5168
      %v5170 = vcombine.high %v5162, %v5162
      %v5171 = vcombine.high %v5169, %v5169
      %v5172 = vcombine.high %v4948, %v4948
      %v5174 = vunpack.c.l.s4 1983009808
      %v5175 = vunpack.c.0.s8 %v5174
      %v5176 = vlaneseq
      %v5177 = vshrl.u32 %v5176, 7
      %v5178 = vsub.s32 %v5175, %v5177
      %v5179 = vrot.slane %v4948, %v5178
      %v5181 = vunpack.c.l.s4 1983009808
      %v5182 = vunpack.c.0.s8 %v5181
      %v5183 = vlaneseq
      %v5184 = vshrl.u32 %v5183, 7
      %v5185 = vsub.s32 %v5182, %v5184
      %v5186 = vrot.slane %v5172, %v5185
      %v5187 = vcombine.high %v5179, %v5179
      %v5188 = vcombine.high %v5186, %v5186
      %v5189 = vcombine.high %v4949, %v4949
      %v5191 = vunpack.c.l.s4 1983009808
      %v5192 = vunpack.c.0.s8 %v5191
      %v5193 = vlaneseq
      %v5194 = vshrl.u32 %v5193, 7
      %v5195 = vsub.s32 %v5192, %v5194
      %v5196 = vrot.slane %v4949, %v5195
      %v5198 = vunpack.c.l.s4 1983009808
      %v5199 = vunpack.c.0.s8 %v5198
      %v5200 = vlaneseq
      %v5201 = vshrl.u32 %v5200, 7
      %v5202 = vsub.s32 %v5199, %v5201
      %v5203 = vrot.slane %v5189, %v5202
      %v5204 = vcombine.high %v5196, %v5196
      %v5205 = vcombine.high %v5203, %v5203
      %v5206 = vcombine.high %v4950, %v4950
      %v5208 = vunpack.c.l.s4 1983009808
      %v5209 = vunpack.c.0.s8 %v5208
      %v5210 = vlaneseq
      %v5211 = vshrl.u32 %v5210, 7
      %v5212 = vsub.s32 %v5209, %v5211
      %v5213 = vrot.slane %v4950, %v5212
      %v5215 = vunpack.c.l.s4 1983009808
      %v5216 = vunpack.c.0.s8 %v5215
      %v5217 = vlaneseq
      %v5218 = vshrl.u32 %v5217, 7
      %v5219 = vsub.s32 %v5216, %v5218
      %v5220 = vrot.slane %v5206, %v5219
      %v5221 = vcombine.high %v5213, %v5213
      %v5222 = vcombine.high %v5220, %v5220
      %v5223 = vcombine.high %v4951, %v4951
      %v5225 = vunpack.c.l.s4 1983009808
      %v5226 = vunpack.c.0.s8 %v5225
      %v5227 = vlaneseq
      %v5228 = vshrl.u32 %v5227, 7
      %v5229 = vsub.s32 %v5226, %v5228
      %v5230 = vrot.slane %v4951, %v5229
      %v5232 = vunpack.c.l.s4 1983009808
      %v5233 = vunpack.c.0.s8 %v5232
      %v5234 = vlaneseq
      %v5235 = vshrl.u32 %v5234, 7
      %v5236 = vsub.s32 %v5233, %v5235
      %v5237 = vrot.slane %v5223, %v5236
      %v5238 = vcombine.high %v5230, %v5230
      %v5239 = vcombine.high %v5237, %v5237
      %v5304 = vrot.slane %v4975, 7
      %v5305 = vrot.slane %v5304, 2
      %v5306 = vrot.slane %v4983, 7
      %v5307 = vrot.slane %v5306, 2
      %v5308 = vrot.slane %v4982, 7
      %v5309 = vrot.slane %v5308, 2
      %v5310 = vrot.slane %v4984, 7
      %v5311 = vrot.slane %v5310, 2
      %v5312 = vrot.slane %v4992, 7
      %v5313 = vrot.slane %v5312, 2
      %v5314 = vrot.slane %v5000, 7
      %v5315 = vrot.slane %v5314, 2
      %v5316 = vrot.slane %v4999, 7
      %v5317 = vrot.slane %v5316, 2
      %v5318 = vrot.slane %v5001, 7
      %v5319 = vrot.slane %v5318, 2
      %v5320 = vrot.slane %v5009, 7
      %v5321 = vrot.slane %v5320, 2
      %v5322 = vrot.slane %v5017, 7
      %v5323 = vrot.slane %v5322, 2
      %v5324 = vrot.slane %v5016, 7
      %v5325 = vrot.slane %v5324, 2
      %v5326 = vrot.slane %v5018, 7
      %v5327 = vrot.slane %v5326, 2
      %v5328 = vrot.slane %v5026, 7
      %v5329 = vrot.slane %v5328, 2
      %v5330 = vrot.slane %v5034, 7
      %v5331 = vrot.slane %v5330, 2
      %v5332 = vrot.slane %v5033, 7
      %v5333 = vrot.slane %v5332, 2
      %v5334 = vrot.slane %v5035, 7
      %v5335 = vrot.slane %v5334, 2
      %v5336 = vrot.slane %v5043, 7
      %v5337 = vrot.slane %v5336, 2
      %v5338 = vrot.slane %v5051, 7
      %v5339 = vrot.slane %v5338, 2
      %v5340 = vrot.slane %v5050, 7
      %v5341 = vrot.slane %v5340, 2
      %v5342 = vrot.slane %v5052, 7
      %v5343 = vrot.slane %v5342, 2
      %v5344 = vrot.slane %v5060, 7
      %v5345 = vrot.slane %v5344, 2
      %v5346 = vrot.slane %v5068, 7
      %v5347 = vrot.slane %v5346, 2
      %v5348 = vrot.slane %v5067, 7
      %v5349 = vrot.slane %v5348, 2
      %v5350 = vrot.slane %v5069, 7
      %v5351 = vrot.slane %v5350, 2
      %v5352 = vrot.slane %v5077, 7
      %v5353 = vrot.slane %v5352, 2
      %v5354 = vrot.slane %v5085, 7
      %v5355 = vrot.slane %v5354, 2
      %v5356 = vrot.slane %v5084, 7
      %v5357 = vrot.slane %v5356, 2
      %v5358 = vrot.slane %v5086, 7
      %v5359 = vrot.slane %v5358, 2
      %v5360 = vrot.slane %v5094, 7
      %v5361 = vrot.slane %v5360, 2
      %v5362 = vrot.slane %v5102, 7
      %v5363 = vrot.slane %v5362, 2
      %v5364 = vrot.slane %v5101, 7
      %v5365 = vrot.slane %v5364, 2
      %v5366 = vrot.slane %v5103, 7
      %v5367 = vrot.slane %v5366, 2
      %v5368 = vrot.slane %v5111, 7
      %v5369 = vrot.slane %v5368, 2
      %v5370 = vrot.slane %v5119, 7
      %v5371 = vrot.slane %v5370, 2
      %v5372 = vrot.slane %v5118, 7
      %v5373 = vrot.slane %v5372, 2
      %v5374 = vrot.slane %v5120, 7
      %v5375 = vrot.slane %v5374, 2
      %v5376 = vrot.slane %v5128, 7
      %v5377 = vrot.slane %v5376, 2
      %v5378 = vrot.slane %v5136, 7
      %v5379 = vrot.slane %v5378, 2
      %v5380 = vrot.slane %v5135, 7
      %v5381 = vrot.slane %v5380, 2
      %v5382 = vrot.slane %v5137, 7
      %v5383 = vrot.slane %v5382, 2
      %v5384 = vrot.slane %v5145, 7
      %v5385 = vrot.slane %v5384, 2
      %v5386 = vrot.slane %v5153, 7
      %v5387 = vrot.slane %v5386, 2
      %v5388 = vrot.slane %v5152, 7
      %v5389 = vrot.slane %v5388, 2
      %v5390 = vrot.slane %v5154, 7
      %v5391 = vrot.slane %v5390, 2
      %v5392 = vrot.slane %v5162, 7
      %v5393 = vrot.slane %v5392, 2
      %v5394 = vrot.slane %v5170, 7
      %v5395 = vrot.slane %v5394, 2
      %v5396 = vrot.slane %v5169, 7
      %v5397 = vrot.slane %v5396, 2
      %v5398 = vrot.slane %v5171, 7
      %v5399 = vrot.slane %v5398, 2
      %v5400 = vrot.slane %v5179, 7
      %v5401 = vrot.slane %v5400, 2
      %v5402 = vrot.slane %v5187, 7
      %v5403 = vrot.slane %v5402, 2
      %v5404 = vrot.slane %v5186, 7
      %v5405 = vrot.slane %v5404, 2
      %v5406 = vrot.slane %v5188, 7
      %v5407 = vrot.slane %v5406, 2
      %v5408 = vrot.slane %v5196, 7
      %v5409 = vrot.slane %v5408, 2
      %v5410 = vrot.slane %v5204, 7
      %v5411 = vrot.slane %v5410, 2
      %v5412 = vrot.slane %v5203, 7
      %v5413 = vrot.slane %v5412, 2
      %v5414 = vrot.slane %v5205, 7
      %v5415 = vrot.slane %v5414, 2
      %v5416 = vrot.slane %v5213, 7
      %v5417 = vrot.slane %v5416, 2
      %v5418 = vrot.slane %v5221, 7
      %v5419 = vrot.slane %v5418, 2
      %v5420 = vrot.slane %v5220, 7
      %v5421 = vrot.slane %v5420, 2
      %v5422 = vrot.slane %v5222, 7
      %v5423 = vrot.slane %v5422, 2
      %v5424 = vrot.slane %v5230, 7
      %v5425 = vrot.slane %v5424, 2
      %v5426 = vrot.slane %v5238, 7
      %v5427 = vrot.slane %v5426, 2
      %v5428 = vrot.slane %v5237, 7
      %v5429 = vrot.slane %v5428, 2
      %v5430 = vrot.slane %v5239, 7
      %v5431 = vrot.slane %v5430, 2
      %v5496 = vmax.f32 %v4975, %v5305
      %v5497 = vmax.f32 %v4983, %v5307
      %v5498 = vmax.f32 %v4982, %v5309
      %v5499 = vmax.f32 %v4984, %v5311
      %v5500 = vmax.f32 %v4992, %v5313
      %v5501 = vmax.f32 %v5000, %v5315
      %v5502 = vmax.f32 %v4999, %v5317
      %v5503 = vmax.f32 %v5001, %v5319
      %v5504 = vmax.f32 %v5009, %v5321
      %v5505 = vmax.f32 %v5017, %v5323
      %v5506 = vmax.f32 %v5016, %v5325
      %v5507 = vmax.f32 %v5018, %v5327
      %v5508 = vmax.f32 %v5026, %v5329
      %v5509 = vmax.f32 %v5034, %v5331
      %v5510 = vmax.f32 %v5033, %v5333
      %v5511 = vmax.f32 %v5035, %v5335
      %v5512 = vmax.f32 %v5043, %v5337
      %v5513 = vmax.f32 %v5051, %v5339
      %v5514 = vmax.f32 %v5050, %v5341
      %v5515 = vmax.f32 %v5052, %v5343
      %v5516 = vmax.f32 %v5060, %v5345
      %v5517 = vmax.f32 %v5068, %v5347
      %v5518 = vmax.f32 %v5067, %v5349
      %v5519 = vmax.f32 %v5069, %v5351
      %v5520 = vmax.f32 %v5077, %v5353
      %v5521 = vmax.f32 %v5085, %v5355
      %v5522 = vmax.f32 %v5084, %v5357
      %v5523 = vmax.f32 %v5086, %v5359
      %v5524 = vmax.f32 %v5094, %v5361
      %v5525 = vmax.f32 %v5102, %v5363
      %v5526 = vmax.f32 %v5101, %v5365
      %v5527 = vmax.f32 %v5103, %v5367
      %v5528 = vmax.f32 %v5111, %v5369
      %v5529 = vmax.f32 %v5119, %v5371
      %v5530 = vmax.f32 %v5118, %v5373
      %v5531 = vmax.f32 %v5120, %v5375
      %v5532 = vmax.f32 %v5128, %v5377
      %v5533 = vmax.f32 %v5136, %v5379
      %v5534 = vmax.f32 %v5135, %v5381
      %v5535 = vmax.f32 %v5137, %v5383
      %v5536 = vmax.f32 %v5145, %v5385
      %v5537 = vmax.f32 %v5153, %v5387
      %v5538 = vmax.f32 %v5152, %v5389
      %v5539 = vmax.f32 %v5154, %v5391
      %v5540 = vmax.f32 %v5162, %v5393
      %v5541 = vmax.f32 %v5170, %v5395
      %v5542 = vmax.f32 %v5169, %v5397
      %v5543 = vmax.f32 %v5171, %v5399
      %v5544 = vmax.f32 %v5179, %v5401
      %v5545 = vmax.f32 %v5187, %v5403
      %v5546 = vmax.f32 %v5186, %v5405
      %v5547 = vmax.f32 %v5188, %v5407
      %v5548 = vmax.f32 %v5196, %v5409
      %v5549 = vmax.f32 %v5204, %v5411
      %v5550 = vmax.f32 %v5203, %v5413
      %v5551 = vmax.f32 %v5205, %v5415
      %v5552 = vmax.f32 %v5213, %v5417
      %v5553 = vmax.f32 %v5221, %v5419
      %v5554 = vmax.f32 %v5220, %v5421
      %v5555 = vmax.f32 %v5222, %v5423
      %v5556 = vmax.f32 %v5230, %v5425
      %v5557 = vmax.f32 %v5238, %v5427
      %v5558 = vmax.f32 %v5237, %v5429
      %v5559 = vmax.f32 %v5239, %v5431
      %v5624 = vlaneseq
      %v5625 = vshrl.u32 %v5624, 7
      %v5626 = vsub.s32 0, %v5625
      %v5627 = vrot.slane %v5496, %v5626
      %v5628 = vlaneseq
      %v5629 = vshrl.u32 %v5628, 7
      %v5630 = vsub.s32 0, %v5629
      %v5631 = vrot.slane %v5497, %v5630
      %v5632 = vlaneseq
      %v5633 = vshrl.u32 %v5632, 7
      %v5634 = vsub.s32 0, %v5633
      %v5635 = vrot.slane %v5498, %v5634
      %v5636 = vlaneseq
      %v5637 = vshrl.u32 %v5636, 7
      %v5638 = vsub.s32 0, %v5637
      %v5639 = vrot.slane %v5499, %v5638
      %v5640 = vlaneseq
      %v5641 = vshrl.u32 %v5640, 7
      %v5642 = vsub.s32 0, %v5641
      %v5643 = vrot.slane %v5500, %v5642
      %v5644 = vlaneseq
      %v5645 = vshrl.u32 %v5644, 7
      %v5646 = vsub.s32 0, %v5645
      %v5647 = vrot.slane %v5501, %v5646
      %v5648 = vlaneseq
      %v5649 = vshrl.u32 %v5648, 7
      %v5650 = vsub.s32 0, %v5649
      %v5651 = vrot.slane %v5502, %v5650
      %v5652 = vlaneseq
      %v5653 = vshrl.u32 %v5652, 7
      %v5654 = vsub.s32 0, %v5653
      %v5655 = vrot.slane %v5503, %v5654
      %v5656 = vlaneseq
      %v5657 = vshrl.u32 %v5656, 7
      %v5658 = vsub.s32 0, %v5657
      %v5659 = vrot.slane %v5504, %v5658
      %v5660 = vlaneseq
      %v5661 = vshrl.u32 %v5660, 7
      %v5662 = vsub.s32 0, %v5661
      %v5663 = vrot.slane %v5505, %v5662
      %v5664 = vlaneseq
      %v5665 = vshrl.u32 %v5664, 7
      %v5666 = vsub.s32 0, %v5665
      %v5667 = vrot.slane %v5506, %v5666
      %v5668 = vlaneseq
      %v5669 = vshrl.u32 %v5668, 7
      %v5670 = vsub.s32 0, %v5669
      %v5671 = vrot.slane %v5507, %v5670
      %v5672 = vlaneseq
      %v5673 = vshrl.u32 %v5672, 7
      %v5674 = vsub.s32 0, %v5673
      %v5675 = vrot.slane %v5508, %v5674
      %v5676 = vlaneseq
      %v5677 = vshrl.u32 %v5676, 7
      %v5678 = vsub.s32 0, %v5677
      %v5679 = vrot.slane %v5509, %v5678
      %v5680 = vlaneseq
      %v5681 = vshrl.u32 %v5680, 7
      %v5682 = vsub.s32 0, %v5681
      %v5683 = vrot.slane %v5510, %v5682
      %v5684 = vlaneseq
      %v5685 = vshrl.u32 %v5684, 7
      %v5686 = vsub.s32 0, %v5685
      %v5687 = vrot.slane %v5511, %v5686
      %v5688 = vlaneseq
      %v5689 = vshrl.u32 %v5688, 7
      %v5690 = vsub.s32 0, %v5689
      %v5691 = vrot.slane %v5512, %v5690
      %v5692 = vlaneseq
      %v5693 = vshrl.u32 %v5692, 7
      %v5694 = vsub.s32 0, %v5693
      %v5695 = vrot.slane %v5513, %v5694
      %v5696 = vlaneseq
      %v5697 = vshrl.u32 %v5696, 7
      %v5698 = vsub.s32 0, %v5697
      %v5699 = vrot.slane %v5514, %v5698
      %v5700 = vlaneseq
      %v5701 = vshrl.u32 %v5700, 7
      %v5702 = vsub.s32 0, %v5701
      %v5703 = vrot.slane %v5515, %v5702
      %v5704 = vlaneseq
      %v5705 = vshrl.u32 %v5704, 7
      %v5706 = vsub.s32 0, %v5705
      %v5707 = vrot.slane %v5516, %v5706
      %v5708 = vlaneseq
      %v5709 = vshrl.u32 %v5708, 7
      %v5710 = vsub.s32 0, %v5709
      %v5711 = vrot.slane %v5517, %v5710
      %v5712 = vlaneseq
      %v5713 = vshrl.u32 %v5712, 7
      %v5714 = vsub.s32 0, %v5713
      %v5715 = vrot.slane %v5518, %v5714
      %v5716 = vlaneseq
      %v5717 = vshrl.u32 %v5716, 7
      %v5718 = vsub.s32 0, %v5717
      %v5719 = vrot.slane %v5519, %v5718
      %v5720 = vlaneseq
      %v5721 = vshrl.u32 %v5720, 7
      %v5722 = vsub.s32 0, %v5721
      %v5723 = vrot.slane %v5520, %v5722
      %v5724 = vlaneseq
      %v5725 = vshrl.u32 %v5724, 7
      %v5726 = vsub.s32 0, %v5725
      %v5727 = vrot.slane %v5521, %v5726
      %v5728 = vlaneseq
      %v5729 = vshrl.u32 %v5728, 7
      %v5730 = vsub.s32 0, %v5729
      %v5731 = vrot.slane %v5522, %v5730
      %v5732 = vlaneseq
      %v5733 = vshrl.u32 %v5732, 7
      %v5734 = vsub.s32 0, %v5733
      %v5735 = vrot.slane %v5523, %v5734
      %v5736 = vlaneseq
      %v5737 = vshrl.u32 %v5736, 7
      %v5738 = vsub.s32 0, %v5737
      %v5739 = vrot.slane %v5524, %v5738
      %v5740 = vlaneseq
      %v5741 = vshrl.u32 %v5740, 7
      %v5742 = vsub.s32 0, %v5741
      %v5743 = vrot.slane %v5525, %v5742
      %v5744 = vlaneseq
      %v5745 = vshrl.u32 %v5744, 7
      %v5746 = vsub.s32 0, %v5745
      %v5747 = vrot.slane %v5526, %v5746
      %v5748 = vlaneseq
      %v5749 = vshrl.u32 %v5748, 7
      %v5750 = vsub.s32 0, %v5749
      %v5751 = vrot.slane %v5527, %v5750
      %v5752 = vlaneseq
      %v5753 = vshrl.u32 %v5752, 7
      %v5754 = vsub.s32 0, %v5753
      %v5755 = vrot.slane %v5528, %v5754
      %v5756 = vlaneseq
      %v5757 = vshrl.u32 %v5756, 7
      %v5758 = vsub.s32 0, %v5757
      %v5759 = vrot.slane %v5529, %v5758
      %v5760 = vlaneseq
      %v5761 = vshrl.u32 %v5760, 7
      %v5762 = vsub.s32 0, %v5761
      %v5763 = vrot.slane %v5530, %v5762
      %v5764 = vlaneseq
      %v5765 = vshrl.u32 %v5764, 7
      %v5766 = vsub.s32 0, %v5765
      %v5767 = vrot.slane %v5531, %v5766
      %v5768 = vlaneseq
      %v5769 = vshrl.u32 %v5768, 7
      %v5770 = vsub.s32 0, %v5769
      %v5771 = vrot.slane %v5532, %v5770
      %v5772 = vlaneseq
      %v5773 = vshrl.u32 %v5772, 7
      %v5774 = vsub.s32 0, %v5773
      %v5775 = vrot.slane %v5533, %v5774
      %v5776 = vlaneseq
      %v5777 = vshrl.u32 %v5776, 7
      %v5778 = vsub.s32 0, %v5777
      %v5779 = vrot.slane %v5534, %v5778
      %v5780 = vlaneseq
      %v5781 = vshrl.u32 %v5780, 7
      %v5782 = vsub.s32 0, %v5781
      %v5783 = vrot.slane %v5535, %v5782
      %v5784 = vlaneseq
      %v5785 = vshrl.u32 %v5784, 7
      %v5786 = vsub.s32 0, %v5785
      %v5787 = vrot.slane %v5536, %v5786
      %v5788 = vlaneseq
      %v5789 = vshrl.u32 %v5788, 7
      %v5790 = vsub.s32 0, %v5789
      %v5791 = vrot.slane %v5537, %v5790
      %v5792 = vlaneseq
      %v5793 = vshrl.u32 %v5792, 7
      %v5794 = vsub.s32 0, %v5793
      %v5795 = vrot.slane %v5538, %v5794
      %v5796 = vlaneseq
      %v5797 = vshrl.u32 %v5796, 7
      %v5798 = vsub.s32 0, %v5797
      %v5799 = vrot.slane %v5539, %v5798
      %v5800 = vlaneseq
      %v5801 = vshrl.u32 %v5800, 7
      %v5802 = vsub.s32 0, %v5801
      %v5803 = vrot.slane %v5540, %v5802
      %v5804 = vlaneseq
      %v5805 = vshrl.u32 %v5804, 7
      %v5806 = vsub.s32 0, %v5805
      %v5807 = vrot.slane %v5541, %v5806
      %v5808 = vlaneseq
      %v5809 = vshrl.u32 %v5808, 7
      %v5810 = vsub.s32 0, %v5809
      %v5811 = vrot.slane %v5542, %v5810
      %v5812 = vlaneseq
      %v5813 = vshrl.u32 %v5812, 7
      %v5814 = vsub.s32 0, %v5813
      %v5815 = vrot.slane %v5543, %v5814
      %v5816 = vlaneseq
      %v5817 = vshrl.u32 %v5816, 7
      %v5818 = vsub.s32 0, %v5817
      %v5819 = vrot.slane %v5544, %v5818
      %v5820 = vlaneseq
      %v5821 = vshrl.u32 %v5820, 7
      %v5822 = vsub.s32 0, %v5821
      %v5823 = vrot.slane %v5545, %v5822
      %v5824 = vlaneseq
      %v5825 = vshrl.u32 %v5824, 7
      %v5826 = vsub.s32 0, %v5825
      %v5827 = vrot.slane %v5546, %v5826
      %v5828 = vlaneseq
      %v5829 = vshrl.u32 %v5828, 7
      %v5830 = vsub.s32 0, %v5829
      %v5831 = vrot.slane %v5547, %v5830
      %v5832 = vlaneseq
      %v5833 = vshrl.u32 %v5832, 7
      %v5834 = vsub.s32 0, %v5833
      %v5835 = vrot.slane %v5548, %v5834
      %v5836 = vlaneseq
      %v5837 = vshrl.u32 %v5836, 7
      %v5838 = vsub.s32 0, %v5837
      %v5839 = vrot.slane %v5549, %v5838
      %v5840 = vlaneseq
      %v5841 = vshrl.u32 %v5840, 7
      %v5842 = vsub.s32 0, %v5841
      %v5843 = vrot.slane %v5550, %v5842
      %v5844 = vlaneseq
      %v5845 = vshrl.u32 %v5844, 7
      %v5846 = vsub.s32 0, %v5845
      %v5847 = vrot.slane %v5551, %v5846
      %v5848 = vlaneseq
      %v5849 = vshrl.u32 %v5848, 7
      %v5850 = vsub.s32 0, %v5849
      %v5851 = vrot.slane %v5552, %v5850
      %v5852 = vlaneseq
      %v5853 = vshrl.u32 %v5852, 7
      %v5854 = vsub.s32 0, %v5853
      %v5855 = vrot.slane %v5553, %v5854
      %v5856 = vlaneseq
      %v5857 = vshrl.u32 %v5856, 7
      %v5858 = vsub.s32 0, %v5857
      %v5859 = vrot.slane %v5554, %v5858
      %v5860 = vlaneseq
      %v5861 = vshrl.u32 %v5860, 7
      %v5862 = vsub.s32 0, %v5861
      %v5863 = vrot.slane %v5555, %v5862
      %v5864 = vlaneseq
      %v5865 = vshrl.u32 %v5864, 7
      %v5866 = vsub.s32 0, %v5865
      %v5867 = vrot.slane %v5556, %v5866
      %v5868 = vlaneseq
      %v5869 = vshrl.u32 %v5868, 7
      %v5870 = vsub.s32 0, %v5869
      %v5871 = vrot.slane %v5557, %v5870
      %v5872 = vlaneseq
      %v5873 = vshrl.u32 %v5872, 7
      %v5874 = vsub.s32 0, %v5873
      %v5875 = vrot.slane %v5558, %v5874
      %v5876 = vlaneseq
      %v5877 = vshrl.u32 %v5876, 7
      %v5878 = vsub.s32 0, %v5877
      %v5879 = vrot.slane %v5559, %v5878
      %vm5880 = vcmask 1041409
      %v5881 = vsel %vm5880, %v5631, %v5627
      %vm5882 = vcmask 1042434
      %v5883 = vsel %vm5882, %v5635, %v5881
      %vm5884 = vcmask 1043459
      %v5885 = vsel %vm5884, %v5639, %v5883
      %vm5886 = vcmask 1044484
      %v5887 = vsel %vm5886, %v5643, %v5885
      %vm5888 = vcmask 1045509
      %v5889 = vsel %vm5888, %v5647, %v5887
      %vm5890 = vcmask 1046534
      %v5891 = vsel %vm5890, %v5651, %v5889
      %vm5892 = vcmask 1047559
      %v5893 = vsel %vm5892, %v5655, %v5891
      %v5894 = vsel %vm5880, %v5663, %v5659
      %v5895 = vsel %vm5882, %v5667, %v5894
      %v5896 = vsel %vm5884, %v5671, %v5895
      %v5897 = vsel %vm5886, %v5675, %v5896
      %v5898 = vsel %vm5888, %v5679, %v5897
      %v5899 = vsel %vm5890, %v5683, %v5898
      %v5900 = vsel %vm5892, %v5687, %v5899
      %v5901 = vsel %vm5880, %v5695, %v5691
      %v5902 = vsel %vm5882, %v5699, %v5901
      %v5903 = vsel %vm5884, %v5703, %v5902
      %v5904 = vsel %vm5886, %v5707, %v5903
      %v5905 = vsel %vm5888, %v5711, %v5904
      %v5906 = vsel %vm5890, %v5715, %v5905
      %v5907 = vsel %vm5892, %v5719, %v5906
      %v5908 = vsel %vm5880, %v5727, %v5723
      %v5909 = vsel %vm5882, %v5731, %v5908
      %v5910 = vsel %vm5884, %v5735, %v5909
      %v5911 = vsel %vm5886, %v5739, %v5910
      %v5912 = vsel %vm5888, %v5743, %v5911
      %v5913 = vsel %vm5890, %v5747, %v5912
      %v5914 = vsel %vm5892, %v5751, %v5913
      %v5915 = vsel %vm5880, %v5759, %v5755
      %v5916 = vsel %vm5882, %v5763, %v5915
      %v5917 = vsel %vm5884, %v5767, %v5916
      %v5918 = vsel %vm5886, %v5771, %v5917
      %v5919 = vsel %vm5888, %v5775, %v5918
      %v5920 = vsel %vm5890, %v5779, %v5919
      %v5921 = vsel %vm5892, %v5783, %v5920
      %v5922 = vsel %vm5880, %v5791, %v5787
      %v5923 = vsel %vm5882, %v5795, %v5922
      %v5924 = vsel %vm5884, %v5799, %v5923
      %v5925 = vsel %vm5886, %v5803, %v5924
      %v5926 = vsel %vm5888, %v5807, %v5925
      %v5927 = vsel %vm5890, %v5811, %v5926
      %v5928 = vsel %vm5892, %v5815, %v5927
      %v5929 = vsel %vm5880, %v5823, %v5819
      %v5930 = vsel %vm5882, %v5827, %v5929
      %v5931 = vsel %vm5884, %v5831, %v5930
      %v5932 = vsel %vm5886, %v5835, %v5931
      %v5933 = vsel %vm5888, %v5839, %v5932
      %v5934 = vsel %vm5890, %v5843, %v5933
      %v5935 = vsel %vm5892, %v5847, %v5934
      %v5936 = vsel %vm5880, %v5855, %v5851
      %v5937 = vsel %vm5882, %v5859, %v5936
      %v5938 = vsel %vm5884, %v5863, %v5937
      %v5939 = vsel %vm5886, %v5867, %v5938
      %v5940 = vsel %vm5888, %v5871, %v5939
      %v5941 = vsel %vm5890, %v5875, %v5940
      %v5942 = vsel %vm5892, %v5879, %v5941
      %5951 = vst [vmem:[%s219] sm:$0xff] %v5893
      %5952 = vst [vmem:[%s219 + $0x8] sm:$0xff] %v5900
      %5953 = vst [vmem:[%s219 + $0x10] sm:$0xff] %v5907
      %5954 = vst [vmem:[%s219 + $0x18] sm:$0xff] %v5914
      %5955 = vst [vmem:[%s219 + $0x20] sm:$0xff] %v5921
      %5956 = vst [vmem:[%s219 + $0x28] sm:$0xff] %v5928
      %5957 = vst [vmem:[%s219 + $0x30] sm:$0xff] %v5935
      %5958 = vst [vmem:[%s219 + $0x38] sm:$0xff] %v5942
      %s5959 = smul.u32 8, %s20
      %p5960 = scmp.lt.s32.totalorder %s19, 1
      %s5961 = scalar_select %p5960, %s19, 1
      %p5962 = scmp.lt.s32.totalorder %s5959, 7
      %s5963 = scalar_select %p5962, %s5959, 7
      %s5964 = smul.addr %s5961, 8
      %s5965 = sadd.s32 %s5963, %s5964
      %s5966 = smul.addr %s5965, 8
      %s5967 = scalar_lea.vmem %s4, %s5966
      // Predicated region
      $region37: #{conv_block_forward.3} parent=35 // pred_check
        %p5968 = pneg %p136
      $region38: #{conv_block_forward.3} parent=35 // pred_check_branch
        %5970 = sbr.rel (%p5968) target = $region40
      $region39: #{conv_block_forward.3} parent=35 // pred_region
        %s5971 = smul.u32 8, %s20
      $region40: #{conv_block_forward.3} parent=35 // pred_fallthru
        _
    $region36: #{conv_block_forward.3} parent=5 // pred_fallthru
      _
    %p5972 = scmp.le.s32.totalorder 2, %s10
    // Predicated region
    $region41: #{conv_block_forward.3} parent=5 // pred_check
      %p5973 = pneg %p5972
    $region42: #{conv_block_forward.3} parent=5 // pred_check_branch
      %5975 = sbr.rel (%p5973) target = $region44
    $region43: #{conv_block_forward.3} parent=5 // pred_region
      %s5976 = ssub.s32 %s10, 2
      // Predicated region
      $region45: #{conv_block_forward.3} parent=43 // pred_check
        %p5977 = pneg %p142
      $region46: #{conv_block_forward.3} parent=43 // pred_check_branch
        %5979 = sbr.rel (%p5977) target = $region48
      $region47: #{conv_block_forward.3} parent=43 // pred_region
        %s5980 = smul.u32 8, %s22
        %p5981 = scmp.lt.s32.totalorder %s21, 1
        %s5982 = scalar_select %p5981, %s21, 1
        %p5983 = scmp.lt.s32.totalorder %s5980, 7
        %s5984 = scalar_select %p5983, %s5980, 7
        %s5985 = smul.addr %s5982, 8
        %s5986 = sadd.s32 %s5984, %s5985
        %s5987 = smul.addr %s5986, 8
        %s5988 = scalar_lea.vmem %s4, %s5987
      $region48: #{conv_block_forward.3} parent=43 // pred_fallthru
        _
    $region44: #{conv_block_forward.3} parent=5 // pred_fallthru
      _
  $region6: #{conv_block_forward.3} parent=0 // loop_footer
    %s14 = sadd.s32 1, %s10
  $region7: #{conv_block_forward.3} parent=0 // loop_footer_branch
    %9 = sbr.rel target = $region3
  $region8: #{conv_block_forward.3} parent=0 // loop_exit
    _

</llo_original>
